<compile_context>
chip_gen: v6e
topology: v6e:2x2x1
jax: 0.10.0
libtpu: 0.0.40
codegen_flags: <defaults>
</compile_context>

<pallas_src>
import jax
import jax.numpy as jnp
import numpy as np
from jax import lax
from jax.experimental import pallas as pl
from jax.experimental.pallas import tpu as pltpu

CONV_K = 5
CONV_PAD = 2
BN_EPS = 1e-5

_CHANS = [(3, 8), (8, 16), (16, 32), (32, 64)]
_CIN_PAD0 = 8          # layer-1 input channels padded 3 -> 8 (sublane-aligned concat)


# ----------------------------------------------------------------------------
# Host-side one-time parameter prep (BN folding, weight reordering, constants)
# ----------------------------------------------------------------------------
def prepare_params(params, height, width):
    H, W = height, width
    ws, shifts = [], []
    for li, ((cin, cout), layer) in enumerate(zip(_CHANS, params["convs"])):
        scale = layer["gamma"] / jnp.sqrt(layer["var"] + BN_EPS)
        shift = layer["beta"] + (layer["b"] - layer["mean"]) * scale
        wf = layer["w"] * scale[:, None, None, None]           # OIHW, BN scale folded
        cin_k = _CIN_PAD0 if li == 0 else cin
        if cin_k != cin:                                       # zero cols for pad channels
            wf = jnp.pad(wf, ((0, 0), (0, cin_k - cin), (0, 0), (0, 0)))
        # column order: kh-major, then kw, then cin  -> matches in-kernel concat
        wf = jnp.transpose(wf, (0, 2, 3, 1)).reshape(cout, CONV_K * CONV_K * cin_k)
        ws.append(wf)
        shifts.append(shift.reshape(cout, 1))

    # tiny per-layer decimation matrices: (2*w2-1, w2) with ones at (2j, j)
    decs = []
    for (h, w) in [(H, W), (H // 2, W // 2), (H // 4, W // 4)]:
        w2 = w // 2
        d = np.zeros((2 * w2 - 1, w2), np.float32)
        d[2 * np.arange(w2), np.arange(w2)] = 1.0
        decs.append(jnp.asarray(d))

    # Linear head: per pooled-pixel (q = i*(W/16)+j) a (64, 24) weight slab
    q = (H // 16) * (W // 16)
    wq = jnp.transpose(params["lin_w"].reshape(24, 64, q), (2, 1, 0))   # (q, 64, 24)
    bh = params["lin_b"].reshape(1, 24)
    return dict(ws=ws, shifts=shifts, decs=decs, wq=wq, bh=bh)


# ----------------------------------------------------------------------------
# Fused Pallas forward
# ----------------------------------------------------------------------------
def make_cnn_forward(height, width):
    H, W = height, width
    assert H % 16 == 0 and W % 16 == 0
    dims = [(H, W), (H // 2, W // 2), (H // 4, W // 4), (H // 8, W // 8)]
    # flat padded length per layer: (h + 2p)*(w + 2p) + (K - 1) slack
    PL = [(h + 2 * CONV_PAD) * (w + 2 * CONV_PAD) + CONV_K - 1 for (h, w) in dims]
    CINK = [_CIN_PAD0, 8, 16, 32]
    COUT = [8, 16, 32, 64]

    def kernel(x_ref,
               w1_ref, s1_ref, w2_ref, s2_ref, w3_ref, s3_ref, w4_ref, s4_ref,
               d1_ref, d2_ref, d3_ref, wq_ref, bh_ref,
               o_ref,
               pad2_ref, pad3_ref, pad4_ref):

        def conv_block(pad_ref, w_ref, shift_ref, h, w, cin, cout):
            """Conv(5x5,p=2) + folded-BN shift + ReLU + 2x2 maxpool on a flat padded
            image (row stride wp = w+4).  Returns m2 (cout, h*wp - 1 - wp); the pooled
            value for output pixel (i, j) sits at column 2*i*wp + 2*j."""
            wp = w + 2 * CONV_PAD
            L = h * wp
            acc = None
            for kh in range(CONV_K):                 # 5 grouped matmuls, K = 5*cin
                base = kh * wp
                opnd = jnp.concatenate(
                    [pad_ref[:, base + kw: base + kw + L] for kw in range(CONV_K)],
                    axis=0)                                          # (5*cin, L)
                part = jnp.dot(w_ref[:, kh * CONV_K * cin:(kh + 1) * CONV_K * cin],
                               opnd, preferred_element_type=jnp.float32)
                acc = part if acc is None else acc + part
            y = jnp.maximum(acc + shift_ref[...], 0.0)       # BN shift + ReLU
            m1 = jnp.maximum(y[:, :L - 1], y[:, 1:])         # horizontal pair max
            return jnp.maximum(m1[:, :L - 1 - wp], m1[:, wp:])   # vertical pair max

        def pool_to_next(m2, dec_ref, nxt_ref, h, w, cout):
            """Decimate pooled values (stride-2 gather via one tiny 0/1 matmul on
            sublane-stacked row slices) and scatter into the next layer's
            zero-padded flat image buffer."""
            wp = w + 2 * CONV_PAD
            h2, w2 = h // 2, w // 2
            wp2 = w2 + 2 * CONV_PAD
            stacked = jnp.concatenate(
                [m2[:, 2 * i * wp: 2 * i * wp + 2 * w2 - 1] for i in range(h2)],
                axis=0)                                              # (h2*cout, 2*w2-1)
            pooled = jnp.dot(stacked, dec_ref[...],
                             preferred_element_type=jnp.float32)     # (h2*cout, w2)
            nxt_ref[...] = jnp.zeros(nxt_ref.shape, jnp.float32)
            for i in range(h2):
                start = (i + CONV_PAD) * wp2 + CONV_PAD
                nxt_ref[:, start:start + w2] = pooled[i * cout:(i + 1) * cout, :]

        m2 = conv_block(x_ref, w1_ref, s1_ref, dims[0][0], dims[0][1], CINK[0], COUT[0])
        pool_to_next(m2, d1_ref, pad2_ref, dims[0][0], dims[0][1], COUT[0])
        m2 = conv_block(pad2_ref, w2_ref, s2_ref, dims[1][0], dims[1][1], CINK[1], COUT[1])
        pool_to_next(m2, d2_ref, pad3_ref, dims[1][0], dims[1][1], COUT[1])
        m2 = conv_block(pad3_ref, w3_ref, s3_ref, dims[2][0], dims[2][1], CINK[2], COUT[2])
        pool_to_next(m2, d3_ref, pad4_ref, dims[2][0], dims[2][1], COUT[2])
        m2 = conv_block(pad4_ref, w4_ref, s4_ref, dims[3][0], dims[3][1], CINK[3], COUT[3])

        # ---- Linear head: per pooled pixel q, lane-broadcast-multiply the (64,24)
        # weight slab by that pixel's 64-channel column, then reduce over channels.
        h4, w4 = dims[3]
        wp4 = w4 + 2 * CONV_PAD
        T = None
        qi = 0
        for i in range(h4 // 2):
            for j in range(w4 // 2):
                p = 2 * i * wp4 + 2 * j
                term = m2[:, p:p + 1] * wq_ref[qi]           # (64, 24)
                T = term if T is None else T + term
                qi += 1
        o_ref[...] = jnp.sum(T, axis=0, keepdims=True) + bh_ref[...]   # (1, 24)

    def forward(x_nchw, prm):
        n = x_nchw.shape[0]
        # Hoisted layer-1 padding: channels 3->8, spatial +2, flatten, +K-1 slack.
        xp = jnp.pad(x_nchw, ((0, 0), (0, _CIN_PAD0 - 3),
                              (CONV_PAD, CONV_PAD), (CONV_PAD, CONV_PAD)))
        xf = xp.reshape(n, _CIN_PAD0, (H + 2 * CONV_PAD) * (W + 2 * CONV_PAD))
        xf = jnp.pad(xf, ((0, 0), (0, 0), (0, CONV_K - 1)))           # (n, 8, PL[0])

        def full(a):
            return pl.BlockSpec(a.shape, lambda i, _nd=a.ndim: (0,) * _nd)

        args = (xf,
                prm["ws"][0], prm["shifts"][0], prm["ws"][1], prm["shifts"][1],
                prm["ws"][2], prm["shifts"][2], prm["ws"][3], prm["shifts"][3],
                prm["decs"][0], prm["decs"][1], prm["decs"][2],
                prm["wq"], prm["bh"])
        in_specs = [pl.BlockSpec((None, _CIN_PAD0, PL[0]), lambda i: (i, 0, 0))]
        in_specs += [full(a) for a in args[1:]]

        out = pl.pallas_call(
            kernel,
            out_shape=jax.ShapeDtypeStruct((n, 1, 24), jnp.float32),
            grid=(n,),
            in_specs=in_specs,
            out_specs=pl.BlockSpec((None, 1, 24), lambda i: (i, 0, 0)),
            scratch_shapes=[
                pltpu.VMEM((8, PL[1]), jnp.float32),
                pltpu.VMEM((16, PL[2]), jnp.float32),
                pltpu.VMEM((32, PL[3]), jnp.float32),
            ],
            compiler_params=pltpu.CompilerParams(
                dimension_semantics=("parallel",),
                vmem_limit_bytes=32 * 1024 * 1024,
            ),
        )(*args)
        return out.reshape(n, 24)

    return jax.jit(forward)


# ----------------------------------------------------------------------------
# Pure-JAX reference (mirrors the PyTorch module, eval-mode BN)
# ----------------------------------------------------------------------------
def cnn_forward_ref(x_nchw, params):
    x = x_nchw
    for layer in params["convs"]:
        y = lax.conv_general_dilated(
            x, layer["w"], window_strides=(1, 1),
            padding=((CONV_PAD, CONV_PAD), (CONV_PAD, CONV_PAD)),
            dimension_numbers=("NCHW", "OIHW", "NCHW"))
        y = y + layer["b"][None, :, None, None]
        y = (y - layer["mean"][None, :, None, None]) / jnp.sqrt(
            layer["var"][None, :, None, None] + BN_EPS)
        y = y * layer["gamma"][None, :, None, None] + layer["beta"][None, :, None, None]
        y = jnp.maximum(y, 0.0)
        N, C, Hh, Ww = y.shape
        x = y.reshape(N, C, Hh // 2, 2, Ww // 2, 2).max(axis=(3, 5))
    x = x.reshape(x.shape[0], -1)
    return x @ params["lin_w"].T + params["lin_b"]


# ----------------------------------------------------------------------------
# Deterministic parameter construction
# ----------------------------------------------------------------------------
def make_params(key, width):
    convs = []
    for cin, cout in _CHANS:
        key, k1, k2, k3, k4, k5, k6 = jax.random.split(key, 7)
        fan_in = cin * CONV_K * CONV_K
        convs.append(dict(
            w=jax.random.normal(k1, (cout, cin, CONV_K, CONV_K), jnp.float32)
              * (1.0 / np.sqrt(fan_in)),
            b=0.1 * jax.random.normal(k2, (cout,), jnp.float32),
            gamma=1.0 + 0.1 * jax.random.normal(k3, (cout,), jnp.float32),
            beta=0.1 * jax.random.normal(k4, (cout,), jnp.float32),
            mean=0.1 * jax.random.normal(k5, (cout,), jnp.float32),
            var=0.5 + jax.random.uniform(k6, (cout,), jnp.float32),
        ))
    out_one = width // 16
    feat = 64 * out_one * out_one
    key, k1, k2 = jax.random.split(key, 3)
    lin_w = jax.random.normal(k1, (24, feat), jnp.float32) * (1.0 / np.sqrt(feat))
    lin_b = 0.1 * jax.random.normal(k2, (24,), jnp.float32)
    return dict(convs=convs, lin_w=lin_w, lin_b=lin_b)


if __name__ == "__main__":
    N, C, H, W = 2, 3, 32, 32
    key = jax.random.PRNGKey(0)
    key, kx = jax.random.split(key)
    x = jax.random.normal(kx, (N, C, H, W), jnp.float32)
    params = make_params(key, W)

    prepped = prepare_params(params, H, W)        # host-side, once
    cnn_forward = make_cnn_forward(H, W)

    out = jax.block_until_ready(cnn_forward(x, prepped))
    ref = jax.block_until_ready(cnn_forward_ref(x, params))

    assert out.shape == (N, 24), out.shape
    np.testing.assert_allclose(np.asarray(out), np.asarray(ref), rtol=1e-3, atol=1e-3)
    print("KERNEL_OK")
</pallas_src>

<mosaic_0001>
module attributes {stable_mosaic.version = 11 : i64} {
  func.func @kernel(%arg0: i32, %arg1: memref<1x8x1300xf32, #tpu.memory_space<vmem>>, %arg2: memref<8x200xf32, #tpu.memory_space<vmem>>, %arg3: memref<8x1xf32, #tpu.memory_space<vmem>>, %arg4: memref<16x200xf32, #tpu.memory_space<vmem>>, %arg5: memref<16x1xf32, #tpu.memory_space<vmem>>, %arg6: memref<32x400xf32, #tpu.memory_space<vmem>>, %arg7: memref<32x1xf32, #tpu.memory_space<vmem>>, %arg8: memref<64x800xf32, #tpu.memory_space<vmem>>, %arg9: memref<64x1xf32, #tpu.memory_space<vmem>>, %arg10: memref<31x16xf32, #tpu.memory_space<vmem>>, %arg11: memref<15x8xf32, #tpu.memory_space<vmem>>, %arg12: memref<7x4xf32, #tpu.memory_space<vmem>>, %arg13: memref<4x64x24xf32, #tpu.memory_space<vmem>>, %arg14: memref<1x24xf32, #tpu.memory_space<vmem>>, %arg15: memref<1x1x24xf32, #tpu.memory_space<vmem>>, %arg16: memref<8x404xf32, #tpu.memory_space<vmem>>, %arg17: memref<16x148xf32, #tpu.memory_space<vmem>>, %arg18: memref<32x68xf32, #tpu.memory_space<vmem>>) attributes {dimension_semantics = [#tpu.dimension_semantics<parallel>], iteration_bounds = array<i64: 2>, scalar_prefetch = 0 : i64, scratch_operands = 3 : i64, tpu.core_type = #tpu.core_type<tc>, window_params = [{transform_indices = @transform_0, window_bounds = array<i64: 1, 8, 1300>}, {pipeline_mode = #tpu.pipeline_mode<synchronous>, transform_indices = @transform_1, window_bounds = array<i64: 8, 200>}, {pipeline_mode = #tpu.pipeline_mode<synchronous>, transform_indices = @transform_2, window_bounds = array<i64: 8, 1>}, {pipeline_mode = #tpu.pipeline_mode<synchronous>, transform_indices = @transform_3, window_bounds = array<i64: 16, 200>}, {pipeline_mode = #tpu.pipeline_mode<synchronous>, transform_indices = @transform_4, window_bounds = array<i64: 16, 1>}, {pipeline_mode = #tpu.pipeline_mode<synchronous>, transform_indices = @transform_5, window_bounds = array<i64: 32, 400>}, {pipeline_mode = #tpu.pipeline_mode<synchronous>, transform_indices = @transform_6, window_bounds = array<i64: 32, 1>}, {pipeline_mode = #tpu.pipeline_mode<synchronous>, transform_indices = @transform_7, window_bounds = array<i64: 64, 800>}, {pipeline_mode = #tpu.pipeline_mode<synchronous>, transform_indices = @transform_8, window_bounds = array<i64: 64, 1>}, {pipeline_mode = #tpu.pipeline_mode<synchronous>, transform_indices = @transform_9, window_bounds = array<i64: 31, 16>}, {pipeline_mode = #tpu.pipeline_mode<synchronous>, transform_indices = @transform_10, window_bounds = array<i64: 15, 8>}, {pipeline_mode = #tpu.pipeline_mode<synchronous>, transform_indices = @transform_11, window_bounds = array<i64: 7, 4>}, {pipeline_mode = #tpu.pipeline_mode<synchronous>, transform_indices = @transform_12, window_bounds = array<i64: 4, 64, 24>}, {pipeline_mode = #tpu.pipeline_mode<synchronous>, transform_indices = @transform_13, window_bounds = array<i64: 1, 24>}, {transform_indices = @transform_14, window_bounds = array<i64: 1, 1, 24>}]} {
    %c0 = arith.constant 0 : index
    %c0_0 = arith.constant 0 : index
    %c0_1 = arith.constant 0 : index
    %0 = vector.load %arg1[%c0, %c0_0, %c0_1] : memref<1x8x1300xf32, #tpu.memory_space<vmem>>, vector<1x8x1152xf32>
    %1 = vector.shape_cast %0 : vector<1x8x1152xf32> to vector<8x1152xf32>
    %c0_2 = arith.constant 0 : index
    %c0_3 = arith.constant 0 : index
    %c1 = arith.constant 1 : index
    %2 = vector.load %arg1[%c0_2, %c0_3, %c1] : memref<1x8x1300xf32, #tpu.memory_space<vmem>>, vector<1x8x1152xf32>
    %3 = vector.shape_cast %2 : vector<1x8x1152xf32> to vector<8x1152xf32>
    %c0_4 = arith.constant 0 : index
    %c0_5 = arith.constant 0 : index
    %c2 = arith.constant 2 : index
    %4 = vector.load %arg1[%c0_4, %c0_5, %c2] : memref<1x8x1300xf32, #tpu.memory_space<vmem>>, vector<1x8x1152xf32>
    %5 = vector.shape_cast %4 : vector<1x8x1152xf32> to vector<8x1152xf32>
    %c0_6 = arith.constant 0 : index
    %c0_7 = arith.constant 0 : index
    %c3 = arith.constant 3 : index
    %6 = vector.load %arg1[%c0_6, %c0_7, %c3] : memref<1x8x1300xf32, #tpu.memory_space<vmem>>, vector<1x8x1152xf32>
    %7 = vector.shape_cast %6 : vector<1x8x1152xf32> to vector<8x1152xf32>
    %c0_8 = arith.constant 0 : index
    %c0_9 = arith.constant 0 : index
    %c4 = arith.constant 4 : index
    %8 = vector.load %arg1[%c0_8, %c0_9, %c4] : memref<1x8x1300xf32, #tpu.memory_space<vmem>>, vector<1x8x1152xf32>
    %9 = vector.shape_cast %8 : vector<1x8x1152xf32> to vector<8x1152xf32>
    %10 = tpu.concatenate %1, %3, %5, %7, %9 in 0 : vector<8x1152xf32>, vector<8x1152xf32>, vector<8x1152xf32>, vector<8x1152xf32>, vector<8x1152xf32> -> vector<40x1152xf32>
    %c0_10 = arith.constant 0 : index
    %c0_11 = arith.constant 0 : index
    %11 = vector.load %arg2[%c0_10, %c0_11] : memref<8x200xf32, #tpu.memory_space<vmem>>, vector<8x40xf32>
    %cst = arith.constant dense<0.000000e+00> : vector<8x1152xf32>
    %12 = tpu.matmul %11, %10, %cst {dimension_numbers = #tpu.dot_dimension_numbers<[1], [0], [0], [1], [0, 0, 1, 1], [], []>} : vector<8x40xf32>, vector<40x1152xf32>, vector<8x1152xf32> -> vector<8x1152xf32>
    %c0_12 = arith.constant 0 : index
    %c0_13 = arith.constant 0 : index
    %c36 = arith.constant 36 : index
    %13 = vector.load %arg1[%c0_12, %c0_13, %c36] : memref<1x8x1300xf32, #tpu.memory_space<vmem>>, vector<1x8x1152xf32>
    %14 = vector.shape_cast %13 : vector<1x8x1152xf32> to vector<8x1152xf32>
    %c0_14 = arith.constant 0 : index
    %c0_15 = arith.constant 0 : index
    %c37 = arith.constant 37 : index
    %15 = vector.load %arg1[%c0_14, %c0_15, %c37] : memref<1x8x1300xf32, #tpu.memory_space<vmem>>, vector<1x8x1152xf32>
    %16 = vector.shape_cast %15 : vector<1x8x1152xf32> to vector<8x1152xf32>
    %c0_16 = arith.constant 0 : index
    %c0_17 = arith.constant 0 : index
    %c38 = arith.constant 38 : index
    %17 = vector.load %arg1[%c0_16, %c0_17, %c38] : memref<1x8x1300xf32, #tpu.memory_space<vmem>>, vector<1x8x1152xf32>
    %18 = vector.shape_cast %17 : vector<1x8x1152xf32> to vector<8x1152xf32>
    %c0_18 = arith.constant 0 : index
    %c0_19 = arith.constant 0 : index
    %c39 = arith.constant 39 : index
    %19 = vector.load %arg1[%c0_18, %c0_19, %c39] : memref<1x8x1300xf32, #tpu.memory_space<vmem>>, vector<1x8x1152xf32>
    %20 = vector.shape_cast %19 : vector<1x8x1152xf32> to vector<8x1152xf32>
    %c0_20 = arith.constant 0 : index
    %c0_21 = arith.constant 0 : index
    %c40 = arith.constant 40 : index
    %21 = vector.load %arg1[%c0_20, %c0_21, %c40] : memref<1x8x1300xf32, #tpu.memory_space<vmem>>, vector<1x8x1152xf32>
    %22 = vector.shape_cast %21 : vector<1x8x1152xf32> to vector<8x1152xf32>
    %23 = tpu.concatenate %14, %16, %18, %20, %22 in 0 : vector<8x1152xf32>, vector<8x1152xf32>, vector<8x1152xf32>, vector<8x1152xf32>, vector<8x1152xf32> -> vector<40x1152xf32>
    %c0_22 = arith.constant 0 : index
    %c40_23 = arith.constant 40 : index
    %24 = vector.load %arg2[%c0_22, %c40_23] : memref<8x200xf32, #tpu.memory_space<vmem>>, vector<8x40xf32>
    %cst_24 = arith.constant dense<0.000000e+00> : vector<8x1152xf32>
    %25 = tpu.matmul %24, %23, %cst_24 {dimension_numbers = #tpu.dot_dimension_numbers<[1], [0], [0], [1], [0, 0, 1, 1], [], []>} : vector<8x40xf32>, vector<40x1152xf32>, vector<8x1152xf32> -> vector<8x1152xf32>
    %26 = arith.addf %12, %25 : vector<8x1152xf32>
    %c0_25 = arith.constant 0 : index
    %c0_26 = arith.constant 0 : index
    %c72 = arith.constant 72 : index
    %27 = vector.load %arg1[%c0_25, %c0_26, %c72] : memref<1x8x1300xf32, #tpu.memory_space<vmem>>, vector<1x8x1152xf32>
    %28 = vector.shape_cast %27 : vector<1x8x1152xf32> to vector<8x1152xf32>
    %c0_27 = arith.constant 0 : index
    %c0_28 = arith.constant 0 : index
    %c73 = arith.constant 73 : index
    %29 = vector.load %arg1[%c0_27, %c0_28, %c73] : memref<1x8x1300xf32, #tpu.memory_space<vmem>>, vector<1x8x1152xf32>
    %30 = vector.shape_cast %29 : vector<1x8x1152xf32> to vector<8x1152xf32>
    %c0_29 = arith.constant 0 : index
    %c0_30 = arith.constant 0 : index
    %c74 = arith.constant 74 : index
    %31 = vector.load %arg1[%c0_29, %c0_30, %c74] : memref<1x8x1300xf32, #tpu.memory_space<vmem>>, vector<1x8x1152xf32>
    %32 = vector.shape_cast %31 : vector<1x8x1152xf32> to vector<8x1152xf32>
    %c0_31 = arith.constant 0 : index
    %c0_32 = arith.constant 0 : index
    %c75 = arith.constant 75 : index
    %33 = vector.load %arg1[%c0_31, %c0_32, %c75] : memref<1x8x1300xf32, #tpu.memory_space<vmem>>, vector<1x8x1152xf32>
    %34 = vector.shape_cast %33 : vector<1x8x1152xf32> to vector<8x1152xf32>
    %c0_33 = arith.constant 0 : index
    %c0_34 = arith.constant 0 : index
    %c76 = arith.constant 76 : index
    %35 = vector.load %arg1[%c0_33, %c0_34, %c76] : memref<1x8x1300xf32, #tpu.memory_space<vmem>>, vector<1x8x1152xf32>
    %36 = vector.shape_cast %35 : vector<1x8x1152xf32> to vector<8x1152xf32>
    %37 = tpu.concatenate %28, %30, %32, %34, %36 in 0 : vector<8x1152xf32>, vector<8x1152xf32>, vector<8x1152xf32>, vector<8x1152xf32>, vector<8x1152xf32> -> vector<40x1152xf32>
    %c0_35 = arith.constant 0 : index
    %c80 = arith.constant 80 : index
    %38 = vector.load %arg2[%c0_35, %c80] : memref<8x200xf32, #tpu.memory_space<vmem>>, vector<8x40xf32>
    %cst_36 = arith.constant dense<0.000000e+00> : vector<8x1152xf32>
    %39 = tpu.matmul %38, %37, %cst_36 {dimension_numbers = #tpu.dot_dimension_numbers<[1], [0], [0], [1], [0, 0, 1, 1], [], []>} : vector<8x40xf32>, vector<40x1152xf32>, vector<8x1152xf32> -> vector<8x1152xf32>
    %40 = arith.addf %26, %39 : vector<8x1152xf32>
    %c0_37 = arith.constant 0 : index
    %c0_38 = arith.constant 0 : index
    %c108 = arith.constant 108 : index
    %41 = vector.load %arg1[%c0_37, %c0_38, %c108] : memref<1x8x1300xf32, #tpu.memory_space<vmem>>, vector<1x8x1152xf32>
    %42 = vector.shape_cast %41 : vector<1x8x1152xf32> to vector<8x1152xf32>
    %c0_39 = arith.constant 0 : index
    %c0_40 = arith.constant 0 : index
    %c109 = arith.constant 109 : index
    %43 = vector.load %arg1[%c0_39, %c0_40, %c109] : memref<1x8x1300xf32, #tpu.memory_space<vmem>>, vector<1x8x1152xf32>
    %44 = vector.shape_cast %43 : vector<1x8x1152xf32> to vector<8x1152xf32>
    %c0_41 = arith.constant 0 : index
    %c0_42 = arith.constant 0 : index
    %c110 = arith.constant 110 : index
    %45 = vector.load %arg1[%c0_41, %c0_42, %c110] : memref<1x8x1300xf32, #tpu.memory_space<vmem>>, vector<1x8x1152xf32>
    %46 = vector.shape_cast %45 : vector<1x8x1152xf32> to vector<8x1152xf32>
    %c0_43 = arith.constant 0 : index
    %c0_44 = arith.constant 0 : index
    %c111 = arith.constant 111 : index
    %47 = vector.load %arg1[%c0_43, %c0_44, %c111] : memref<1x8x1300xf32, #tpu.memory_space<vmem>>, vector<1x8x1152xf32>
    %48 = vector.shape_cast %47 : vector<1x8x1152xf32> to vector<8x1152xf32>
    %c0_45 = arith.constant 0 : index
    %c0_46 = arith.constant 0 : index
    %c112 = arith.constant 112 : index
    %49 = vector.load %arg1[%c0_45, %c0_46, %c112] : memref<1x8x1300xf32, #tpu.memory_space<vmem>>, vector<1x8x1152xf32>
    %50 = vector.shape_cast %49 : vector<1x8x1152xf32> to vector<8x1152xf32>
    %51 = tpu.concatenate %42, %44, %46, %48, %50 in 0 : vector<8x1152xf32>, vector<8x1152xf32>, vector<8x1152xf32>, vector<8x1152xf32>, vector<8x1152xf32> -> vector<40x1152xf32>
    %c0_47 = arith.constant 0 : index
    %c120 = arith.constant 120 : index
    %52 = vector.load %arg2[%c0_47, %c120] : memref<8x200xf32, #tpu.memory_space<vmem>>, vector<8x40xf32>
    %cst_48 = arith.constant dense<0.000000e+00> : vector<8x1152xf32>
    %53 = tpu.matmul %52, %51, %cst_48 {dimension_numbers = #tpu.dot_dimension_numbers<[1], [0], [0], [1], [0, 0, 1, 1], [], []>} : vector<8x40xf32>, vector<40x1152xf32>, vector<8x1152xf32> -> vector<8x1152xf32>
    %54 = arith.addf %40, %53 : vector<8x1152xf32>
    %c0_49 = arith.constant 0 : index
    %c0_50 = arith.constant 0 : index
    %c144 = arith.constant 144 : index
    %55 = vector.load %arg1[%c0_49, %c0_50, %c144] : memref<1x8x1300xf32, #tpu.memory_space<vmem>>, vector<1x8x1152xf32>
    %56 = vector.shape_cast %55 : vector<1x8x1152xf32> to vector<8x1152xf32>
    %c0_51 = arith.constant 0 : index
    %c0_52 = arith.constant 0 : index
    %c145 = arith.constant 145 : index
    %57 = vector.load %arg1[%c0_51, %c0_52, %c145] : memref<1x8x1300xf32, #tpu.memory_space<vmem>>, vector<1x8x1152xf32>
    %58 = vector.shape_cast %57 : vector<1x8x1152xf32> to vector<8x1152xf32>
    %c0_53 = arith.constant 0 : index
    %c0_54 = arith.constant 0 : index
    %c146 = arith.constant 146 : index
    %59 = vector.load %arg1[%c0_53, %c0_54, %c146] : memref<1x8x1300xf32, #tpu.memory_space<vmem>>, vector<1x8x1152xf32>
    %60 = vector.shape_cast %59 : vector<1x8x1152xf32> to vector<8x1152xf32>
    %c0_55 = arith.constant 0 : index
    %c0_56 = arith.constant 0 : index
    %c147 = arith.constant 147 : index
    %61 = vector.load %arg1[%c0_55, %c0_56, %c147] : memref<1x8x1300xf32, #tpu.memory_space<vmem>>, vector<1x8x1152xf32>
    %62 = vector.shape_cast %61 : vector<1x8x1152xf32> to vector<8x1152xf32>
    %c0_57 = arith.constant 0 : index
    %c0_58 = arith.constant 0 : index
    %c148 = arith.constant 148 : index
    %63 = vector.load %arg1[%c0_57, %c0_58, %c148] : memref<1x8x1300xf32, #tpu.memory_space<vmem>>, vector<1x8x1152xf32>
    %64 = vector.shape_cast %63 : vector<1x8x1152xf32> to vector<8x1152xf32>
    %65 = tpu.concatenate %56, %58, %60, %62, %64 in 0 : vector<8x1152xf32>, vector<8x1152xf32>, vector<8x1152xf32>, vector<8x1152xf32>, vector<8x1152xf32> -> vector<40x1152xf32>
    %c0_59 = arith.constant 0 : index
    %c160 = arith.constant 160 : index
    %66 = vector.load %arg2[%c0_59, %c160] : memref<8x200xf32, #tpu.memory_space<vmem>>, vector<8x40xf32>
    %cst_60 = arith.constant dense<0.000000e+00> : vector<8x1152xf32>
    %67 = tpu.matmul %66, %65, %cst_60 {dimension_numbers = #tpu.dot_dimension_numbers<[1], [0], [0], [1], [0, 0, 1, 1], [], []>} : vector<8x40xf32>, vector<40x1152xf32>, vector<8x1152xf32> -> vector<8x1152xf32>
    %68 = arith.addf %54, %67 : vector<8x1152xf32>
    %c0_61 = arith.constant 0 : index
    %c0_62 = arith.constant 0 : index
    %69 = vector.load %arg3[%c0_61, %c0_62] : memref<8x1xf32, #tpu.memory_space<vmem>>, vector<8x1xf32>
    %70 = vector.broadcast %69 : vector<8x1xf32> to vector<8x1152xf32>
    %71 = arith.addf %68, %70 : vector<8x1152xf32>
    %cst_63 = arith.constant 0.000000e+00 : f32
    %72 = vector.broadcast %cst_63 : f32 to vector<8x1152xf32>
    %73 = arith.maximumf %71, %72 : vector<8x1152xf32>
    %74 = vector.extract_strided_slice %73 {offsets = [0, 0], sizes = [8, 1151], strides = [1, 1]} : vector<8x1152xf32> to vector<8x1151xf32>
    %75 = vector.extract_strided_slice %73 {offsets = [0, 1], sizes = [8, 1151], strides = [1, 1]} : vector<8x1152xf32> to vector<8x1151xf32>
    %76 = arith.maximumf %74, %75 : vector<8x1151xf32>
    %77 = vector.extract_strided_slice %76 {offsets = [0, 0], sizes = [8, 1115], strides = [1, 1]} : vector<8x1151xf32> to vector<8x1115xf32>
    %78 = vector.extract_strided_slice %76 {offsets = [0, 36], sizes = [8, 1115], strides = [1, 1]} : vector<8x1151xf32> to vector<8x1115xf32>
    %79 = arith.maximumf %77, %78 : vector<8x1115xf32>
    %80 = vector.extract_strided_slice %79 {offsets = [0, 0], sizes = [8, 31], strides = [1, 1]} : vector<8x1115xf32> to vector<8x31xf32>
    %81 = vector.extract_strided_slice %79 {offsets = [0, 72], sizes = [8, 31], strides = [1, 1]} : vector<8x1115xf32> to vector<8x31xf32>
    %82 = vector.extract_strided_slice %79 {offsets = [0, 144], sizes = [8, 31], strides = [1, 1]} : vector<8x1115xf32> to vector<8x31xf32>
    %83 = vector.extract_strided_slice %79 {offsets = [0, 216], sizes = [8, 31], strides = [1, 1]} : vector<8x1115xf32> to vector<8x31xf32>
    %84 = vector.extract_strided_slice %79 {offsets = [0, 288], sizes = [8, 31], strides = [1, 1]} : vector<8x1115xf32> to vector<8x31xf32>
    %85 = vector.extract_strided_slice %79 {offsets = [0, 360], sizes = [8, 31], strides = [1, 1]} : vector<8x1115xf32> to vector<8x31xf32>
    %86 = vector.extract_strided_slice %79 {offsets = [0, 432], sizes = [8, 31], strides = [1, 1]} : vector<8x1115xf32> to vector<8x31xf32>
    %87 = vector.extract_strided_slice %79 {offsets = [0, 504], sizes = [8, 31], strides = [1, 1]} : vector<8x1115xf32> to vector<8x31xf32>
    %88 = vector.extract_strided_slice %79 {offsets = [0, 576], sizes = [8, 31], strides = [1, 1]} : vector<8x1115xf32> to vector<8x31xf32>
    %89 = vector.extract_strided_slice %79 {offsets = [0, 648], sizes = [8, 31], strides = [1, 1]} : vector<8x1115xf32> to vector<8x31xf32>
    %90 = vector.extract_strided_slice %79 {offsets = [0, 720], sizes = [8, 31], strides = [1, 1]} : vector<8x1115xf32> to vector<8x31xf32>
    %91 = vector.extract_strided_slice %79 {offsets = [0, 792], sizes = [8, 31], strides = [1, 1]} : vector<8x1115xf32> to vector<8x31xf32>
    %92 = vector.extract_strided_slice %79 {offsets = [0, 864], sizes = [8, 31], strides = [1, 1]} : vector<8x1115xf32> to vector<8x31xf32>
    %93 = vector.extract_strided_slice %79 {offsets = [0, 936], sizes = [8, 31], strides = [1, 1]} : vector<8x1115xf32> to vector<8x31xf32>
    %94 = vector.extract_strided_slice %79 {offsets = [0, 1008], sizes = [8, 31], strides = [1, 1]} : vector<8x1115xf32> to vector<8x31xf32>
    %95 = vector.extract_strided_slice %79 {offsets = [0, 1080], sizes = [8, 31], strides = [1, 1]} : vector<8x1115xf32> to vector<8x31xf32>
    %96 = tpu.concatenate %80, %81, %82, %83, %84, %85, %86, %87, %88, %89, %90, %91, %92, %93, %94, %95 in 0 : vector<8x31xf32>, vector<8x31xf32>, vector<8x31xf32>, vector<8x31xf32>, vector<8x31xf32>, vector<8x31xf32>, vector<8x31xf32>, vector<8x31xf32>, vector<8x31xf32>, vector<8x31xf32>, vector<8x31xf32>, vector<8x31xf32>, vector<8x31xf32>, vector<8x31xf32>, vector<8x31xf32>, vector<8x31xf32> -> vector<128x31xf32>
    %c0_64 = arith.constant 0 : index
    %c0_65 = arith.constant 0 : index
    %97 = vector.load %arg10[%c0_64, %c0_65] : memref<31x16xf32, #tpu.memory_space<vmem>>, vector<31x16xf32>
    %cst_66 = arith.constant dense<0.000000e+00> : vector<128x16xf32>
    %98 = tpu.matmul %96, %97, %cst_66 {dimension_numbers = #tpu.dot_dimension_numbers<[1], [0], [0], [1], [0, 0, 1, 1], [], []>} : vector<128x31xf32>, vector<31x16xf32>, vector<128x16xf32> -> vector<128x16xf32>
    %cst_67 = arith.constant 0.000000e+00 : f32
    %99 = vector.broadcast %cst_67 : f32 to vector<8x404xf32>
    %c0_68 = arith.constant 0 : index
    %c0_69 = arith.constant 0 : index
    %100 = vector.load %arg16[%c0_68, %c0_69] : memref<8x404xf32, #tpu.memory_space<vmem>>, vector<8x404xf32>
    tpu.vector_store %arg16[%c0_68, %c0_69], %99 {strides = array<i32>} : memref<8x404xf32, #tpu.memory_space<vmem>>, vector<8x404xf32>,
    %101 = vector.extract_strided_slice %98 {offsets = [0, 0], sizes = [8, 16], strides = [1, 1]} : vector<128x16xf32> to vector<8x16xf32>
    %c0_70 = arith.constant 0 : index
    %c42 = arith.constant 42 : index
    %102 = vector.load %arg16[%c0_70, %c42] : memref<8x404xf32, #tpu.memory_space<vmem>>, vector<8x16xf32>
    tpu.vector_store %arg16[%c0_70, %c42], %101 {strides = array<i32>} : memref<8x404xf32, #tpu.memory_space<vmem>>, vector<8x16xf32>,
    %103 = vector.extract_strided_slice %98 {offsets = [8, 0], sizes = [8, 16], strides = [1, 1]} : vector<128x16xf32> to vector<8x16xf32>
    %c0_71 = arith.constant 0 : index
    %c62 = arith.constant 62 : index
    %104 = vector.load %arg16[%c0_71, %c62] : memref<8x404xf32, #tpu.memory_space<vmem>>, vector<8x16xf32>
    tpu.vector_store %arg16[%c0_71, %c62], %103 {strides = array<i32>} : memref<8x404xf32, #tpu.memory_space<vmem>>, vector<8x16xf32>,
    %105 = vector.extract_strided_slice %98 {offsets = [16, 0], sizes = [8, 16], strides = [1, 1]} : vector<128x16xf32> to vector<8x16xf32>
    %c0_72 = arith.constant 0 : index
    %c82 = arith.constant 82 : index
    %106 = vector.load %arg16[%c0_72, %c82] : memref<8x404xf32, #tpu.memory_space<vmem>>, vector<8x16xf32>
    tpu.vector_store %arg16[%c0_72, %c82], %105 {strides = array<i32>} : memref<8x404xf32, #tpu.memory_space<vmem>>, vector<8x16xf32>,
    %107 = vector.extract_strided_slice %98 {offsets = [24, 0], sizes = [8, 16], strides = [1, 1]} : vector<128x16xf32> to vector<8x16xf32>
    %c0_73 = arith.constant 0 : index
    %c102 = arith.constant 102 : index
    %108 = vector.load %arg16[%c0_73, %c102] : memref<8x404xf32, #tpu.memory_space<vmem>>, vector<8x16xf32>
    tpu.vector_store %arg16[%c0_73, %c102], %107 {strides = array<i32>} : memref<8x404xf32, #tpu.memory_space<vmem>>, vector<8x16xf32>,
    %109 = vector.extract_strided_slice %98 {offsets = [32, 0], sizes = [8, 16], strides = [1, 1]} : vector<128x16xf32> to vector<8x16xf32>
    %c0_74 = arith.constant 0 : index
    %c122 = arith.constant 122 : index
    %110 = vector.load %arg16[%c0_74, %c122] : memref<8x404xf32, #tpu.memory_space<vmem>>, vector<8x16xf32>
    tpu.vector_store %arg16[%c0_74, %c122], %109 {strides = array<i32>} : memref<8x404xf32, #tpu.memory_space<vmem>>, vector<8x16xf32>,
    %111 = vector.extract_strided_slice %98 {offsets = [40, 0], sizes = [8, 16], strides = [1, 1]} : vector<128x16xf32> to vector<8x16xf32>
    %c0_75 = arith.constant 0 : index
    %c142 = arith.constant 142 : index
    %112 = vector.load %arg16[%c0_75, %c142] : memref<8x404xf32, #tpu.memory_space<vmem>>, vector<8x16xf32>
    tpu.vector_store %arg16[%c0_75, %c142], %111 {strides = array<i32>} : memref<8x404xf32, #tpu.memory_space<vmem>>, vector<8x16xf32>,
    %113 = vector.extract_strided_slice %98 {offsets = [48, 0], sizes = [8, 16], strides = [1, 1]} : vector<128x16xf32> to vector<8x16xf32>
    %c0_76 = arith.constant 0 : index
    %c162 = arith.constant 162 : index
    %114 = vector.load %arg16[%c0_76, %c162] : memref<8x404xf32, #tpu.memory_space<vmem>>, vector<8x16xf32>
    tpu.vector_store %arg16[%c0_76, %c162], %113 {strides = array<i32>} : memref<8x404xf32, #tpu.memory_space<vmem>>, vector<8x16xf32>,
    %115 = vector.extract_strided_slice %98 {offsets = [56, 0], sizes = [8, 16], strides = [1, 1]} : vector<128x16xf32> to vector<8x16xf32>
    %c0_77 = arith.constant 0 : index
    %c182 = arith.constant 182 : index
    %116 = vector.load %arg16[%c0_77, %c182] : memref<8x404xf32, #tpu.memory_space<vmem>>, vector<8x16xf32>
    tpu.vector_store %arg16[%c0_77, %c182], %115 {strides = array<i32>} : memref<8x404xf32, #tpu.memory_space<vmem>>, vector<8x16xf32>,
    %117 = vector.extract_strided_slice %98 {offsets = [64, 0], sizes = [8, 16], strides = [1, 1]} : vector<128x16xf32> to vector<8x16xf32>
    %c0_78 = arith.constant 0 : index
    %c202 = arith.constant 202 : index
    %118 = vector.load %arg16[%c0_78, %c202] : memref<8x404xf32, #tpu.memory_space<vmem>>, vector<8x16xf32>
    tpu.vector_store %arg16[%c0_78, %c202], %117 {strides = array<i32>} : memref<8x404xf32, #tpu.memory_space<vmem>>, vector<8x16xf32>,
    %119 = vector.extract_strided_slice %98 {offsets = [72, 0], sizes = [8, 16], strides = [1, 1]} : vector<128x16xf32> to vector<8x16xf32>
    %c0_79 = arith.constant 0 : index
    %c222 = arith.constant 222 : index
    %120 = vector.load %arg16[%c0_79, %c222] : memref<8x404xf32, #tpu.memory_space<vmem>>, vector<8x16xf32>
    tpu.vector_store %arg16[%c0_79, %c222], %119 {strides = array<i32>} : memref<8x404xf32, #tpu.memory_space<vmem>>, vector<8x16xf32>,
    %121 = vector.extract_strided_slice %98 {offsets = [80, 0], sizes = [8, 16], strides = [1, 1]} : vector<128x16xf32> to vector<8x16xf32>
    %c0_80 = arith.constant 0 : index
    %c242 = arith.constant 242 : index
    %122 = vector.load %arg16[%c0_80, %c242] : memref<8x404xf32, #tpu.memory_space<vmem>>, vector<8x16xf32>
    tpu.vector_store %arg16[%c0_80, %c242], %121 {strides = array<i32>} : memref<8x404xf32, #tpu.memory_space<vmem>>, vector<8x16xf32>,
    %123 = vector.extract_strided_slice %98 {offsets = [88, 0], sizes = [8, 16], strides = [1, 1]} : vector<128x16xf32> to vector<8x16xf32>
    %c0_81 = arith.constant 0 : index
    %c262 = arith.constant 262 : index
    %124 = vector.load %arg16[%c0_81, %c262] : memref<8x404xf32, #tpu.memory_space<vmem>>, vector<8x16xf32>
    tpu.vector_store %arg16[%c0_81, %c262], %123 {strides = array<i32>} : memref<8x404xf32, #tpu.memory_space<vmem>>, vector<8x16xf32>,
    %125 = vector.extract_strided_slice %98 {offsets = [96, 0], sizes = [8, 16], strides = [1, 1]} : vector<128x16xf32> to vector<8x16xf32>
    %c0_82 = arith.constant 0 : index
    %c282 = arith.constant 282 : index
    %126 = vector.load %arg16[%c0_82, %c282] : memref<8x404xf32, #tpu.memory_space<vmem>>, vector<8x16xf32>
    tpu.vector_store %arg16[%c0_82, %c282], %125 {strides = array<i32>} : memref<8x404xf32, #tpu.memory_space<vmem>>, vector<8x16xf32>,
    %127 = vector.extract_strided_slice %98 {offsets = [104, 0], sizes = [8, 16], strides = [1, 1]} : vector<128x16xf32> to vector<8x16xf32>
    %c0_83 = arith.constant 0 : index
    %c302 = arith.constant 302 : index
    %128 = vector.load %arg16[%c0_83, %c302] : memref<8x404xf32, #tpu.memory_space<vmem>>, vector<8x16xf32>
    tpu.vector_store %arg16[%c0_83, %c302], %127 {strides = array<i32>} : memref<8x404xf32, #tpu.memory_space<vmem>>, vector<8x16xf32>,
    %129 = vector.extract_strided_slice %98 {offsets = [112, 0], sizes = [8, 16], strides = [1, 1]} : vector<128x16xf32> to vector<8x16xf32>
    %c0_84 = arith.constant 0 : index
    %c322 = arith.constant 322 : index
    %130 = vector.load %arg16[%c0_84, %c322] : memref<8x404xf32, #tpu.memory_space<vmem>>, vector<8x16xf32>
    tpu.vector_store %arg16[%c0_84, %c322], %129 {strides = array<i32>} : memref<8x404xf32, #tpu.memory_space<vmem>>, vector<8x16xf32>,
    %131 = vector.extract_strided_slice %98 {offsets = [120, 0], sizes = [8, 16], strides = [1, 1]} : vector<128x16xf32> to vector<8x16xf32>
    %c0_85 = arith.constant 0 : index
    %c342 = arith.constant 342 : index
    %132 = vector.load %arg16[%c0_85, %c342] : memref<8x404xf32, #tpu.memory_space<vmem>>, vector<8x16xf32>
    tpu.vector_store %arg16[%c0_85, %c342], %131 {strides = array<i32>} : memref<8x404xf32, #tpu.memory_space<vmem>>, vector<8x16xf32>,
    %c0_86 = arith.constant 0 : index
    %c0_87 = arith.constant 0 : index
    %133 = vector.load %arg16[%c0_86, %c0_87] : memref<8x404xf32, #tpu.memory_space<vmem>>, vector<8x320xf32>
    %c0_88 = arith.constant 0 : index
    %c1_89 = arith.constant 1 : index
    %134 = vector.load %arg16[%c0_88, %c1_89] : memref<8x404xf32, #tpu.memory_space<vmem>>, vector<8x320xf32>
    %c0_90 = arith.constant 0 : index
    %c2_91 = arith.constant 2 : index
    %135 = vector.load %arg16[%c0_90, %c2_91] : memref<8x404xf32, #tpu.memory_space<vmem>>, vector<8x320xf32>
    %c0_92 = arith.constant 0 : index
    %c3_93 = arith.constant 3 : index
    %136 = vector.load %arg16[%c0_92, %c3_93] : memref<8x404xf32, #tpu.memory_space<vmem>>, vector<8x320xf32>
    %c0_94 = arith.constant 0 : index
    %c4_95 = arith.constant 4 : index
    %137 = vector.load %arg16[%c0_94, %c4_95] : memref<8x404xf32, #tpu.memory_space<vmem>>, vector<8x320xf32>
    %138 = tpu.concatenate %133, %134, %135, %136, %137 in 0 : vector<8x320xf32>, vector<8x320xf32>, vector<8x320xf32>, vector<8x320xf32>, vector<8x320xf32> -> vector<40x320xf32>
    %c0_96 = arith.constant 0 : index
    %c0_97 = arith.constant 0 : index
    %139 = vector.load %arg4[%c0_96, %c0_97] : memref<16x200xf32, #tpu.memory_space<vmem>>, vector<16x40xf32>
    %cst_98 = arith.constant dense<0.000000e+00> : vector<16x320xf32>
    %140 = tpu.matmul %139, %138, %cst_98 {dimension_numbers = #tpu.dot_dimension_numbers<[1], [0], [0], [1], [0, 0, 1, 1], [], []>} : vector<16x40xf32>, vector<40x320xf32>, vector<16x320xf32> -> vector<16x320xf32>
    %c0_99 = arith.constant 0 : index
    %c20 = arith.constant 20 : index
    %141 = vector.load %arg16[%c0_99, %c20] : memref<8x404xf32, #tpu.memory_space<vmem>>, vector<8x320xf32>
    %c0_100 = arith.constant 0 : index
    %c21 = arith.constant 21 : index
    %142 = vector.load %arg16[%c0_100, %c21] : memref<8x404xf32, #tpu.memory_space<vmem>>, vector<8x320xf32>
    %c0_101 = arith.constant 0 : index
    %c22 = arith.constant 22 : index
    %143 = vector.load %arg16[%c0_101, %c22] : memref<8x404xf32, #tpu.memory_space<vmem>>, vector<8x320xf32>
    %c0_102 = arith.constant 0 : index
    %c23 = arith.constant 23 : index
    %144 = vector.load %arg16[%c0_102, %c23] : memref<8x404xf32, #tpu.memory_space<vmem>>, vector<8x320xf32>
    %c0_103 = arith.constant 0 : index
    %c24 = arith.constant 24 : index
    %145 = vector.load %arg16[%c0_103, %c24] : memref<8x404xf32, #tpu.memory_space<vmem>>, vector<8x320xf32>
    %146 = tpu.concatenate %141, %142, %143, %144, %145 in 0 : vector<8x320xf32>, vector<8x320xf32>, vector<8x320xf32>, vector<8x320xf32>, vector<8x320xf32> -> vector<40x320xf32>
    %c0_104 = arith.constant 0 : index
    %c40_105 = arith.constant 40 : index
    %147 = vector.load %arg4[%c0_104, %c40_105] : memref<16x200xf32, #tpu.memory_space<vmem>>, vector<16x40xf32>
    %cst_106 = arith.constant dense<0.000000e+00> : vector<16x320xf32>
    %148 = tpu.matmul %147, %146, %cst_106 {dimension_numbers = #tpu.dot_dimension_numbers<[1], [0], [0], [1], [0, 0, 1, 1], [], []>} : vector<16x40xf32>, vector<40x320xf32>, vector<16x320xf32> -> vector<16x320xf32>
    %149 = arith.addf %140, %148 : vector<16x320xf32>
    %c0_107 = arith.constant 0 : index
    %c40_108 = arith.constant 40 : index
    %150 = vector.load %arg16[%c0_107, %c40_108] : memref<8x404xf32, #tpu.memory_space<vmem>>, vector<8x320xf32>
    %c0_109 = arith.constant 0 : index
    %c41 = arith.constant 41 : index
    %151 = vector.load %arg16[%c0_109, %c41] : memref<8x404xf32, #tpu.memory_space<vmem>>, vector<8x320xf32>
    %c0_110 = arith.constant 0 : index
    %c42_111 = arith.constant 42 : index
    %152 = vector.load %arg16[%c0_110, %c42_111] : memref<8x404xf32, #tpu.memory_space<vmem>>, vector<8x320xf32>
    %c0_112 = arith.constant 0 : index
    %c43 = arith.constant 43 : index
    %153 = vector.load %arg16[%c0_112, %c43] : memref<8x404xf32, #tpu.memory_space<vmem>>, vector<8x320xf32>
    %c0_113 = arith.constant 0 : index
    %c44 = arith.constant 44 : index
    %154 = vector.load %arg16[%c0_113, %c44] : memref<8x404xf32, #tpu.memory_space<vmem>>, vector<8x320xf32>
    %155 = tpu.concatenate %150, %151, %152, %153, %154 in 0 : vector<8x320xf32>, vector<8x320xf32>, vector<8x320xf32>, vector<8x320xf32>, vector<8x320xf32> -> vector<40x320xf32>
    %c0_114 = arith.constant 0 : index
    %c80_115 = arith.constant 80 : index
    %156 = vector.load %arg4[%c0_114, %c80_115] : memref<16x200xf32, #tpu.memory_space<vmem>>, vector<16x40xf32>
    %cst_116 = arith.constant dense<0.000000e+00> : vector<16x320xf32>
    %157 = tpu.matmul %156, %155, %cst_116 {dimension_numbers = #tpu.dot_dimension_numbers<[1], [0], [0], [1], [0, 0, 1, 1], [], []>} : vector<16x40xf32>, vector<40x320xf32>, vector<16x320xf32> -> vector<16x320xf32>
    %158 = arith.addf %149, %157 : vector<16x320xf32>
    %c0_117 = arith.constant 0 : index
    %c60 = arith.constant 60 : index
    %159 = vector.load %arg16[%c0_117, %c60] : memref<8x404xf32, #tpu.memory_space<vmem>>, vector<8x320xf32>
    %c0_118 = arith.constant 0 : index
    %c61 = arith.constant 61 : index
    %160 = vector.load %arg16[%c0_118, %c61] : memref<8x404xf32, #tpu.memory_space<vmem>>, vector<8x320xf32>
    %c0_119 = arith.constant 0 : index
    %c62_120 = arith.constant 62 : index
    %161 = vector.load %arg16[%c0_119, %c62_120] : memref<8x404xf32, #tpu.memory_space<vmem>>, vector<8x320xf32>
    %c0_121 = arith.constant 0 : index
    %c63 = arith.constant 63 : index
    %162 = vector.load %arg16[%c0_121, %c63] : memref<8x404xf32, #tpu.memory_space<vmem>>, vector<8x320xf32>
    %c0_122 = arith.constant 0 : index
    %c64 = arith.constant 64 : index
    %163 = vector.load %arg16[%c0_122, %c64] : memref<8x404xf32, #tpu.memory_space<vmem>>, vector<8x320xf32>
    %164 = tpu.concatenate %159, %160, %161, %162, %163 in 0 : vector<8x320xf32>, vector<8x320xf32>, vector<8x320xf32>, vector<8x320xf32>, vector<8x320xf32> -> vector<40x320xf32>
    %c0_123 = arith.constant 0 : index
    %c120_124 = arith.constant 120 : index
    %165 = vector.load %arg4[%c0_123, %c120_124] : memref<16x200xf32, #tpu.memory_space<vmem>>, vector<16x40xf32>
    %cst_125 = arith.constant dense<0.000000e+00> : vector<16x320xf32>
    %166 = tpu.matmul %165, %164, %cst_125 {dimension_numbers = #tpu.dot_dimension_numbers<[1], [0], [0], [1], [0, 0, 1, 1], [], []>} : vector<16x40xf32>, vector<40x320xf32>, vector<16x320xf32> -> vector<16x320xf32>
    %167 = arith.addf %158, %166 : vector<16x320xf32>
    %c0_126 = arith.constant 0 : index
    %c80_127 = arith.constant 80 : index
    %168 = vector.load %arg16[%c0_126, %c80_127] : memref<8x404xf32, #tpu.memory_space<vmem>>, vector<8x320xf32>
    %c0_128 = arith.constant 0 : index
    %c81 = arith.constant 81 : index
    %169 = vector.load %arg16[%c0_128, %c81] : memref<8x404xf32, #tpu.memory_space<vmem>>, vector<8x320xf32>
    %c0_129 = arith.constant 0 : index
    %c82_130 = arith.constant 82 : index
    %170 = vector.load %arg16[%c0_129, %c82_130] : memref<8x404xf32, #tpu.memory_space<vmem>>, vector<8x320xf32>
    %c0_131 = arith.constant 0 : index
    %c83 = arith.constant 83 : index
    %171 = vector.load %arg16[%c0_131, %c83] : memref<8x404xf32, #tpu.memory_space<vmem>>, vector<8x320xf32>
    %c0_132 = arith.constant 0 : index
    %c84 = arith.constant 84 : index
    %172 = vector.load %arg16[%c0_132, %c84] : memref<8x404xf32, #tpu.memory_space<vmem>>, vector<8x320xf32>
    %173 = tpu.concatenate %168, %169, %170, %171, %172 in 0 : vector<8x320xf32>, vector<8x320xf32>, vector<8x320xf32>, vector<8x320xf32>, vector<8x320xf32> -> vector<40x320xf32>
    %c0_133 = arith.constant 0 : index
    %c160_134 = arith.constant 160 : index
    %174 = vector.load %arg4[%c0_133, %c160_134] : memref<16x200xf32, #tpu.memory_space<vmem>>, vector<16x40xf32>
    %cst_135 = arith.constant dense<0.000000e+00> : vector<16x320xf32>
    %175 = tpu.matmul %174, %173, %cst_135 {dimension_numbers = #tpu.dot_dimension_numbers<[1], [0], [0], [1], [0, 0, 1, 1], [], []>} : vector<16x40xf32>, vector<40x320xf32>, vector<16x320xf32> -> vector<16x320xf32>
    %176 = arith.addf %167, %175 : vector<16x320xf32>
    %c0_136 = arith.constant 0 : index
    %c0_137 = arith.constant 0 : index
    %177 = vector.load %arg5[%c0_136, %c0_137] : memref<16x1xf32, #tpu.memory_space<vmem>>, vector<16x1xf32>
    %178 = vector.broadcast %177 : vector<16x1xf32> to vector<16x320xf32>
    %179 = arith.addf %176, %178 : vector<16x320xf32>
    %cst_138 = arith.constant 0.000000e+00 : f32
    %180 = vector.broadcast %cst_138 : f32 to vector<16x320xf32>
    %181 = arith.maximumf %179, %180 : vector<16x320xf32>
    %182 = vector.extract_strided_slice %181 {offsets = [0, 0], sizes = [16, 319], strides = [1, 1]} : vector<16x320xf32> to vector<16x319xf32>
    %183 = vector.extract_strided_slice %181 {offsets = [0, 1], sizes = [16, 319], strides = [1, 1]} : vector<16x320xf32> to vector<16x319xf32>
    %184 = arith.maximumf %182, %183 : vector<16x319xf32>
    %185 = vector.extract_strided_slice %184 {offsets = [0, 0], sizes = [16, 299], strides = [1, 1]} : vector<16x319xf32> to vector<16x299xf32>
    %186 = vector.extract_strided_slice %184 {offsets = [0, 20], sizes = [16, 299], strides = [1, 1]} : vector<16x319xf32> to vector<16x299xf32>
    %187 = arith.maximumf %185, %186 : vector<16x299xf32>
    %188 = vector.extract_strided_slice %187 {offsets = [0, 0], sizes = [16, 15], strides = [1, 1]} : vector<16x299xf32> to vector<16x15xf32>
    %189 = vector.extract_strided_slice %187 {offsets = [0, 40], sizes = [16, 15], strides = [1, 1]} : vector<16x299xf32> to vector<16x15xf32>
    %190 = vector.extract_strided_slice %187 {offsets = [0, 80], sizes = [16, 15], strides = [1, 1]} : vector<16x299xf32> to vector<16x15xf32>
    %191 = vector.extract_strided_slice %187 {offsets = [0, 120], sizes = [16, 15], strides = [1, 1]} : vector<16x299xf32> to vector<16x15xf32>
    %192 = vector.extract_strided_slice %187 {offsets = [0, 160], sizes = [16, 15], strides = [1, 1]} : vector<16x299xf32> to vector<16x15xf32>
    %193 = vector.extract_strided_slice %187 {offsets = [0, 200], sizes = [16, 15], strides = [1, 1]} : vector<16x299xf32> to vector<16x15xf32>
    %194 = vector.extract_strided_slice %187 {offsets = [0, 240], sizes = [16, 15], strides = [1, 1]} : vector<16x299xf32> to vector<16x15xf32>
    %195 = vector.extract_strided_slice %187 {offsets = [0, 280], sizes = [16, 15], strides = [1, 1]} : vector<16x299xf32> to vector<16x15xf32>
    %196 = tpu.concatenate %188, %189, %190, %191, %192, %193, %194, %195 in 0 : vector<16x15xf32>, vector<16x15xf32>, vector<16x15xf32>, vector<16x15xf32>, vector<16x15xf32>, vector<16x15xf32>, vector<16x15xf32>, vector<16x15xf32> -> vector<128x15xf32>
    %c0_139 = arith.constant 0 : index
    %c0_140 = arith.constant 0 : index
    %197 = vector.load %arg11[%c0_139, %c0_140] : memref<15x8xf32, #tpu.memory_space<vmem>>, vector<15x8xf32>
    %cst_141 = arith.constant dense<0.000000e+00> : vector<128x8xf32>
    %198 = tpu.matmul %196, %197, %cst_141 {dimension_numbers = #tpu.dot_dimension_numbers<[1], [0], [0], [1], [0, 0, 1, 1], [], []>} : vector<128x15xf32>, vector<15x8xf32>, vector<128x8xf32> -> vector<128x8xf32>
    %cst_142 = arith.constant 0.000000e+00 : f32
    %199 = vector.broadcast %cst_142 : f32 to vector<16x148xf32>
    %c0_143 = arith.constant 0 : index
    %c0_144 = arith.constant 0 : index
    %200 = vector.load %arg17[%c0_143, %c0_144] : memref<16x148xf32, #tpu.memory_space<vmem>>, vector<16x148xf32>
    tpu.vector_store %arg17[%c0_143, %c0_144], %199 {strides = array<i32>} : memref<16x148xf32, #tpu.memory_space<vmem>>, vector<16x148xf32>,
    %201 = vector.extract_strided_slice %198 {offsets = [0, 0], sizes = [16, 8], strides = [1, 1]} : vector<128x8xf32> to vector<16x8xf32>
    %c0_145 = arith.constant 0 : index
    %c26 = arith.constant 26 : index
    %202 = vector.load %arg17[%c0_145, %c26] : memref<16x148xf32, #tpu.memory_space<vmem>>, vector<16x8xf32>
    tpu.vector_store %arg17[%c0_145, %c26], %201 {strides = array<i32>} : memref<16x148xf32, #tpu.memory_space<vmem>>, vector<16x8xf32>,
    %203 = vector.extract_strided_slice %198 {offsets = [16, 0], sizes = [16, 8], strides = [1, 1]} : vector<128x8xf32> to vector<16x8xf32>
    %c0_146 = arith.constant 0 : index
    %c38_147 = arith.constant 38 : index
    %204 = vector.load %arg17[%c0_146, %c38_147] : memref<16x148xf32, #tpu.memory_space<vmem>>, vector<16x8xf32>
    tpu.vector_store %arg17[%c0_146, %c38_147], %203 {strides = array<i32>} : memref<16x148xf32, #tpu.memory_space<vmem>>, vector<16x8xf32>,
    %205 = vector.extract_strided_slice %198 {offsets = [32, 0], sizes = [16, 8], strides = [1, 1]} : vector<128x8xf32> to vector<16x8xf32>
    %c0_148 = arith.constant 0 : index
    %c50 = arith.constant 50 : index
    %206 = vector.load %arg17[%c0_148, %c50] : memref<16x148xf32, #tpu.memory_space<vmem>>, vector<16x8xf32>
    tpu.vector_store %arg17[%c0_148, %c50], %205 {strides = array<i32>} : memref<16x148xf32, #tpu.memory_space<vmem>>, vector<16x8xf32>,
    %207 = vector.extract_strided_slice %198 {offsets = [48, 0], sizes = [16, 8], strides = [1, 1]} : vector<128x8xf32> to vector<16x8xf32>
    %c0_149 = arith.constant 0 : index
    %c62_150 = arith.constant 62 : index
    %208 = vector.load %arg17[%c0_149, %c62_150] : memref<16x148xf32, #tpu.memory_space<vmem>>, vector<16x8xf32>
    tpu.vector_store %arg17[%c0_149, %c62_150], %207 {strides = array<i32>} : memref<16x148xf32, #tpu.memory_space<vmem>>, vector<16x8xf32>,
    %209 = vector.extract_strided_slice %198 {offsets = [64, 0], sizes = [16, 8], strides = [1, 1]} : vector<128x8xf32> to vector<16x8xf32>
    %c0_151 = arith.constant 0 : index
    %c74_152 = arith.constant 74 : index
    %210 = vector.load %arg17[%c0_151, %c74_152] : memref<16x148xf32, #tpu.memory_space<vmem>>, vector<16x8xf32>
    tpu.vector_store %arg17[%c0_151, %c74_152], %209 {strides = array<i32>} : memref<16x148xf32, #tpu.memory_space<vmem>>, vector<16x8xf32>,
    %211 = vector.extract_strided_slice %198 {offsets = [80, 0], sizes = [16, 8], strides = [1, 1]} : vector<128x8xf32> to vector<16x8xf32>
    %c0_153 = arith.constant 0 : index
    %c86 = arith.constant 86 : index
    %212 = vector.load %arg17[%c0_153, %c86] : memref<16x148xf32, #tpu.memory_space<vmem>>, vector<16x8xf32>
    tpu.vector_store %arg17[%c0_153, %c86], %211 {strides = array<i32>} : memref<16x148xf32, #tpu.memory_space<vmem>>, vector<16x8xf32>,
    %213 = vector.extract_strided_slice %198 {offsets = [96, 0], sizes = [16, 8], strides = [1, 1]} : vector<128x8xf32> to vector<16x8xf32>
    %c0_154 = arith.constant 0 : index
    %c98 = arith.constant 98 : index
    %214 = vector.load %arg17[%c0_154, %c98] : memref<16x148xf32, #tpu.memory_space<vmem>>, vector<16x8xf32>
    tpu.vector_store %arg17[%c0_154, %c98], %213 {strides = array<i32>} : memref<16x148xf32, #tpu.memory_space<vmem>>, vector<16x8xf32>,
    %215 = vector.extract_strided_slice %198 {offsets = [112, 0], sizes = [16, 8], strides = [1, 1]} : vector<128x8xf32> to vector<16x8xf32>
    %c0_155 = arith.constant 0 : index
    %c110_156 = arith.constant 110 : index
    %216 = vector.load %arg17[%c0_155, %c110_156] : memref<16x148xf32, #tpu.memory_space<vmem>>, vector<16x8xf32>
    tpu.vector_store %arg17[%c0_155, %c110_156], %215 {strides = array<i32>} : memref<16x148xf32, #tpu.memory_space<vmem>>, vector<16x8xf32>,
    %c0_157 = arith.constant 0 : index
    %c0_158 = arith.constant 0 : index
    %217 = vector.load %arg17[%c0_157, %c0_158] : memref<16x148xf32, #tpu.memory_space<vmem>>, vector<16x96xf32>
    %c0_159 = arith.constant 0 : index
    %c1_160 = arith.constant 1 : index
    %218 = vector.load %arg17[%c0_159, %c1_160] : memref<16x148xf32, #tpu.memory_space<vmem>>, vector<16x96xf32>
    %c0_161 = arith.constant 0 : index
    %c2_162 = arith.constant 2 : index
    %219 = vector.load %arg17[%c0_161, %c2_162] : memref<16x148xf32, #tpu.memory_space<vmem>>, vector<16x96xf32>
    %c0_163 = arith.constant 0 : index
    %c3_164 = arith.constant 3 : index
    %220 = vector.load %arg17[%c0_163, %c3_164] : memref<16x148xf32, #tpu.memory_space<vmem>>, vector<16x96xf32>
    %c0_165 = arith.constant 0 : index
    %c4_166 = arith.constant 4 : index
    %221 = vector.load %arg17[%c0_165, %c4_166] : memref<16x148xf32, #tpu.memory_space<vmem>>, vector<16x96xf32>
    %222 = tpu.concatenate %217, %218, %219, %220, %221 in 0 : vector<16x96xf32>, vector<16x96xf32>, vector<16x96xf32>, vector<16x96xf32>, vector<16x96xf32> -> vector<80x96xf32>
    %c0_167 = arith.constant 0 : index
    %c0_168 = arith.constant 0 : index
    %223 = vector.load %arg6[%c0_167, %c0_168] : memref<32x400xf32, #tpu.memory_space<vmem>>, vector<32x80xf32>
    %cst_169 = arith.constant dense<0.000000e+00> : vector<32x96xf32>
    %224 = tpu.matmul %223, %222, %cst_169 {dimension_numbers = #tpu.dot_dimension_numbers<[1], [0], [0], [1], [0, 0, 1, 1], [], []>} : vector<32x80xf32>, vector<80x96xf32>, vector<32x96xf32> -> vector<32x96xf32>
    %c0_170 = arith.constant 0 : index
    %c12 = arith.constant 12 : index
    %225 = vector.load %arg17[%c0_170, %c12] : memref<16x148xf32, #tpu.memory_space<vmem>>, vector<16x96xf32>
    %c0_171 = arith.constant 0 : index
    %c13 = arith.constant 13 : index
    %226 = vector.load %arg17[%c0_171, %c13] : memref<16x148xf32, #tpu.memory_space<vmem>>, vector<16x96xf32>
    %c0_172 = arith.constant 0 : index
    %c14 = arith.constant 14 : index
    %227 = vector.load %arg17[%c0_172, %c14] : memref<16x148xf32, #tpu.memory_space<vmem>>, vector<16x96xf32>
    %c0_173 = arith.constant 0 : index
    %c15 = arith.constant 15 : index
    %228 = vector.load %arg17[%c0_173, %c15] : memref<16x148xf32, #tpu.memory_space<vmem>>, vector<16x96xf32>
    %c0_174 = arith.constant 0 : index
    %c16 = arith.constant 16 : index
    %229 = vector.load %arg17[%c0_174, %c16] : memref<16x148xf32, #tpu.memory_space<vmem>>, vector<16x96xf32>
    %230 = tpu.concatenate %225, %226, %227, %228, %229 in 0 : vector<16x96xf32>, vector<16x96xf32>, vector<16x96xf32>, vector<16x96xf32>, vector<16x96xf32> -> vector<80x96xf32>
    %c0_175 = arith.constant 0 : index
    %c80_176 = arith.constant 80 : index
    %231 = vector.load %arg6[%c0_175, %c80_176] : memref<32x400xf32, #tpu.memory_space<vmem>>, vector<32x80xf32>
    %cst_177 = arith.constant dense<0.000000e+00> : vector<32x96xf32>
    %232 = tpu.matmul %231, %230, %cst_177 {dimension_numbers = #tpu.dot_dimension_numbers<[1], [0], [0], [1], [0, 0, 1, 1], [], []>} : vector<32x80xf32>, vector<80x96xf32>, vector<32x96xf32> -> vector<32x96xf32>
    %233 = arith.addf %224, %232 : vector<32x96xf32>
    %c0_178 = arith.constant 0 : index
    %c24_179 = arith.constant 24 : index
    %234 = vector.load %arg17[%c0_178, %c24_179] : memref<16x148xf32, #tpu.memory_space<vmem>>, vector<16x96xf32>
    %c0_180 = arith.constant 0 : index
    %c25 = arith.constant 25 : index
    %235 = vector.load %arg17[%c0_180, %c25] : memref<16x148xf32, #tpu.memory_space<vmem>>, vector<16x96xf32>
    %c0_181 = arith.constant 0 : index
    %c26_182 = arith.constant 26 : index
    %236 = vector.load %arg17[%c0_181, %c26_182] : memref<16x148xf32, #tpu.memory_space<vmem>>, vector<16x96xf32>
    %c0_183 = arith.constant 0 : index
    %c27 = arith.constant 27 : index
    %237 = vector.load %arg17[%c0_183, %c27] : memref<16x148xf32, #tpu.memory_space<vmem>>, vector<16x96xf32>
    %c0_184 = arith.constant 0 : index
    %c28 = arith.constant 28 : index
    %238 = vector.load %arg17[%c0_184, %c28] : memref<16x148xf32, #tpu.memory_space<vmem>>, vector<16x96xf32>
    %239 = tpu.concatenate %234, %235, %236, %237, %238 in 0 : vector<16x96xf32>, vector<16x96xf32>, vector<16x96xf32>, vector<16x96xf32>, vector<16x96xf32> -> vector<80x96xf32>
    %c0_185 = arith.constant 0 : index
    %c160_186 = arith.constant 160 : index
    %240 = vector.load %arg6[%c0_185, %c160_186] : memref<32x400xf32, #tpu.memory_space<vmem>>, vector<32x80xf32>
    %cst_187 = arith.constant dense<0.000000e+00> : vector<32x96xf32>
    %241 = tpu.matmul %240, %239, %cst_187 {dimension_numbers = #tpu.dot_dimension_numbers<[1], [0], [0], [1], [0, 0, 1, 1], [], []>} : vector<32x80xf32>, vector<80x96xf32>, vector<32x96xf32> -> vector<32x96xf32>
    %242 = arith.addf %233, %241 : vector<32x96xf32>
    %c0_188 = arith.constant 0 : index
    %c36_189 = arith.constant 36 : index
    %243 = vector.load %arg17[%c0_188, %c36_189] : memref<16x148xf32, #tpu.memory_space<vmem>>, vector<16x96xf32>
    %c0_190 = arith.constant 0 : index
    %c37_191 = arith.constant 37 : index
    %244 = vector.load %arg17[%c0_190, %c37_191] : memref<16x148xf32, #tpu.memory_space<vmem>>, vector<16x96xf32>
    %c0_192 = arith.constant 0 : index
    %c38_193 = arith.constant 38 : index
    %245 = vector.load %arg17[%c0_192, %c38_193] : memref<16x148xf32, #tpu.memory_space<vmem>>, vector<16x96xf32>
    %c0_194 = arith.constant 0 : index
    %c39_195 = arith.constant 39 : index
    %246 = vector.load %arg17[%c0_194, %c39_195] : memref<16x148xf32, #tpu.memory_space<vmem>>, vector<16x96xf32>
    %c0_196 = arith.constant 0 : index
    %c40_197 = arith.constant 40 : index
    %247 = vector.load %arg17[%c0_196, %c40_197] : memref<16x148xf32, #tpu.memory_space<vmem>>, vector<16x96xf32>
    %248 = tpu.concatenate %243, %244, %245, %246, %247 in 0 : vector<16x96xf32>, vector<16x96xf32>, vector<16x96xf32>, vector<16x96xf32>, vector<16x96xf32> -> vector<80x96xf32>
    %c0_198 = arith.constant 0 : index
    %c240 = arith.constant 240 : index
    %249 = vector.load %arg6[%c0_198, %c240] : memref<32x400xf32, #tpu.memory_space<vmem>>, vector<32x80xf32>
    %cst_199 = arith.constant dense<0.000000e+00> : vector<32x96xf32>
    %250 = tpu.matmul %249, %248, %cst_199 {dimension_numbers = #tpu.dot_dimension_numbers<[1], [0], [0], [1], [0, 0, 1, 1], [], []>} : vector<32x80xf32>, vector<80x96xf32>, vector<32x96xf32> -> vector<32x96xf32>
    %251 = arith.addf %242, %250 : vector<32x96xf32>
    %c0_200 = arith.constant 0 : index
    %c48 = arith.constant 48 : index
    %252 = vector.load %arg17[%c0_200, %c48] : memref<16x148xf32, #tpu.memory_space<vmem>>, vector<16x96xf32>
    %c0_201 = arith.constant 0 : index
    %c49 = arith.constant 49 : index
    %253 = vector.load %arg17[%c0_201, %c49] : memref<16x148xf32, #tpu.memory_space<vmem>>, vector<16x96xf32>
    %c0_202 = arith.constant 0 : index
    %c50_203 = arith.constant 50 : index
    %254 = vector.load %arg17[%c0_202, %c50_203] : memref<16x148xf32, #tpu.memory_space<vmem>>, vector<16x96xf32>
    %c0_204 = arith.constant 0 : index
    %c51 = arith.constant 51 : index
    %255 = vector.load %arg17[%c0_204, %c51] : memref<16x148xf32, #tpu.memory_space<vmem>>, vector<16x96xf32>
    %c0_205 = arith.constant 0 : index
    %c52 = arith.constant 52 : index
    %256 = vector.load %arg17[%c0_205, %c52] : memref<16x148xf32, #tpu.memory_space<vmem>>, vector<16x96xf32>
    %257 = tpu.concatenate %252, %253, %254, %255, %256 in 0 : vector<16x96xf32>, vector<16x96xf32>, vector<16x96xf32>, vector<16x96xf32>, vector<16x96xf32> -> vector<80x96xf32>
    %c0_206 = arith.constant 0 : index
    %c320 = arith.constant 320 : index
    %258 = vector.load %arg6[%c0_206, %c320] : memref<32x400xf32, #tpu.memory_space<vmem>>, vector<32x80xf32>
    %cst_207 = arith.constant dense<0.000000e+00> : vector<32x96xf32>
    %259 = tpu.matmul %258, %257, %cst_207 {dimension_numbers = #tpu.dot_dimension_numbers<[1], [0], [0], [1], [0, 0, 1, 1], [], []>} : vector<32x80xf32>, vector<80x96xf32>, vector<32x96xf32> -> vector<32x96xf32>
    %260 = arith.addf %251, %259 : vector<32x96xf32>
    %c0_208 = arith.constant 0 : index
    %c0_209 = arith.constant 0 : index
    %261 = vector.load %arg7[%c0_208, %c0_209] : memref<32x1xf32, #tpu.memory_space<vmem>>, vector<32x1xf32>
    %262 = vector.broadcast %261 : vector<32x1xf32> to vector<32x96xf32>
    %263 = arith.addf %260, %262 : vector<32x96xf32>
    %cst_210 = arith.constant 0.000000e+00 : f32
    %264 = vector.broadcast %cst_210 : f32 to vector<32x96xf32>
    %265 = arith.maximumf %263, %264 : vector<32x96xf32>
    %266 = vector.extract_strided_slice %265 {offsets = [0, 0], sizes = [32, 95], strides = [1, 1]} : vector<32x96xf32> to vector<32x95xf32>
    %267 = vector.extract_strided_slice %265 {offsets = [0, 1], sizes = [32, 95], strides = [1, 1]} : vector<32x96xf32> to vector<32x95xf32>
    %268 = arith.maximumf %266, %267 : vector<32x95xf32>
    %269 = vector.extract_strided_slice %268 {offsets = [0, 0], sizes = [32, 83], strides = [1, 1]} : vector<32x95xf32> to vector<32x83xf32>
    %270 = vector.extract_strided_slice %268 {offsets = [0, 12], sizes = [32, 83], strides = [1, 1]} : vector<32x95xf32> to vector<32x83xf32>
    %271 = arith.maximumf %269, %270 : vector<32x83xf32>
    %272 = vector.extract_strided_slice %271 {offsets = [0, 0], sizes = [32, 7], strides = [1, 1]} : vector<32x83xf32> to vector<32x7xf32>
    %273 = vector.extract_strided_slice %271 {offsets = [0, 24], sizes = [32, 7], strides = [1, 1]} : vector<32x83xf32> to vector<32x7xf32>
    %274 = vector.extract_strided_slice %271 {offsets = [0, 48], sizes = [32, 7], strides = [1, 1]} : vector<32x83xf32> to vector<32x7xf32>
    %275 = vector.extract_strided_slice %271 {offsets = [0, 72], sizes = [32, 7], strides = [1, 1]} : vector<32x83xf32> to vector<32x7xf32>
    %276 = tpu.concatenate %272, %273, %274, %275 in 0 : vector<32x7xf32>, vector<32x7xf32>, vector<32x7xf32>, vector<32x7xf32> -> vector<128x7xf32>
    %c0_211 = arith.constant 0 : index
    %c0_212 = arith.constant 0 : index
    %277 = vector.load %arg12[%c0_211, %c0_212] : memref<7x4xf32, #tpu.memory_space<vmem>>, vector<7x4xf32>
    %cst_213 = arith.constant dense<0.000000e+00> : vector<128x4xf32>
    %278 = tpu.matmul %276, %277, %cst_213 {dimension_numbers = #tpu.dot_dimension_numbers<[1], [0], [0], [1], [0, 0, 1, 1], [], []>} : vector<128x7xf32>, vector<7x4xf32>, vector<128x4xf32> -> vector<128x4xf32>
    %cst_214 = arith.constant 0.000000e+00 : f32
    %279 = vector.broadcast %cst_214 : f32 to vector<32x68xf32>
    %c0_215 = arith.constant 0 : index
    %c0_216 = arith.constant 0 : index
    %280 = vector.load %arg18[%c0_215, %c0_216] : memref<32x68xf32, #tpu.memory_space<vmem>>, vector<32x68xf32>
    tpu.vector_store %arg18[%c0_215, %c0_216], %279 {strides = array<i32>} : memref<32x68xf32, #tpu.memory_space<vmem>>, vector<32x68xf32>,
    %281 = vector.extract_strided_slice %278 {offsets = [0, 0], sizes = [32, 4], strides = [1, 1]} : vector<128x4xf32> to vector<32x4xf32>
    %c0_217 = arith.constant 0 : index
    %c18 = arith.constant 18 : index
    %282 = vector.load %arg18[%c0_217, %c18] : memref<32x68xf32, #tpu.memory_space<vmem>>, vector<32x4xf32>
    tpu.vector_store %arg18[%c0_217, %c18], %281 {strides = array<i32>} : memref<32x68xf32, #tpu.memory_space<vmem>>, vector<32x4xf32>,
    %283 = vector.extract_strided_slice %278 {offsets = [32, 0], sizes = [32, 4], strides = [1, 1]} : vector<128x4xf32> to vector<32x4xf32>
    %c0_218 = arith.constant 0 : index
    %c26_219 = arith.constant 26 : index
    %284 = vector.load %arg18[%c0_218, %c26_219] : memref<32x68xf32, #tpu.memory_space<vmem>>, vector<32x4xf32>
    tpu.vector_store %arg18[%c0_218, %c26_219], %283 {strides = array<i32>} : memref<32x68xf32, #tpu.memory_space<vmem>>, vector<32x4xf32>,
    %285 = vector.extract_strided_slice %278 {offsets = [64, 0], sizes = [32, 4], strides = [1, 1]} : vector<128x4xf32> to vector<32x4xf32>
    %c0_220 = arith.constant 0 : index
    %c34 = arith.constant 34 : index
    %286 = vector.load %arg18[%c0_220, %c34] : memref<32x68xf32, #tpu.memory_space<vmem>>, vector<32x4xf32>
    tpu.vector_store %arg18[%c0_220, %c34], %285 {strides = array<i32>} : memref<32x68xf32, #tpu.memory_space<vmem>>, vector<32x4xf32>,
    %287 = vector.extract_strided_slice %278 {offsets = [96, 0], sizes = [32, 4], strides = [1, 1]} : vector<128x4xf32> to vector<32x4xf32>
    %c0_221 = arith.constant 0 : index
    %c42_222 = arith.constant 42 : index
    %288 = vector.load %arg18[%c0_221, %c42_222] : memref<32x68xf32, #tpu.memory_space<vmem>>, vector<32x4xf32>
    tpu.vector_store %arg18[%c0_221, %c42_222], %287 {strides = array<i32>} : memref<32x68xf32, #tpu.memory_space<vmem>>, vector<32x4xf32>,
    %c0_223 = arith.constant 0 : index
    %c0_224 = arith.constant 0 : index
    %289 = vector.load %arg18[%c0_223, %c0_224] : memref<32x68xf32, #tpu.memory_space<vmem>>, vector<32x32xf32>
    %c0_225 = arith.constant 0 : index
    %c1_226 = arith.constant 1 : index
    %290 = vector.load %arg18[%c0_225, %c1_226] : memref<32x68xf32, #tpu.memory_space<vmem>>, vector<32x32xf32>
    %c0_227 = arith.constant 0 : index
    %c2_228 = arith.constant 2 : index
    %291 = vector.load %arg18[%c0_227, %c2_228] : memref<32x68xf32, #tpu.memory_space<vmem>>, vector<32x32xf32>
    %c0_229 = arith.constant 0 : index
    %c3_230 = arith.constant 3 : index
    %292 = vector.load %arg18[%c0_229, %c3_230] : memref<32x68xf32, #tpu.memory_space<vmem>>, vector<32x32xf32>
    %c0_231 = arith.constant 0 : index
    %c4_232 = arith.constant 4 : index
    %293 = vector.load %arg18[%c0_231, %c4_232] : memref<32x68xf32, #tpu.memory_space<vmem>>, vector<32x32xf32>
    %294 = tpu.concatenate %289, %290, %291, %292, %293 in 0 : vector<32x32xf32>, vector<32x32xf32>, vector<32x32xf32>, vector<32x32xf32>, vector<32x32xf32> -> vector<160x32xf32>
    %c0_233 = arith.constant 0 : index
    %c0_234 = arith.constant 0 : index
    %295 = vector.load %arg8[%c0_233, %c0_234] : memref<64x800xf32, #tpu.memory_space<vmem>>, vector<64x160xf32>
    %cst_235 = arith.constant dense<0.000000e+00> : vector<64x32xf32>
    %296 = tpu.matmul %295, %294, %cst_235 {dimension_numbers = #tpu.dot_dimension_numbers<[1], [0], [0], [1], [0, 0, 1, 1], [], []>} : vector<64x160xf32>, vector<160x32xf32>, vector<64x32xf32> -> vector<64x32xf32>
    %c0_236 = arith.constant 0 : index
    %c8 = arith.constant 8 : index
    %297 = vector.load %arg18[%c0_236, %c8] : memref<32x68xf32, #tpu.memory_space<vmem>>, vector<32x32xf32>
    %c0_237 = arith.constant 0 : index
    %c9 = arith.constant 9 : index
    %298 = vector.load %arg18[%c0_237, %c9] : memref<32x68xf32, #tpu.memory_space<vmem>>, vector<32x32xf32>
    %c0_238 = arith.constant 0 : index
    %c10 = arith.constant 10 : index
    %299 = vector.load %arg18[%c0_238, %c10] : memref<32x68xf32, #tpu.memory_space<vmem>>, vector<32x32xf32>
    %c0_239 = arith.constant 0 : index
    %c11 = arith.constant 11 : index
    %300 = vector.load %arg18[%c0_239, %c11] : memref<32x68xf32, #tpu.memory_space<vmem>>, vector<32x32xf32>
    %c0_240 = arith.constant 0 : index
    %c12_241 = arith.constant 12 : index
    %301 = vector.load %arg18[%c0_240, %c12_241] : memref<32x68xf32, #tpu.memory_space<vmem>>, vector<32x32xf32>
    %302 = tpu.concatenate %297, %298, %299, %300, %301 in 0 : vector<32x32xf32>, vector<32x32xf32>, vector<32x32xf32>, vector<32x32xf32>, vector<32x32xf32> -> vector<160x32xf32>
    %c0_242 = arith.constant 0 : index
    %c160_243 = arith.constant 160 : index
    %303 = vector.load %arg8[%c0_242, %c160_243] : memref<64x800xf32, #tpu.memory_space<vmem>>, vector<64x160xf32>
    %cst_244 = arith.constant dense<0.000000e+00> : vector<64x32xf32>
    %304 = tpu.matmul %303, %302, %cst_244 {dimension_numbers = #tpu.dot_dimension_numbers<[1], [0], [0], [1], [0, 0, 1, 1], [], []>} : vector<64x160xf32>, vector<160x32xf32>, vector<64x32xf32> -> vector<64x32xf32>
    %305 = arith.addf %296, %304 : vector<64x32xf32>
    %c0_245 = arith.constant 0 : index
    %c16_246 = arith.constant 16 : index
    %306 = vector.load %arg18[%c0_245, %c16_246] : memref<32x68xf32, #tpu.memory_space<vmem>>, vector<32x32xf32>
    %c0_247 = arith.constant 0 : index
    %c17 = arith.constant 17 : index
    %307 = vector.load %arg18[%c0_247, %c17] : memref<32x68xf32, #tpu.memory_space<vmem>>, vector<32x32xf32>
    %c0_248 = arith.constant 0 : index
    %c18_249 = arith.constant 18 : index
    %308 = vector.load %arg18[%c0_248, %c18_249] : memref<32x68xf32, #tpu.memory_space<vmem>>, vector<32x32xf32>
    %c0_250 = arith.constant 0 : index
    %c19 = arith.constant 19 : index
    %309 = vector.load %arg18[%c0_250, %c19] : memref<32x68xf32, #tpu.memory_space<vmem>>, vector<32x32xf32>
    %c0_251 = arith.constant 0 : index
    %c20_252 = arith.constant 20 : index
    %310 = vector.load %arg18[%c0_251, %c20_252] : memref<32x68xf32, #tpu.memory_space<vmem>>, vector<32x32xf32>
    %311 = tpu.concatenate %306, %307, %308, %309, %310 in 0 : vector<32x32xf32>, vector<32x32xf32>, vector<32x32xf32>, vector<32x32xf32>, vector<32x32xf32> -> vector<160x32xf32>
    %c0_253 = arith.constant 0 : index
    %c320_254 = arith.constant 320 : index
    %312 = vector.load %arg8[%c0_253, %c320_254] : memref<64x800xf32, #tpu.memory_space<vmem>>, vector<64x160xf32>
    %cst_255 = arith.constant dense<0.000000e+00> : vector<64x32xf32>
    %313 = tpu.matmul %312, %311, %cst_255 {dimension_numbers = #tpu.dot_dimension_numbers<[1], [0], [0], [1], [0, 0, 1, 1], [], []>} : vector<64x160xf32>, vector<160x32xf32>, vector<64x32xf32> -> vector<64x32xf32>
    %314 = arith.addf %305, %313 : vector<64x32xf32>
    %c0_256 = arith.constant 0 : index
    %c24_257 = arith.constant 24 : index
    %315 = vector.load %arg18[%c0_256, %c24_257] : memref<32x68xf32, #tpu.memory_space<vmem>>, vector<32x32xf32>
    %c0_258 = arith.constant 0 : index
    %c25_259 = arith.constant 25 : index
    %316 = vector.load %arg18[%c0_258, %c25_259] : memref<32x68xf32, #tpu.memory_space<vmem>>, vector<32x32xf32>
    %c0_260 = arith.constant 0 : index
    %c26_261 = arith.constant 26 : index
    %317 = vector.load %arg18[%c0_260, %c26_261] : memref<32x68xf32, #tpu.memory_space<vmem>>, vector<32x32xf32>
    %c0_262 = arith.constant 0 : index
    %c27_263 = arith.constant 27 : index
    %318 = vector.load %arg18[%c0_262, %c27_263] : memref<32x68xf32, #tpu.memory_space<vmem>>, vector<32x32xf32>
    %c0_264 = arith.constant 0 : index
    %c28_265 = arith.constant 28 : index
    %319 = vector.load %arg18[%c0_264, %c28_265] : memref<32x68xf32, #tpu.memory_space<vmem>>, vector<32x32xf32>
    %320 = tpu.concatenate %315, %316, %317, %318, %319 in 0 : vector<32x32xf32>, vector<32x32xf32>, vector<32x32xf32>, vector<32x32xf32>, vector<32x32xf32> -> vector<160x32xf32>
    %c0_266 = arith.constant 0 : index
    %c480 = arith.constant 480 : index
    %321 = vector.load %arg8[%c0_266, %c480] : memref<64x800xf32, #tpu.memory_space<vmem>>, vector<64x160xf32>
    %cst_267 = arith.constant dense<0.000000e+00> : vector<64x32xf32>
    %322 = tpu.matmul %321, %320, %cst_267 {dimension_numbers = #tpu.dot_dimension_numbers<[1], [0], [0], [1], [0, 0, 1, 1], [], []>} : vector<64x160xf32>, vector<160x32xf32>, vector<64x32xf32> -> vector<64x32xf32>
    %323 = arith.addf %314, %322 : vector<64x32xf32>
    %c0_268 = arith.constant 0 : index
    %c32 = arith.constant 32 : index
    %324 = vector.load %arg18[%c0_268, %c32] : memref<32x68xf32, #tpu.memory_space<vmem>>, vector<32x32xf32>
    %c0_269 = arith.constant 0 : index
    %c33 = arith.constant 33 : index
    %325 = vector.load %arg18[%c0_269, %c33] : memref<32x68xf32, #tpu.memory_space<vmem>>, vector<32x32xf32>
    %c0_270 = arith.constant 0 : index
    %c34_271 = arith.constant 34 : index
    %326 = vector.load %arg18[%c0_270, %c34_271] : memref<32x68xf32, #tpu.memory_space<vmem>>, vector<32x32xf32>
    %c0_272 = arith.constant 0 : index
    %c35 = arith.constant 35 : index
    %327 = vector.load %arg18[%c0_272, %c35] : memref<32x68xf32, #tpu.memory_space<vmem>>, vector<32x32xf32>
    %c0_273 = arith.constant 0 : index
    %c36_274 = arith.constant 36 : index
    %328 = vector.load %arg18[%c0_273, %c36_274] : memref<32x68xf32, #tpu.memory_space<vmem>>, vector<32x32xf32>
    %329 = tpu.concatenate %324, %325, %326, %327, %328 in 0 : vector<32x32xf32>, vector<32x32xf32>, vector<32x32xf32>, vector<32x32xf32>, vector<32x32xf32> -> vector<160x32xf32>
    %c0_275 = arith.constant 0 : index
    %c640 = arith.constant 640 : index
    %330 = vector.load %arg8[%c0_275, %c640] : memref<64x800xf32, #tpu.memory_space<vmem>>, vector<64x160xf32>
    %cst_276 = arith.constant dense<0.000000e+00> : vector<64x32xf32>
    %331 = tpu.matmul %330, %329, %cst_276 {dimension_numbers = #tpu.dot_dimension_numbers<[1], [0], [0], [1], [0, 0, 1, 1], [], []>} : vector<64x160xf32>, vector<160x32xf32>, vector<64x32xf32> -> vector<64x32xf32>
    %332 = arith.addf %323, %331 : vector<64x32xf32>
    %c0_277 = arith.constant 0 : index
    %c0_278 = arith.constant 0 : index
    %333 = vector.load %arg9[%c0_277, %c0_278] : memref<64x1xf32, #tpu.memory_space<vmem>>, vector<64x1xf32>
    %334 = vector.broadcast %333 : vector<64x1xf32> to vector<64x32xf32>
    %335 = arith.addf %332, %334 : vector<64x32xf32>
    %cst_279 = arith.constant 0.000000e+00 : f32
    %336 = vector.broadcast %cst_279 : f32 to vector<64x32xf32>
    %337 = arith.maximumf %335, %336 : vector<64x32xf32>
    %338 = vector.extract_strided_slice %337 {offsets = [0, 0], sizes = [64, 31], strides = [1, 1]} : vector<64x32xf32> to vector<64x31xf32>
    %339 = vector.extract_strided_slice %337 {offsets = [0, 1], sizes = [64, 31], strides = [1, 1]} : vector<64x32xf32> to vector<64x31xf32>
    %340 = arith.maximumf %338, %339 : vector<64x31xf32>
    %341 = vector.extract_strided_slice %340 {offsets = [0, 0], sizes = [64, 23], strides = [1, 1]} : vector<64x31xf32> to vector<64x23xf32>
    %342 = vector.extract_strided_slice %340 {offsets = [0, 8], sizes = [64, 23], strides = [1, 1]} : vector<64x31xf32> to vector<64x23xf32>
    %343 = arith.maximumf %341, %342 : vector<64x23xf32>
    %344 = vector.extract_strided_slice %343 {offsets = [0, 0], sizes = [64, 1], strides = [1, 1]} : vector<64x23xf32> to vector<64x1xf32>
    %c0_280 = arith.constant 0 : index
    %c0_281 = arith.constant 0 : index
    %c0_282 = arith.constant 0 : index
    %345 = vector.load %arg13[%c0_280, %c0_281, %c0_282] : memref<4x64x24xf32, #tpu.memory_space<vmem>>, vector<1x64x24xf32>
    %346 = vector.shape_cast %345 : vector<1x64x24xf32> to vector<64x24xf32>
    %347 = vector.broadcast %344 : vector<64x1xf32> to vector<64x24xf32>
    %348 = arith.mulf %347, %346 : vector<64x24xf32>
    %349 = vector.extract_strided_slice %343 {offsets = [0, 2], sizes = [64, 1], strides = [1, 1]} : vector<64x23xf32> to vector<64x1xf32>
    %c1_283 = arith.constant 1 : index
    %c0_284 = arith.constant 0 : index
    %c0_285 = arith.constant 0 : index
    %350 = vector.load %arg13[%c1_283, %c0_284, %c0_285] : memref<4x64x24xf32, #tpu.memory_space<vmem>>, vector<1x64x24xf32>
    %351 = vector.shape_cast %350 : vector<1x64x24xf32> to vector<64x24xf32>
    %352 = vector.broadcast %349 : vector<64x1xf32> to vector<64x24xf32>
    %353 = arith.mulf %352, %351 : vector<64x24xf32>
    %354 = arith.addf %348, %353 : vector<64x24xf32>
    %355 = vector.extract_strided_slice %343 {offsets = [0, 16], sizes = [64, 1], strides = [1, 1]} : vector<64x23xf32> to vector<64x1xf32>
    %c2_286 = arith.constant 2 : index
    %c0_287 = arith.constant 0 : index
    %c0_288 = arith.constant 0 : index
    %356 = vector.load %arg13[%c2_286, %c0_287, %c0_288] : memref<4x64x24xf32, #tpu.memory_space<vmem>>, vector<1x64x24xf32>
    %357 = vector.shape_cast %356 : vector<1x64x24xf32> to vector<64x24xf32>
    %358 = vector.broadcast %355 : vector<64x1xf32> to vector<64x24xf32>
    %359 = arith.mulf %358, %357 : vector<64x24xf32>
    %360 = arith.addf %354, %359 : vector<64x24xf32>
    %361 = vector.extract_strided_slice %343 {offsets = [0, 18], sizes = [64, 1], strides = [1, 1]} : vector<64x23xf32> to vector<64x1xf32>
    %c3_289 = arith.constant 3 : index
    %c0_290 = arith.constant 0 : index
    %c0_291 = arith.constant 0 : index
    %362 = vector.load %arg13[%c3_289, %c0_290, %c0_291] : memref<4x64x24xf32, #tpu.memory_space<vmem>>, vector<1x64x24xf32>
    %363 = vector.shape_cast %362 : vector<1x64x24xf32> to vector<64x24xf32>
    %364 = vector.broadcast %361 : vector<64x1xf32> to vector<64x24xf32>
    %365 = arith.mulf %364, %363 : vector<64x24xf32>
    %366 = arith.addf %360, %365 : vector<64x24xf32>
    %cst_292 = arith.constant dense<0.000000e+00> : vector<24xf32>
    %367 = vector.multi_reduction <add>, %366, %cst_292 [0] : vector<64x24xf32> to vector<24xf32>
    %368 = vector.shape_cast %367 : vector<24xf32> to vector<1x24xf32>
    %c0_293 = arith.constant 0 : index
    %c0_294 = arith.constant 0 : index
    %369 = vector.load %arg14[%c0_293, %c0_294] : memref<1x24xf32, #tpu.memory_space<vmem>>, vector<1x24xf32>
    %370 = arith.addf %368, %369 : vector<1x24xf32>
    %c0_295 = arith.constant 0 : index
    %c0_296 = arith.constant 0 : index
    %c0_297 = arith.constant 0 : index
    %371 = vector.load %arg15[%c0_295, %c0_296, %c0_297] : memref<1x1x24xf32, #tpu.memory_space<vmem>>, vector<1x1x24xf32>
    %372 = vector.shape_cast %371 : vector<1x1x24xf32> to vector<1x24xf32>
    %373 = vector.shape_cast %370 : vector<1x24xf32> to vector<1x1x24xf32>
    tpu.vector_store %arg15[%c0_295, %c0_296, %c0_297], %373 {strides = array<i32>} : memref<1x1x24xf32, #tpu.memory_space<vmem>>, vector<1x1x24xf32>,
    return
  }
  func.func @transform_0(%arg0: i32) -> (i32, i32, i32) {
    %c0_i32 = arith.constant 0 : i32
    %c0_i32_0 = arith.constant 0 : i32
    %c0_i32_1 = arith.constant 0 : i32
    return %arg0, %c0_i32, %c0_i32_0 : i32, i32, i32
  }
  func.func @transform_1(%arg0: i32) -> (i32, i32) {
    %c0_i32 = arith.constant 0 : i32
    %c0_i32_0 = arith.constant 0 : i32
    %c0_i32_1 = arith.constant 0 : i32
    return %c0_i32, %c0_i32_0 : i32, i32
  }
  func.func @transform_2(%arg0: i32) -> (i32, i32) {
    %c0_i32 = arith.constant 0 : i32
    %c0_i32_0 = arith.constant 0 : i32
    %c0_i32_1 = arith.constant 0 : i32
    return %c0_i32, %c0_i32_0 : i32, i32
  }
  func.func @transform_3(%arg0: i32) -> (i32, i32) {
    %c0_i32 = arith.constant 0 : i32
    %c0_i32_0 = arith.constant 0 : i32
    %c0_i32_1 = arith.constant 0 : i32
    return %c0_i32, %c0_i32_0 : i32, i32
  }
  func.func @transform_4(%arg0: i32) -> (i32, i32) {
    %c0_i32 = arith.constant 0 : i32
    %c0_i32_0 = arith.constant 0 : i32
    %c0_i32_1 = arith.constant 0 : i32
    return %c0_i32, %c0_i32_0 : i32, i32
  }
  func.func @transform_5(%arg0: i32) -> (i32, i32) {
    %c0_i32 = arith.constant 0 : i32
    %c0_i32_0 = arith.constant 0 : i32
    %c0_i32_1 = arith.constant 0 : i32
    return %c0_i32, %c0_i32_0 : i32, i32
  }
  func.func @transform_6(%arg0: i32) -> (i32, i32) {
    %c0_i32 = arith.constant 0 : i32
    %c0_i32_0 = arith.constant 0 : i32
    %c0_i32_1 = arith.constant 0 : i32
    return %c0_i32, %c0_i32_0 : i32, i32
  }
  func.func @transform_7(%arg0: i32) -> (i32, i32) {
    %c0_i32 = arith.constant 0 : i32
    %c0_i32_0 = arith.constant 0 : i32
    %c0_i32_1 = arith.constant 0 : i32
    return %c0_i32, %c0_i32_0 : i32, i32
  }
  func.func @transform_8(%arg0: i32) -> (i32, i32) {
    %c0_i32 = arith.constant 0 : i32
    %c0_i32_0 = arith.constant 0 : i32
    %c0_i32_1 = arith.constant 0 : i32
    return %c0_i32, %c0_i32_0 : i32, i32
  }
  func.func @transform_9(%arg0: i32) -> (i32, i32) {
    %c0_i32 = arith.constant 0 : i32
    %c0_i32_0 = arith.constant 0 : i32
    %c0_i32_1 = arith.constant 0 : i32
    return %c0_i32, %c0_i32_0 : i32, i32
  }
  func.func @transform_10(%arg0: i32) -> (i32, i32) {
    %c0_i32 = arith.constant 0 : i32
    %c0_i32_0 = arith.constant 0 : i32
    %c0_i32_1 = arith.constant 0 : i32
    return %c0_i32, %c0_i32_0 : i32, i32
  }
  func.func @transform_11(%arg0: i32) -> (i32, i32) {
    %c0_i32 = arith.constant 0 : i32
    %c0_i32_0 = arith.constant 0 : i32
    %c0_i32_1 = arith.constant 0 : i32
    return %c0_i32, %c0_i32_0 : i32, i32
  }
  func.func @transform_12(%arg0: i32) -> (i32, i32, i32) {
    %c0_i32 = arith.constant 0 : i32
    %c0_i32_0 = arith.constant 0 : i32
    %c0_i32_1 = arith.constant 0 : i32
    %c0_i32_2 = arith.constant 0 : i32
    return %c0_i32, %c0_i32_0, %c0_i32_1 : i32, i32, i32
  }
  func.func @transform_13(%arg0: i32) -> (i32, i32) {
    %c0_i32 = arith.constant 0 : i32
    %c0_i32_0 = arith.constant 0 : i32
    %c0_i32_1 = arith.constant 0 : i32
    return %c0_i32, %c0_i32_0 : i32, i32
  }
  func.func @transform_14(%arg0: i32) -> (i32, i32, i32) {
    %c0_i32 = arith.constant 0 : i32
    %c0_i32_0 = arith.constant 0 : i32
    %c0_i32_1 = arith.constant 0 : i32
    return %arg0, %c0_i32, %c0_i32_0 : i32, i32, i32
  }
}

</mosaic_0001>

<llo_original>
// kernel: forward.1
$region0: #{forward.1}
  #allocation0 [shape = 'u32[]', space=smem, size = 0x4, offset = 0x4, fixed_abs, tag = 'smem constant byte address 0x4 - core index']
  #allocation1 [shape = 'u32[144,128]{1,0:T(1,128)}', space=vmem, size = 0x12000, scoped, tag = 'internal scratch']
  #allocation2 [shape = 'f32[8,404]{1,0:T(8,128)}', space=vmem, size = 0x4000, scoped, tag = 'scratch operand']
  #allocation3 [shape = 'f32[16,148]{1,0:T(8,128)}', space=vmem, size = 0x4000, scoped, tag = 'scratch operand']
  #allocation4 [shape = 'f32[32,68]{1,0:T(8,128)}', space=vmem, size = 0x4000, scoped, tag = 'scratch operand']
  %s0 = inlined_call_operand.vmem [shape: f32[2,8,1300], index: 0, kind: input, shape index: {}]
  %s1 = inlined_call_operand.vmem [shape: f32[8,200], index: 1, kind: input, shape index: {}]
  %s2 = inlined_call_operand.vmem [shape: f32[8,1], index: 2, kind: input, shape index: {}]
  %s3 = inlined_call_operand.vmem [shape: f32[16,200], index: 3, kind: input, shape index: {}]
  %s4 = inlined_call_operand.vmem [shape: f32[16,1], index: 4, kind: input, shape index: {}]
  %s5 = inlined_call_operand.vmem [shape: f32[32,400], index: 5, kind: input, shape index: {}]
  %s6 = inlined_call_operand.vmem [shape: f32[32,1], index: 6, kind: input, shape index: {}]
  %s7 = inlined_call_operand.vmem [shape: f32[64,800], index: 7, kind: input, shape index: {}]
  %s8 = inlined_call_operand.vmem [shape: f32[64,1], index: 8, kind: input, shape index: {}]
  %s9 = inlined_call_operand.vmem [shape: f32[31,16], index: 9, kind: input, shape index: {}]
  %s10 = inlined_call_operand.vmem [shape: f32[15,8], index: 10, kind: input, shape index: {}]
  %s11 = inlined_call_operand.vmem [shape: f32[7,4], index: 11, kind: input, shape index: {}]
  %s12 = inlined_call_operand.vmem [shape: f32[4,64,24], index: 12, kind: input, shape index: {}]
  %s13 = inlined_call_operand.vmem [shape: f32[1,24], index: 13, kind: input, shape index: {}]
  %s14 = inlined_call_operand.hbm [shape: f32[2,1,24], index: 14, kind: output, shape index: {}]
  %s15 = sld [smem:[#allocation0]]
  $region89: #{forward.1} parent=0
    _
  %s17 = ssub.s32 1, %s15
  %s18 = scalar_select 0, %s17, %s15
  $region1: #{forward.1} parent=0
    #allocation5 [shape = 'u8[1024]{0}', space=vmem, size = 0x400, scoped, tag = 'output window, operand 0']
    #allocation6 [shape = 's32[2]{0}', space=sflag, size = 0x8, scoped, tag = 'scoped memory for forward.1']
    %19 = vsyncpa [#allocation6], 0
    %s20 = scalar_lea.sflag [#allocation6], 1
    %21 = vsyncpa %s20, 0
    loop: start=0, step=1, limit=4
    $region2: #{forward.1} parent=1 // loop_pre_header
      _
    $region3: #{forward.1} parent=1 // loop_header
      %s23 = sphi 0, %s27
      %p24 = scmp.ge.s32.totalorder %s23, 4
      %s33 = sphi 0, %s35
      %s36 = sphi 0, %s33
      %s37 = sphi 0, %s36
      %s53 = sphi 0, %s37
      %s57 = sphi 0, %s57
      %s59 = sphi 0, %s57
      %s60 = sphi 0, %s59
      %s74 = sphi 0, %s60
      %s78 = sphi 0, %s78
      %s80 = sphi 0, %s78
      %s81 = sphi 0, %s80
      %s95 = sphi 0, %s81
      %s99 = sphi 0, %s99
      %s101 = sphi 0, %s99
      %s102 = sphi 0, %s101
      %s116 = sphi 0, %s102
      %s120 = sphi 0, %s120
      %s122 = sphi 0, %s120
      %s123 = sphi 0, %s122
      %s137 = sphi 0, %s123
      %s141 = sphi 0, %s141
      %s143 = sphi 0, %s141
      %s144 = sphi 0, %s143
      %s158 = sphi 0, %s144
      %s162 = sphi 0, %s162
      %s164 = sphi 0, %s162
      %s165 = sphi 0, %s164
      %s179 = sphi 0, %s165
      %s183 = sphi 0, %s183
      %s185 = sphi 0, %s183
      %s186 = sphi 0, %s185
      %s200 = sphi 0, %s186
      %s204 = sphi 0, %s204
      %s206 = sphi 0, %s204
      %s207 = sphi 0, %s206
      %s221 = sphi 0, %s207
      %s225 = sphi 0, %s225
      %s227 = sphi 0, %s225
      %s228 = sphi 0, %s227
      %s242 = sphi 0, %s228
      %s246 = sphi 0, %s246
      %s248 = sphi 0, %s246
      %s249 = sphi 0, %s248
      %s263 = sphi 0, %s249
      %s267 = sphi 0, %s267
      %s269 = sphi 0, %s267
      %s270 = sphi 0, %s269
      %s284 = sphi 0, %s270
      %s288 = sphi 0, %s288
      %s290 = sphi 0, %s288
      %s291 = sphi 0, %s290
      %s305 = sphi 0, %s291
      %s309 = sphi 0, %s309
      %s311 = sphi 0, %s309
      %s312 = sphi 0, %s311
      %s326 = sphi 0, %s312
      %s332 = sphi 0, %s334
      %s335 = sphi 0, %s332
      %s336 = sphi 0, %s335
      %s352 = sphi 0, %s336
    $region4: #{forward.1} parent=1 // loop_header_branch
      %26 = sbr.rel (%p24) target = $region8
    $region5: #{forward.1} parent=1 // loop_body
      %s28 = ssub.s32 %s23, 1
      %s29 = ssub.s32 %s23, 2
      %s30 = sadd.s32 %s23, 1
      %s31 = ssub.s32 %s23, %s30
      %p32 = scmp.eq.s32.totalorder %s31, 0
      %s34 = sadd.s32 %s33, 1
      %s35 = scalar_select %p32, %s33, %s34
      %p38 = pneg %p32
      %p39 = scmp.eq.s32.totalorder %s23, 1
      %p40 = por %p38, %p39
      %p41 = scmp.ne.s32.totalorder %s33, %s36
      %p42 = scmp.eq.s32.totalorder %s23, 0
      %p43 = por %p41, %p42
      %p44 = scmp.ne.s32.totalorder %s33, %s36
      %p45 = scmp.eq.s32.totalorder %s28, 1
      %p46 = por %p44, %p45
      %p47 = scmp.ne.s32.totalorder %s36, %s37
      %p48 = scmp.eq.s32.totalorder %s28, 0
      %p49 = por %p47, %p48
      %p50 = scmp.ne.s32.totalorder %s36, %s37
      %p51 = scmp.eq.s32.totalorder %s29, 1
      %p52 = por %p50, %p51
      %p54 = scmp.ne.s32.totalorder %s37, %s53
      %p55 = scmp.eq.s32.totalorder %s29, 0
      %p56 = por %p54, %p55
      %s58 = sadd.s32 %s57, 1
      %p61 = scmp.eq.s32.totalorder %s23, 1
      %p62 = scmp.ne.s32.totalorder %s57, %s59
      %p63 = scmp.eq.s32.totalorder %s23, 0
      %p64 = por %p62, %p63
      %p65 = scmp.ne.s32.totalorder %s57, %s59
      %p66 = scmp.eq.s32.totalorder %s28, 1
      %p67 = por %p65, %p66
      %p68 = scmp.ne.s32.totalorder %s59, %s60
      %p69 = scmp.eq.s32.totalorder %s28, 0
      %p70 = por %p68, %p69
      %p71 = scmp.ne.s32.totalorder %s59, %s60
      %p72 = scmp.eq.s32.totalorder %s29, 1
      %p73 = por %p71, %p72
      %p75 = scmp.ne.s32.totalorder %s60, %s74
      %p76 = scmp.eq.s32.totalorder %s29, 0
      %p77 = por %p75, %p76
      %s79 = sadd.s32 %s78, 1
      %p82 = scmp.eq.s32.totalorder %s23, 1
      %p83 = scmp.ne.s32.totalorder %s78, %s80
      %p84 = scmp.eq.s32.totalorder %s23, 0
      %p85 = por %p83, %p84
      %p86 = scmp.ne.s32.totalorder %s78, %s80
      %p87 = scmp.eq.s32.totalorder %s28, 1
      %p88 = por %p86, %p87
      %p89 = scmp.ne.s32.totalorder %s80, %s81
      %p90 = scmp.eq.s32.totalorder %s28, 0
      %p91 = por %p89, %p90
      %p92 = scmp.ne.s32.totalorder %s80, %s81
      %p93 = scmp.eq.s32.totalorder %s29, 1
      %p94 = por %p92, %p93
      %p96 = scmp.ne.s32.totalorder %s81, %s95
      %p97 = scmp.eq.s32.totalorder %s29, 0
      %p98 = por %p96, %p97
      %s100 = sadd.s32 %s99, 1
      %p103 = scmp.eq.s32.totalorder %s23, 1
      %p104 = scmp.ne.s32.totalorder %s99, %s101
      %p105 = scmp.eq.s32.totalorder %s23, 0
      %p106 = por %p104, %p105
      %p107 = scmp.ne.s32.totalorder %s99, %s101
      %p108 = scmp.eq.s32.totalorder %s28, 1
      %p109 = por %p107, %p108
      %p110 = scmp.ne.s32.totalorder %s101, %s102
      %p111 = scmp.eq.s32.totalorder %s28, 0
      %p112 = por %p110, %p111
      %p113 = scmp.ne.s32.totalorder %s101, %s102
      %p114 = scmp.eq.s32.totalorder %s29, 1
      %p115 = por %p113, %p114
      %p117 = scmp.ne.s32.totalorder %s102, %s116
      %p118 = scmp.eq.s32.totalorder %s29, 0
      %p119 = por %p117, %p118
      %s121 = sadd.s32 %s120, 1
      %p124 = scmp.eq.s32.totalorder %s23, 1
      %p125 = scmp.ne.s32.totalorder %s120, %s122
      %p126 = scmp.eq.s32.totalorder %s23, 0
      %p127 = por %p125, %p126
      %p128 = scmp.ne.s32.totalorder %s120, %s122
      %p129 = scmp.eq.s32.totalorder %s28, 1
      %p130 = por %p128, %p129
      %p131 = scmp.ne.s32.totalorder %s122, %s123
      %p132 = scmp.eq.s32.totalorder %s28, 0
      %p133 = por %p131, %p132
      %p134 = scmp.ne.s32.totalorder %s122, %s123
      %p135 = scmp.eq.s32.totalorder %s29, 1
      %p136 = por %p134, %p135
      %p138 = scmp.ne.s32.totalorder %s123, %s137
      %p139 = scmp.eq.s32.totalorder %s29, 0
      %p140 = por %p138, %p139
      %s142 = sadd.s32 %s141, 1
      %p145 = scmp.eq.s32.totalorder %s23, 1
      %p146 = scmp.ne.s32.totalorder %s141, %s143
      %p147 = scmp.eq.s32.totalorder %s23, 0
      %p148 = por %p146, %p147
      %p149 = scmp.ne.s32.totalorder %s141, %s143
      %p150 = scmp.eq.s32.totalorder %s28, 1
      %p151 = por %p149, %p150
      %p152 = scmp.ne.s32.totalorder %s143, %s144
      %p153 = scmp.eq.s32.totalorder %s28, 0
      %p154 = por %p152, %p153
      %p155 = scmp.ne.s32.totalorder %s143, %s144
      %p156 = scmp.eq.s32.totalorder %s29, 1
      %p157 = por %p155, %p156
      %p159 = scmp.ne.s32.totalorder %s144, %s158
      %p160 = scmp.eq.s32.totalorder %s29, 0
      %p161 = por %p159, %p160
      %s163 = sadd.s32 %s162, 1
      %p166 = scmp.eq.s32.totalorder %s23, 1
      %p167 = scmp.ne.s32.totalorder %s162, %s164
      %p168 = scmp.eq.s32.totalorder %s23, 0
      %p169 = por %p167, %p168
      %p170 = scmp.ne.s32.totalorder %s162, %s164
      %p171 = scmp.eq.s32.totalorder %s28, 1
      %p172 = por %p170, %p171
      %p173 = scmp.ne.s32.totalorder %s164, %s165
      %p174 = scmp.eq.s32.totalorder %s28, 0
      %p175 = por %p173, %p174
      %p176 = scmp.ne.s32.totalorder %s164, %s165
      %p177 = scmp.eq.s32.totalorder %s29, 1
      %p178 = por %p176, %p177
      %p180 = scmp.ne.s32.totalorder %s165, %s179
      %p181 = scmp.eq.s32.totalorder %s29, 0
      %p182 = por %p180, %p181
      %s184 = sadd.s32 %s183, 1
      %p187 = scmp.eq.s32.totalorder %s23, 1
      %p188 = scmp.ne.s32.totalorder %s183, %s185
      %p189 = scmp.eq.s32.totalorder %s23, 0
      %p190 = por %p188, %p189
      %p191 = scmp.ne.s32.totalorder %s183, %s185
      %p192 = scmp.eq.s32.totalorder %s28, 1
      %p193 = por %p191, %p192
      %p194 = scmp.ne.s32.totalorder %s185, %s186
      %p195 = scmp.eq.s32.totalorder %s28, 0
      %p196 = por %p194, %p195
      %p197 = scmp.ne.s32.totalorder %s185, %s186
      %p198 = scmp.eq.s32.totalorder %s29, 1
      %p199 = por %p197, %p198
      %p201 = scmp.ne.s32.totalorder %s186, %s200
      %p202 = scmp.eq.s32.totalorder %s29, 0
      %p203 = por %p201, %p202
      %s205 = sadd.s32 %s204, 1
      %p208 = scmp.eq.s32.totalorder %s23, 1
      %p209 = scmp.ne.s32.totalorder %s204, %s206
      %p210 = scmp.eq.s32.totalorder %s23, 0
      %p211 = por %p209, %p210
      %p212 = scmp.ne.s32.totalorder %s204, %s206
      %p213 = scmp.eq.s32.totalorder %s28, 1
      %p214 = por %p212, %p213
      %p215 = scmp.ne.s32.totalorder %s206, %s207
      %p216 = scmp.eq.s32.totalorder %s28, 0
      %p217 = por %p215, %p216
      %p218 = scmp.ne.s32.totalorder %s206, %s207
      %p219 = scmp.eq.s32.totalorder %s29, 1
      %p220 = por %p218, %p219
      %p222 = scmp.ne.s32.totalorder %s207, %s221
      %p223 = scmp.eq.s32.totalorder %s29, 0
      %p224 = por %p222, %p223
      %s226 = sadd.s32 %s225, 1
      %p229 = scmp.eq.s32.totalorder %s23, 1
      %p230 = scmp.ne.s32.totalorder %s225, %s227
      %p231 = scmp.eq.s32.totalorder %s23, 0
      %p232 = por %p230, %p231
      %p233 = scmp.ne.s32.totalorder %s225, %s227
      %p234 = scmp.eq.s32.totalorder %s28, 1
      %p235 = por %p233, %p234
      %p236 = scmp.ne.s32.totalorder %s227, %s228
      %p237 = scmp.eq.s32.totalorder %s28, 0
      %p238 = por %p236, %p237
      %p239 = scmp.ne.s32.totalorder %s227, %s228
      %p240 = scmp.eq.s32.totalorder %s29, 1
      %p241 = por %p239, %p240
      %p243 = scmp.ne.s32.totalorder %s228, %s242
      %p244 = scmp.eq.s32.totalorder %s29, 0
      %p245 = por %p243, %p244
      %s247 = sadd.s32 %s246, 1
      %p250 = scmp.eq.s32.totalorder %s23, 1
      %p251 = scmp.ne.s32.totalorder %s246, %s248
      %p252 = scmp.eq.s32.totalorder %s23, 0
      %p253 = por %p251, %p252
      %p254 = scmp.ne.s32.totalorder %s246, %s248
      %p255 = scmp.eq.s32.totalorder %s28, 1
      %p256 = por %p254, %p255
      %p257 = scmp.ne.s32.totalorder %s248, %s249
      %p258 = scmp.eq.s32.totalorder %s28, 0
      %p259 = por %p257, %p258
      %p260 = scmp.ne.s32.totalorder %s248, %s249
      %p261 = scmp.eq.s32.totalorder %s29, 1
      %p262 = por %p260, %p261
      %p264 = scmp.ne.s32.totalorder %s249, %s263
      %p265 = scmp.eq.s32.totalorder %s29, 0
      %p266 = por %p264, %p265
      %s268 = sadd.s32 %s267, 1
      %p271 = scmp.eq.s32.totalorder %s23, 1
      %p272 = scmp.ne.s32.totalorder %s267, %s269
      %p273 = scmp.eq.s32.totalorder %s23, 0
      %p274 = por %p272, %p273
      %p275 = scmp.ne.s32.totalorder %s267, %s269
      %p276 = scmp.eq.s32.totalorder %s28, 1
      %p277 = por %p275, %p276
      %p278 = scmp.ne.s32.totalorder %s269, %s270
      %p279 = scmp.eq.s32.totalorder %s28, 0
      %p280 = por %p278, %p279
      %p281 = scmp.ne.s32.totalorder %s269, %s270
      %p282 = scmp.eq.s32.totalorder %s29, 1
      %p283 = por %p281, %p282
      %p285 = scmp.ne.s32.totalorder %s270, %s284
      %p286 = scmp.eq.s32.totalorder %s29, 0
      %p287 = por %p285, %p286
      %s289 = sadd.s32 %s288, 1
      %p292 = scmp.eq.s32.totalorder %s23, 1
      %p293 = scmp.ne.s32.totalorder %s288, %s290
      %p294 = scmp.eq.s32.totalorder %s23, 0
      %p295 = por %p293, %p294
      %p296 = scmp.ne.s32.totalorder %s288, %s290
      %p297 = scmp.eq.s32.totalorder %s28, 1
      %p298 = por %p296, %p297
      %p299 = scmp.ne.s32.totalorder %s290, %s291
      %p300 = scmp.eq.s32.totalorder %s28, 0
      %p301 = por %p299, %p300
      %p302 = scmp.ne.s32.totalorder %s290, %s291
      %p303 = scmp.eq.s32.totalorder %s29, 1
      %p304 = por %p302, %p303
      %p306 = scmp.ne.s32.totalorder %s291, %s305
      %p307 = scmp.eq.s32.totalorder %s29, 0
      %p308 = por %p306, %p307
      %s310 = sadd.s32 %s309, 1
      %p313 = scmp.eq.s32.totalorder %s23, 1
      %p314 = scmp.ne.s32.totalorder %s309, %s311
      %p315 = scmp.eq.s32.totalorder %s23, 0
      %p316 = por %p314, %p315
      %p317 = scmp.ne.s32.totalorder %s309, %s311
      %p318 = scmp.eq.s32.totalorder %s28, 1
      %p319 = por %p317, %p318
      %p320 = scmp.ne.s32.totalorder %s311, %s312
      %p321 = scmp.eq.s32.totalorder %s28, 0
      %p322 = por %p320, %p321
      %p323 = scmp.ne.s32.totalorder %s311, %s312
      %p324 = scmp.eq.s32.totalorder %s29, 1
      %p325 = por %p323, %p324
      %p327 = scmp.ne.s32.totalorder %s312, %s326
      %p328 = scmp.eq.s32.totalorder %s29, 0
      %p329 = por %p327, %p328
      %s330 = ssub.s32 %s23, %s30
      %p331 = scmp.eq.s32.totalorder %s330, 0
      %s333 = sadd.s32 %s332, 1
      %s334 = scalar_select %p331, %s332, %s333
      %p337 = pneg %p331
      %p338 = scmp.eq.s32.totalorder %s23, 1
      %p339 = por %p337, %p338
      %p340 = scmp.ne.s32.totalorder %s332, %s335
      %p341 = scmp.eq.s32.totalorder %s23, 0
      %p342 = por %p340, %p341
      %p343 = scmp.ne.s32.totalorder %s332, %s335
      %p344 = scmp.eq.s32.totalorder %s28, 1
      %p345 = por %p343, %p344
      %p346 = scmp.ne.s32.totalorder %s335, %s336
      %p347 = scmp.eq.s32.totalorder %s28, 0
      %p348 = por %p346, %p347
      %p349 = scmp.ne.s32.totalorder %s335, %s336
      %p350 = scmp.eq.s32.totalorder %s29, 1
      %p351 = por %p349, %p350
      %p353 = scmp.ne.s32.totalorder %s336, %s352
      %p354 = scmp.eq.s32.totalorder %s29, 0
      %p355 = por %p353, %p354
      %p356 = scmp.le.s32.totalorder 1, %s23
      %p357 = scmp.lt.s32.totalorder %s23, 3
      %p358 = pnand %p356, %p357
      %p359 = pneg %p358
      // Predicated region
      $region9: #{forward.1} parent=5 // pred_check
        _
      $region10: #{forward.1} parent=5 // pred_check_branch
        %361 = sbr.rel (%p358) target = $region12
      $region11: #{forward.1} parent=5 // pred_region
        %s362 = ssub.s32 %s23, 1
        // Predicated region
        $region13: #{forward.1} parent=11 // pred_check
          %p363 = pneg %p70
        $region14: #{forward.1} parent=11 // pred_check_branch
          %365 = sbr.rel (%p363) target = $region16
        $region15: #{forward.1} parent=11 // pred_region
          _
        $region16: #{forward.1} parent=11 // pred_fallthru
          _
        // Predicated region
        $region17: #{forward.1} parent=11 // pred_check
          %p366 = pneg %p91
        $region18: #{forward.1} parent=11 // pred_check_branch
          %368 = sbr.rel (%p366) target = $region20
        $region19: #{forward.1} parent=11 // pred_region
          _
        $region20: #{forward.1} parent=11 // pred_fallthru
          _
        // Predicated region
        $region21: #{forward.1} parent=11 // pred_check
          %p369 = pneg %p112
        $region22: #{forward.1} parent=11 // pred_check_branch
          %371 = sbr.rel (%p369) target = $region24
        $region23: #{forward.1} parent=11 // pred_region
          _
        $region24: #{forward.1} parent=11 // pred_fallthru
          _
        // Predicated region
        $region25: #{forward.1} parent=11 // pred_check
          %p372 = pneg %p133
        $region26: #{forward.1} parent=11 // pred_check_branch
          %374 = sbr.rel (%p372) target = $region28
        $region27: #{forward.1} parent=11 // pred_region
          _
        $region28: #{forward.1} parent=11 // pred_fallthru
          _
        // Predicated region
        $region29: #{forward.1} parent=11 // pred_check
          %p375 = pneg %p154
        $region30: #{forward.1} parent=11 // pred_check_branch
          %377 = sbr.rel (%p375) target = $region32
        $region31: #{forward.1} parent=11 // pred_region
          _
        $region32: #{forward.1} parent=11 // pred_fallthru
          _
        // Predicated region
        $region33: #{forward.1} parent=11 // pred_check
          %p378 = pneg %p175
        $region34: #{forward.1} parent=11 // pred_check_branch
          %380 = sbr.rel (%p378) target = $region36
        $region35: #{forward.1} parent=11 // pred_region
          _
        $region36: #{forward.1} parent=11 // pred_fallthru
          _
        // Predicated region
        $region37: #{forward.1} parent=11 // pred_check
          %p381 = pneg %p196
        $region38: #{forward.1} parent=11 // pred_check_branch
          %383 = sbr.rel (%p381) target = $region40
        $region39: #{forward.1} parent=11 // pred_region
          _
        $region40: #{forward.1} parent=11 // pred_fallthru
          _
        // Predicated region
        $region41: #{forward.1} parent=11 // pred_check
          %p384 = pneg %p217
        $region42: #{forward.1} parent=11 // pred_check_branch
          %386 = sbr.rel (%p384) target = $region44
        $region43: #{forward.1} parent=11 // pred_region
          _
        $region44: #{forward.1} parent=11 // pred_fallthru
          _
        // Predicated region
        $region45: #{forward.1} parent=11 // pred_check
          %p387 = pneg %p238
        $region46: #{forward.1} parent=11 // pred_check_branch
          %389 = sbr.rel (%p387) target = $region48
        $region47: #{forward.1} parent=11 // pred_region
          _
        $region48: #{forward.1} parent=11 // pred_fallthru
          _
        // Predicated region
        $region49: #{forward.1} parent=11 // pred_check
          %p390 = pneg %p259
        $region50: #{forward.1} parent=11 // pred_check_branch
          %392 = sbr.rel (%p390) target = $region52
        $region51: #{forward.1} parent=11 // pred_region
          _
        $region52: #{forward.1} parent=11 // pred_fallthru
          _
        // Predicated region
        $region53: #{forward.1} parent=11 // pred_check
          %p393 = pneg %p280
        $region54: #{forward.1} parent=11 // pred_check_branch
          %395 = sbr.rel (%p393) target = $region56
        $region55: #{forward.1} parent=11 // pred_region
          _
        $region56: #{forward.1} parent=11 // pred_fallthru
          _
        // Predicated region
        $region57: #{forward.1} parent=11 // pred_check
          %p396 = pneg %p301
        $region58: #{forward.1} parent=11 // pred_check_branch
          %398 = sbr.rel (%p396) target = $region60
        $region59: #{forward.1} parent=11 // pred_region
          _
        $region60: #{forward.1} parent=11 // pred_fallthru
          _
        // Predicated region
        $region61: #{forward.1} parent=11 // pred_check
          %p399 = pneg %p322
        $region62: #{forward.1} parent=11 // pred_check_branch
          %401 = sbr.rel (%p399) target = $region64
        $region63: #{forward.1} parent=11 // pred_region
          _
        $region64: #{forward.1} parent=11 // pred_fallthru
          _
      $region12: #{forward.1} parent=5 // pred_fallthru
        _
      %p402 = scmp.lt.s32.totalorder %s23, 2
      // Predicated region
      $region65: #{forward.1} parent=5 // pred_check
        %p403 = pneg %p402
      $region66: #{forward.1} parent=5 // pred_check_branch
        %405 = sbr.rel (%p403) target = $region68
      $region67: #{forward.1} parent=5 // pred_region
        // Predicated region
        $region69: #{forward.1} parent=67 // pred_check
          %p406 = pneg %p43
        $region70: #{forward.1} parent=67 // pred_check_branch
          %408 = sbr.rel (%p406) target = $region72
        $region71: #{forward.1} parent=67 // pred_region
          %p409 = scmp.lt.s32.totalorder %s23, 1
          %s410 = scalar_select %p409, %s23, 1
          %s411 = smul.addr %s410, 11
          %s412 = smul.addr %s411, 8
          %s413 = scalar_lea.vmem %s0, %s412
        $region72: #{forward.1} parent=67 // pred_fallthru
          _
      $region68: #{forward.1} parent=5 // pred_fallthru
        _
      %p414 = scmp.le.s32.totalorder 1, %s23
      %p415 = scmp.lt.s32.totalorder %s23, 3
      %p416 = pnand %p414, %p415
      %p417 = pneg %p416
      // Predicated region
      $region73: #{forward.1} parent=5 // pred_check
        _
      $region74: #{forward.1} parent=5 // pred_check_branch
        %419 = sbr.rel (%p416) target = $region76
      $region75: #{forward.1} parent=5 // pred_region
        %s420 = ssub.s32 %s23, 1
        %p421 = scmp.lt.s32.totalorder %s28, 1
        %s422 = scalar_select %p421, %s28, 1
        %s423 = smul.addr %s422, 11
        %s424 = smul.addr %s423, 8
        %s425 = scalar_lea.vmem %s0, %s424
        %p426 = pneg %p49
        %p427 = pneg %p46
        %p428 = pneg %p70
        %p429 = pneg %p67
        %p430 = pneg %p91
        %p431 = pneg %p88
        %p432 = pneg %p112
        %p433 = pneg %p109
        %p434 = pneg %p133
        %p435 = pneg %p130
        %p436 = pneg %p154
        %p437 = pneg %p151
        %p438 = pneg %p175
        %p439 = pneg %p172
        %p440 = pneg %p196
        %p441 = pneg %p193
        %p442 = pneg %p217
        %p443 = pneg %p214
        %p444 = pneg %p238
        %p445 = pneg %p235
        %p446 = pneg %p259
        %p447 = pneg %p256
        %p448 = pneg %p280
        %p449 = pneg %p277
        %p450 = pneg %p301
        %p451 = pneg %p298
        %p452 = pneg %p322
        %p453 = pneg %p319
        %p454 = pneg %p348
        %p455 = pneg %p345
        %s456 = sand.u32 %s335, 1
        %s457 = scalar_lea.sflag [#allocation6], %s456
        %s458 = sand.u32 %s335, 1
        %s459 = scalar_lea.vmem [#allocation5], %s458
        %p460 = scmp.lt.s32.totalorder %s28, 1
        %s461 = scalar_select %p460, %s28, 1
        %s462 = smul.addr %s461, 11
        %s463 = smul.addr %s462, 8
        %s464 = scalar_lea.vmem %s0, %s463
        %v465 = vld [vmem:[%s464] sm:$0xff]
        %v466 = vld [vmem:[%s464 + $0x8] sm:$0xff]
        %v467 = vld [vmem:[%s464 + $0x10] sm:$0xff]
        %v468 = vld [vmem:[%s464 + $0x18] sm:$0xff]
        %v469 = vld [vmem:[%s464 + $0x20] sm:$0xff]
        %v470 = vld [vmem:[%s464 + $0x28] sm:$0xff]
        %v471 = vld [vmem:[%s464 + $0x30] sm:$0xff]
        %v472 = vld [vmem:[%s464 + $0x38] sm:$0xff]
        %v473 = vld [vmem:[%s464 + $0x40] sm:$0xff]
        %v474 = vld [vmem:[%s464 + $0x48] sm:$0xff]
        %485 = vrot.lane.b32.xlu0 %v465, 127
        %v486 = vpop.permute.xlu0 %485
        %487 = vrot.lane.b32.xlu0 %v466, 127
        %v488 = vpop.permute.xlu0 %487
        %489 = vrot.lane.b32.xlu0 %v467, 127
        %v490 = vpop.permute.xlu0 %489
        %491 = vrot.lane.b32.xlu0 %v468, 127
        %v492 = vpop.permute.xlu0 %491
        %493 = vrot.lane.b32.xlu0 %v469, 127
        %v494 = vpop.permute.xlu0 %493
        %495 = vrot.lane.b32.xlu0 %v470, 127
        %v496 = vpop.permute.xlu0 %495
        %497 = vrot.lane.b32.xlu0 %v471, 127
        %v498 = vpop.permute.xlu0 %497
        %499 = vrot.lane.b32.xlu0 %v472, 127
        %v500 = vpop.permute.xlu0 %499
        %501 = vrot.lane.b32.xlu0 %v473, 127
        %v502 = vpop.permute.xlu0 %501
        %503 = vrot.lane.b32.xlu0 %v474, 127
        %v504 = vpop.permute.xlu0 %503
        %vm505 = vcmask 1039360
        %v506 = vsel %vm505, %v486, %v488
        %v507 = vsel %vm505, %v488, %v490
        %v508 = vsel %vm505, %v490, %v492
        %v509 = vsel %vm505, %v492, %v494
        %v510 = vsel %vm505, %v494, %v496
        %v511 = vsel %vm505, %v496, %v498
        %v512 = vsel %vm505, %v498, %v500
        %v513 = vsel %vm505, %v500, %v502
        %v514 = vsel %vm505, %v502, %v504
        %524 = vrot.lane.b32.xlu0 %v465, 126
        %v525 = vpop.permute.xlu0 %524
        %526 = vrot.lane.b32.xlu0 %v466, 126
        %v527 = vpop.permute.xlu0 %526
        %528 = vrot.lane.b32.xlu0 %v467, 126
        %v529 = vpop.permute.xlu0 %528
        %530 = vrot.lane.b32.xlu0 %v468, 126
        %v531 = vpop.permute.xlu0 %530
        %532 = vrot.lane.b32.xlu0 %v469, 126
        %v533 = vpop.permute.xlu0 %532
        %534 = vrot.lane.b32.xlu0 %v470, 126
        %v535 = vpop.permute.xlu0 %534
        %536 = vrot.lane.b32.xlu0 %v471, 126
        %v537 = vpop.permute.xlu0 %536
        %538 = vrot.lane.b32.xlu0 %v472, 126
        %v539 = vpop.permute.xlu0 %538
        %540 = vrot.lane.b32.xlu0 %v473, 126
        %v541 = vpop.permute.xlu0 %540
        %542 = vrot.lane.b32.xlu0 %v474, 126
        %v543 = vpop.permute.xlu0 %542
        %vm544 = vcmask 1031168
        %v545 = vsel %vm544, %v525, %v527
        %v546 = vsel %vm544, %v527, %v529
        %v547 = vsel %vm544, %v529, %v531
        %v548 = vsel %vm544, %v531, %v533
        %v549 = vsel %vm544, %v533, %v535
        %v550 = vsel %vm544, %v535, %v537
        %v551 = vsel %vm544, %v537, %v539
        %v552 = vsel %vm544, %v539, %v541
        %v553 = vsel %vm544, %v541, %v543
        %563 = vrot.lane.b32.xlu0 %v465, 125
        %v564 = vpop.permute.xlu0 %563
        %565 = vrot.lane.b32.xlu0 %v466, 125
        %v566 = vpop.permute.xlu0 %565
        %567 = vrot.lane.b32.xlu0 %v467, 125
        %v568 = vpop.permute.xlu0 %567
        %569 = vrot.lane.b32.xlu0 %v468, 125
        %v570 = vpop.permute.xlu0 %569
        %571 = vrot.lane.b32.xlu0 %v469, 125
        %v572 = vpop.permute.xlu0 %571
        %573 = vrot.lane.b32.xlu0 %v470, 125
        %v574 = vpop.permute.xlu0 %573
        %575 = vrot.lane.b32.xlu0 %v471, 125
        %v576 = vpop.permute.xlu0 %575
        %577 = vrot.lane.b32.xlu0 %v472, 125
        %v578 = vpop.permute.xlu0 %577
        %579 = vrot.lane.b32.xlu0 %v473, 125
        %v580 = vpop.permute.xlu0 %579
        %581 = vrot.lane.b32.xlu0 %v474, 125
        %v582 = vpop.permute.xlu0 %581
        %vm583 = vcmask 1022976
        %v584 = vsel %vm583, %v564, %v566
        %v585 = vsel %vm583, %v566, %v568
        %v586 = vsel %vm583, %v568, %v570
        %v587 = vsel %vm583, %v570, %v572
        %v588 = vsel %vm583, %v572, %v574
        %v589 = vsel %vm583, %v574, %v576
        %v590 = vsel %vm583, %v576, %v578
        %v591 = vsel %vm583, %v578, %v580
        %v592 = vsel %vm583, %v580, %v582
        %602 = vrot.lane.b32.xlu0 %v465, 124
        %v603 = vpop.permute.xlu0 %602
        %604 = vrot.lane.b32.xlu0 %v466, 124
        %v605 = vpop.permute.xlu0 %604
        %606 = vrot.lane.b32.xlu0 %v467, 124
        %v607 = vpop.permute.xlu0 %606
        %608 = vrot.lane.b32.xlu0 %v468, 124
        %v609 = vpop.permute.xlu0 %608
        %610 = vrot.lane.b32.xlu0 %v469, 124
        %v611 = vpop.permute.xlu0 %610
        %612 = vrot.lane.b32.xlu0 %v470, 124
        %v613 = vpop.permute.xlu0 %612
        %614 = vrot.lane.b32.xlu0 %v471, 124
        %v615 = vpop.permute.xlu0 %614
        %616 = vrot.lane.b32.xlu0 %v472, 124
        %v617 = vpop.permute.xlu0 %616
        %618 = vrot.lane.b32.xlu0 %v473, 124
        %v619 = vpop.permute.xlu0 %618
        %620 = vrot.lane.b32.xlu0 %v474, 124
        %v621 = vpop.permute.xlu0 %620
        %vm622 = vcmask 1014784
        %v623 = vsel %vm622, %v603, %v605
        %v624 = vsel %vm622, %v605, %v607
        %v625 = vsel %vm622, %v607, %v609
        %v626 = vsel %vm622, %v609, %v611
        %v627 = vsel %vm622, %v611, %v613
        %v628 = vsel %vm622, %v613, %v615
        %v629 = vsel %vm622, %v615, %v617
        %v630 = vsel %vm622, %v617, %v619
        %v631 = vsel %vm622, %v619, %v621
        %v641 = vld [vmem:[%s1] sm:$0xff]
        %643 = vrot.lane.b32.xlu0 %v641, 88
        %v644 = vpop.permute.xlu0 %643
        %645 = vrot.lane.b32.xlu0 %v465, 92
        %v646 = vpop.permute.xlu0 %645
        %647 = vrot.lane.b32.xlu0 %v466, 92
        %v648 = vpop.permute.xlu0 %647
        %649 = vrot.lane.b32.xlu0 %v467, 92
        %v650 = vpop.permute.xlu0 %649
        %651 = vrot.lane.b32.xlu0 %v468, 92
        %v652 = vpop.permute.xlu0 %651
        %653 = vrot.lane.b32.xlu0 %v469, 92
        %v654 = vpop.permute.xlu0 %653
        %655 = vrot.lane.b32.xlu0 %v470, 92
        %v656 = vpop.permute.xlu0 %655
        %657 = vrot.lane.b32.xlu0 %v471, 92
        %v658 = vpop.permute.xlu0 %657
        %659 = vrot.lane.b32.xlu0 %v472, 92
        %v660 = vpop.permute.xlu0 %659
        %661 = vrot.lane.b32.xlu0 %v473, 92
        %v662 = vpop.permute.xlu0 %661
        %663 = vrot.lane.b32.xlu0 %v474, 92
        %v664 = vpop.permute.xlu0 %663
        %665 = vrot.lane.b32.xlu0 %v506, 92
        %v666 = vpop.permute.xlu0 %665
        %667 = vrot.lane.b32.xlu0 %v507, 92
        %v668 = vpop.permute.xlu0 %667
        %669 = vrot.lane.b32.xlu0 %v508, 92
        %v670 = vpop.permute.xlu0 %669
        %671 = vrot.lane.b32.xlu0 %v509, 92
        %v672 = vpop.permute.xlu0 %671
        %673 = vrot.lane.b32.xlu0 %v510, 92
        %v674 = vpop.permute.xlu0 %673
        %675 = vrot.lane.b32.xlu0 %v511, 92
        %v676 = vpop.permute.xlu0 %675
        %677 = vrot.lane.b32.xlu0 %v512, 92
        %v678 = vpop.permute.xlu0 %677
        %679 = vrot.lane.b32.xlu0 %v513, 92
        %v680 = vpop.permute.xlu0 %679
        %681 = vrot.lane.b32.xlu0 %v514, 92
        %v682 = vpop.permute.xlu0 %681
        %683 = vrot.lane.b32.xlu0 %v504, 92
        %v684 = vpop.permute.xlu0 %683
        %685 = vrot.lane.b32.xlu0 %v545, 92
        %v686 = vpop.permute.xlu0 %685
        %687 = vrot.lane.b32.xlu0 %v546, 92
        %v688 = vpop.permute.xlu0 %687
        %689 = vrot.lane.b32.xlu0 %v547, 92
        %v690 = vpop.permute.xlu0 %689
        %691 = vrot.lane.b32.xlu0 %v548, 92
        %v692 = vpop.permute.xlu0 %691
        %693 = vrot.lane.b32.xlu0 %v549, 92
        %v694 = vpop.permute.xlu0 %693
        %695 = vrot.lane.b32.xlu0 %v550, 92
        %v696 = vpop.permute.xlu0 %695
        %697 = vrot.lane.b32.xlu0 %v551, 92
        %v698 = vpop.permute.xlu0 %697
        %699 = vrot.lane.b32.xlu0 %v552, 92
        %v700 = vpop.permute.xlu0 %699
        %701 = vrot.lane.b32.xlu0 %v553, 92
        %v702 = vpop.permute.xlu0 %701
        %703 = vrot.lane.b32.xlu0 %v543, 92
        %v704 = vpop.permute.xlu0 %703
        %705 = vrot.lane.b32.xlu0 %v584, 92
        %v706 = vpop.permute.xlu0 %705
        %707 = vrot.lane.b32.xlu0 %v585, 92
        %v708 = vpop.permute.xlu0 %707
        %709 = vrot.lane.b32.xlu0 %v586, 92
        %v710 = vpop.permute.xlu0 %709
        %711 = vrot.lane.b32.xlu0 %v587, 92
        %v712 = vpop.permute.xlu0 %711
        %713 = vrot.lane.b32.xlu0 %v588, 92
        %v714 = vpop.permute.xlu0 %713
        %715 = vrot.lane.b32.xlu0 %v589, 92
        %v716 = vpop.permute.xlu0 %715
        %717 = vrot.lane.b32.xlu0 %v590, 92
        %v718 = vpop.permute.xlu0 %717
        %719 = vrot.lane.b32.xlu0 %v591, 92
        %v720 = vpop.permute.xlu0 %719
        %721 = vrot.lane.b32.xlu0 %v592, 92
        %v722 = vpop.permute.xlu0 %721
        %723 = vrot.lane.b32.xlu0 %v582, 92
        %v724 = vpop.permute.xlu0 %723
        %725 = vrot.lane.b32.xlu0 %v623, 92
        %v726 = vpop.permute.xlu0 %725
        %727 = vrot.lane.b32.xlu0 %v624, 92
        %v728 = vpop.permute.xlu0 %727
        %729 = vrot.lane.b32.xlu0 %v625, 92
        %v730 = vpop.permute.xlu0 %729
        %731 = vrot.lane.b32.xlu0 %v626, 92
        %v732 = vpop.permute.xlu0 %731
        %733 = vrot.lane.b32.xlu0 %v627, 92
        %v734 = vpop.permute.xlu0 %733
        %735 = vrot.lane.b32.xlu0 %v628, 92
        %v736 = vpop.permute.xlu0 %735
        %737 = vrot.lane.b32.xlu0 %v629, 92
        %v738 = vpop.permute.xlu0 %737
        %739 = vrot.lane.b32.xlu0 %v630, 92
        %v740 = vpop.permute.xlu0 %739
        %741 = vrot.lane.b32.xlu0 %v631, 92
        %v742 = vpop.permute.xlu0 %741
        %743 = vrot.lane.b32.xlu0 %v621, 92
        %v744 = vpop.permute.xlu0 %743
        %vm745 = vcmask 752640
        %v746 = vsel %vm745, %v646, %v648
        %v747 = vsel %vm745, %v648, %v650
        %v748 = vsel %vm745, %v650, %v652
        %v749 = vsel %vm745, %v652, %v654
        %v750 = vsel %vm745, %v654, %v656
        %v751 = vsel %vm745, %v656, %v658
        %v752 = vsel %vm745, %v658, %v660
        %v753 = vsel %vm745, %v660, %v662
        %v754 = vsel %vm745, %v662, %v664
        %v755 = vsel %vm745, %v666, %v668
        %v756 = vsel %vm745, %v668, %v670
        %v757 = vsel %vm745, %v670, %v672
        %v758 = vsel %vm745, %v672, %v674
        %v759 = vsel %vm745, %v674, %v676
        %v760 = vsel %vm745, %v676, %v678
        %v761 = vsel %vm745, %v678, %v680
        %v762 = vsel %vm745, %v680, %v682
        %v763 = vsel %vm745, %v682, %v684
        %v764 = vsel %vm745, %v686, %v688
        %v765 = vsel %vm745, %v688, %v690
        %v766 = vsel %vm745, %v690, %v692
        %v767 = vsel %vm745, %v692, %v694
        %v768 = vsel %vm745, %v694, %v696
        %v769 = vsel %vm745, %v696, %v698
        %v770 = vsel %vm745, %v698, %v700
        %v771 = vsel %vm745, %v700, %v702
        %v772 = vsel %vm745, %v702, %v704
        %v773 = vsel %vm745, %v706, %v708
        %v774 = vsel %vm745, %v708, %v710
        %v775 = vsel %vm745, %v710, %v712
        %v776 = vsel %vm745, %v712, %v714
        %v777 = vsel %vm745, %v714, %v716
        %v778 = vsel %vm745, %v716, %v718
        %v779 = vsel %vm745, %v718, %v720
        %v780 = vsel %vm745, %v720, %v722
        %v781 = vsel %vm745, %v722, %v724
        %v782 = vsel %vm745, %v726, %v728
        %v783 = vsel %vm745, %v728, %v730
        %v784 = vsel %vm745, %v730, %v732
        %v785 = vsel %vm745, %v732, %v734
        %v786 = vsel %vm745, %v734, %v736
        %v787 = vsel %vm745, %v736, %v738
        %v788 = vsel %vm745, %v738, %v740
        %v789 = vsel %vm745, %v740, %v742
        %v790 = vsel %vm745, %v742, %v744
        %vm836 = vcmask 326656
        %v837 = vsel %vm836, %v644, 0
        %839 = vmatprep.subr.mxu0 0.0
        %840 = vmatpush1.msra.mxu0 0.0
        %841 = vmatprep.subr.mxu0 0.0
        %842 = vmatpush1.msra.mxu0 0.0
        %843 = vmatprep.subr.mxu0 0.0
        %844 = vmatpush1.msra.mxu0 0.0
        %845 = vmatprep.subr.mxu0 0.0
        %846 = vmatpush1.msra.mxu0 0.0
        %847 = vmatprep.subr.mxu0 0.0
        %848 = vmatpush1.msra.mxu0 0.0
        %849 = vmatprep.subr.mxu0 0.0
        %850 = vmatpush1.msra.mxu0 0.0
        %851 = vmatprep.subr.mxu0 0.0
        %852 = vmatpush1.msra.mxu0 0.0
        %853 = vmatprep.subr.mxu0 0.0
        %854 = vmatpush1.msra.mxu0 0.0
        %855 = vmatprep.subr.mxu0 0.0
        %856 = vmatpush1.msra.mxu0 0.0
        %857 = vmatprep.subr.mxu0 0.0
        %858 = vmatpush1.msra.mxu0 0.0
        %859 = vmatprep.subr.mxu0 0.0
        %860 = vmatpush1.msra.mxu0 0.0
        %861 = vmatprep.subr.mxu0 %v783
        %862 = vmatpush1.msra.mxu0 %v782
        %863 = vmatprep.subr.mxu0 %v774
        %864 = vmatpush1.msra.mxu0 %v773
        %865 = vmatprep.subr.mxu0 %v765
        %866 = vmatpush1.msra.mxu0 %v764
        %867 = vmatprep.subr.mxu0 %v756
        %868 = vmatpush1.msra.mxu0 %v755
        %869 = vmatprep.subr.mxu0 %v747
        %870 = vmatpush1.msra.mxu0 %v746
        %871 = vmatprep.subr.mxu0 0.0
        %872 = vmatpush2.msra.mxu0 0.0
        %873 = vmatprep.subr.mxu0 0.0
        %874 = vmatpush2.msra.mxu0 0.0
        %875 = vmatprep.subr.mxu0 0.0
        %876 = vmatpush2.msra.mxu0 0.0
        %877 = vmatprep.subr.mxu0 0.0
        %878 = vmatpush2.msra.mxu0 0.0
        %879 = vmatprep.subr.mxu0 0.0
        %880 = vmatpush2.msra.mxu0 0.0
        %881 = vmatprep.subr.mxu0 0.0
        %882 = vmatpush2.msra.mxu0 0.0
        %883 = vmatprep.subr.mxu0 0.0
        %884 = vmatpush2.msra.mxu0 0.0
        %885 = vmatprep.subr.mxu0 0.0
        %886 = vmatpush2.msra.mxu0 0.0
        %887 = vmatprep.subr.mxu0 0.0
        %888 = vmatpush2.msra.mxu0 0.0
        %889 = vmatprep.subr.mxu0 0.0
        %890 = vmatpush2.msra.mxu0 0.0
        %891 = vmatprep.subr.mxu0 0.0
        %892 = vmatpush2.msra.mxu0 0.0
        %893 = vmatprep.subr.mxu0 0.0
        %894 = vmatpush2.msra.mxu0 0.0
        %895 = vmatprep.subr.mxu0 0.0
        %896 = vmatpush2.msra.mxu0 0.0
        %897 = vmatprep.subr.mxu0 0.0
        %898 = vmatpush2.msra.mxu0 0.0
        %899 = vmatprep.subr.mxu0 0.0
        %900 = vmatpush2.msra.mxu0 0.0
        %901 = vmatprep.subr.mxu0 0.0
        %902 = vmatpush2.msra.mxu0 0.0
        %903 = vmatprep.mubr.f32.mxu0 0.0
        %904 = vmatmul.mubr.f32.gmra.mxu0 %v837
        %v905 = vpop.f32.mrf.mxu0
        %v906 = vadd.f32 0.0, %v905
        %v907 = vpop.f32.mrf.mxu0
        %v908 = vadd.f32 0.0, %v907
        %909 = vdwg.mxu0
        %910 = vmatprep.subr.mxu0 0.0
        %911 = vmatpush1.msra.mxu0 0.0
        %912 = vmatprep.subr.mxu0 0.0
        %913 = vmatpush1.msra.mxu0 0.0
        %914 = vmatprep.subr.mxu0 0.0
        %915 = vmatpush1.msra.mxu0 0.0
        %916 = vmatprep.subr.mxu0 0.0
        %917 = vmatpush1.msra.mxu0 0.0
        %918 = vmatprep.subr.mxu0 0.0
        %919 = vmatpush1.msra.mxu0 0.0
        %920 = vmatprep.subr.mxu0 0.0
        %921 = vmatpush1.msra.mxu0 0.0
        %922 = vmatprep.subr.mxu0 0.0
        %923 = vmatpush1.msra.mxu0 0.0
        %924 = vmatprep.subr.mxu0 0.0
        %925 = vmatpush1.msra.mxu0 0.0
        %926 = vmatprep.subr.mxu0 0.0
        %927 = vmatpush1.msra.mxu0 0.0
        %928 = vmatprep.subr.mxu0 0.0
        %929 = vmatpush1.msra.mxu0 0.0
        %930 = vmatprep.subr.mxu0 0.0
        %931 = vmatpush1.msra.mxu0 0.0
        %932 = vmatprep.subr.mxu0 %v785
        %933 = vmatpush1.msra.mxu0 %v784
        %934 = vmatprep.subr.mxu0 %v776
        %935 = vmatpush1.msra.mxu0 %v775
        %936 = vmatprep.subr.mxu0 %v767
        %937 = vmatpush1.msra.mxu0 %v766
        %938 = vmatprep.subr.mxu0 %v758
        %939 = vmatpush1.msra.mxu0 %v757
        %940 = vmatprep.subr.mxu0 %v749
        %941 = vmatpush1.msra.mxu0 %v748
        %942 = vmatprep.subr.mxu0 0.0
        %943 = vmatpush2.msra.mxu0 0.0
        %944 = vmatprep.subr.mxu0 0.0
        %945 = vmatpush2.msra.mxu0 0.0
        %946 = vmatprep.subr.mxu0 0.0
        %947 = vmatpush2.msra.mxu0 0.0
        %948 = vmatprep.subr.mxu0 0.0
        %949 = vmatpush2.msra.mxu0 0.0
        %950 = vmatprep.subr.mxu0 0.0
        %951 = vmatpush2.msra.mxu0 0.0
        %952 = vmatprep.subr.mxu0 0.0
        %953 = vmatpush2.msra.mxu0 0.0
        %954 = vmatprep.subr.mxu0 0.0
        %955 = vmatpush2.msra.mxu0 0.0
        %956 = vmatprep.subr.mxu0 0.0
        %957 = vmatpush2.msra.mxu0 0.0
        %958 = vmatprep.subr.mxu0 0.0
        %959 = vmatpush2.msra.mxu0 0.0
        %960 = vmatprep.subr.mxu0 0.0
        %961 = vmatpush2.msra.mxu0 0.0
        %962 = vmatprep.subr.mxu0 0.0
        %963 = vmatpush2.msra.mxu0 0.0
        %964 = vmatprep.subr.mxu0 0.0
        %965 = vmatpush2.msra.mxu0 0.0
        %966 = vmatprep.subr.mxu0 0.0
        %967 = vmatpush2.msra.mxu0 0.0
        %968 = vmatprep.subr.mxu0 0.0
        %969 = vmatpush2.msra.mxu0 0.0
        %970 = vmatprep.subr.mxu0 0.0
        %971 = vmatpush2.msra.mxu0 0.0
        %972 = vmatprep.subr.mxu0 0.0
        %973 = vmatpush2.msra.mxu0 0.0
        %974 = vmatprep.mubr.f32.mxu0 0.0
        %975 = vmatmul.mubr.f32.gmra.mxu0 %v837
        %v976 = vpop.f32.mrf.mxu0
        %v977 = vadd.f32 0.0, %v976
        %v978 = vpop.f32.mrf.mxu0
        %v979 = vadd.f32 0.0, %v978
        %980 = vdwg.mxu0
        %981 = vmatprep.subr.mxu0 0.0
        %982 = vmatpush1.msra.mxu0 0.0
        %983 = vmatprep.subr.mxu0 0.0
        %984 = vmatpush1.msra.mxu0 0.0
        %985 = vmatprep.subr.mxu0 0.0
        %986 = vmatpush1.msra.mxu0 0.0
        %987 = vmatprep.subr.mxu0 0.0
        %988 = vmatpush1.msra.mxu0 0.0
        %989 = vmatprep.subr.mxu0 0.0
        %990 = vmatpush1.msra.mxu0 0.0
        %991 = vmatprep.subr.mxu0 0.0
        %992 = vmatpush1.msra.mxu0 0.0
        %993 = vmatprep.subr.mxu0 0.0
        %994 = vmatpush1.msra.mxu0 0.0
        %995 = vmatprep.subr.mxu0 0.0
        %996 = vmatpush1.msra.mxu0 0.0
        %997 = vmatprep.subr.mxu0 0.0
        %998 = vmatpush1.msra.mxu0 0.0
        %999 = vmatprep.subr.mxu0 0.0
        %1000 = vmatpush1.msra.mxu0 0.0
        %1001 = vmatprep.subr.mxu0 0.0
        %1002 = vmatpush1.msra.mxu0 0.0
        %1003 = vmatprep.subr.mxu0 %v787
        %1004 = vmatpush1.msra.mxu0 %v786
        %1005 = vmatprep.subr.mxu0 %v778
        %1006 = vmatpush1.msra.mxu0 %v777
        %1007 = vmatprep.subr.mxu0 %v769
        %1008 = vmatpush1.msra.mxu0 %v768
        %1009 = vmatprep.subr.mxu0 %v760
        %1010 = vmatpush1.msra.mxu0 %v759
        %1011 = vmatprep.subr.mxu0 %v751
        %1012 = vmatpush1.msra.mxu0 %v750
        %1013 = vmatprep.subr.mxu0 0.0
        %1014 = vmatpush2.msra.mxu0 0.0
        %1015 = vmatprep.subr.mxu0 0.0
        %1016 = vmatpush2.msra.mxu0 0.0
        %1017 = vmatprep.subr.mxu0 0.0
        %1018 = vmatpush2.msra.mxu0 0.0
        %1019 = vmatprep.subr.mxu0 0.0
        %1020 = vmatpush2.msra.mxu0 0.0
        %1021 = vmatprep.subr.mxu0 0.0
        %1022 = vmatpush2.msra.mxu0 0.0
        %1023 = vmatprep.subr.mxu0 0.0
        %1024 = vmatpush2.msra.mxu0 0.0
        %1025 = vmatprep.subr.mxu0 0.0
        %1026 = vmatpush2.msra.mxu0 0.0
        %1027 = vmatprep.subr.mxu0 0.0
        %1028 = vmatpush2.msra.mxu0 0.0
        %1029 = vmatprep.subr.mxu0 0.0
        %1030 = vmatpush2.msra.mxu0 0.0
        %1031 = vmatprep.subr.mxu0 0.0
        %1032 = vmatpush2.msra.mxu0 0.0
        %1033 = vmatprep.subr.mxu0 0.0
        %1034 = vmatpush2.msra.mxu0 0.0
        %1035 = vmatprep.subr.mxu0 0.0
        %1036 = vmatpush2.msra.mxu0 0.0
        %1037 = vmatprep.subr.mxu0 0.0
        %1038 = vmatpush2.msra.mxu0 0.0
        %1039 = vmatprep.subr.mxu0 0.0
        %1040 = vmatpush2.msra.mxu0 0.0
        %1041 = vmatprep.subr.mxu0 0.0
        %1042 = vmatpush2.msra.mxu0 0.0
        %1043 = vmatprep.subr.mxu0 0.0
        %1044 = vmatpush2.msra.mxu0 0.0
        %1045 = vmatprep.mubr.f32.mxu0 0.0
        %1046 = vmatmul.mubr.f32.gmra.mxu0 %v837
        %v1047 = vpop.f32.mrf.mxu0
        %v1048 = vadd.f32 0.0, %v1047
        %v1049 = vpop.f32.mrf.mxu0
        %v1050 = vadd.f32 0.0, %v1049
        %1051 = vdwg.mxu0
        %1052 = vmatprep.subr.mxu0 0.0
        %1053 = vmatpush1.msra.mxu0 0.0
        %1054 = vmatprep.subr.mxu0 0.0
        %1055 = vmatpush1.msra.mxu0 0.0
        %1056 = vmatprep.subr.mxu0 0.0
        %1057 = vmatpush1.msra.mxu0 0.0
        %1058 = vmatprep.subr.mxu0 0.0
        %1059 = vmatpush1.msra.mxu0 0.0
        %1060 = vmatprep.subr.mxu0 0.0
        %1061 = vmatpush1.msra.mxu0 0.0
        %1062 = vmatprep.subr.mxu0 0.0
        %1063 = vmatpush1.msra.mxu0 0.0
        %1064 = vmatprep.subr.mxu0 0.0
        %1065 = vmatpush1.msra.mxu0 0.0
        %1066 = vmatprep.subr.mxu0 0.0
        %1067 = vmatpush1.msra.mxu0 0.0
        %1068 = vmatprep.subr.mxu0 0.0
        %1069 = vmatpush1.msra.mxu0 0.0
        %1070 = vmatprep.subr.mxu0 0.0
        %1071 = vmatpush1.msra.mxu0 0.0
        %1072 = vmatprep.subr.mxu0 0.0
        %1073 = vmatpush1.msra.mxu0 0.0
        %1074 = vmatprep.subr.mxu0 %v789
        %1075 = vmatpush1.msra.mxu0 %v788
        %1076 = vmatprep.subr.mxu0 %v780
        %1077 = vmatpush1.msra.mxu0 %v779
        %1078 = vmatprep.subr.mxu0 %v771
        %1079 = vmatpush1.msra.mxu0 %v770
        %1080 = vmatprep.subr.mxu0 %v762
        %1081 = vmatpush1.msra.mxu0 %v761
        %1082 = vmatprep.subr.mxu0 %v753
        %1083 = vmatpush1.msra.mxu0 %v752
        %1084 = vmatprep.subr.mxu0 0.0
        %1085 = vmatpush2.msra.mxu0 0.0
        %1086 = vmatprep.subr.mxu0 0.0
        %1087 = vmatpush2.msra.mxu0 0.0
        %1088 = vmatprep.subr.mxu0 0.0
        %1089 = vmatpush2.msra.mxu0 0.0
        %1090 = vmatprep.subr.mxu0 0.0
        %1091 = vmatpush2.msra.mxu0 0.0
        %1092 = vmatprep.subr.mxu0 0.0
        %1093 = vmatpush2.msra.mxu0 0.0
        %1094 = vmatprep.subr.mxu0 0.0
        %1095 = vmatpush2.msra.mxu0 0.0
        %1096 = vmatprep.subr.mxu0 0.0
        %1097 = vmatpush2.msra.mxu0 0.0
        %1098 = vmatprep.subr.mxu0 0.0
        %1099 = vmatpush2.msra.mxu0 0.0
        %1100 = vmatprep.subr.mxu0 0.0
        %1101 = vmatpush2.msra.mxu0 0.0
        %1102 = vmatprep.subr.mxu0 0.0
        %1103 = vmatpush2.msra.mxu0 0.0
        %1104 = vmatprep.subr.mxu0 0.0
        %1105 = vmatpush2.msra.mxu0 0.0
        %1106 = vmatprep.subr.mxu0 0.0
        %1107 = vmatpush2.msra.mxu0 0.0
        %1108 = vmatprep.subr.mxu0 0.0
        %1109 = vmatpush2.msra.mxu0 0.0
        %1110 = vmatprep.subr.mxu0 0.0
        %1111 = vmatpush2.msra.mxu0 0.0
        %1112 = vmatprep.subr.mxu0 0.0
        %1113 = vmatpush2.msra.mxu0 0.0
        %1114 = vmatprep.subr.mxu0 0.0
        %1115 = vmatpush2.msra.mxu0 0.0
        %1116 = vmatprep.mubr.f32.mxu0 0.0
        %1117 = vmatmul.mubr.f32.gmra.mxu0 %v837
        %v1118 = vpop.f32.mrf.mxu0
        %v1119 = vadd.f32 0.0, %v1118
        %v1120 = vpop.f32.mrf.mxu0
        %v1121 = vadd.f32 0.0, %v1120
        %1122 = vdwg.mxu0
        %1123 = vmatprep.subr.mxu0 0.0
        %1124 = vmatpush1.msra.mxu0 0.0
        %1125 = vmatprep.subr.mxu0 0.0
        %1126 = vmatpush1.msra.mxu0 0.0
        %1127 = vmatprep.subr.mxu0 0.0
        %1128 = vmatpush1.msra.mxu0 0.0
        %1129 = vmatprep.subr.mxu0 0.0
        %1130 = vmatpush1.msra.mxu0 0.0
        %1131 = vmatprep.subr.mxu0 0.0
        %1132 = vmatpush1.msra.mxu0 0.0
        %1133 = vmatprep.subr.mxu0 0.0
        %1134 = vmatpush1.msra.mxu0 0.0
        %1135 = vmatprep.subr.mxu0 0.0
        %1136 = vmatpush1.msra.mxu0 0.0
        %1137 = vmatprep.subr.mxu0 0.0
        %1138 = vmatpush1.msra.mxu0 0.0
        %1139 = vmatprep.subr.mxu0 0.0
        %1140 = vmatpush1.msra.mxu0 0.0
        %1141 = vmatprep.subr.mxu0 0.0
        %1142 = vmatpush1.msra.mxu0 0.0
        %1143 = vmatprep.subr.mxu0 0.0
        %1144 = vmatpush1.msra.mxu0 0.0
        %1145 = vmatprep.subr.mxu0 0.0
        %1146 = vmatpush1.msra.mxu0 %v790
        %1147 = vmatprep.subr.mxu0 0.0
        %1148 = vmatpush1.msra.mxu0 %v781
        %1149 = vmatprep.subr.mxu0 0.0
        %1150 = vmatpush1.msra.mxu0 %v772
        %1151 = vmatprep.subr.mxu0 0.0
        %1152 = vmatpush1.msra.mxu0 %v763
        %1153 = vmatprep.subr.mxu0 0.0
        %1154 = vmatpush1.msra.mxu0 %v754
        %1155 = vmatprep.subr.mxu0 0.0
        %1156 = vmatpush2.msra.mxu0 0.0
        %1157 = vmatprep.subr.mxu0 0.0
        %1158 = vmatpush2.msra.mxu0 0.0
        %1159 = vmatprep.subr.mxu0 0.0
        %1160 = vmatpush2.msra.mxu0 0.0
        %1161 = vmatprep.subr.mxu0 0.0
        %1162 = vmatpush2.msra.mxu0 0.0
        %1163 = vmatprep.subr.mxu0 0.0
        %1164 = vmatpush2.msra.mxu0 0.0
        %1165 = vmatprep.subr.mxu0 0.0
        %1166 = vmatpush2.msra.mxu0 0.0
        %1167 = vmatprep.subr.mxu0 0.0
        %1168 = vmatpush2.msra.mxu0 0.0
        %1169 = vmatprep.subr.mxu0 0.0
        %1170 = vmatpush2.msra.mxu0 0.0
        %1171 = vmatprep.subr.mxu0 0.0
        %1172 = vmatpush2.msra.mxu0 0.0
        %1173 = vmatprep.subr.mxu0 0.0
        %1174 = vmatpush2.msra.mxu0 0.0
        %1175 = vmatprep.subr.mxu0 0.0
        %1176 = vmatpush2.msra.mxu0 0.0
        %1177 = vmatprep.subr.mxu0 0.0
        %1178 = vmatpush2.msra.mxu0 0.0
        %1179 = vmatprep.subr.mxu0 0.0
        %1180 = vmatpush2.msra.mxu0 0.0
        %1181 = vmatprep.subr.mxu0 0.0
        %1182 = vmatpush2.msra.mxu0 0.0
        %1183 = vmatprep.subr.mxu0 0.0
        %1184 = vmatpush2.msra.mxu0 0.0
        %1185 = vmatprep.subr.mxu0 0.0
        %1186 = vmatpush2.msra.mxu0 0.0
        %1187 = vmatprep.mubr.f32.mxu0 0.0
        %1188 = vmatmul.mubr.f32.gmra.mxu0 %v837
        %v1189 = vpop.f32.mrf.mxu0
        %v1190 = vadd.f32 0.0, %v1189
        %v1191 = vpop.f32.mrf.mxu0
        %1192 = vdwg.mxu0
        %v1193 = vsel %vm836, %v641, 0
        %1195 = vmatprep.subr.mxu0 0.0
        %1196 = vmatpush1.msra.mxu0 0.0
        %1197 = vmatprep.subr.mxu0 0.0
        %1198 = vmatpush1.msra.mxu0 0.0
        %1199 = vmatprep.subr.mxu0 0.0
        %1200 = vmatpush1.msra.mxu0 0.0
        %1201 = vmatprep.subr.mxu0 0.0
        %1202 = vmatpush1.msra.mxu0 0.0
        %1203 = vmatprep.subr.mxu0 0.0
        %1204 = vmatpush1.msra.mxu0 0.0
        %1205 = vmatprep.subr.mxu0 0.0
        %1206 = vmatpush1.msra.mxu0 0.0
        %1207 = vmatprep.subr.mxu0 0.0
        %1208 = vmatpush1.msra.mxu0 0.0
        %1209 = vmatprep.subr.mxu0 0.0
        %1210 = vmatpush1.msra.mxu0 0.0
        %1211 = vmatprep.subr.mxu0 0.0
        %1212 = vmatpush1.msra.mxu0 0.0
        %1213 = vmatprep.subr.mxu0 0.0
        %1214 = vmatpush1.msra.mxu0 0.0
        %1215 = vmatprep.subr.mxu0 0.0
        %1216 = vmatpush1.msra.mxu0 0.0
        %1217 = vmatprep.subr.mxu0 %v624
        %1218 = vmatpush1.msra.mxu0 %v623
        %1219 = vmatprep.subr.mxu0 %v585
        %1220 = vmatpush1.msra.mxu0 %v584
        %1221 = vmatprep.subr.mxu0 %v546
        %1222 = vmatpush1.msra.mxu0 %v545
        %1223 = vmatprep.subr.mxu0 %v507
        %1224 = vmatpush1.msra.mxu0 %v506
        %1225 = vmatprep.subr.mxu0 %v466
        %1226 = vmatpush1.msra.mxu0 %v465
        %1227 = vmatprep.subr.mxu0 0.0
        %1228 = vmatpush2.msra.mxu0 0.0
        %1229 = vmatprep.subr.mxu0 0.0
        %1230 = vmatpush2.msra.mxu0 0.0
        %1231 = vmatprep.subr.mxu0 0.0
        %1232 = vmatpush2.msra.mxu0 0.0
        %1233 = vmatprep.subr.mxu0 0.0
        %1234 = vmatpush2.msra.mxu0 0.0
        %1235 = vmatprep.subr.mxu0 0.0
        %1236 = vmatpush2.msra.mxu0 0.0
        %1237 = vmatprep.subr.mxu0 0.0
        %1238 = vmatpush2.msra.mxu0 0.0
        %1239 = vmatprep.subr.mxu0 0.0
        %1240 = vmatpush2.msra.mxu0 0.0
        %1241 = vmatprep.subr.mxu0 0.0
        %1242 = vmatpush2.msra.mxu0 0.0
        %1243 = vmatprep.subr.mxu0 0.0
        %1244 = vmatpush2.msra.mxu0 0.0
        %1245 = vmatprep.subr.mxu0 0.0
        %1246 = vmatpush2.msra.mxu0 0.0
        %1247 = vmatprep.subr.mxu0 0.0
        %1248 = vmatpush2.msra.mxu0 0.0
        %1249 = vmatprep.subr.mxu0 0.0
        %1250 = vmatpush2.msra.mxu0 0.0
        %1251 = vmatprep.subr.mxu0 0.0
        %1252 = vmatpush2.msra.mxu0 0.0
        %1253 = vmatprep.subr.mxu0 0.0
        %1254 = vmatpush2.msra.mxu0 0.0
        %1255 = vmatprep.subr.mxu0 0.0
        %1256 = vmatpush2.msra.mxu0 0.0
        %1257 = vmatprep.subr.mxu0 0.0
        %1258 = vmatpush2.msra.mxu0 0.0
        %1259 = vmatprep.mubr.f32.mxu0 0.0
        %1260 = vmatmul.mubr.f32.gmra.mxu0 %v1193
        %v1261 = vpop.f32.mrf.mxu0
        %v1262 = vadd.f32 %v906, %v1261
        %v1263 = vpop.f32.mrf.mxu0
        %v1264 = vadd.f32 %v908, %v1263
        %1265 = vdwg.mxu0
        %1266 = vmatprep.subr.mxu0 0.0
        %1267 = vmatpush1.msra.mxu0 0.0
        %1268 = vmatprep.subr.mxu0 0.0
        %1269 = vmatpush1.msra.mxu0 0.0
        %1270 = vmatprep.subr.mxu0 0.0
        %1271 = vmatpush1.msra.mxu0 0.0
        %1272 = vmatprep.subr.mxu0 0.0
        %1273 = vmatpush1.msra.mxu0 0.0
        %1274 = vmatprep.subr.mxu0 0.0
        %1275 = vmatpush1.msra.mxu0 0.0
        %1276 = vmatprep.subr.mxu0 0.0
        %1277 = vmatpush1.msra.mxu0 0.0
        %1278 = vmatprep.subr.mxu0 0.0
        %1279 = vmatpush1.msra.mxu0 0.0
        %1280 = vmatprep.subr.mxu0 0.0
        %1281 = vmatpush1.msra.mxu0 0.0
        %1282 = vmatprep.subr.mxu0 0.0
        %1283 = vmatpush1.msra.mxu0 0.0
        %1284 = vmatprep.subr.mxu0 0.0
        %1285 = vmatpush1.msra.mxu0 0.0
        %1286 = vmatprep.subr.mxu0 0.0
        %1287 = vmatpush1.msra.mxu0 0.0
        %1288 = vmatprep.subr.mxu0 %v626
        %1289 = vmatpush1.msra.mxu0 %v625
        %1290 = vmatprep.subr.mxu0 %v587
        %1291 = vmatpush1.msra.mxu0 %v586
        %1292 = vmatprep.subr.mxu0 %v548
        %1293 = vmatpush1.msra.mxu0 %v547
        %1294 = vmatprep.subr.mxu0 %v509
        %1295 = vmatpush1.msra.mxu0 %v508
        %1296 = vmatprep.subr.mxu0 %v468
        %1297 = vmatpush1.msra.mxu0 %v467
        %1298 = vmatprep.subr.mxu0 0.0
        %1299 = vmatpush2.msra.mxu0 0.0
        %1300 = vmatprep.subr.mxu0 0.0
        %1301 = vmatpush2.msra.mxu0 0.0
        %1302 = vmatprep.subr.mxu0 0.0
        %1303 = vmatpush2.msra.mxu0 0.0
        %1304 = vmatprep.subr.mxu0 0.0
        %1305 = vmatpush2.msra.mxu0 0.0
        %1306 = vmatprep.subr.mxu0 0.0
        %1307 = vmatpush2.msra.mxu0 0.0
        %1308 = vmatprep.subr.mxu0 0.0
        %1309 = vmatpush2.msra.mxu0 0.0
        %1310 = vmatprep.subr.mxu0 0.0
        %1311 = vmatpush2.msra.mxu0 0.0
        %1312 = vmatprep.subr.mxu0 0.0
        %1313 = vmatpush2.msra.mxu0 0.0
        %1314 = vmatprep.subr.mxu0 0.0
        %1315 = vmatpush2.msra.mxu0 0.0
        %1316 = vmatprep.subr.mxu0 0.0
        %1317 = vmatpush2.msra.mxu0 0.0
        %1318 = vmatprep.subr.mxu0 0.0
        %1319 = vmatpush2.msra.mxu0 0.0
        %1320 = vmatprep.subr.mxu0 0.0
        %1321 = vmatpush2.msra.mxu0 0.0
        %1322 = vmatprep.subr.mxu0 0.0
        %1323 = vmatpush2.msra.mxu0 0.0
        %1324 = vmatprep.subr.mxu0 0.0
        %1325 = vmatpush2.msra.mxu0 0.0
        %1326 = vmatprep.subr.mxu0 0.0
        %1327 = vmatpush2.msra.mxu0 0.0
        %1328 = vmatprep.subr.mxu0 0.0
        %1329 = vmatpush2.msra.mxu0 0.0
        %1330 = vmatprep.mubr.f32.mxu0 0.0
        %1331 = vmatmul.mubr.f32.gmra.mxu0 %v1193
        %v1332 = vpop.f32.mrf.mxu0
        %v1333 = vadd.f32 %v977, %v1332
        %v1334 = vpop.f32.mrf.mxu0
        %v1335 = vadd.f32 %v979, %v1334
        %1336 = vdwg.mxu0
        %1337 = vmatprep.subr.mxu0 0.0
        %1338 = vmatpush1.msra.mxu0 0.0
        %1339 = vmatprep.subr.mxu0 0.0
        %1340 = vmatpush1.msra.mxu0 0.0
        %1341 = vmatprep.subr.mxu0 0.0
        %1342 = vmatpush1.msra.mxu0 0.0
        %1343 = vmatprep.subr.mxu0 0.0
        %1344 = vmatpush1.msra.mxu0 0.0
        %1345 = vmatprep.subr.mxu0 0.0
        %1346 = vmatpush1.msra.mxu0 0.0
        %1347 = vmatprep.subr.mxu0 0.0
        %1348 = vmatpush1.msra.mxu0 0.0
        %1349 = vmatprep.subr.mxu0 0.0
        %1350 = vmatpush1.msra.mxu0 0.0
        %1351 = vmatprep.subr.mxu0 0.0
        %1352 = vmatpush1.msra.mxu0 0.0
        %1353 = vmatprep.subr.mxu0 0.0
        %1354 = vmatpush1.msra.mxu0 0.0
        %1355 = vmatprep.subr.mxu0 0.0
        %1356 = vmatpush1.msra.mxu0 0.0
        %1357 = vmatprep.subr.mxu0 0.0
        %1358 = vmatpush1.msra.mxu0 0.0
        %1359 = vmatprep.subr.mxu0 %v628
        %1360 = vmatpush1.msra.mxu0 %v627
        %1361 = vmatprep.subr.mxu0 %v589
        %1362 = vmatpush1.msra.mxu0 %v588
        %1363 = vmatprep.subr.mxu0 %v550
        %1364 = vmatpush1.msra.mxu0 %v549
        %1365 = vmatprep.subr.mxu0 %v511
        %1366 = vmatpush1.msra.mxu0 %v510
        %1367 = vmatprep.subr.mxu0 %v470
        %1368 = vmatpush1.msra.mxu0 %v469
        %1369 = vmatprep.subr.mxu0 0.0
        %1370 = vmatpush2.msra.mxu0 0.0
        %1371 = vmatprep.subr.mxu0 0.0
        %1372 = vmatpush2.msra.mxu0 0.0
        %1373 = vmatprep.subr.mxu0 0.0
        %1374 = vmatpush2.msra.mxu0 0.0
        %1375 = vmatprep.subr.mxu0 0.0
        %1376 = vmatpush2.msra.mxu0 0.0
        %1377 = vmatprep.subr.mxu0 0.0
        %1378 = vmatpush2.msra.mxu0 0.0
        %1379 = vmatprep.subr.mxu0 0.0
        %1380 = vmatpush2.msra.mxu0 0.0
        %1381 = vmatprep.subr.mxu0 0.0
        %1382 = vmatpush2.msra.mxu0 0.0
        %1383 = vmatprep.subr.mxu0 0.0
        %1384 = vmatpush2.msra.mxu0 0.0
        %1385 = vmatprep.subr.mxu0 0.0
        %1386 = vmatpush2.msra.mxu0 0.0
        %1387 = vmatprep.subr.mxu0 0.0
        %1388 = vmatpush2.msra.mxu0 0.0
        %1389 = vmatprep.subr.mxu0 0.0
        %1390 = vmatpush2.msra.mxu0 0.0
        %1391 = vmatprep.subr.mxu0 0.0
        %1392 = vmatpush2.msra.mxu0 0.0
        %1393 = vmatprep.subr.mxu0 0.0
        %1394 = vmatpush2.msra.mxu0 0.0
        %1395 = vmatprep.subr.mxu0 0.0
        %1396 = vmatpush2.msra.mxu0 0.0
        %1397 = vmatprep.subr.mxu0 0.0
        %1398 = vmatpush2.msra.mxu0 0.0
        %1399 = vmatprep.subr.mxu0 0.0
        %1400 = vmatpush2.msra.mxu0 0.0
        %1401 = vmatprep.mubr.f32.mxu0 0.0
        %1402 = vmatmul.mubr.f32.gmra.mxu0 %v1193
        %v1403 = vpop.f32.mrf.mxu0
        %v1404 = vadd.f32 %v1048, %v1403
        %v1405 = vpop.f32.mrf.mxu0
        %v1406 = vadd.f32 %v1050, %v1405
        %1407 = vdwg.mxu0
        %1408 = vmatprep.subr.mxu0 0.0
        %1409 = vmatpush1.msra.mxu0 0.0
        %1410 = vmatprep.subr.mxu0 0.0
        %1411 = vmatpush1.msra.mxu0 0.0
        %1412 = vmatprep.subr.mxu0 0.0
        %1413 = vmatpush1.msra.mxu0 0.0
        %1414 = vmatprep.subr.mxu0 0.0
        %1415 = vmatpush1.msra.mxu0 0.0
        %1416 = vmatprep.subr.mxu0 0.0
        %1417 = vmatpush1.msra.mxu0 0.0
        %1418 = vmatprep.subr.mxu0 0.0
        %1419 = vmatpush1.msra.mxu0 0.0
        %1420 = vmatprep.subr.mxu0 0.0
        %1421 = vmatpush1.msra.mxu0 0.0
        %1422 = vmatprep.subr.mxu0 0.0
        %1423 = vmatpush1.msra.mxu0 0.0
        %1424 = vmatprep.subr.mxu0 0.0
        %1425 = vmatpush1.msra.mxu0 0.0
        %1426 = vmatprep.subr.mxu0 0.0
        %1427 = vmatpush1.msra.mxu0 0.0
        %1428 = vmatprep.subr.mxu0 0.0
        %1429 = vmatpush1.msra.mxu0 0.0
        %1430 = vmatprep.subr.mxu0 %v630
        %1431 = vmatpush1.msra.mxu0 %v629
        %1432 = vmatprep.subr.mxu0 %v591
        %1433 = vmatpush1.msra.mxu0 %v590
        %1434 = vmatprep.subr.mxu0 %v552
        %1435 = vmatpush1.msra.mxu0 %v551
        %1436 = vmatprep.subr.mxu0 %v513
        %1437 = vmatpush1.msra.mxu0 %v512
        %1438 = vmatprep.subr.mxu0 %v472
        %1439 = vmatpush1.msra.mxu0 %v471
        %1440 = vmatprep.subr.mxu0 0.0
        %1441 = vmatpush2.msra.mxu0 0.0
        %1442 = vmatprep.subr.mxu0 0.0
        %1443 = vmatpush2.msra.mxu0 0.0
        %1444 = vmatprep.subr.mxu0 0.0
        %1445 = vmatpush2.msra.mxu0 0.0
        %1446 = vmatprep.subr.mxu0 0.0
        %1447 = vmatpush2.msra.mxu0 0.0
        %1448 = vmatprep.subr.mxu0 0.0
        %1449 = vmatpush2.msra.mxu0 0.0
        %1450 = vmatprep.subr.mxu0 0.0
        %1451 = vmatpush2.msra.mxu0 0.0
        %1452 = vmatprep.subr.mxu0 0.0
        %1453 = vmatpush2.msra.mxu0 0.0
        %1454 = vmatprep.subr.mxu0 0.0
        %1455 = vmatpush2.msra.mxu0 0.0
        %1456 = vmatprep.subr.mxu0 0.0
        %1457 = vmatpush2.msra.mxu0 0.0
        %1458 = vmatprep.subr.mxu0 0.0
        %1459 = vmatpush2.msra.mxu0 0.0
        %1460 = vmatprep.subr.mxu0 0.0
        %1461 = vmatpush2.msra.mxu0 0.0
        %1462 = vmatprep.subr.mxu0 0.0
        %1463 = vmatpush2.msra.mxu0 0.0
        %1464 = vmatprep.subr.mxu0 0.0
        %1465 = vmatpush2.msra.mxu0 0.0
        %1466 = vmatprep.subr.mxu0 0.0
        %1467 = vmatpush2.msra.mxu0 0.0
        %1468 = vmatprep.subr.mxu0 0.0
        %1469 = vmatpush2.msra.mxu0 0.0
        %1470 = vmatprep.subr.mxu0 0.0
        %1471 = vmatpush2.msra.mxu0 0.0
        %1472 = vmatprep.mubr.f32.mxu0 0.0
        %1473 = vmatmul.mubr.f32.gmra.mxu0 %v1193
        %v1474 = vpop.f32.mrf.mxu0
        %v1475 = vadd.f32 %v1119, %v1474
        %v1476 = vpop.f32.mrf.mxu0
        %v1477 = vadd.f32 %v1121, %v1476
        %1478 = vdwg.mxu0
        %1479 = vmatprep.subr.mxu0 0.0
        %1480 = vmatpush1.msra.mxu0 0.0
        %1481 = vmatprep.subr.mxu0 0.0
        %1482 = vmatpush1.msra.mxu0 0.0
        %1483 = vmatprep.subr.mxu0 0.0
        %1484 = vmatpush1.msra.mxu0 0.0
        %1485 = vmatprep.subr.mxu0 0.0
        %1486 = vmatpush1.msra.mxu0 0.0
        %1487 = vmatprep.subr.mxu0 0.0
        %1488 = vmatpush1.msra.mxu0 0.0
        %1489 = vmatprep.subr.mxu0 0.0
        %1490 = vmatpush1.msra.mxu0 0.0
        %1491 = vmatprep.subr.mxu0 0.0
        %1492 = vmatpush1.msra.mxu0 0.0
        %1493 = vmatprep.subr.mxu0 0.0
        %1494 = vmatpush1.msra.mxu0 0.0
        %1495 = vmatprep.subr.mxu0 0.0
        %1496 = vmatpush1.msra.mxu0 0.0
        %1497 = vmatprep.subr.mxu0 0.0
        %1498 = vmatpush1.msra.mxu0 0.0
        %1499 = vmatprep.subr.mxu0 0.0
        %1500 = vmatpush1.msra.mxu0 0.0
        %1501 = vmatprep.subr.mxu0 0.0
        %1502 = vmatpush1.msra.mxu0 %v631
        %1503 = vmatprep.subr.mxu0 0.0
        %1504 = vmatpush1.msra.mxu0 %v592
        %1505 = vmatprep.subr.mxu0 0.0
        %1506 = vmatpush1.msra.mxu0 %v553
        %1507 = vmatprep.subr.mxu0 0.0
        %1508 = vmatpush1.msra.mxu0 %v514
        %1509 = vmatprep.subr.mxu0 0.0
        %1510 = vmatpush1.msra.mxu0 %v473
        %1511 = vmatprep.subr.mxu0 0.0
        %1512 = vmatpush2.msra.mxu0 0.0
        %1513 = vmatprep.subr.mxu0 0.0
        %1514 = vmatpush2.msra.mxu0 0.0
        %1515 = vmatprep.subr.mxu0 0.0
        %1516 = vmatpush2.msra.mxu0 0.0
        %1517 = vmatprep.subr.mxu0 0.0
        %1518 = vmatpush2.msra.mxu0 0.0
        %1519 = vmatprep.subr.mxu0 0.0
        %1520 = vmatpush2.msra.mxu0 0.0
        %1521 = vmatprep.subr.mxu0 0.0
        %1522 = vmatpush2.msra.mxu0 0.0
        %1523 = vmatprep.subr.mxu0 0.0
        %1524 = vmatpush2.msra.mxu0 0.0
        %1525 = vmatprep.subr.mxu0 0.0
        %1526 = vmatpush2.msra.mxu0 0.0
        %1527 = vmatprep.subr.mxu0 0.0
        %1528 = vmatpush2.msra.mxu0 0.0
        %1529 = vmatprep.subr.mxu0 0.0
        %1530 = vmatpush2.msra.mxu0 0.0
        %1531 = vmatprep.subr.mxu0 0.0
        %1532 = vmatpush2.msra.mxu0 0.0
        %1533 = vmatprep.subr.mxu0 0.0
        %1534 = vmatpush2.msra.mxu0 0.0
        %1535 = vmatprep.subr.mxu0 0.0
        %1536 = vmatpush2.msra.mxu0 0.0
        %1537 = vmatprep.subr.mxu0 0.0
        %1538 = vmatpush2.msra.mxu0 0.0
        %1539 = vmatprep.subr.mxu0 0.0
        %1540 = vmatpush2.msra.mxu0 0.0
        %1541 = vmatprep.subr.mxu0 0.0
        %1542 = vmatpush2.msra.mxu0 0.0
        %1543 = vmatprep.mubr.f32.mxu0 0.0
        %1544 = vmatmul.mubr.f32.gmra.mxu0 %v1193
        %v1545 = vpop.f32.mrf.mxu0
        %v1546 = vadd.f32 %v1190, %v1545
        %v1547 = vpop.f32.mrf.mxu0
        %1548 = vdwg.mxu0
        %1549 = vrot.lane.b32.xlu0 %v641, 48
        %v1550 = vpop.permute.xlu0 %1549
        %1551 = vrot.lane.b32.xlu0 %v465, 56
        %v1552 = vpop.permute.xlu0 %1551
        %1553 = vrot.lane.b32.xlu0 %v466, 56
        %v1554 = vpop.permute.xlu0 %1553
        %1555 = vrot.lane.b32.xlu0 %v467, 56
        %v1556 = vpop.permute.xlu0 %1555
        %1557 = vrot.lane.b32.xlu0 %v468, 56
        %v1558 = vpop.permute.xlu0 %1557
        %1559 = vrot.lane.b32.xlu0 %v469, 56
        %v1560 = vpop.permute.xlu0 %1559
        %1561 = vrot.lane.b32.xlu0 %v470, 56
        %v1562 = vpop.permute.xlu0 %1561
        %1563 = vrot.lane.b32.xlu0 %v471, 56
        %v1564 = vpop.permute.xlu0 %1563
        %1565 = vrot.lane.b32.xlu0 %v472, 56
        %v1566 = vpop.permute.xlu0 %1565
        %1567 = vrot.lane.b32.xlu0 %v473, 56
        %v1568 = vpop.permute.xlu0 %1567
        %1569 = vrot.lane.b32.xlu0 %v474, 56
        %v1570 = vpop.permute.xlu0 %1569
        %1571 = vrot.lane.b32.xlu0 %v506, 56
        %v1572 = vpop.permute.xlu0 %1571
        %1573 = vrot.lane.b32.xlu0 %v507, 56
        %v1574 = vpop.permute.xlu0 %1573
        %1575 = vrot.lane.b32.xlu0 %v508, 56
        %v1576 = vpop.permute.xlu0 %1575
        %1577 = vrot.lane.b32.xlu0 %v509, 56
        %v1578 = vpop.permute.xlu0 %1577
        %1579 = vrot.lane.b32.xlu0 %v510, 56
        %v1580 = vpop.permute.xlu0 %1579
        %1581 = vrot.lane.b32.xlu0 %v511, 56
        %v1582 = vpop.permute.xlu0 %1581
        %1583 = vrot.lane.b32.xlu0 %v512, 56
        %v1584 = vpop.permute.xlu0 %1583
        %1585 = vrot.lane.b32.xlu0 %v513, 56
        %v1586 = vpop.permute.xlu0 %1585
        %1587 = vrot.lane.b32.xlu0 %v514, 56
        %v1588 = vpop.permute.xlu0 %1587
        %1589 = vrot.lane.b32.xlu0 %v504, 56
        %v1590 = vpop.permute.xlu0 %1589
        %1591 = vrot.lane.b32.xlu0 %v545, 56
        %v1592 = vpop.permute.xlu0 %1591
        %1593 = vrot.lane.b32.xlu0 %v546, 56
        %v1594 = vpop.permute.xlu0 %1593
        %1595 = vrot.lane.b32.xlu0 %v547, 56
        %v1596 = vpop.permute.xlu0 %1595
        %1597 = vrot.lane.b32.xlu0 %v548, 56
        %v1598 = vpop.permute.xlu0 %1597
        %1599 = vrot.lane.b32.xlu0 %v549, 56
        %v1600 = vpop.permute.xlu0 %1599
        %1601 = vrot.lane.b32.xlu0 %v550, 56
        %v1602 = vpop.permute.xlu0 %1601
        %1603 = vrot.lane.b32.xlu0 %v551, 56
        %v1604 = vpop.permute.xlu0 %1603
        %1605 = vrot.lane.b32.xlu0 %v552, 56
        %v1606 = vpop.permute.xlu0 %1605
        %1607 = vrot.lane.b32.xlu0 %v553, 56
        %v1608 = vpop.permute.xlu0 %1607
        %1609 = vrot.lane.b32.xlu0 %v543, 56
        %v1610 = vpop.permute.xlu0 %1609
        %1611 = vrot.lane.b32.xlu0 %v584, 56
        %v1612 = vpop.permute.xlu0 %1611
        %1613 = vrot.lane.b32.xlu0 %v585, 56
        %v1614 = vpop.permute.xlu0 %1613
        %1615 = vrot.lane.b32.xlu0 %v586, 56
        %v1616 = vpop.permute.xlu0 %1615
        %1617 = vrot.lane.b32.xlu0 %v587, 56
        %v1618 = vpop.permute.xlu0 %1617
        %1619 = vrot.lane.b32.xlu0 %v588, 56
        %v1620 = vpop.permute.xlu0 %1619
        %1621 = vrot.lane.b32.xlu0 %v589, 56
        %v1622 = vpop.permute.xlu0 %1621
        %1623 = vrot.lane.b32.xlu0 %v590, 56
        %v1624 = vpop.permute.xlu0 %1623
        %1625 = vrot.lane.b32.xlu0 %v591, 56
        %v1626 = vpop.permute.xlu0 %1625
        %1627 = vrot.lane.b32.xlu0 %v592, 56
        %v1628 = vpop.permute.xlu0 %1627
        %1629 = vrot.lane.b32.xlu0 %v582, 56
        %v1630 = vpop.permute.xlu0 %1629
        %1631 = vrot.lane.b32.xlu0 %v623, 56
        %v1632 = vpop.permute.xlu0 %1631
        %1633 = vrot.lane.b32.xlu0 %v624, 56
        %v1634 = vpop.permute.xlu0 %1633
        %1635 = vrot.lane.b32.xlu0 %v625, 56
        %v1636 = vpop.permute.xlu0 %1635
        %1637 = vrot.lane.b32.xlu0 %v626, 56
        %v1638 = vpop.permute.xlu0 %1637
        %1639 = vrot.lane.b32.xlu0 %v627, 56
        %v1640 = vpop.permute.xlu0 %1639
        %1641 = vrot.lane.b32.xlu0 %v628, 56
        %v1642 = vpop.permute.xlu0 %1641
        %1643 = vrot.lane.b32.xlu0 %v629, 56
        %v1644 = vpop.permute.xlu0 %1643
        %1645 = vrot.lane.b32.xlu0 %v630, 56
        %v1646 = vpop.permute.xlu0 %1645
        %1647 = vrot.lane.b32.xlu0 %v631, 56
        %v1648 = vpop.permute.xlu0 %1647
        %1649 = vrot.lane.b32.xlu0 %v621, 56
        %v1650 = vpop.permute.xlu0 %1649
        %vm1651 = vcmask 457728
        %v1652 = vsel %vm1651, %v1552, %v1554
        %v1653 = vsel %vm1651, %v1554, %v1556
        %v1654 = vsel %vm1651, %v1556, %v1558
        %v1655 = vsel %vm1651, %v1558, %v1560
        %v1656 = vsel %vm1651, %v1560, %v1562
        %v1657 = vsel %vm1651, %v1562, %v1564
        %v1658 = vsel %vm1651, %v1564, %v1566
        %v1659 = vsel %vm1651, %v1566, %v1568
        %v1660 = vsel %vm1651, %v1568, %v1570
        %v1661 = vsel %vm1651, %v1572, %v1574
        %v1662 = vsel %vm1651, %v1574, %v1576
        %v1663 = vsel %vm1651, %v1576, %v1578
        %v1664 = vsel %vm1651, %v1578, %v1580
        %v1665 = vsel %vm1651, %v1580, %v1582
        %v1666 = vsel %vm1651, %v1582, %v1584
        %v1667 = vsel %vm1651, %v1584, %v1586
        %v1668 = vsel %vm1651, %v1586, %v1588
        %v1669 = vsel %vm1651, %v1588, %v1590
        %v1670 = vsel %vm1651, %v1592, %v1594
        %v1671 = vsel %vm1651, %v1594, %v1596
        %v1672 = vsel %vm1651, %v1596, %v1598
        %v1673 = vsel %vm1651, %v1598, %v1600
        %v1674 = vsel %vm1651, %v1600, %v1602
        %v1675 = vsel %vm1651, %v1602, %v1604
        %v1676 = vsel %vm1651, %v1604, %v1606
        %v1677 = vsel %vm1651, %v1606, %v1608
        %v1678 = vsel %vm1651, %v1608, %v1610
        %v1679 = vsel %vm1651, %v1612, %v1614
        %v1680 = vsel %vm1651, %v1614, %v1616
        %v1681 = vsel %vm1651, %v1616, %v1618
        %v1682 = vsel %vm1651, %v1618, %v1620
        %v1683 = vsel %vm1651, %v1620, %v1622
        %v1684 = vsel %vm1651, %v1622, %v1624
        %v1685 = vsel %vm1651, %v1624, %v1626
        %v1686 = vsel %vm1651, %v1626, %v1628
        %v1687 = vsel %vm1651, %v1628, %v1630
        %v1688 = vsel %vm1651, %v1632, %v1634
        %v1689 = vsel %vm1651, %v1634, %v1636
        %v1690 = vsel %vm1651, %v1636, %v1638
        %v1691 = vsel %vm1651, %v1638, %v1640
        %v1692 = vsel %vm1651, %v1640, %v1642
        %v1693 = vsel %vm1651, %v1642, %v1644
        %v1694 = vsel %vm1651, %v1644, %v1646
        %v1695 = vsel %vm1651, %v1646, %v1648
        %v1696 = vsel %vm1651, %v1648, %v1650
        %v1742 = vsel %vm836, %v1550, 0
        %1744 = vmatprep.subr.mxu0 0.0
        %1745 = vmatpush1.msra.mxu0 0.0
        %1746 = vmatprep.subr.mxu0 0.0
        %1747 = vmatpush1.msra.mxu0 0.0
        %1748 = vmatprep.subr.mxu0 0.0
        %1749 = vmatpush1.msra.mxu0 0.0
        %1750 = vmatprep.subr.mxu0 0.0
        %1751 = vmatpush1.msra.mxu0 0.0
        %1752 = vmatprep.subr.mxu0 0.0
        %1753 = vmatpush1.msra.mxu0 0.0
        %1754 = vmatprep.subr.mxu0 0.0
        %1755 = vmatpush1.msra.mxu0 0.0
        %1756 = vmatprep.subr.mxu0 0.0
        %1757 = vmatpush1.msra.mxu0 0.0
        %1758 = vmatprep.subr.mxu0 0.0
        %1759 = vmatpush1.msra.mxu0 0.0
        %1760 = vmatprep.subr.mxu0 0.0
        %1761 = vmatpush1.msra.mxu0 0.0
        %1762 = vmatprep.subr.mxu0 0.0
        %1763 = vmatpush1.msra.mxu0 0.0
        %1764 = vmatprep.subr.mxu0 0.0
        %1765 = vmatpush1.msra.mxu0 0.0
        %1766 = vmatprep.subr.mxu0 %v1689
        %1767 = vmatpush1.msra.mxu0 %v1688
        %1768 = vmatprep.subr.mxu0 %v1680
        %1769 = vmatpush1.msra.mxu0 %v1679
        %1770 = vmatprep.subr.mxu0 %v1671
        %1771 = vmatpush1.msra.mxu0 %v1670
        %1772 = vmatprep.subr.mxu0 %v1662
        %1773 = vmatpush1.msra.mxu0 %v1661
        %1774 = vmatprep.subr.mxu0 %v1653
        %1775 = vmatpush1.msra.mxu0 %v1652
        %1776 = vmatprep.subr.mxu0 0.0
        %1777 = vmatpush2.msra.mxu0 0.0
        %1778 = vmatprep.subr.mxu0 0.0
        %1779 = vmatpush2.msra.mxu0 0.0
        %1780 = vmatprep.subr.mxu0 0.0
        %1781 = vmatpush2.msra.mxu0 0.0
        %1782 = vmatprep.subr.mxu0 0.0
        %1783 = vmatpush2.msra.mxu0 0.0
        %1784 = vmatprep.subr.mxu0 0.0
        %1785 = vmatpush2.msra.mxu0 0.0
        %1786 = vmatprep.subr.mxu0 0.0
        %1787 = vmatpush2.msra.mxu0 0.0
        %1788 = vmatprep.subr.mxu0 0.0
        %1789 = vmatpush2.msra.mxu0 0.0
        %1790 = vmatprep.subr.mxu0 0.0
        %1791 = vmatpush2.msra.mxu0 0.0
        %1792 = vmatprep.subr.mxu0 0.0
        %1793 = vmatpush2.msra.mxu0 0.0
        %1794 = vmatprep.subr.mxu0 0.0
        %1795 = vmatpush2.msra.mxu0 0.0
        %1796 = vmatprep.subr.mxu0 0.0
        %1797 = vmatpush2.msra.mxu0 0.0
        %1798 = vmatprep.subr.mxu0 0.0
        %1799 = vmatpush2.msra.mxu0 0.0
        %1800 = vmatprep.subr.mxu0 0.0
        %1801 = vmatpush2.msra.mxu0 0.0
        %1802 = vmatprep.subr.mxu0 0.0
        %1803 = vmatpush2.msra.mxu0 0.0
        %1804 = vmatprep.subr.mxu0 0.0
        %1805 = vmatpush2.msra.mxu0 0.0
        %1806 = vmatprep.subr.mxu0 0.0
        %1807 = vmatpush2.msra.mxu0 0.0
        %1808 = vmatprep.mubr.f32.mxu0 0.0
        %1809 = vmatmul.mubr.f32.gmra.mxu0 %v1742
        %v1810 = vpop.f32.mrf.mxu0
        %v1811 = vadd.f32 0.0, %v1810
        %v1812 = vpop.f32.mrf.mxu0
        %v1813 = vadd.f32 0.0, %v1812
        %1814 = vdwg.mxu0
        %1815 = vmatprep.subr.mxu0 0.0
        %1816 = vmatpush1.msra.mxu0 0.0
        %1817 = vmatprep.subr.mxu0 0.0
        %1818 = vmatpush1.msra.mxu0 0.0
        %1819 = vmatprep.subr.mxu0 0.0
        %1820 = vmatpush1.msra.mxu0 0.0
        %1821 = vmatprep.subr.mxu0 0.0
        %1822 = vmatpush1.msra.mxu0 0.0
        %1823 = vmatprep.subr.mxu0 0.0
        %1824 = vmatpush1.msra.mxu0 0.0
        %1825 = vmatprep.subr.mxu0 0.0
        %1826 = vmatpush1.msra.mxu0 0.0
        %1827 = vmatprep.subr.mxu0 0.0
        %1828 = vmatpush1.msra.mxu0 0.0
        %1829 = vmatprep.subr.mxu0 0.0
        %1830 = vmatpush1.msra.mxu0 0.0
        %1831 = vmatprep.subr.mxu0 0.0
        %1832 = vmatpush1.msra.mxu0 0.0
        %1833 = vmatprep.subr.mxu0 0.0
        %1834 = vmatpush1.msra.mxu0 0.0
        %1835 = vmatprep.subr.mxu0 0.0
        %1836 = vmatpush1.msra.mxu0 0.0
        %1837 = vmatprep.subr.mxu0 %v1691
        %1838 = vmatpush1.msra.mxu0 %v1690
        %1839 = vmatprep.subr.mxu0 %v1682
        %1840 = vmatpush1.msra.mxu0 %v1681
        %1841 = vmatprep.subr.mxu0 %v1673
        %1842 = vmatpush1.msra.mxu0 %v1672
        %1843 = vmatprep.subr.mxu0 %v1664
        %1844 = vmatpush1.msra.mxu0 %v1663
        %1845 = vmatprep.subr.mxu0 %v1655
        %1846 = vmatpush1.msra.mxu0 %v1654
        %1847 = vmatprep.subr.mxu0 0.0
        %1848 = vmatpush2.msra.mxu0 0.0
        %1849 = vmatprep.subr.mxu0 0.0
        %1850 = vmatpush2.msra.mxu0 0.0
        %1851 = vmatprep.subr.mxu0 0.0
        %1852 = vmatpush2.msra.mxu0 0.0
        %1853 = vmatprep.subr.mxu0 0.0
        %1854 = vmatpush2.msra.mxu0 0.0
        %1855 = vmatprep.subr.mxu0 0.0
        %1856 = vmatpush2.msra.mxu0 0.0
        %1857 = vmatprep.subr.mxu0 0.0
        %1858 = vmatpush2.msra.mxu0 0.0
        %1859 = vmatprep.subr.mxu0 0.0
        %1860 = vmatpush2.msra.mxu0 0.0
        %1861 = vmatprep.subr.mxu0 0.0
        %1862 = vmatpush2.msra.mxu0 0.0
        %1863 = vmatprep.subr.mxu0 0.0
        %1864 = vmatpush2.msra.mxu0 0.0
        %1865 = vmatprep.subr.mxu0 0.0
        %1866 = vmatpush2.msra.mxu0 0.0
        %1867 = vmatprep.subr.mxu0 0.0
        %1868 = vmatpush2.msra.mxu0 0.0
        %1869 = vmatprep.subr.mxu0 0.0
        %1870 = vmatpush2.msra.mxu0 0.0
        %1871 = vmatprep.subr.mxu0 0.0
        %1872 = vmatpush2.msra.mxu0 0.0
        %1873 = vmatprep.subr.mxu0 0.0
        %1874 = vmatpush2.msra.mxu0 0.0
        %1875 = vmatprep.subr.mxu0 0.0
        %1876 = vmatpush2.msra.mxu0 0.0
        %1877 = vmatprep.subr.mxu0 0.0
        %1878 = vmatpush2.msra.mxu0 0.0
        %1879 = vmatprep.mubr.f32.mxu0 0.0
        %1880 = vmatmul.mubr.f32.gmra.mxu0 %v1742
        %v1881 = vpop.f32.mrf.mxu0
        %v1882 = vadd.f32 0.0, %v1881
        %v1883 = vpop.f32.mrf.mxu0
        %v1884 = vadd.f32 0.0, %v1883
        %1885 = vdwg.mxu0
        %1886 = vmatprep.subr.mxu0 0.0
        %1887 = vmatpush1.msra.mxu0 0.0
        %1888 = vmatprep.subr.mxu0 0.0
        %1889 = vmatpush1.msra.mxu0 0.0
        %1890 = vmatprep.subr.mxu0 0.0
        %1891 = vmatpush1.msra.mxu0 0.0
        %1892 = vmatprep.subr.mxu0 0.0
        %1893 = vmatpush1.msra.mxu0 0.0
        %1894 = vmatprep.subr.mxu0 0.0
        %1895 = vmatpush1.msra.mxu0 0.0
        %1896 = vmatprep.subr.mxu0 0.0
        %1897 = vmatpush1.msra.mxu0 0.0
        %1898 = vmatprep.subr.mxu0 0.0
        %1899 = vmatpush1.msra.mxu0 0.0
        %1900 = vmatprep.subr.mxu0 0.0
        %1901 = vmatpush1.msra.mxu0 0.0
        %1902 = vmatprep.subr.mxu0 0.0
        %1903 = vmatpush1.msra.mxu0 0.0
        %1904 = vmatprep.subr.mxu0 0.0
        %1905 = vmatpush1.msra.mxu0 0.0
        %1906 = vmatprep.subr.mxu0 0.0
        %1907 = vmatpush1.msra.mxu0 0.0
        %1908 = vmatprep.subr.mxu0 %v1693
        %1909 = vmatpush1.msra.mxu0 %v1692
        %1910 = vmatprep.subr.mxu0 %v1684
        %1911 = vmatpush1.msra.mxu0 %v1683
        %1912 = vmatprep.subr.mxu0 %v1675
        %1913 = vmatpush1.msra.mxu0 %v1674
        %1914 = vmatprep.subr.mxu0 %v1666
        %1915 = vmatpush1.msra.mxu0 %v1665
        %1916 = vmatprep.subr.mxu0 %v1657
        %1917 = vmatpush1.msra.mxu0 %v1656
        %1918 = vmatprep.subr.mxu0 0.0
        %1919 = vmatpush2.msra.mxu0 0.0
        %1920 = vmatprep.subr.mxu0 0.0
        %1921 = vmatpush2.msra.mxu0 0.0
        %1922 = vmatprep.subr.mxu0 0.0
        %1923 = vmatpush2.msra.mxu0 0.0
        %1924 = vmatprep.subr.mxu0 0.0
        %1925 = vmatpush2.msra.mxu0 0.0
        %1926 = vmatprep.subr.mxu0 0.0
        %1927 = vmatpush2.msra.mxu0 0.0
        %1928 = vmatprep.subr.mxu0 0.0
        %1929 = vmatpush2.msra.mxu0 0.0
        %1930 = vmatprep.subr.mxu0 0.0
        %1931 = vmatpush2.msra.mxu0 0.0
        %1932 = vmatprep.subr.mxu0 0.0
        %1933 = vmatpush2.msra.mxu0 0.0
        %1934 = vmatprep.subr.mxu0 0.0
        %1935 = vmatpush2.msra.mxu0 0.0
        %1936 = vmatprep.subr.mxu0 0.0
        %1937 = vmatpush2.msra.mxu0 0.0
        %1938 = vmatprep.subr.mxu0 0.0
        %1939 = vmatpush2.msra.mxu0 0.0
        %1940 = vmatprep.subr.mxu0 0.0
        %1941 = vmatpush2.msra.mxu0 0.0
        %1942 = vmatprep.subr.mxu0 0.0
        %1943 = vmatpush2.msra.mxu0 0.0
        %1944 = vmatprep.subr.mxu0 0.0
        %1945 = vmatpush2.msra.mxu0 0.0
        %1946 = vmatprep.subr.mxu0 0.0
        %1947 = vmatpush2.msra.mxu0 0.0
        %1948 = vmatprep.subr.mxu0 0.0
        %1949 = vmatpush2.msra.mxu0 0.0
        %1950 = vmatprep.mubr.f32.mxu0 0.0
        %1951 = vmatmul.mubr.f32.gmra.mxu0 %v1742
        %v1952 = vpop.f32.mrf.mxu0
        %v1953 = vadd.f32 0.0, %v1952
        %v1954 = vpop.f32.mrf.mxu0
        %v1955 = vadd.f32 0.0, %v1954
        %1956 = vdwg.mxu0
        %1957 = vmatprep.subr.mxu0 0.0
        %1958 = vmatpush1.msra.mxu0 0.0
        %1959 = vmatprep.subr.mxu0 0.0
        %1960 = vmatpush1.msra.mxu0 0.0
        %1961 = vmatprep.subr.mxu0 0.0
        %1962 = vmatpush1.msra.mxu0 0.0
        %1963 = vmatprep.subr.mxu0 0.0
        %1964 = vmatpush1.msra.mxu0 0.0
        %1965 = vmatprep.subr.mxu0 0.0
        %1966 = vmatpush1.msra.mxu0 0.0
        %1967 = vmatprep.subr.mxu0 0.0
        %1968 = vmatpush1.msra.mxu0 0.0
        %1969 = vmatprep.subr.mxu0 0.0
        %1970 = vmatpush1.msra.mxu0 0.0
        %1971 = vmatprep.subr.mxu0 0.0
        %1972 = vmatpush1.msra.mxu0 0.0
        %1973 = vmatprep.subr.mxu0 0.0
        %1974 = vmatpush1.msra.mxu0 0.0
        %1975 = vmatprep.subr.mxu0 0.0
        %1976 = vmatpush1.msra.mxu0 0.0
        %1977 = vmatprep.subr.mxu0 0.0
        %1978 = vmatpush1.msra.mxu0 0.0
        %1979 = vmatprep.subr.mxu0 %v1695
        %1980 = vmatpush1.msra.mxu0 %v1694
        %1981 = vmatprep.subr.mxu0 %v1686
        %1982 = vmatpush1.msra.mxu0 %v1685
        %1983 = vmatprep.subr.mxu0 %v1677
        %1984 = vmatpush1.msra.mxu0 %v1676
        %1985 = vmatprep.subr.mxu0 %v1668
        %1986 = vmatpush1.msra.mxu0 %v1667
        %1987 = vmatprep.subr.mxu0 %v1659
        %1988 = vmatpush1.msra.mxu0 %v1658
        %1989 = vmatprep.subr.mxu0 0.0
        %1990 = vmatpush2.msra.mxu0 0.0
        %1991 = vmatprep.subr.mxu0 0.0
        %1992 = vmatpush2.msra.mxu0 0.0
        %1993 = vmatprep.subr.mxu0 0.0
        %1994 = vmatpush2.msra.mxu0 0.0
        %1995 = vmatprep.subr.mxu0 0.0
        %1996 = vmatpush2.msra.mxu0 0.0
        %1997 = vmatprep.subr.mxu0 0.0
        %1998 = vmatpush2.msra.mxu0 0.0
        %1999 = vmatprep.subr.mxu0 0.0
        %2000 = vmatpush2.msra.mxu0 0.0
        %2001 = vmatprep.subr.mxu0 0.0
        %2002 = vmatpush2.msra.mxu0 0.0
        %2003 = vmatprep.subr.mxu0 0.0
        %2004 = vmatpush2.msra.mxu0 0.0
        %2005 = vmatprep.subr.mxu0 0.0
        %2006 = vmatpush2.msra.mxu0 0.0
        %2007 = vmatprep.subr.mxu0 0.0
        %2008 = vmatpush2.msra.mxu0 0.0
        %2009 = vmatprep.subr.mxu0 0.0
        %2010 = vmatpush2.msra.mxu0 0.0
        %2011 = vmatprep.subr.mxu0 0.0
        %2012 = vmatpush2.msra.mxu0 0.0
        %2013 = vmatprep.subr.mxu0 0.0
        %2014 = vmatpush2.msra.mxu0 0.0
        %2015 = vmatprep.subr.mxu0 0.0
        %2016 = vmatpush2.msra.mxu0 0.0
        %2017 = vmatprep.subr.mxu0 0.0
        %2018 = vmatpush2.msra.mxu0 0.0
        %2019 = vmatprep.subr.mxu0 0.0
        %2020 = vmatpush2.msra.mxu0 0.0
        %2021 = vmatprep.mubr.f32.mxu0 0.0
        %2022 = vmatmul.mubr.f32.gmra.mxu0 %v1742
        %v2023 = vpop.f32.mrf.mxu0
        %v2024 = vadd.f32 0.0, %v2023
        %v2025 = vpop.f32.mrf.mxu0
        %v2026 = vadd.f32 0.0, %v2025
        %2027 = vdwg.mxu0
        %2028 = vmatprep.subr.mxu0 0.0
        %2029 = vmatpush1.msra.mxu0 0.0
        %2030 = vmatprep.subr.mxu0 0.0
        %2031 = vmatpush1.msra.mxu0 0.0
        %2032 = vmatprep.subr.mxu0 0.0
        %2033 = vmatpush1.msra.mxu0 0.0
        %2034 = vmatprep.subr.mxu0 0.0
        %2035 = vmatpush1.msra.mxu0 0.0
        %2036 = vmatprep.subr.mxu0 0.0
        %2037 = vmatpush1.msra.mxu0 0.0
        %2038 = vmatprep.subr.mxu0 0.0
        %2039 = vmatpush1.msra.mxu0 0.0
        %2040 = vmatprep.subr.mxu0 0.0
        %2041 = vmatpush1.msra.mxu0 0.0
        %2042 = vmatprep.subr.mxu0 0.0
        %2043 = vmatpush1.msra.mxu0 0.0
        %2044 = vmatprep.subr.mxu0 0.0
        %2045 = vmatpush1.msra.mxu0 0.0
        %2046 = vmatprep.subr.mxu0 0.0
        %2047 = vmatpush1.msra.mxu0 0.0
        %2048 = vmatprep.subr.mxu0 0.0
        %2049 = vmatpush1.msra.mxu0 0.0
        %2050 = vmatprep.subr.mxu0 0.0
        %2051 = vmatpush1.msra.mxu0 %v1696
        %2052 = vmatprep.subr.mxu0 0.0
        %2053 = vmatpush1.msra.mxu0 %v1687
        %2054 = vmatprep.subr.mxu0 0.0
        %2055 = vmatpush1.msra.mxu0 %v1678
        %2056 = vmatprep.subr.mxu0 0.0
        %2057 = vmatpush1.msra.mxu0 %v1669
        %2058 = vmatprep.subr.mxu0 0.0
        %2059 = vmatpush1.msra.mxu0 %v1660
        %2060 = vmatprep.subr.mxu0 0.0
        %2061 = vmatpush2.msra.mxu0 0.0
        %2062 = vmatprep.subr.mxu0 0.0
        %2063 = vmatpush2.msra.mxu0 0.0
        %2064 = vmatprep.subr.mxu0 0.0
        %2065 = vmatpush2.msra.mxu0 0.0
        %2066 = vmatprep.subr.mxu0 0.0
        %2067 = vmatpush2.msra.mxu0 0.0
        %2068 = vmatprep.subr.mxu0 0.0
        %2069 = vmatpush2.msra.mxu0 0.0
        %2070 = vmatprep.subr.mxu0 0.0
        %2071 = vmatpush2.msra.mxu0 0.0
        %2072 = vmatprep.subr.mxu0 0.0
        %2073 = vmatpush2.msra.mxu0 0.0
        %2074 = vmatprep.subr.mxu0 0.0
        %2075 = vmatpush2.msra.mxu0 0.0
        %2076 = vmatprep.subr.mxu0 0.0
        %2077 = vmatpush2.msra.mxu0 0.0
        %2078 = vmatprep.subr.mxu0 0.0
        %2079 = vmatpush2.msra.mxu0 0.0
        %2080 = vmatprep.subr.mxu0 0.0
        %2081 = vmatpush2.msra.mxu0 0.0
        %2082 = vmatprep.subr.mxu0 0.0
        %2083 = vmatpush2.msra.mxu0 0.0
        %2084 = vmatprep.subr.mxu0 0.0
        %2085 = vmatpush2.msra.mxu0 0.0
        %2086 = vmatprep.subr.mxu0 0.0
        %2087 = vmatpush2.msra.mxu0 0.0
        %2088 = vmatprep.subr.mxu0 0.0
        %2089 = vmatpush2.msra.mxu0 0.0
        %2090 = vmatprep.subr.mxu0 0.0
        %2091 = vmatpush2.msra.mxu0 0.0
        %2092 = vmatprep.mubr.f32.mxu0 0.0
        %2093 = vmatmul.mubr.f32.gmra.mxu0 %v1742
        %v2094 = vpop.f32.mrf.mxu0
        %v2095 = vadd.f32 0.0, %v2094
        %v2096 = vpop.f32.mrf.mxu0
        %2097 = vdwg.mxu0
        %v2098 = vadd.f32 %v1262, %v1811
        %v2099 = vadd.f32 %v1264, %v1813
        %v2100 = vadd.f32 %v1333, %v1882
        %v2101 = vadd.f32 %v1335, %v1884
        %v2102 = vadd.f32 %v1404, %v1953
        %v2103 = vadd.f32 %v1406, %v1955
        %v2104 = vadd.f32 %v1475, %v2024
        %v2105 = vadd.f32 %v1477, %v2026
        %v2106 = vadd.f32 %v1546, %v2095
        %v2107 = vld [vmem:[%s1] sm:$0xff]
        %v2108 = vld [vmem:[%s1 + $0x8] sm:$0xff]
        %2111 = vrot.lane.b32.xlu0 %v2107, 8
        %v2112 = vpop.permute.xlu0 %2111
        %2113 = vrot.lane.b32.xlu0 %v2108, 8
        %v2114 = vpop.permute.xlu0 %2113
        %vm2115 = vcmask 64512
        %v2116 = vsel %vm2115, %v2112, %v2114
        %2117 = vrot.lane.b32.xlu0 %v465, 20
        %v2118 = vpop.permute.xlu0 %2117
        %2119 = vrot.lane.b32.xlu0 %v466, 20
        %v2120 = vpop.permute.xlu0 %2119
        %2121 = vrot.lane.b32.xlu0 %v467, 20
        %v2122 = vpop.permute.xlu0 %2121
        %2123 = vrot.lane.b32.xlu0 %v468, 20
        %v2124 = vpop.permute.xlu0 %2123
        %2125 = vrot.lane.b32.xlu0 %v469, 20
        %v2126 = vpop.permute.xlu0 %2125
        %2127 = vrot.lane.b32.xlu0 %v470, 20
        %v2128 = vpop.permute.xlu0 %2127
        %2129 = vrot.lane.b32.xlu0 %v471, 20
        %v2130 = vpop.permute.xlu0 %2129
        %2131 = vrot.lane.b32.xlu0 %v472, 20
        %v2132 = vpop.permute.xlu0 %2131
        %2133 = vrot.lane.b32.xlu0 %v473, 20
        %v2134 = vpop.permute.xlu0 %2133
        %2135 = vrot.lane.b32.xlu0 %v474, 20
        %v2136 = vpop.permute.xlu0 %2135
        %2137 = vrot.lane.b32.xlu0 %v506, 20
        %v2138 = vpop.permute.xlu0 %2137
        %2139 = vrot.lane.b32.xlu0 %v507, 20
        %v2140 = vpop.permute.xlu0 %2139
        %2141 = vrot.lane.b32.xlu0 %v508, 20
        %v2142 = vpop.permute.xlu0 %2141
        %2143 = vrot.lane.b32.xlu0 %v509, 20
        %v2144 = vpop.permute.xlu0 %2143
        %2145 = vrot.lane.b32.xlu0 %v510, 20
        %v2146 = vpop.permute.xlu0 %2145
        %2147 = vrot.lane.b32.xlu0 %v511, 20
        %v2148 = vpop.permute.xlu0 %2147
        %2149 = vrot.lane.b32.xlu0 %v512, 20
        %v2150 = vpop.permute.xlu0 %2149
        %2151 = vrot.lane.b32.xlu0 %v513, 20
        %v2152 = vpop.permute.xlu0 %2151
        %2153 = vrot.lane.b32.xlu0 %v514, 20
        %v2154 = vpop.permute.xlu0 %2153
        %2155 = vrot.lane.b32.xlu0 %v504, 20
        %v2156 = vpop.permute.xlu0 %2155
        %2157 = vrot.lane.b32.xlu0 %v545, 20
        %v2158 = vpop.permute.xlu0 %2157
        %2159 = vrot.lane.b32.xlu0 %v546, 20
        %v2160 = vpop.permute.xlu0 %2159
        %2161 = vrot.lane.b32.xlu0 %v547, 20
        %v2162 = vpop.permute.xlu0 %2161
        %2163 = vrot.lane.b32.xlu0 %v548, 20
        %v2164 = vpop.permute.xlu0 %2163
        %2165 = vrot.lane.b32.xlu0 %v549, 20
        %v2166 = vpop.permute.xlu0 %2165
        %2167 = vrot.lane.b32.xlu0 %v550, 20
        %v2168 = vpop.permute.xlu0 %2167
        %2169 = vrot.lane.b32.xlu0 %v551, 20
        %v2170 = vpop.permute.xlu0 %2169
        %2171 = vrot.lane.b32.xlu0 %v552, 20
        %v2172 = vpop.permute.xlu0 %2171
        %2173 = vrot.lane.b32.xlu0 %v553, 20
        %v2174 = vpop.permute.xlu0 %2173
        %2175 = vrot.lane.b32.xlu0 %v543, 20
        %v2176 = vpop.permute.xlu0 %2175
        %2177 = vrot.lane.b32.xlu0 %v584, 20
        %v2178 = vpop.permute.xlu0 %2177
        %2179 = vrot.lane.b32.xlu0 %v585, 20
        %v2180 = vpop.permute.xlu0 %2179
        %2181 = vrot.lane.b32.xlu0 %v586, 20
        %v2182 = vpop.permute.xlu0 %2181
        %2183 = vrot.lane.b32.xlu0 %v587, 20
        %v2184 = vpop.permute.xlu0 %2183
        %2185 = vrot.lane.b32.xlu0 %v588, 20
        %v2186 = vpop.permute.xlu0 %2185
        %2187 = vrot.lane.b32.xlu0 %v589, 20
        %v2188 = vpop.permute.xlu0 %2187
        %2189 = vrot.lane.b32.xlu0 %v590, 20
        %v2190 = vpop.permute.xlu0 %2189
        %2191 = vrot.lane.b32.xlu0 %v591, 20
        %v2192 = vpop.permute.xlu0 %2191
        %2193 = vrot.lane.b32.xlu0 %v592, 20
        %v2194 = vpop.permute.xlu0 %2193
        %2195 = vrot.lane.b32.xlu0 %v582, 20
        %v2196 = vpop.permute.xlu0 %2195
        %2197 = vrot.lane.b32.xlu0 %v623, 20
        %v2198 = vpop.permute.xlu0 %2197
        %2199 = vrot.lane.b32.xlu0 %v624, 20
        %v2200 = vpop.permute.xlu0 %2199
        %2201 = vrot.lane.b32.xlu0 %v625, 20
        %v2202 = vpop.permute.xlu0 %2201
        %2203 = vrot.lane.b32.xlu0 %v626, 20
        %v2204 = vpop.permute.xlu0 %2203
        %2205 = vrot.lane.b32.xlu0 %v627, 20
        %v2206 = vpop.permute.xlu0 %2205
        %2207 = vrot.lane.b32.xlu0 %v628, 20
        %v2208 = vpop.permute.xlu0 %2207
        %2209 = vrot.lane.b32.xlu0 %v629, 20
        %v2210 = vpop.permute.xlu0 %2209
        %2211 = vrot.lane.b32.xlu0 %v630, 20
        %v2212 = vpop.permute.xlu0 %2211
        %2213 = vrot.lane.b32.xlu0 %v631, 20
        %v2214 = vpop.permute.xlu0 %2213
        %2215 = vrot.lane.b32.xlu0 %v621, 20
        %v2216 = vpop.permute.xlu0 %2215
        %vm2217 = vcmask 162816
        %v2218 = vsel %vm2217, %v2118, %v2120
        %v2219 = vsel %vm2217, %v2120, %v2122
        %v2220 = vsel %vm2217, %v2122, %v2124
        %v2221 = vsel %vm2217, %v2124, %v2126
        %v2222 = vsel %vm2217, %v2126, %v2128
        %v2223 = vsel %vm2217, %v2128, %v2130
        %v2224 = vsel %vm2217, %v2130, %v2132
        %v2225 = vsel %vm2217, %v2132, %v2134
        %v2226 = vsel %vm2217, %v2134, %v2136
        %v2227 = vsel %vm2217, %v2138, %v2140
        %v2228 = vsel %vm2217, %v2140, %v2142
        %v2229 = vsel %vm2217, %v2142, %v2144
        %v2230 = vsel %vm2217, %v2144, %v2146
        %v2231 = vsel %vm2217, %v2146, %v2148
        %v2232 = vsel %vm2217, %v2148, %v2150
        %v2233 = vsel %vm2217, %v2150, %v2152
        %v2234 = vsel %vm2217, %v2152, %v2154
        %v2235 = vsel %vm2217, %v2154, %v2156
        %v2236 = vsel %vm2217, %v2158, %v2160
        %v2237 = vsel %vm2217, %v2160, %v2162
        %v2238 = vsel %vm2217, %v2162, %v2164
        %v2239 = vsel %vm2217, %v2164, %v2166
        %v2240 = vsel %vm2217, %v2166, %v2168
        %v2241 = vsel %vm2217, %v2168, %v2170
        %v2242 = vsel %vm2217, %v2170, %v2172
        %v2243 = vsel %vm2217, %v2172, %v2174
        %v2244 = vsel %vm2217, %v2174, %v2176
        %v2245 = vsel %vm2217, %v2178, %v2180
        %v2246 = vsel %vm2217, %v2180, %v2182
        %v2247 = vsel %vm2217, %v2182, %v2184
        %v2248 = vsel %vm2217, %v2184, %v2186
        %v2249 = vsel %vm2217, %v2186, %v2188
        %v2250 = vsel %vm2217, %v2188, %v2190
        %v2251 = vsel %vm2217, %v2190, %v2192
        %v2252 = vsel %vm2217, %v2192, %v2194
        %v2253 = vsel %vm2217, %v2194, %v2196
        %v2254 = vsel %vm2217, %v2198, %v2200
        %v2255 = vsel %vm2217, %v2200, %v2202
        %v2256 = vsel %vm2217, %v2202, %v2204
        %v2257 = vsel %vm2217, %v2204, %v2206
        %v2258 = vsel %vm2217, %v2206, %v2208
        %v2259 = vsel %vm2217, %v2208, %v2210
        %v2260 = vsel %vm2217, %v2210, %v2212
        %v2261 = vsel %vm2217, %v2212, %v2214
        %v2262 = vsel %vm2217, %v2214, %v2216
        %v2308 = vsel %vm836, %v2116, 0
        %2310 = vmatprep.subr.mxu0 0.0
        %2311 = vmatpush1.msra.mxu0 0.0
        %2312 = vmatprep.subr.mxu0 0.0
        %2313 = vmatpush1.msra.mxu0 0.0
        %2314 = vmatprep.subr.mxu0 0.0
        %2315 = vmatpush1.msra.mxu0 0.0
        %2316 = vmatprep.subr.mxu0 0.0
        %2317 = vmatpush1.msra.mxu0 0.0
        %2318 = vmatprep.subr.mxu0 0.0
        %2319 = vmatpush1.msra.mxu0 0.0
        %2320 = vmatprep.subr.mxu0 0.0
        %2321 = vmatpush1.msra.mxu0 0.0
        %2322 = vmatprep.subr.mxu0 0.0
        %2323 = vmatpush1.msra.mxu0 0.0
        %2324 = vmatprep.subr.mxu0 0.0
        %2325 = vmatpush1.msra.mxu0 0.0
        %2326 = vmatprep.subr.mxu0 0.0
        %2327 = vmatpush1.msra.mxu0 0.0
        %2328 = vmatprep.subr.mxu0 0.0
        %2329 = vmatpush1.msra.mxu0 0.0
        %2330 = vmatprep.subr.mxu0 0.0
        %2331 = vmatpush1.msra.mxu0 0.0
        %2332 = vmatprep.subr.mxu0 %v2255
        %2333 = vmatpush1.msra.mxu0 %v2254
        %2334 = vmatprep.subr.mxu0 %v2246
        %2335 = vmatpush1.msra.mxu0 %v2245
        %2336 = vmatprep.subr.mxu0 %v2237
        %2337 = vmatpush1.msra.mxu0 %v2236
        %2338 = vmatprep.subr.mxu0 %v2228
        %2339 = vmatpush1.msra.mxu0 %v2227
        %2340 = vmatprep.subr.mxu0 %v2219
        %2341 = vmatpush1.msra.mxu0 %v2218
        %2342 = vmatprep.subr.mxu0 0.0
        %2343 = vmatpush2.msra.mxu0 0.0
        %2344 = vmatprep.subr.mxu0 0.0
        %2345 = vmatpush2.msra.mxu0 0.0
        %2346 = vmatprep.subr.mxu0 0.0
        %2347 = vmatpush2.msra.mxu0 0.0
        %2348 = vmatprep.subr.mxu0 0.0
        %2349 = vmatpush2.msra.mxu0 0.0
        %2350 = vmatprep.subr.mxu0 0.0
        %2351 = vmatpush2.msra.mxu0 0.0
        %2352 = vmatprep.subr.mxu0 0.0
        %2353 = vmatpush2.msra.mxu0 0.0
        %2354 = vmatprep.subr.mxu0 0.0
        %2355 = vmatpush2.msra.mxu0 0.0
        %2356 = vmatprep.subr.mxu0 0.0
        %2357 = vmatpush2.msra.mxu0 0.0
        %2358 = vmatprep.subr.mxu0 0.0
        %2359 = vmatpush2.msra.mxu0 0.0
        %2360 = vmatprep.subr.mxu0 0.0
        %2361 = vmatpush2.msra.mxu0 0.0
        %2362 = vmatprep.subr.mxu0 0.0
        %2363 = vmatpush2.msra.mxu0 0.0
        %2364 = vmatprep.subr.mxu0 0.0
        %2365 = vmatpush2.msra.mxu0 0.0
        %2366 = vmatprep.subr.mxu0 0.0
        %2367 = vmatpush2.msra.mxu0 0.0
        %2368 = vmatprep.subr.mxu0 0.0
        %2369 = vmatpush2.msra.mxu0 0.0
        %2370 = vmatprep.subr.mxu0 0.0
        %2371 = vmatpush2.msra.mxu0 0.0
        %2372 = vmatprep.subr.mxu0 0.0
        %2373 = vmatpush2.msra.mxu0 0.0
        %2374 = vmatprep.mubr.f32.mxu0 0.0
        %2375 = vmatmul.mubr.f32.gmra.mxu0 %v2308
        %v2376 = vpop.f32.mrf.mxu0
        %v2377 = vadd.f32 0.0, %v2376
        %v2378 = vpop.f32.mrf.mxu0
        %v2379 = vadd.f32 0.0, %v2378
        %2380 = vdwg.mxu0
        %2381 = vmatprep.subr.mxu0 0.0
        %2382 = vmatpush1.msra.mxu0 0.0
        %2383 = vmatprep.subr.mxu0 0.0
        %2384 = vmatpush1.msra.mxu0 0.0
        %2385 = vmatprep.subr.mxu0 0.0
        %2386 = vmatpush1.msra.mxu0 0.0
        %2387 = vmatprep.subr.mxu0 0.0
        %2388 = vmatpush1.msra.mxu0 0.0
        %2389 = vmatprep.subr.mxu0 0.0
        %2390 = vmatpush1.msra.mxu0 0.0
        %2391 = vmatprep.subr.mxu0 0.0
        %2392 = vmatpush1.msra.mxu0 0.0
        %2393 = vmatprep.subr.mxu0 0.0
        %2394 = vmatpush1.msra.mxu0 0.0
        %2395 = vmatprep.subr.mxu0 0.0
        %2396 = vmatpush1.msra.mxu0 0.0
        %2397 = vmatprep.subr.mxu0 0.0
        %2398 = vmatpush1.msra.mxu0 0.0
        %2399 = vmatprep.subr.mxu0 0.0
        %2400 = vmatpush1.msra.mxu0 0.0
        %2401 = vmatprep.subr.mxu0 0.0
        %2402 = vmatpush1.msra.mxu0 0.0
        %2403 = vmatprep.subr.mxu0 %v2257
        %2404 = vmatpush1.msra.mxu0 %v2256
        %2405 = vmatprep.subr.mxu0 %v2248
        %2406 = vmatpush1.msra.mxu0 %v2247
        %2407 = vmatprep.subr.mxu0 %v2239
        %2408 = vmatpush1.msra.mxu0 %v2238
        %2409 = vmatprep.subr.mxu0 %v2230
        %2410 = vmatpush1.msra.mxu0 %v2229
        %2411 = vmatprep.subr.mxu0 %v2221
        %2412 = vmatpush1.msra.mxu0 %v2220
        %2413 = vmatprep.subr.mxu0 0.0
        %2414 = vmatpush2.msra.mxu0 0.0
        %2415 = vmatprep.subr.mxu0 0.0
        %2416 = vmatpush2.msra.mxu0 0.0
        %2417 = vmatprep.subr.mxu0 0.0
        %2418 = vmatpush2.msra.mxu0 0.0
        %2419 = vmatprep.subr.mxu0 0.0
        %2420 = vmatpush2.msra.mxu0 0.0
        %2421 = vmatprep.subr.mxu0 0.0
        %2422 = vmatpush2.msra.mxu0 0.0
        %2423 = vmatprep.subr.mxu0 0.0
        %2424 = vmatpush2.msra.mxu0 0.0
        %2425 = vmatprep.subr.mxu0 0.0
        %2426 = vmatpush2.msra.mxu0 0.0
        %2427 = vmatprep.subr.mxu0 0.0
        %2428 = vmatpush2.msra.mxu0 0.0
        %2429 = vmatprep.subr.mxu0 0.0
        %2430 = vmatpush2.msra.mxu0 0.0
        %2431 = vmatprep.subr.mxu0 0.0
        %2432 = vmatpush2.msra.mxu0 0.0
        %2433 = vmatprep.subr.mxu0 0.0
        %2434 = vmatpush2.msra.mxu0 0.0
        %2435 = vmatprep.subr.mxu0 0.0
        %2436 = vmatpush2.msra.mxu0 0.0
        %2437 = vmatprep.subr.mxu0 0.0
        %2438 = vmatpush2.msra.mxu0 0.0
        %2439 = vmatprep.subr.mxu0 0.0
        %2440 = vmatpush2.msra.mxu0 0.0
        %2441 = vmatprep.subr.mxu0 0.0
        %2442 = vmatpush2.msra.mxu0 0.0
        %2443 = vmatprep.subr.mxu0 0.0
        %2444 = vmatpush2.msra.mxu0 0.0
        %2445 = vmatprep.mubr.f32.mxu0 0.0
        %2446 = vmatmul.mubr.f32.gmra.mxu0 %v2308
        %v2447 = vpop.f32.mrf.mxu0
        %v2448 = vadd.f32 0.0, %v2447
        %v2449 = vpop.f32.mrf.mxu0
        %v2450 = vadd.f32 0.0, %v2449
        %2451 = vdwg.mxu0
        %2452 = vmatprep.subr.mxu0 0.0
        %2453 = vmatpush1.msra.mxu0 0.0
        %2454 = vmatprep.subr.mxu0 0.0
        %2455 = vmatpush1.msra.mxu0 0.0
        %2456 = vmatprep.subr.mxu0 0.0
        %2457 = vmatpush1.msra.mxu0 0.0
        %2458 = vmatprep.subr.mxu0 0.0
        %2459 = vmatpush1.msra.mxu0 0.0
        %2460 = vmatprep.subr.mxu0 0.0
        %2461 = vmatpush1.msra.mxu0 0.0
        %2462 = vmatprep.subr.mxu0 0.0
        %2463 = vmatpush1.msra.mxu0 0.0
        %2464 = vmatprep.subr.mxu0 0.0
        %2465 = vmatpush1.msra.mxu0 0.0
        %2466 = vmatprep.subr.mxu0 0.0
        %2467 = vmatpush1.msra.mxu0 0.0
        %2468 = vmatprep.subr.mxu0 0.0
        %2469 = vmatpush1.msra.mxu0 0.0
        %2470 = vmatprep.subr.mxu0 0.0
        %2471 = vmatpush1.msra.mxu0 0.0
        %2472 = vmatprep.subr.mxu0 0.0
        %2473 = vmatpush1.msra.mxu0 0.0
        %2474 = vmatprep.subr.mxu0 %v2259
        %2475 = vmatpush1.msra.mxu0 %v2258
        %2476 = vmatprep.subr.mxu0 %v2250
        %2477 = vmatpush1.msra.mxu0 %v2249
        %2478 = vmatprep.subr.mxu0 %v2241
        %2479 = vmatpush1.msra.mxu0 %v2240
        %2480 = vmatprep.subr.mxu0 %v2232
        %2481 = vmatpush1.msra.mxu0 %v2231
        %2482 = vmatprep.subr.mxu0 %v2223
        %2483 = vmatpush1.msra.mxu0 %v2222
        %2484 = vmatprep.subr.mxu0 0.0
        %2485 = vmatpush2.msra.mxu0 0.0
        %2486 = vmatprep.subr.mxu0 0.0
        %2487 = vmatpush2.msra.mxu0 0.0
        %2488 = vmatprep.subr.mxu0 0.0
        %2489 = vmatpush2.msra.mxu0 0.0
        %2490 = vmatprep.subr.mxu0 0.0
        %2491 = vmatpush2.msra.mxu0 0.0
        %2492 = vmatprep.subr.mxu0 0.0
        %2493 = vmatpush2.msra.mxu0 0.0
        %2494 = vmatprep.subr.mxu0 0.0
        %2495 = vmatpush2.msra.mxu0 0.0
        %2496 = vmatprep.subr.mxu0 0.0
        %2497 = vmatpush2.msra.mxu0 0.0
        %2498 = vmatprep.subr.mxu0 0.0
        %2499 = vmatpush2.msra.mxu0 0.0
        %2500 = vmatprep.subr.mxu0 0.0
        %2501 = vmatpush2.msra.mxu0 0.0
        %2502 = vmatprep.subr.mxu0 0.0
        %2503 = vmatpush2.msra.mxu0 0.0
        %2504 = vmatprep.subr.mxu0 0.0
        %2505 = vmatpush2.msra.mxu0 0.0
        %2506 = vmatprep.subr.mxu0 0.0
        %2507 = vmatpush2.msra.mxu0 0.0
        %2508 = vmatprep.subr.mxu0 0.0
        %2509 = vmatpush2.msra.mxu0 0.0
        %2510 = vmatprep.subr.mxu0 0.0
        %2511 = vmatpush2.msra.mxu0 0.0
        %2512 = vmatprep.subr.mxu0 0.0
        %2513 = vmatpush2.msra.mxu0 0.0
        %2514 = vmatprep.subr.mxu0 0.0
        %2515 = vmatpush2.msra.mxu0 0.0
        %2516 = vmatprep.mubr.f32.mxu0 0.0
        %2517 = vmatmul.mubr.f32.gmra.mxu0 %v2308
        %v2518 = vpop.f32.mrf.mxu0
        %v2519 = vadd.f32 0.0, %v2518
        %v2520 = vpop.f32.mrf.mxu0
        %v2521 = vadd.f32 0.0, %v2520
        %2522 = vdwg.mxu0
        %2523 = vmatprep.subr.mxu0 0.0
        %2524 = vmatpush1.msra.mxu0 0.0
        %2525 = vmatprep.subr.mxu0 0.0
        %2526 = vmatpush1.msra.mxu0 0.0
        %2527 = vmatprep.subr.mxu0 0.0
        %2528 = vmatpush1.msra.mxu0 0.0
        %2529 = vmatprep.subr.mxu0 0.0
        %2530 = vmatpush1.msra.mxu0 0.0
        %2531 = vmatprep.subr.mxu0 0.0
        %2532 = vmatpush1.msra.mxu0 0.0
        %2533 = vmatprep.subr.mxu0 0.0
        %2534 = vmatpush1.msra.mxu0 0.0
        %2535 = vmatprep.subr.mxu0 0.0
        %2536 = vmatpush1.msra.mxu0 0.0
        %2537 = vmatprep.subr.mxu0 0.0
        %2538 = vmatpush1.msra.mxu0 0.0
        %2539 = vmatprep.subr.mxu0 0.0
        %2540 = vmatpush1.msra.mxu0 0.0
        %2541 = vmatprep.subr.mxu0 0.0
        %2542 = vmatpush1.msra.mxu0 0.0
        %2543 = vmatprep.subr.mxu0 0.0
        %2544 = vmatpush1.msra.mxu0 0.0
        %2545 = vmatprep.subr.mxu0 %v2261
        %2546 = vmatpush1.msra.mxu0 %v2260
        %2547 = vmatprep.subr.mxu0 %v2252
        %2548 = vmatpush1.msra.mxu0 %v2251
        %2549 = vmatprep.subr.mxu0 %v2243
        %2550 = vmatpush1.msra.mxu0 %v2242
        %2551 = vmatprep.subr.mxu0 %v2234
        %2552 = vmatpush1.msra.mxu0 %v2233
        %2553 = vmatprep.subr.mxu0 %v2225
        %2554 = vmatpush1.msra.mxu0 %v2224
        %2555 = vmatprep.subr.mxu0 0.0
        %2556 = vmatpush2.msra.mxu0 0.0
        %2557 = vmatprep.subr.mxu0 0.0
        %2558 = vmatpush2.msra.mxu0 0.0
        %2559 = vmatprep.subr.mxu0 0.0
        %2560 = vmatpush2.msra.mxu0 0.0
        %2561 = vmatprep.subr.mxu0 0.0
        %2562 = vmatpush2.msra.mxu0 0.0
        %2563 = vmatprep.subr.mxu0 0.0
        %2564 = vmatpush2.msra.mxu0 0.0
        %2565 = vmatprep.subr.mxu0 0.0
        %2566 = vmatpush2.msra.mxu0 0.0
        %2567 = vmatprep.subr.mxu0 0.0
        %2568 = vmatpush2.msra.mxu0 0.0
        %2569 = vmatprep.subr.mxu0 0.0
        %2570 = vmatpush2.msra.mxu0 0.0
        %2571 = vmatprep.subr.mxu0 0.0
        %2572 = vmatpush2.msra.mxu0 0.0
        %2573 = vmatprep.subr.mxu0 0.0
        %2574 = vmatpush2.msra.mxu0 0.0
        %2575 = vmatprep.subr.mxu0 0.0
        %2576 = vmatpush2.msra.mxu0 0.0
        %2577 = vmatprep.subr.mxu0 0.0
        %2578 = vmatpush2.msra.mxu0 0.0
        %2579 = vmatprep.subr.mxu0 0.0
        %2580 = vmatpush2.msra.mxu0 0.0
        %2581 = vmatprep.subr.mxu0 0.0
        %2582 = vmatpush2.msra.mxu0 0.0
        %2583 = vmatprep.subr.mxu0 0.0
        %2584 = vmatpush2.msra.mxu0 0.0
        %2585 = vmatprep.subr.mxu0 0.0
        %2586 = vmatpush2.msra.mxu0 0.0
        %2587 = vmatprep.mubr.f32.mxu0 0.0
        %2588 = vmatmul.mubr.f32.gmra.mxu0 %v2308
        %v2589 = vpop.f32.mrf.mxu0
        %v2590 = vadd.f32 0.0, %v2589
        %v2591 = vpop.f32.mrf.mxu0
        %v2592 = vadd.f32 0.0, %v2591
        %2593 = vdwg.mxu0
        %2594 = vmatprep.subr.mxu0 0.0
        %2595 = vmatpush1.msra.mxu0 0.0
        %2596 = vmatprep.subr.mxu0 0.0
        %2597 = vmatpush1.msra.mxu0 0.0
        %2598 = vmatprep.subr.mxu0 0.0
        %2599 = vmatpush1.msra.mxu0 0.0
        %2600 = vmatprep.subr.mxu0 0.0
        %2601 = vmatpush1.msra.mxu0 0.0
        %2602 = vmatprep.subr.mxu0 0.0
        %2603 = vmatpush1.msra.mxu0 0.0
        %2604 = vmatprep.subr.mxu0 0.0
        %2605 = vmatpush1.msra.mxu0 0.0
        %2606 = vmatprep.subr.mxu0 0.0
        %2607 = vmatpush1.msra.mxu0 0.0
        %2608 = vmatprep.subr.mxu0 0.0
        %2609 = vmatpush1.msra.mxu0 0.0
        %2610 = vmatprep.subr.mxu0 0.0
        %2611 = vmatpush1.msra.mxu0 0.0
        %2612 = vmatprep.subr.mxu0 0.0
        %2613 = vmatpush1.msra.mxu0 0.0
        %2614 = vmatprep.subr.mxu0 0.0
        %2615 = vmatpush1.msra.mxu0 0.0
        %2616 = vmatprep.subr.mxu0 0.0
        %2617 = vmatpush1.msra.mxu0 %v2262
        %2618 = vmatprep.subr.mxu0 0.0
        %2619 = vmatpush1.msra.mxu0 %v2253
        %2620 = vmatprep.subr.mxu0 0.0
        %2621 = vmatpush1.msra.mxu0 %v2244
        %2622 = vmatprep.subr.mxu0 0.0
        %2623 = vmatpush1.msra.mxu0 %v2235
        %2624 = vmatprep.subr.mxu0 0.0
        %2625 = vmatpush1.msra.mxu0 %v2226
        %2626 = vmatprep.subr.mxu0 0.0
        %2627 = vmatpush2.msra.mxu0 0.0
        %2628 = vmatprep.subr.mxu0 0.0
        %2629 = vmatpush2.msra.mxu0 0.0
        %2630 = vmatprep.subr.mxu0 0.0
        %2631 = vmatpush2.msra.mxu0 0.0
        %2632 = vmatprep.subr.mxu0 0.0
        %2633 = vmatpush2.msra.mxu0 0.0
        %2634 = vmatprep.subr.mxu0 0.0
        %2635 = vmatpush2.msra.mxu0 0.0
        %2636 = vmatprep.subr.mxu0 0.0
        %2637 = vmatpush2.msra.mxu0 0.0
        %2638 = vmatprep.subr.mxu0 0.0
        %2639 = vmatpush2.msra.mxu0 0.0
        %2640 = vmatprep.subr.mxu0 0.0
        %2641 = vmatpush2.msra.mxu0 0.0
        %2642 = vmatprep.subr.mxu0 0.0
        %2643 = vmatpush2.msra.mxu0 0.0
        %2644 = vmatprep.subr.mxu0 0.0
        %2645 = vmatpush2.msra.mxu0 0.0
        %2646 = vmatprep.subr.mxu0 0.0
        %2647 = vmatpush2.msra.mxu0 0.0
        %2648 = vmatprep.subr.mxu0 0.0
        %2649 = vmatpush2.msra.mxu0 0.0
        %2650 = vmatprep.subr.mxu0 0.0
        %2651 = vmatpush2.msra.mxu0 0.0
        %2652 = vmatprep.subr.mxu0 0.0
        %2653 = vmatpush2.msra.mxu0 0.0
        %2654 = vmatprep.subr.mxu0 0.0
        %2655 = vmatpush2.msra.mxu0 0.0
        %2656 = vmatprep.subr.mxu0 0.0
        %2657 = vmatpush2.msra.mxu0 0.0
        %2658 = vmatprep.mubr.f32.mxu0 0.0
        %2659 = vmatmul.mubr.f32.gmra.mxu0 %v2308
        %v2660 = vpop.f32.mrf.mxu0
        %v2661 = vadd.f32 0.0, %v2660
        %v2662 = vpop.f32.mrf.mxu0
        %2663 = vdwg.mxu0
        %v2664 = vadd.f32 %v2098, %v2377
        %v2665 = vadd.f32 %v2099, %v2379
        %v2666 = vadd.f32 %v2100, %v2448
        %v2667 = vadd.f32 %v2101, %v2450
        %v2668 = vadd.f32 %v2102, %v2519
        %v2669 = vadd.f32 %v2103, %v2521
        %v2670 = vadd.f32 %v2104, %v2590
        %v2671 = vadd.f32 %v2105, %v2592
        %v2672 = vadd.f32 %v2106, %v2661
        %v2673 = vld [vmem:[%s464 + $0x8] sm:$0xff]
        %v2674 = vld [vmem:[%s464 + $0x10] sm:$0xff]
        %v2675 = vld [vmem:[%s464 + $0x18] sm:$0xff]
        %v2676 = vld [vmem:[%s464 + $0x20] sm:$0xff]
        %v2677 = vld [vmem:[%s464 + $0x28] sm:$0xff]
        %v2678 = vld [vmem:[%s464 + $0x30] sm:$0xff]
        %v2679 = vld [vmem:[%s464 + $0x38] sm:$0xff]
        %v2680 = vld [vmem:[%s464 + $0x40] sm:$0xff]
        %v2681 = vld [vmem:[%s464 + $0x48] sm:$0xff]
        %v2682 = vld [vmem:[%s464 + $0x50] sm:$0xff]
        %2693 = vrot.lane.b32.xlu0 %v2673, 127
        %v2694 = vpop.permute.xlu0 %2693
        %2695 = vrot.lane.b32.xlu0 %v2674, 127
        %v2696 = vpop.permute.xlu0 %2695
        %2697 = vrot.lane.b32.xlu0 %v2675, 127
        %v2698 = vpop.permute.xlu0 %2697
        %2699 = vrot.lane.b32.xlu0 %v2676, 127
        %v2700 = vpop.permute.xlu0 %2699
        %2701 = vrot.lane.b32.xlu0 %v2677, 127
        %v2702 = vpop.permute.xlu0 %2701
        %2703 = vrot.lane.b32.xlu0 %v2678, 127
        %v2704 = vpop.permute.xlu0 %2703
        %2705 = vrot.lane.b32.xlu0 %v2679, 127
        %v2706 = vpop.permute.xlu0 %2705
        %2707 = vrot.lane.b32.xlu0 %v2680, 127
        %v2708 = vpop.permute.xlu0 %2707
        %2709 = vrot.lane.b32.xlu0 %v2681, 127
        %v2710 = vpop.permute.xlu0 %2709
        %2711 = vrot.lane.b32.xlu0 %v2682, 127
        %v2712 = vpop.permute.xlu0 %2711
        %v2713 = vsel %vm505, %v2694, %v2696
        %v2714 = vsel %vm505, %v2696, %v2698
        %v2715 = vsel %vm505, %v2698, %v2700
        %v2716 = vsel %vm505, %v2700, %v2702
        %v2717 = vsel %vm505, %v2702, %v2704
        %v2718 = vsel %vm505, %v2704, %v2706
        %v2719 = vsel %vm505, %v2706, %v2708
        %v2720 = vsel %vm505, %v2708, %v2710
        %v2721 = vsel %vm505, %v2710, %v2712
        %2722 = vrot.lane.b32.xlu0 %v2673, 126
        %v2723 = vpop.permute.xlu0 %2722
        %2724 = vrot.lane.b32.xlu0 %v2674, 126
        %v2725 = vpop.permute.xlu0 %2724
        %2726 = vrot.lane.b32.xlu0 %v2675, 126
        %v2727 = vpop.permute.xlu0 %2726
        %2728 = vrot.lane.b32.xlu0 %v2676, 126
        %v2729 = vpop.permute.xlu0 %2728
        %2730 = vrot.lane.b32.xlu0 %v2677, 126
        %v2731 = vpop.permute.xlu0 %2730
        %2732 = vrot.lane.b32.xlu0 %v2678, 126
        %v2733 = vpop.permute.xlu0 %2732
        %2734 = vrot.lane.b32.xlu0 %v2679, 126
        %v2735 = vpop.permute.xlu0 %2734
        %2736 = vrot.lane.b32.xlu0 %v2680, 126
        %v2737 = vpop.permute.xlu0 %2736
        %2738 = vrot.lane.b32.xlu0 %v2681, 126
        %v2739 = vpop.permute.xlu0 %2738
        %2740 = vrot.lane.b32.xlu0 %v2682, 126
        %v2741 = vpop.permute.xlu0 %2740
        %v2742 = vsel %vm544, %v2723, %v2725
        %v2743 = vsel %vm544, %v2725, %v2727
        %v2744 = vsel %vm544, %v2727, %v2729
        %v2745 = vsel %vm544, %v2729, %v2731
        %v2746 = vsel %vm544, %v2731, %v2733
        %v2747 = vsel %vm544, %v2733, %v2735
        %v2748 = vsel %vm544, %v2735, %v2737
        %v2749 = vsel %vm544, %v2737, %v2739
        %v2750 = vsel %vm544, %v2739, %v2741
        %2751 = vrot.lane.b32.xlu0 %v2673, 125
        %v2752 = vpop.permute.xlu0 %2751
        %2753 = vrot.lane.b32.xlu0 %v2674, 125
        %v2754 = vpop.permute.xlu0 %2753
        %2755 = vrot.lane.b32.xlu0 %v2675, 125
        %v2756 = vpop.permute.xlu0 %2755
        %2757 = vrot.lane.b32.xlu0 %v2676, 125
        %v2758 = vpop.permute.xlu0 %2757
        %2759 = vrot.lane.b32.xlu0 %v2677, 125
        %v2760 = vpop.permute.xlu0 %2759
        %2761 = vrot.lane.b32.xlu0 %v2678, 125
        %v2762 = vpop.permute.xlu0 %2761
        %2763 = vrot.lane.b32.xlu0 %v2679, 125
        %v2764 = vpop.permute.xlu0 %2763
        %2765 = vrot.lane.b32.xlu0 %v2680, 125
        %v2766 = vpop.permute.xlu0 %2765
        %2767 = vrot.lane.b32.xlu0 %v2681, 125
        %v2768 = vpop.permute.xlu0 %2767
        %2769 = vrot.lane.b32.xlu0 %v2682, 125
        %v2770 = vpop.permute.xlu0 %2769
        %v2771 = vsel %vm583, %v2752, %v2754
        %v2772 = vsel %vm583, %v2754, %v2756
        %v2773 = vsel %vm583, %v2756, %v2758
        %v2774 = vsel %vm583, %v2758, %v2760
        %v2775 = vsel %vm583, %v2760, %v2762
        %v2776 = vsel %vm583, %v2762, %v2764
        %v2777 = vsel %vm583, %v2764, %v2766
        %v2778 = vsel %vm583, %v2766, %v2768
        %v2779 = vsel %vm583, %v2768, %v2770
        %2780 = vrot.lane.b32.xlu0 %v2673, 124
        %v2781 = vpop.permute.xlu0 %2780
        %2782 = vrot.lane.b32.xlu0 %v2674, 124
        %v2783 = vpop.permute.xlu0 %2782
        %2784 = vrot.lane.b32.xlu0 %v2675, 124
        %v2785 = vpop.permute.xlu0 %2784
        %2786 = vrot.lane.b32.xlu0 %v2676, 124
        %v2787 = vpop.permute.xlu0 %2786
        %2788 = vrot.lane.b32.xlu0 %v2677, 124
        %v2789 = vpop.permute.xlu0 %2788
        %2790 = vrot.lane.b32.xlu0 %v2678, 124
        %v2791 = vpop.permute.xlu0 %2790
        %2792 = vrot.lane.b32.xlu0 %v2679, 124
        %v2793 = vpop.permute.xlu0 %2792
        %2794 = vrot.lane.b32.xlu0 %v2680, 124
        %v2795 = vpop.permute.xlu0 %2794
        %2796 = vrot.lane.b32.xlu0 %v2681, 124
        %v2797 = vpop.permute.xlu0 %2796
        %2798 = vrot.lane.b32.xlu0 %v2682, 124
        %v2799 = vpop.permute.xlu0 %2798
        %v2800 = vsel %vm622, %v2781, %v2783
        %v2801 = vsel %vm622, %v2783, %v2785
        %v2802 = vsel %vm622, %v2785, %v2787
        %v2803 = vsel %vm622, %v2787, %v2789
        %v2804 = vsel %vm622, %v2789, %v2791
        %v2805 = vsel %vm622, %v2791, %v2793
        %v2806 = vsel %vm622, %v2793, %v2795
        %v2807 = vsel %vm622, %v2795, %v2797
        %v2808 = vsel %vm622, %v2797, %v2799
        %2809 = vrot.lane.b32.xlu0 %v2108, 96
        %v2810 = vpop.permute.xlu0 %2809
        %2811 = vrot.lane.b32.xlu0 %v2673, 112
        %v2812 = vpop.permute.xlu0 %2811
        %2813 = vrot.lane.b32.xlu0 %v2674, 112
        %v2814 = vpop.permute.xlu0 %2813
        %2815 = vrot.lane.b32.xlu0 %v2675, 112
        %v2816 = vpop.permute.xlu0 %2815
        %2817 = vrot.lane.b32.xlu0 %v2676, 112
        %v2818 = vpop.permute.xlu0 %2817
        %2819 = vrot.lane.b32.xlu0 %v2677, 112
        %v2820 = vpop.permute.xlu0 %2819
        %2821 = vrot.lane.b32.xlu0 %v2678, 112
        %v2822 = vpop.permute.xlu0 %2821
        %2823 = vrot.lane.b32.xlu0 %v2679, 112
        %v2824 = vpop.permute.xlu0 %2823
        %2825 = vrot.lane.b32.xlu0 %v2680, 112
        %v2826 = vpop.permute.xlu0 %2825
        %2827 = vrot.lane.b32.xlu0 %v2681, 112
        %v2828 = vpop.permute.xlu0 %2827
        %2829 = vrot.lane.b32.xlu0 %v2682, 112
        %v2830 = vpop.permute.xlu0 %2829
        %2831 = vrot.lane.b32.xlu0 %v2713, 112
        %v2832 = vpop.permute.xlu0 %2831
        %2833 = vrot.lane.b32.xlu0 %v2714, 112
        %v2834 = vpop.permute.xlu0 %2833
        %2835 = vrot.lane.b32.xlu0 %v2715, 112
        %v2836 = vpop.permute.xlu0 %2835
        %2837 = vrot.lane.b32.xlu0 %v2716, 112
        %v2838 = vpop.permute.xlu0 %2837
        %2839 = vrot.lane.b32.xlu0 %v2717, 112
        %v2840 = vpop.permute.xlu0 %2839
        %2841 = vrot.lane.b32.xlu0 %v2718, 112
        %v2842 = vpop.permute.xlu0 %2841
        %2843 = vrot.lane.b32.xlu0 %v2719, 112
        %v2844 = vpop.permute.xlu0 %2843
        %2845 = vrot.lane.b32.xlu0 %v2720, 112
        %v2846 = vpop.permute.xlu0 %2845
        %2847 = vrot.lane.b32.xlu0 %v2721, 112
        %v2848 = vpop.permute.xlu0 %2847
        %2849 = vrot.lane.b32.xlu0 %v2712, 112
        %v2850 = vpop.permute.xlu0 %2849
        %2851 = vrot.lane.b32.xlu0 %v2742, 112
        %v2852 = vpop.permute.xlu0 %2851
        %2853 = vrot.lane.b32.xlu0 %v2743, 112
        %v2854 = vpop.permute.xlu0 %2853
        %2855 = vrot.lane.b32.xlu0 %v2744, 112
        %v2856 = vpop.permute.xlu0 %2855
        %2857 = vrot.lane.b32.xlu0 %v2745, 112
        %v2858 = vpop.permute.xlu0 %2857
        %2859 = vrot.lane.b32.xlu0 %v2746, 112
        %v2860 = vpop.permute.xlu0 %2859
        %2861 = vrot.lane.b32.xlu0 %v2747, 112
        %v2862 = vpop.permute.xlu0 %2861
        %2863 = vrot.lane.b32.xlu0 %v2748, 112
        %v2864 = vpop.permute.xlu0 %2863
        %2865 = vrot.lane.b32.xlu0 %v2749, 112
        %v2866 = vpop.permute.xlu0 %2865
        %2867 = vrot.lane.b32.xlu0 %v2750, 112
        %v2868 = vpop.permute.xlu0 %2867
        %2869 = vrot.lane.b32.xlu0 %v2741, 112
        %v2870 = vpop.permute.xlu0 %2869
        %2871 = vrot.lane.b32.xlu0 %v2771, 112
        %v2872 = vpop.permute.xlu0 %2871
        %2873 = vrot.lane.b32.xlu0 %v2772, 112
        %v2874 = vpop.permute.xlu0 %2873
        %2875 = vrot.lane.b32.xlu0 %v2773, 112
        %v2876 = vpop.permute.xlu0 %2875
        %2877 = vrot.lane.b32.xlu0 %v2774, 112
        %v2878 = vpop.permute.xlu0 %2877
        %2879 = vrot.lane.b32.xlu0 %v2775, 112
        %v2880 = vpop.permute.xlu0 %2879
        %2881 = vrot.lane.b32.xlu0 %v2776, 112
        %v2882 = vpop.permute.xlu0 %2881
        %2883 = vrot.lane.b32.xlu0 %v2777, 112
        %v2884 = vpop.permute.xlu0 %2883
        %2885 = vrot.lane.b32.xlu0 %v2778, 112
        %v2886 = vpop.permute.xlu0 %2885
        %2887 = vrot.lane.b32.xlu0 %v2779, 112
        %v2888 = vpop.permute.xlu0 %2887
        %2889 = vrot.lane.b32.xlu0 %v2770, 112
        %v2890 = vpop.permute.xlu0 %2889
        %2891 = vrot.lane.b32.xlu0 %v2800, 112
        %v2892 = vpop.permute.xlu0 %2891
        %2893 = vrot.lane.b32.xlu0 %v2801, 112
        %v2894 = vpop.permute.xlu0 %2893
        %2895 = vrot.lane.b32.xlu0 %v2802, 112
        %v2896 = vpop.permute.xlu0 %2895
        %2897 = vrot.lane.b32.xlu0 %v2803, 112
        %v2898 = vpop.permute.xlu0 %2897
        %2899 = vrot.lane.b32.xlu0 %v2804, 112
        %v2900 = vpop.permute.xlu0 %2899
        %2901 = vrot.lane.b32.xlu0 %v2805, 112
        %v2902 = vpop.permute.xlu0 %2901
        %2903 = vrot.lane.b32.xlu0 %v2806, 112
        %v2904 = vpop.permute.xlu0 %2903
        %2905 = vrot.lane.b32.xlu0 %v2807, 112
        %v2906 = vpop.permute.xlu0 %2905
        %2907 = vrot.lane.b32.xlu0 %v2808, 112
        %v2908 = vpop.permute.xlu0 %2907
        %2909 = vrot.lane.b32.xlu0 %v2799, 112
        %v2910 = vpop.permute.xlu0 %2909
        %vm2911 = vcmask 916480
        %v2912 = vsel %vm2911, %v2812, %v2814
        %v2913 = vsel %vm2911, %v2814, %v2816
        %v2914 = vsel %vm2911, %v2816, %v2818
        %v2915 = vsel %vm2911, %v2818, %v2820
        %v2916 = vsel %vm2911, %v2820, %v2822
        %v2917 = vsel %vm2911, %v2822, %v2824
        %v2918 = vsel %vm2911, %v2824, %v2826
        %v2919 = vsel %vm2911, %v2826, %v2828
        %v2920 = vsel %vm2911, %v2828, %v2830
        %v2921 = vsel %vm2911, %v2832, %v2834
        %v2922 = vsel %vm2911, %v2834, %v2836
        %v2923 = vsel %vm2911, %v2836, %v2838
        %v2924 = vsel %vm2911, %v2838, %v2840
        %v2925 = vsel %vm2911, %v2840, %v2842
        %v2926 = vsel %vm2911, %v2842, %v2844
        %v2927 = vsel %vm2911, %v2844, %v2846
        %v2928 = vsel %vm2911, %v2846, %v2848
        %v2929 = vsel %vm2911, %v2848, %v2850
        %v2930 = vsel %vm2911, %v2852, %v2854
        %v2931 = vsel %vm2911, %v2854, %v2856
        %v2932 = vsel %vm2911, %v2856, %v2858
        %v2933 = vsel %vm2911, %v2858, %v2860
        %v2934 = vsel %vm2911, %v2860, %v2862
        %v2935 = vsel %vm2911, %v2862, %v2864
        %v2936 = vsel %vm2911, %v2864, %v2866
        %v2937 = vsel %vm2911, %v2866, %v2868
        %v2938 = vsel %vm2911, %v2868, %v2870
        %v2939 = vsel %vm2911, %v2872, %v2874
        %v2940 = vsel %vm2911, %v2874, %v2876
        %v2941 = vsel %vm2911, %v2876, %v2878
        %v2942 = vsel %vm2911, %v2878, %v2880
        %v2943 = vsel %vm2911, %v2880, %v2882
        %v2944 = vsel %vm2911, %v2882, %v2884
        %v2945 = vsel %vm2911, %v2884, %v2886
        %v2946 = vsel %vm2911, %v2886, %v2888
        %v2947 = vsel %vm2911, %v2888, %v2890
        %v2948 = vsel %vm2911, %v2892, %v2894
        %v2949 = vsel %vm2911, %v2894, %v2896
        %v2950 = vsel %vm2911, %v2896, %v2898
        %v2951 = vsel %vm2911, %v2898, %v2900
        %v2952 = vsel %vm2911, %v2900, %v2902
        %v2953 = vsel %vm2911, %v2902, %v2904
        %v2954 = vsel %vm2911, %v2904, %v2906
        %v2955 = vsel %vm2911, %v2906, %v2908
        %v2956 = vsel %vm2911, %v2908, %v2910
        %v3002 = vsel %vm836, %v2810, 0
        %3004 = vmatprep.subr.mxu0 0.0
        %3005 = vmatpush1.msra.mxu0 0.0
        %3006 = vmatprep.subr.mxu0 0.0
        %3007 = vmatpush1.msra.mxu0 0.0
        %3008 = vmatprep.subr.mxu0 0.0
        %3009 = vmatpush1.msra.mxu0 0.0
        %3010 = vmatprep.subr.mxu0 0.0
        %3011 = vmatpush1.msra.mxu0 0.0
        %3012 = vmatprep.subr.mxu0 0.0
        %3013 = vmatpush1.msra.mxu0 0.0
        %3014 = vmatprep.subr.mxu0 0.0
        %3015 = vmatpush1.msra.mxu0 0.0
        %3016 = vmatprep.subr.mxu0 0.0
        %3017 = vmatpush1.msra.mxu0 0.0
        %3018 = vmatprep.subr.mxu0 0.0
        %3019 = vmatpush1.msra.mxu0 0.0
        %3020 = vmatprep.subr.mxu0 0.0
        %3021 = vmatpush1.msra.mxu0 0.0
        %3022 = vmatprep.subr.mxu0 0.0
        %3023 = vmatpush1.msra.mxu0 0.0
        %3024 = vmatprep.subr.mxu0 0.0
        %3025 = vmatpush1.msra.mxu0 0.0
        %3026 = vmatprep.subr.mxu0 %v2949
        %3027 = vmatpush1.msra.mxu0 %v2948
        %3028 = vmatprep.subr.mxu0 %v2940
        %3029 = vmatpush1.msra.mxu0 %v2939
        %3030 = vmatprep.subr.mxu0 %v2931
        %3031 = vmatpush1.msra.mxu0 %v2930
        %3032 = vmatprep.subr.mxu0 %v2922
        %3033 = vmatpush1.msra.mxu0 %v2921
        %3034 = vmatprep.subr.mxu0 %v2913
        %3035 = vmatpush1.msra.mxu0 %v2912
        %3036 = vmatprep.subr.mxu0 0.0
        %3037 = vmatpush2.msra.mxu0 0.0
        %3038 = vmatprep.subr.mxu0 0.0
        %3039 = vmatpush2.msra.mxu0 0.0
        %3040 = vmatprep.subr.mxu0 0.0
        %3041 = vmatpush2.msra.mxu0 0.0
        %3042 = vmatprep.subr.mxu0 0.0
        %3043 = vmatpush2.msra.mxu0 0.0
        %3044 = vmatprep.subr.mxu0 0.0
        %3045 = vmatpush2.msra.mxu0 0.0
        %3046 = vmatprep.subr.mxu0 0.0
        %3047 = vmatpush2.msra.mxu0 0.0
        %3048 = vmatprep.subr.mxu0 0.0
        %3049 = vmatpush2.msra.mxu0 0.0
        %3050 = vmatprep.subr.mxu0 0.0
        %3051 = vmatpush2.msra.mxu0 0.0
        %3052 = vmatprep.subr.mxu0 0.0
        %3053 = vmatpush2.msra.mxu0 0.0
        %3054 = vmatprep.subr.mxu0 0.0
        %3055 = vmatpush2.msra.mxu0 0.0
        %3056 = vmatprep.subr.mxu0 0.0
        %3057 = vmatpush2.msra.mxu0 0.0
        %3058 = vmatprep.subr.mxu0 0.0
        %3059 = vmatpush2.msra.mxu0 0.0
        %3060 = vmatprep.subr.mxu0 0.0
        %3061 = vmatpush2.msra.mxu0 0.0
        %3062 = vmatprep.subr.mxu0 0.0
        %3063 = vmatpush2.msra.mxu0 0.0
        %3064 = vmatprep.subr.mxu0 0.0
        %3065 = vmatpush2.msra.mxu0 0.0
        %3066 = vmatprep.subr.mxu0 0.0
        %3067 = vmatpush2.msra.mxu0 0.0
        %3068 = vmatprep.mubr.f32.mxu0 0.0
        %3069 = vmatmul.mubr.f32.gmra.mxu0 %v3002
        %v3070 = vpop.f32.mrf.mxu0
        %v3071 = vadd.f32 0.0, %v3070
        %v3072 = vpop.f32.mrf.mxu0
        %v3073 = vadd.f32 0.0, %v3072
        %3074 = vdwg.mxu0
        %3075 = vmatprep.subr.mxu0 0.0
        %3076 = vmatpush1.msra.mxu0 0.0
        %3077 = vmatprep.subr.mxu0 0.0
        %3078 = vmatpush1.msra.mxu0 0.0
        %3079 = vmatprep.subr.mxu0 0.0
        %3080 = vmatpush1.msra.mxu0 0.0
        %3081 = vmatprep.subr.mxu0 0.0
        %3082 = vmatpush1.msra.mxu0 0.0
        %3083 = vmatprep.subr.mxu0 0.0
        %3084 = vmatpush1.msra.mxu0 0.0
        %3085 = vmatprep.subr.mxu0 0.0
        %3086 = vmatpush1.msra.mxu0 0.0
        %3087 = vmatprep.subr.mxu0 0.0
        %3088 = vmatpush1.msra.mxu0 0.0
        %3089 = vmatprep.subr.mxu0 0.0
        %3090 = vmatpush1.msra.mxu0 0.0
        %3091 = vmatprep.subr.mxu0 0.0
        %3092 = vmatpush1.msra.mxu0 0.0
        %3093 = vmatprep.subr.mxu0 0.0
        %3094 = vmatpush1.msra.mxu0 0.0
        %3095 = vmatprep.subr.mxu0 0.0
        %3096 = vmatpush1.msra.mxu0 0.0
        %3097 = vmatprep.subr.mxu0 %v2951
        %3098 = vmatpush1.msra.mxu0 %v2950
        %3099 = vmatprep.subr.mxu0 %v2942
        %3100 = vmatpush1.msra.mxu0 %v2941
        %3101 = vmatprep.subr.mxu0 %v2933
        %3102 = vmatpush1.msra.mxu0 %v2932
        %3103 = vmatprep.subr.mxu0 %v2924
        %3104 = vmatpush1.msra.mxu0 %v2923
        %3105 = vmatprep.subr.mxu0 %v2915
        %3106 = vmatpush1.msra.mxu0 %v2914
        %3107 = vmatprep.subr.mxu0 0.0
        %3108 = vmatpush2.msra.mxu0 0.0
        %3109 = vmatprep.subr.mxu0 0.0
        %3110 = vmatpush2.msra.mxu0 0.0
        %3111 = vmatprep.subr.mxu0 0.0
        %3112 = vmatpush2.msra.mxu0 0.0
        %3113 = vmatprep.subr.mxu0 0.0
        %3114 = vmatpush2.msra.mxu0 0.0
        %3115 = vmatprep.subr.mxu0 0.0
        %3116 = vmatpush2.msra.mxu0 0.0
        %3117 = vmatprep.subr.mxu0 0.0
        %3118 = vmatpush2.msra.mxu0 0.0
        %3119 = vmatprep.subr.mxu0 0.0
        %3120 = vmatpush2.msra.mxu0 0.0
        %3121 = vmatprep.subr.mxu0 0.0
        %3122 = vmatpush2.msra.mxu0 0.0
        %3123 = vmatprep.subr.mxu0 0.0
        %3124 = vmatpush2.msra.mxu0 0.0
        %3125 = vmatprep.subr.mxu0 0.0
        %3126 = vmatpush2.msra.mxu0 0.0
        %3127 = vmatprep.subr.mxu0 0.0
        %3128 = vmatpush2.msra.mxu0 0.0
        %3129 = vmatprep.subr.mxu0 0.0
        %3130 = vmatpush2.msra.mxu0 0.0
        %3131 = vmatprep.subr.mxu0 0.0
        %3132 = vmatpush2.msra.mxu0 0.0
        %3133 = vmatprep.subr.mxu0 0.0
        %3134 = vmatpush2.msra.mxu0 0.0
        %3135 = vmatprep.subr.mxu0 0.0
        %3136 = vmatpush2.msra.mxu0 0.0
        %3137 = vmatprep.subr.mxu0 0.0
        %3138 = vmatpush2.msra.mxu0 0.0
        %3139 = vmatprep.mubr.f32.mxu0 0.0
        %3140 = vmatmul.mubr.f32.gmra.mxu0 %v3002
        %v3141 = vpop.f32.mrf.mxu0
        %v3142 = vadd.f32 0.0, %v3141
        %v3143 = vpop.f32.mrf.mxu0
        %v3144 = vadd.f32 0.0, %v3143
        %3145 = vdwg.mxu0
        %3146 = vmatprep.subr.mxu0 0.0
        %3147 = vmatpush1.msra.mxu0 0.0
        %3148 = vmatprep.subr.mxu0 0.0
        %3149 = vmatpush1.msra.mxu0 0.0
        %3150 = vmatprep.subr.mxu0 0.0
        %3151 = vmatpush1.msra.mxu0 0.0
        %3152 = vmatprep.subr.mxu0 0.0
        %3153 = vmatpush1.msra.mxu0 0.0
        %3154 = vmatprep.subr.mxu0 0.0
        %3155 = vmatpush1.msra.mxu0 0.0
        %3156 = vmatprep.subr.mxu0 0.0
        %3157 = vmatpush1.msra.mxu0 0.0
        %3158 = vmatprep.subr.mxu0 0.0
        %3159 = vmatpush1.msra.mxu0 0.0
        %3160 = vmatprep.subr.mxu0 0.0
        %3161 = vmatpush1.msra.mxu0 0.0
        %3162 = vmatprep.subr.mxu0 0.0
        %3163 = vmatpush1.msra.mxu0 0.0
        %3164 = vmatprep.subr.mxu0 0.0
        %3165 = vmatpush1.msra.mxu0 0.0
        %3166 = vmatprep.subr.mxu0 0.0
        %3167 = vmatpush1.msra.mxu0 0.0
        %3168 = vmatprep.subr.mxu0 %v2953
        %3169 = vmatpush1.msra.mxu0 %v2952
        %3170 = vmatprep.subr.mxu0 %v2944
        %3171 = vmatpush1.msra.mxu0 %v2943
        %3172 = vmatprep.subr.mxu0 %v2935
        %3173 = vmatpush1.msra.mxu0 %v2934
        %3174 = vmatprep.subr.mxu0 %v2926
        %3175 = vmatpush1.msra.mxu0 %v2925
        %3176 = vmatprep.subr.mxu0 %v2917
        %3177 = vmatpush1.msra.mxu0 %v2916
        %3178 = vmatprep.subr.mxu0 0.0
        %3179 = vmatpush2.msra.mxu0 0.0
        %3180 = vmatprep.subr.mxu0 0.0
        %3181 = vmatpush2.msra.mxu0 0.0
        %3182 = vmatprep.subr.mxu0 0.0
        %3183 = vmatpush2.msra.mxu0 0.0
        %3184 = vmatprep.subr.mxu0 0.0
        %3185 = vmatpush2.msra.mxu0 0.0
        %3186 = vmatprep.subr.mxu0 0.0
        %3187 = vmatpush2.msra.mxu0 0.0
        %3188 = vmatprep.subr.mxu0 0.0
        %3189 = vmatpush2.msra.mxu0 0.0
        %3190 = vmatprep.subr.mxu0 0.0
        %3191 = vmatpush2.msra.mxu0 0.0
        %3192 = vmatprep.subr.mxu0 0.0
        %3193 = vmatpush2.msra.mxu0 0.0
        %3194 = vmatprep.subr.mxu0 0.0
        %3195 = vmatpush2.msra.mxu0 0.0
        %3196 = vmatprep.subr.mxu0 0.0
        %3197 = vmatpush2.msra.mxu0 0.0
        %3198 = vmatprep.subr.mxu0 0.0
        %3199 = vmatpush2.msra.mxu0 0.0
        %3200 = vmatprep.subr.mxu0 0.0
        %3201 = vmatpush2.msra.mxu0 0.0
        %3202 = vmatprep.subr.mxu0 0.0
        %3203 = vmatpush2.msra.mxu0 0.0
        %3204 = vmatprep.subr.mxu0 0.0
        %3205 = vmatpush2.msra.mxu0 0.0
        %3206 = vmatprep.subr.mxu0 0.0
        %3207 = vmatpush2.msra.mxu0 0.0
        %3208 = vmatprep.subr.mxu0 0.0
        %3209 = vmatpush2.msra.mxu0 0.0
        %3210 = vmatprep.mubr.f32.mxu0 0.0
        %3211 = vmatmul.mubr.f32.gmra.mxu0 %v3002
        %v3212 = vpop.f32.mrf.mxu0
        %v3213 = vadd.f32 0.0, %v3212
        %v3214 = vpop.f32.mrf.mxu0
        %v3215 = vadd.f32 0.0, %v3214
        %3216 = vdwg.mxu0
        %3217 = vmatprep.subr.mxu0 0.0
        %3218 = vmatpush1.msra.mxu0 0.0
        %3219 = vmatprep.subr.mxu0 0.0
        %3220 = vmatpush1.msra.mxu0 0.0
        %3221 = vmatprep.subr.mxu0 0.0
        %3222 = vmatpush1.msra.mxu0 0.0
        %3223 = vmatprep.subr.mxu0 0.0
        %3224 = vmatpush1.msra.mxu0 0.0
        %3225 = vmatprep.subr.mxu0 0.0
        %3226 = vmatpush1.msra.mxu0 0.0
        %3227 = vmatprep.subr.mxu0 0.0
        %3228 = vmatpush1.msra.mxu0 0.0
        %3229 = vmatprep.subr.mxu0 0.0
        %3230 = vmatpush1.msra.mxu0 0.0
        %3231 = vmatprep.subr.mxu0 0.0
        %3232 = vmatpush1.msra.mxu0 0.0
        %3233 = vmatprep.subr.mxu0 0.0
        %3234 = vmatpush1.msra.mxu0 0.0
        %3235 = vmatprep.subr.mxu0 0.0
        %3236 = vmatpush1.msra.mxu0 0.0
        %3237 = vmatprep.subr.mxu0 0.0
        %3238 = vmatpush1.msra.mxu0 0.0
        %3239 = vmatprep.subr.mxu0 %v2955
        %3240 = vmatpush1.msra.mxu0 %v2954
        %3241 = vmatprep.subr.mxu0 %v2946
        %3242 = vmatpush1.msra.mxu0 %v2945
        %3243 = vmatprep.subr.mxu0 %v2937
        %3244 = vmatpush1.msra.mxu0 %v2936
        %3245 = vmatprep.subr.mxu0 %v2928
        %3246 = vmatpush1.msra.mxu0 %v2927
        %3247 = vmatprep.subr.mxu0 %v2919
        %3248 = vmatpush1.msra.mxu0 %v2918
        %3249 = vmatprep.subr.mxu0 0.0
        %3250 = vmatpush2.msra.mxu0 0.0
        %3251 = vmatprep.subr.mxu0 0.0
        %3252 = vmatpush2.msra.mxu0 0.0
        %3253 = vmatprep.subr.mxu0 0.0
        %3254 = vmatpush2.msra.mxu0 0.0
        %3255 = vmatprep.subr.mxu0 0.0
        %3256 = vmatpush2.msra.mxu0 0.0
        %3257 = vmatprep.subr.mxu0 0.0
        %3258 = vmatpush2.msra.mxu0 0.0
        %3259 = vmatprep.subr.mxu0 0.0
        %3260 = vmatpush2.msra.mxu0 0.0
        %3261 = vmatprep.subr.mxu0 0.0
        %3262 = vmatpush2.msra.mxu0 0.0
        %3263 = vmatprep.subr.mxu0 0.0
        %3264 = vmatpush2.msra.mxu0 0.0
        %3265 = vmatprep.subr.mxu0 0.0
        %3266 = vmatpush2.msra.mxu0 0.0
        %3267 = vmatprep.subr.mxu0 0.0
        %3268 = vmatpush2.msra.mxu0 0.0
        %3269 = vmatprep.subr.mxu0 0.0
        %3270 = vmatpush2.msra.mxu0 0.0
        %3271 = vmatprep.subr.mxu0 0.0
        %3272 = vmatpush2.msra.mxu0 0.0
        %3273 = vmatprep.subr.mxu0 0.0
        %3274 = vmatpush2.msra.mxu0 0.0
        %3275 = vmatprep.subr.mxu0 0.0
        %3276 = vmatpush2.msra.mxu0 0.0
        %3277 = vmatprep.subr.mxu0 0.0
        %3278 = vmatpush2.msra.mxu0 0.0
        %3279 = vmatprep.subr.mxu0 0.0
        %3280 = vmatpush2.msra.mxu0 0.0
        %3281 = vmatprep.mubr.f32.mxu0 0.0
        %3282 = vmatmul.mubr.f32.gmra.mxu0 %v3002
        %v3283 = vpop.f32.mrf.mxu0
        %v3284 = vadd.f32 0.0, %v3283
        %v3285 = vpop.f32.mrf.mxu0
        %v3286 = vadd.f32 0.0, %v3285
        %3287 = vdwg.mxu0
        %3288 = vmatprep.subr.mxu0 0.0
        %3289 = vmatpush1.msra.mxu0 0.0
        %3290 = vmatprep.subr.mxu0 0.0
        %3291 = vmatpush1.msra.mxu0 0.0
        %3292 = vmatprep.subr.mxu0 0.0
        %3293 = vmatpush1.msra.mxu0 0.0
        %3294 = vmatprep.subr.mxu0 0.0
        %3295 = vmatpush1.msra.mxu0 0.0
        %3296 = vmatprep.subr.mxu0 0.0
        %3297 = vmatpush1.msra.mxu0 0.0
        %3298 = vmatprep.subr.mxu0 0.0
        %3299 = vmatpush1.msra.mxu0 0.0
        %3300 = vmatprep.subr.mxu0 0.0
        %3301 = vmatpush1.msra.mxu0 0.0
        %3302 = vmatprep.subr.mxu0 0.0
        %3303 = vmatpush1.msra.mxu0 0.0
        %3304 = vmatprep.subr.mxu0 0.0
        %3305 = vmatpush1.msra.mxu0 0.0
        %3306 = vmatprep.subr.mxu0 0.0
        %3307 = vmatpush1.msra.mxu0 0.0
        %3308 = vmatprep.subr.mxu0 0.0
        %3309 = vmatpush1.msra.mxu0 0.0
        %3310 = vmatprep.subr.mxu0 0.0
        %3311 = vmatpush1.msra.mxu0 %v2956
        %3312 = vmatprep.subr.mxu0 0.0
        %3313 = vmatpush1.msra.mxu0 %v2947
        %3314 = vmatprep.subr.mxu0 0.0
        %3315 = vmatpush1.msra.mxu0 %v2938
        %3316 = vmatprep.subr.mxu0 0.0
        %3317 = vmatpush1.msra.mxu0 %v2929
        %3318 = vmatprep.subr.mxu0 0.0
        %3319 = vmatpush1.msra.mxu0 %v2920
        %3320 = vmatprep.subr.mxu0 0.0
        %3321 = vmatpush2.msra.mxu0 0.0
        %3322 = vmatprep.subr.mxu0 0.0
        %3323 = vmatpush2.msra.mxu0 0.0
        %3324 = vmatprep.subr.mxu0 0.0
        %3325 = vmatpush2.msra.mxu0 0.0
        %3326 = vmatprep.subr.mxu0 0.0
        %3327 = vmatpush2.msra.mxu0 0.0
        %3328 = vmatprep.subr.mxu0 0.0
        %3329 = vmatpush2.msra.mxu0 0.0
        %3330 = vmatprep.subr.mxu0 0.0
        %3331 = vmatpush2.msra.mxu0 0.0
        %3332 = vmatprep.subr.mxu0 0.0
        %3333 = vmatpush2.msra.mxu0 0.0
        %3334 = vmatprep.subr.mxu0 0.0
        %3335 = vmatpush2.msra.mxu0 0.0
        %3336 = vmatprep.subr.mxu0 0.0
        %3337 = vmatpush2.msra.mxu0 0.0
        %3338 = vmatprep.subr.mxu0 0.0
        %3339 = vmatpush2.msra.mxu0 0.0
        %3340 = vmatprep.subr.mxu0 0.0
        %3341 = vmatpush2.msra.mxu0 0.0
        %3342 = vmatprep.subr.mxu0 0.0
        %3343 = vmatpush2.msra.mxu0 0.0
        %3344 = vmatprep.subr.mxu0 0.0
        %3345 = vmatpush2.msra.mxu0 0.0
        %3346 = vmatprep.subr.mxu0 0.0
        %3347 = vmatpush2.msra.mxu0 0.0
        %3348 = vmatprep.subr.mxu0 0.0
        %3349 = vmatpush2.msra.mxu0 0.0
        %3350 = vmatprep.subr.mxu0 0.0
        %3351 = vmatpush2.msra.mxu0 0.0
        %3352 = vmatprep.mubr.f32.mxu0 0.0
        %3353 = vmatmul.mubr.f32.gmra.mxu0 %v3002
        %v3354 = vpop.f32.mrf.mxu0
        %v3355 = vadd.f32 0.0, %v3354
        %v3356 = vpop.f32.mrf.mxu0
        %3357 = vdwg.mxu0
        %v3358 = vadd.f32 %v2664, %v3071
        %v3359 = vadd.f32 %v2665, %v3073
        %v3360 = vadd.f32 %v2666, %v3142
        %v3361 = vadd.f32 %v2667, %v3144
        %v3362 = vadd.f32 %v2668, %v3213
        %v3363 = vadd.f32 %v2669, %v3215
        %v3364 = vadd.f32 %v2670, %v3284
        %v3365 = vadd.f32 %v2671, %v3286
        %v3366 = vadd.f32 %v2672, %v3355
        %v3367 = vld [vmem:[%s2] sm:$0xff]
        %3369 = vset.pattern.permute.xlu0 0
        %3370 = vperm.xlu0 %3369, %v3367
        %v3371 = vpop.permute.xlu0 %3370
        %v3373 = vadd.f32 %v3358, %v3371
        %v3374 = vadd.f32 %v3359, %v3371
        %v3375 = vadd.f32 %v3360, %v3371
        %v3376 = vadd.f32 %v3361, %v3371
        %v3377 = vadd.f32 %v3362, %v3371
        %v3378 = vadd.f32 %v3363, %v3371
        %v3379 = vadd.f32 %v3364, %v3371
        %v3380 = vadd.f32 %v3365, %v3371
        %v3381 = vadd.f32 %v3366, %v3371
        %v3382 = vmax.f32 %v3373, 0.0
        %v3383 = vmax.f32 %v3374, 0.0
        %v3384 = vmax.f32 %v3375, 0.0
        %v3385 = vmax.f32 %v3376, 0.0
        %v3386 = vmax.f32 %v3377, 0.0
        %v3387 = vmax.f32 %v3378, 0.0
        %v3388 = vmax.f32 %v3379, 0.0
        %v3389 = vmax.f32 %v3380, 0.0
        %v3390 = vmax.f32 %v3381, 0.0
        %3400 = vrot.lane.b32.xlu0 %v3382, 127
        %v3401 = vpop.permute.xlu0 %3400
        %3402 = vrot.lane.b32.xlu0 %v3383, 127
        %v3403 = vpop.permute.xlu0 %3402
        %3404 = vrot.lane.b32.xlu0 %v3384, 127
        %v3405 = vpop.permute.xlu0 %3404
        %3406 = vrot.lane.b32.xlu0 %v3385, 127
        %v3407 = vpop.permute.xlu0 %3406
        %3408 = vrot.lane.b32.xlu0 %v3386, 127
        %v3409 = vpop.permute.xlu0 %3408
        %3410 = vrot.lane.b32.xlu0 %v3387, 127
        %v3411 = vpop.permute.xlu0 %3410
        %3412 = vrot.lane.b32.xlu0 %v3388, 127
        %v3413 = vpop.permute.xlu0 %3412
        %3414 = vrot.lane.b32.xlu0 %v3389, 127
        %v3415 = vpop.permute.xlu0 %3414
        %3416 = vrot.lane.b32.xlu0 %v3390, 127
        %v3417 = vpop.permute.xlu0 %3416
        %v3418 = vsel %vm505, %v3401, %v3403
        %v3419 = vsel %vm505, %v3403, %v3405
        %v3420 = vsel %vm505, %v3405, %v3407
        %v3421 = vsel %vm505, %v3407, %v3409
        %v3422 = vsel %vm505, %v3409, %v3411
        %v3423 = vsel %vm505, %v3411, %v3413
        %v3424 = vsel %vm505, %v3413, %v3415
        %v3425 = vsel %vm505, %v3415, %v3417
        %v3435 = vmax.f32 %v3382, %v3418
        %v3436 = vmax.f32 %v3383, %v3419
        %v3437 = vmax.f32 %v3384, %v3420
        %v3438 = vmax.f32 %v3385, %v3421
        %v3439 = vmax.f32 %v3386, %v3422
        %v3440 = vmax.f32 %v3387, %v3423
        %v3441 = vmax.f32 %v3388, %v3424
        %v3442 = vmax.f32 %v3389, %v3425
        %v3443 = vmax.f32 %v3390, %v3417
        %3453 = vrot.lane.b32.xlu0 %v3435, 92
        %v3454 = vpop.permute.xlu0 %3453
        %3455 = vrot.lane.b32.xlu0 %v3436, 92
        %v3456 = vpop.permute.xlu0 %3455
        %3457 = vrot.lane.b32.xlu0 %v3437, 92
        %v3458 = vpop.permute.xlu0 %3457
        %3459 = vrot.lane.b32.xlu0 %v3438, 92
        %v3460 = vpop.permute.xlu0 %3459
        %3461 = vrot.lane.b32.xlu0 %v3439, 92
        %v3462 = vpop.permute.xlu0 %3461
        %3463 = vrot.lane.b32.xlu0 %v3440, 92
        %v3464 = vpop.permute.xlu0 %3463
        %3465 = vrot.lane.b32.xlu0 %v3441, 92
        %v3466 = vpop.permute.xlu0 %3465
        %3467 = vrot.lane.b32.xlu0 %v3442, 92
        %v3468 = vpop.permute.xlu0 %3467
        %3469 = vrot.lane.b32.xlu0 %v3443, 92
        %v3470 = vpop.permute.xlu0 %3469
        %v3471 = vsel %vm745, %v3454, %v3456
        %v3472 = vsel %vm745, %v3456, %v3458
        %v3473 = vsel %vm745, %v3458, %v3460
        %v3474 = vsel %vm745, %v3460, %v3462
        %v3475 = vsel %vm745, %v3462, %v3464
        %v3476 = vsel %vm745, %v3464, %v3466
        %v3477 = vsel %vm745, %v3466, %v3468
        %v3478 = vsel %vm745, %v3468, %v3470
        %v3488 = vmax.f32 %v3435, %v3471
        %v3489 = vmax.f32 %v3436, %v3472
        %v3490 = vmax.f32 %v3437, %v3473
        %v3491 = vmax.f32 %v3438, %v3474
        %v3492 = vmax.f32 %v3439, %v3475
        %v3493 = vmax.f32 %v3440, %v3476
        %v3494 = vmax.f32 %v3441, %v3477
        %v3495 = vmax.f32 %v3442, %v3478
        %v3496 = vmax.f32 %v3443, %v3470
        %3498 = vrot.lane.b32.xlu0 %v3488, 56
        %v3499 = vpop.permute.xlu0 %3498
        %3501 = vrot.lane.b32.xlu0 %v3489, 112
        %v3502 = vpop.permute.xlu0 %3501
        %3503 = vrot.lane.b32.xlu0 %v3489, 40
        %v3504 = vpop.permute.xlu0 %3503
        %3506 = vrot.lane.b32.xlu0 %v3490, 96
        %v3507 = vpop.permute.xlu0 %3506
        %3509 = vrot.lane.b32.xlu0 %v3490, 24
        %v3510 = vpop.permute.xlu0 %3509
        %3511 = vrot.lane.b32.xlu0 %v3491, 24
        %v3512 = vpop.permute.xlu0 %3511
        %vm3513 = vcmask 195584
        %v3514 = vsel %vm3513, %v3510, %v3512
        %3515 = vrot.lane.b32.xlu0 %v3491, 80
        %v3516 = vpop.permute.xlu0 %3515
        %3518 = vrot.lane.b32.xlu0 %v3491, 8
        %v3519 = vpop.permute.xlu0 %3518
        %3520 = vrot.lane.b32.xlu0 %v3492, 8
        %v3521 = vpop.permute.xlu0 %3520
        %v3522 = vsel %vm2115, %v3519, %v3521
        %3523 = vrot.lane.b32.xlu0 %v3492, 64
        %v3524 = vpop.permute.xlu0 %3523
        %3526 = vrot.lane.b32.xlu0 %v3493, 120
        %v3527 = vpop.permute.xlu0 %3526
        %3528 = vrot.lane.b32.xlu0 %v3493, 48
        %v3529 = vpop.permute.xlu0 %3528
        %3531 = vrot.lane.b32.xlu0 %v3494, 104
        %v3532 = vpop.permute.xlu0 %3531
        %3533 = vrot.lane.b32.xlu0 %v3494, 32
        %v3534 = vpop.permute.xlu0 %3533
        %3536 = vrot.lane.b32.xlu0 %v3495, 88
        %v3537 = vpop.permute.xlu0 %3536
        %3539 = vrot.lane.b32.xlu0 %v3495, 16
        %v3540 = vpop.permute.xlu0 %3539
        %3541 = vrot.lane.b32.xlu0 %v3496, 16
        %v3542 = vpop.permute.xlu0 %3541
        %vm3543 = vcmask 130048
        %v3544 = vsel %vm3543, %v3540, %v3542
        %3545 = vrot.lane.b32.xlu0 %v3496, 72
        %v3546 = vpop.permute.xlu0 %3545
        %v3547 = vld [vmem:[%s9] sm:$0xff]
        %v3548 = vld [vmem:[%s9 + $0x8] sm:$0xff]
        %v3549 = vld [vmem:[%s9 + $0x10] sm:$0xff]
        %v3550 = vld [vmem:[%s9 + $0x18] sm:$0x7f]
        %vm3551 = vcmask 252928
        %v3552 = vsel %vm3551, %v3488, 0
        %v3554 = vsel %vm3551, %v3499, 0
        %v3556 = vsel %vm3551, %v3502, 0
        %v3558 = vsel %vm3551, %v3504, 0
        %v3560 = vsel %vm3551, %v3507, 0
        %v3562 = vsel %vm3551, %v3514, 0
        %v3564 = vsel %vm3551, %v3516, 0
        %v3566 = vsel %vm3551, %v3522, 0
        %v3568 = vsel %vm3551, %v3524, 0
        %v3570 = vsel %vm3551, %v3527, 0
        %v3572 = vsel %vm3551, %v3529, 0
        %v3574 = vsel %vm3551, %v3532, 0
        %v3576 = vsel %vm3551, %v3534, 0
        %v3578 = vsel %vm3551, %v3537, 0
        %v3580 = vsel %vm3551, %v3544, 0
        %v3582 = vsel %vm3551, %v3546, 0
        %vm3584 = vcmask 1046528
        %v3586 = vsel %vm3584, %v3550, 0
        %3588 = vmatprep.subr.mxu0 0.0
        %3589 = vmatpush1.msra.mxu0 0.0
        %3590 = vmatprep.subr.mxu0 0.0
        %3591 = vmatpush1.msra.mxu0 0.0
        %3592 = vmatprep.subr.mxu0 0.0
        %3593 = vmatpush1.msra.mxu0 0.0
        %3594 = vmatprep.subr.mxu0 0.0
        %3595 = vmatpush1.msra.mxu0 0.0
        %3596 = vmatprep.subr.mxu0 0.0
        %3597 = vmatpush1.msra.mxu0 0.0
        %3598 = vmatprep.subr.mxu0 0.0
        %3599 = vmatpush1.msra.mxu0 0.0
        %3600 = vmatprep.subr.mxu0 0.0
        %3601 = vmatpush1.msra.mxu0 0.0
        %3602 = vmatprep.subr.mxu0 0.0
        %3603 = vmatpush1.msra.mxu0 0.0
        %3604 = vmatprep.subr.mxu0 0.0
        %3605 = vmatpush1.msra.mxu0 0.0
        %3606 = vmatprep.subr.mxu0 0.0
        %3607 = vmatpush1.msra.mxu0 0.0
        %3608 = vmatprep.subr.mxu0 0.0
        %3609 = vmatpush1.msra.mxu0 0.0
        %3610 = vmatprep.subr.mxu0 0.0
        %3611 = vmatpush1.msra.mxu0 0.0
        %3612 = vmatprep.subr.mxu0 0.0
        %3613 = vmatpush1.msra.mxu0 %v3586
        %3614 = vmatprep.subr.mxu0 0.0
        %3615 = vmatpush1.msra.mxu0 %v3549
        %3616 = vmatprep.subr.mxu0 0.0
        %3617 = vmatpush1.msra.mxu0 %v3548
        %3618 = vmatprep.subr.mxu0 0.0
        %3619 = vmatpush1.msra.mxu0 %v3547
        %3620 = vmatprep.subr.mxu0 0.0
        %3621 = vmatpush2.msra.mxu0 0.0
        %3622 = vmatprep.subr.mxu0 0.0
        %3623 = vmatpush2.msra.mxu0 0.0
        %3624 = vmatprep.subr.mxu0 0.0
        %3625 = vmatpush2.msra.mxu0 0.0
        %3626 = vmatprep.subr.mxu0 0.0
        %3627 = vmatpush2.msra.mxu0 0.0
        %3628 = vmatprep.subr.mxu0 0.0
        %3629 = vmatpush2.msra.mxu0 0.0
        %3630 = vmatprep.subr.mxu0 0.0
        %3631 = vmatpush2.msra.mxu0 0.0
        %3632 = vmatprep.subr.mxu0 0.0
        %3633 = vmatpush2.msra.mxu0 0.0
        %3634 = vmatprep.subr.mxu0 0.0
        %3635 = vmatpush2.msra.mxu0 0.0
        %3636 = vmatprep.subr.mxu0 0.0
        %3637 = vmatpush2.msra.mxu0 0.0
        %3638 = vmatprep.subr.mxu0 0.0
        %3639 = vmatpush2.msra.mxu0 0.0
        %3640 = vmatprep.subr.mxu0 0.0
        %3641 = vmatpush2.msra.mxu0 0.0
        %3642 = vmatprep.subr.mxu0 0.0
        %3643 = vmatpush2.msra.mxu0 0.0
        %3644 = vmatprep.subr.mxu0 0.0
        %3645 = vmatpush2.msra.mxu0 0.0
        %3646 = vmatprep.subr.mxu0 0.0
        %3647 = vmatpush2.msra.mxu0 0.0
        %3648 = vmatprep.subr.mxu0 0.0
        %3649 = vmatpush2.msra.mxu0 0.0
        %3650 = vmatprep.subr.mxu0 0.0
        %3651 = vmatpush2.msra.mxu0 0.0
        %3652 = vmatprep.mubr.f32.mxu0 0.0
        %3653 = vmatmul.mubr.f32.gmra.mxu0 %v3552
        %v3654 = vpop.f32.mrf.mxu0
        %v3655 = vadd.f32 0.0, %v3654
        %v3656 = vpop.f32.mrf.mxu0
        %3657 = vmatprep.mubr.f32.mxu0 0.0
        %3658 = vmatmul.mubr.f32.gmra.mxu0 %v3554
        %v3659 = vpop.f32.mrf.mxu0
        %v3660 = vadd.f32 0.0, %v3659
        %v3661 = vpop.f32.mrf.mxu0
        %3662 = vmatprep.mubr.f32.mxu0 0.0
        %3663 = vmatmul.mubr.f32.gmra.mxu0 %v3556
        %v3664 = vpop.f32.mrf.mxu0
        %v3665 = vadd.f32 0.0, %v3664
        %v3666 = vpop.f32.mrf.mxu0
        %3667 = vmatprep.mubr.f32.mxu0 0.0
        %3668 = vmatmul.mubr.f32.gmra.mxu0 %v3558
        %v3669 = vpop.f32.mrf.mxu0
        %v3670 = vadd.f32 0.0, %v3669
        %v3671 = vpop.f32.mrf.mxu0
        %3672 = vmatprep.mubr.f32.mxu0 0.0
        %3673 = vmatmul.mubr.f32.gmra.mxu0 %v3560
        %v3674 = vpop.f32.mrf.mxu0
        %v3675 = vadd.f32 0.0, %v3674
        %v3676 = vpop.f32.mrf.mxu0
        %3677 = vmatprep.mubr.f32.mxu0 0.0
        %3678 = vmatmul.mubr.f32.gmra.mxu0 %v3562
        %v3679 = vpop.f32.mrf.mxu0
        %v3680 = vadd.f32 0.0, %v3679
        %v3681 = vpop.f32.mrf.mxu0
        %3682 = vmatprep.mubr.f32.mxu0 0.0
        %3683 = vmatmul.mubr.f32.gmra.mxu0 %v3564
        %v3684 = vpop.f32.mrf.mxu0
        %v3685 = vadd.f32 0.0, %v3684
        %v3686 = vpop.f32.mrf.mxu0
        %3687 = vmatprep.mubr.f32.mxu0 0.0
        %3688 = vmatmul.mubr.f32.gmra.mxu0 %v3566
        %v3689 = vpop.f32.mrf.mxu0
        %v3690 = vadd.f32 0.0, %v3689
        %v3691 = vpop.f32.mrf.mxu0
        %3692 = vmatprep.mubr.f32.mxu0 0.0
        %3693 = vmatmul.mubr.f32.gmra.mxu0 %v3568
        %v3694 = vpop.f32.mrf.mxu0
        %v3695 = vadd.f32 0.0, %v3694
        %v3696 = vpop.f32.mrf.mxu0
        %3697 = vmatprep.mubr.f32.mxu0 0.0
        %3698 = vmatmul.mubr.f32.gmra.mxu0 %v3570
        %v3699 = vpop.f32.mrf.mxu0
        %v3700 = vadd.f32 0.0, %v3699
        %v3701 = vpop.f32.mrf.mxu0
        %3702 = vmatprep.mubr.f32.mxu0 0.0
        %3703 = vmatmul.mubr.f32.gmra.mxu0 %v3572
        %v3704 = vpop.f32.mrf.mxu0
        %v3705 = vadd.f32 0.0, %v3704
        %v3706 = vpop.f32.mrf.mxu0
        %3707 = vmatprep.mubr.f32.mxu0 0.0
        %3708 = vmatmul.mubr.f32.gmra.mxu0 %v3574
        %v3709 = vpop.f32.mrf.mxu0
        %v3710 = vadd.f32 0.0, %v3709
        %v3711 = vpop.f32.mrf.mxu0
        %3712 = vmatprep.mubr.f32.mxu0 0.0
        %3713 = vmatmul.mubr.f32.gmra.mxu0 %v3576
        %v3714 = vpop.f32.mrf.mxu0
        %v3715 = vadd.f32 0.0, %v3714
        %v3716 = vpop.f32.mrf.mxu0
        %3717 = vmatprep.mubr.f32.mxu0 0.0
        %3718 = vmatmul.mubr.f32.gmra.mxu0 %v3578
        %v3719 = vpop.f32.mrf.mxu0
        %v3720 = vadd.f32 0.0, %v3719
        %v3721 = vpop.f32.mrf.mxu0
        %3722 = vmatprep.mubr.f32.mxu0 0.0
        %3723 = vmatmul.mubr.f32.gmra.mxu0 %v3580
        %v3724 = vpop.f32.mrf.mxu0
        %v3725 = vadd.f32 0.0, %v3724
        %v3726 = vpop.f32.mrf.mxu0
        %3727 = vmatprep.mubr.f32.mxu0 0.0
        %3728 = vmatmul.mubr.f32.gmra.mxu0 %v3582
        %v3729 = vpop.f32.mrf.mxu0
        %v3730 = vadd.f32 0.0, %v3729
        %v3731 = vpop.f32.mrf.mxu0
        %3732 = vdwg.mxu0
        %3733 = vst [vmem:[#allocation2] sm:$0xff] 0.0
        %3734 = vst [vmem:[#allocation2 + $0x8] sm:$0xff] 0.0
        %3735 = vst [vmem:[#allocation2 + $0x10] sm:$0xff] 0.0
        %3736 = vst.msk [vmem:[#allocation2 + $0x18] sm:$0xff] %vm2217, 0.0
        %3738 = vrot.lane.b32.xlu0 %v3655, 42
        %v3739 = vpop.permute.xlu0 %3738
        %vm3741 = vcmask 474448
        %3742 = vst.msk [vmem:[#allocation2] sm:$0xff] %vm3741, %v3739
        %3744 = vrot.lane.b32.xlu0 %v3660, 62
        %v3745 = vpop.permute.xlu0 %3744
        %vm3747 = vcmask 638448
        %3748 = vst.msk [vmem:[#allocation2] sm:$0xff] %vm3747, %v3745
        %3750 = vrot.lane.b32.xlu0 %v3665, 82
        %v3751 = vpop.permute.xlu0 %3750
        %vm3753 = vcmask 802448
        %3754 = vst.msk [vmem:[#allocation2] sm:$0xff] %vm3753, %v3751
        %3756 = vrot.lane.b32.xlu0 %v3670, 102
        %v3757 = vpop.permute.xlu0 %3756
        %vm3759 = vcmask 966448
        %3760 = vst.msk [vmem:[#allocation2] sm:$0xff] %vm3759, %v3757
        %3762 = vrot.lane.b32.xlu0 %v3675, 122
        %v3763 = vpop.permute.xlu0 %3762
        %vm3765 = vcmask 1048528
        %3766 = vst.msk [vmem:[#allocation2] sm:$0xff] %vm3765, %v3763
        %vm3767 = vcmask 80896
        %3768 = vst.msk [vmem:[#allocation2 + $0x8] sm:$0xff] %vm3767, %v3763
        %3770 = vrot.lane.b32.xlu0 %v3680, 14
        %v3771 = vpop.permute.xlu0 %3770
        %vm3773 = vcmask 244848
        %3774 = vst.msk [vmem:[#allocation2 + $0x8] sm:$0xff] %vm3773, %v3771
        %3776 = vrot.lane.b32.xlu0 %v3685, 34
        %v3777 = vpop.permute.xlu0 %3776
        %vm3779 = vcmask 408848
        %3780 = vst.msk [vmem:[#allocation2 + $0x8] sm:$0xff] %vm3779, %v3777
        %3782 = vrot.lane.b32.xlu0 %v3690, 54
        %v3783 = vpop.permute.xlu0 %3782
        %vm3785 = vcmask 572848
        %3786 = vst.msk [vmem:[#allocation2 + $0x8] sm:$0xff] %vm3785, %v3783
        %3788 = vrot.lane.b32.xlu0 %v3695, 74
        %v3789 = vpop.permute.xlu0 %3788
        %vm3791 = vcmask 736848
        %3792 = vst.msk [vmem:[#allocation2 + $0x8] sm:$0xff] %vm3791, %v3789
        %3794 = vrot.lane.b32.xlu0 %v3700, 94
        %v3795 = vpop.permute.xlu0 %3794
        %vm3797 = vcmask 900848
        %3798 = vst.msk [vmem:[#allocation2 + $0x8] sm:$0xff] %vm3797, %v3795
        %3800 = vrot.lane.b32.xlu0 %v3705, 114
        %v3801 = vpop.permute.xlu0 %3800
        %vm3803 = vcmask 1048464
        %3804 = vst.msk [vmem:[#allocation2 + $0x8] sm:$0xff] %vm3803, %v3801
        %vm3805 = vcmask 15360
        %3806 = vst.msk [vmem:[#allocation2 + $0x10] sm:$0xff] %vm3805, %v3801
        %3808 = vrot.lane.b32.xlu0 %v3710, 6
        %v3809 = vpop.permute.xlu0 %3808
        %vm3811 = vcmask 179248
        %3812 = vst.msk [vmem:[#allocation2 + $0x10] sm:$0xff] %vm3811, %v3809
        %3814 = vrot.lane.b32.xlu0 %v3715, 26
        %v3815 = vpop.permute.xlu0 %3814
        %vm3817 = vcmask 343248
        %3818 = vst.msk [vmem:[#allocation2 + $0x10] sm:$0xff] %vm3817, %v3815
        %3820 = vrot.lane.b32.xlu0 %v3720, 46
        %v3821 = vpop.permute.xlu0 %3820
        %vm3823 = vcmask 507248
        %3824 = vst.msk [vmem:[#allocation2 + $0x10] sm:$0xff] %vm3823, %v3821
        %3826 = vrot.lane.b32.xlu0 %v3725, 66
        %v3827 = vpop.permute.xlu0 %3826
        %vm3829 = vcmask 671248
        %3830 = vst.msk [vmem:[#allocation2 + $0x10] sm:$0xff] %vm3829, %v3827
        %3832 = vrot.lane.b32.xlu0 %v3730, 86
        %v3833 = vpop.permute.xlu0 %3832
        %vm3835 = vcmask 835248
        %3836 = vst.msk [vmem:[#allocation2 + $0x10] sm:$0xff] %vm3835, %v3833
        %v3837 = vld [vmem:[#allocation2] sm:$0xff]
        %v3838 = vld [vmem:[#allocation2 + $0x8] sm:$0xff]
        %v3839 = vld [vmem:[#allocation2 + $0x10] sm:$0xff]
        %3843 = vrot.lane.b32.xlu0 %v3837, 127
        %v3844 = vpop.permute.xlu0 %3843
        %3845 = vrot.lane.b32.xlu0 %v3838, 127
        %v3846 = vpop.permute.xlu0 %3845
        %3847 = vrot.lane.b32.xlu0 %v3839, 127
        %v3848 = vpop.permute.xlu0 %3847
        %v3849 = vsel %vm505, %v3844, %v3846
        %v3850 = vsel %vm505, %v3846, %v3848
        %3854 = vrot.lane.b32.xlu0 %v3837, 126
        %v3855 = vpop.permute.xlu0 %3854
        %3856 = vrot.lane.b32.xlu0 %v3838, 126
        %v3857 = vpop.permute.xlu0 %3856
        %3858 = vrot.lane.b32.xlu0 %v3839, 126
        %v3859 = vpop.permute.xlu0 %3858
        %v3860 = vsel %vm544, %v3855, %v3857
        %v3861 = vsel %vm544, %v3857, %v3859
        %3865 = vrot.lane.b32.xlu0 %v3837, 125
        %v3866 = vpop.permute.xlu0 %3865
        %3867 = vrot.lane.b32.xlu0 %v3838, 125
        %v3868 = vpop.permute.xlu0 %3867
        %3869 = vrot.lane.b32.xlu0 %v3839, 125
        %v3870 = vpop.permute.xlu0 %3869
        %v3871 = vsel %vm583, %v3866, %v3868
        %v3872 = vsel %vm583, %v3868, %v3870
        %3876 = vrot.lane.b32.xlu0 %v3837, 124
        %v3877 = vpop.permute.xlu0 %3876
        %3878 = vrot.lane.b32.xlu0 %v3838, 124
        %v3879 = vpop.permute.xlu0 %3878
        %3880 = vrot.lane.b32.xlu0 %v3839, 124
        %v3881 = vpop.permute.xlu0 %3880
        %v3882 = vsel %vm622, %v3877, %v3879
        %v3883 = vsel %vm622, %v3879, %v3881
        %v3887 = vld [vmem:[%s3] sm:$0xff]
        %v3888 = vld [vmem:[%s3 + $0x10] sm:$0xff]
        %3891 = vrot.lane.b32.xlu0 %v3887, 88
        %v3892 = vpop.permute.xlu0 %3891
        %3893 = vrot.lane.b32.xlu0 %v3888, 88
        %v3894 = vpop.permute.xlu0 %3893
        %3895 = vrot.lane.b32.xlu0 %v3837, 108
        %v3896 = vpop.permute.xlu0 %3895
        %3897 = vrot.lane.b32.xlu0 %v3838, 108
        %v3898 = vpop.permute.xlu0 %3897
        %3899 = vrot.lane.b32.xlu0 %v3839, 108
        %v3900 = vpop.permute.xlu0 %3899
        %3901 = vrot.lane.b32.xlu0 %v3849, 108
        %v3902 = vpop.permute.xlu0 %3901
        %3903 = vrot.lane.b32.xlu0 %v3850, 108
        %v3904 = vpop.permute.xlu0 %3903
        %3905 = vrot.lane.b32.xlu0 %v3848, 108
        %v3906 = vpop.permute.xlu0 %3905
        %3907 = vrot.lane.b32.xlu0 %v3860, 108
        %v3908 = vpop.permute.xlu0 %3907
        %3909 = vrot.lane.b32.xlu0 %v3861, 108
        %v3910 = vpop.permute.xlu0 %3909
        %3911 = vrot.lane.b32.xlu0 %v3859, 108
        %v3912 = vpop.permute.xlu0 %3911
        %3913 = vrot.lane.b32.xlu0 %v3871, 108
        %v3914 = vpop.permute.xlu0 %3913
        %3915 = vrot.lane.b32.xlu0 %v3872, 108
        %v3916 = vpop.permute.xlu0 %3915
        %3917 = vrot.lane.b32.xlu0 %v3870, 108
        %v3918 = vpop.permute.xlu0 %3917
        %3919 = vrot.lane.b32.xlu0 %v3882, 108
        %v3920 = vpop.permute.xlu0 %3919
        %3921 = vrot.lane.b32.xlu0 %v3883, 108
        %v3922 = vpop.permute.xlu0 %3921
        %3923 = vrot.lane.b32.xlu0 %v3881, 108
        %v3924 = vpop.permute.xlu0 %3923
        %vm3925 = vcmask 883712
        %v3926 = vsel %vm3925, %v3896, %v3898
        %v3927 = vsel %vm3925, %v3898, %v3900
        %v3928 = vsel %vm3925, %v3902, %v3904
        %v3929 = vsel %vm3925, %v3904, %v3906
        %v3930 = vsel %vm3925, %v3908, %v3910
        %v3931 = vsel %vm3925, %v3910, %v3912
        %v3932 = vsel %vm3925, %v3914, %v3916
        %v3933 = vsel %vm3925, %v3916, %v3918
        %v3934 = vsel %vm3925, %v3920, %v3922
        %v3935 = vsel %vm3925, %v3922, %v3924
        %v3951 = vsel %vm836, %v3892, 0
        %v3953 = vsel %vm836, %v3894, 0
        %3955 = vmatprep.subr.mxu0 0.0
        %3956 = vmatpush1.msra.mxu0 0.0
        %3957 = vmatprep.subr.mxu0 0.0
        %3958 = vmatpush1.msra.mxu0 0.0
        %3959 = vmatprep.subr.mxu0 0.0
        %3960 = vmatpush1.msra.mxu0 0.0
        %3961 = vmatprep.subr.mxu0 0.0
        %3962 = vmatpush1.msra.mxu0 0.0
        %3963 = vmatprep.subr.mxu0 0.0
        %3964 = vmatpush1.msra.mxu0 0.0
        %3965 = vmatprep.subr.mxu0 0.0
        %3966 = vmatpush1.msra.mxu0 0.0
        %3967 = vmatprep.subr.mxu0 0.0
        %3968 = vmatpush1.msra.mxu0 0.0
        %3969 = vmatprep.subr.mxu0 0.0
        %3970 = vmatpush1.msra.mxu0 0.0
        %3971 = vmatprep.subr.mxu0 0.0
        %3972 = vmatpush1.msra.mxu0 0.0
        %3973 = vmatprep.subr.mxu0 0.0
        %3974 = vmatpush1.msra.mxu0 0.0
        %3975 = vmatprep.subr.mxu0 0.0
        %3976 = vmatpush1.msra.mxu0 0.0
        %3977 = vmatprep.subr.mxu0 %v3935
        %3978 = vmatpush1.msra.mxu0 %v3934
        %3979 = vmatprep.subr.mxu0 %v3933
        %3980 = vmatpush1.msra.mxu0 %v3932
        %3981 = vmatprep.subr.mxu0 %v3931
        %3982 = vmatpush1.msra.mxu0 %v3930
        %3983 = vmatprep.subr.mxu0 %v3929
        %3984 = vmatpush1.msra.mxu0 %v3928
        %3985 = vmatprep.subr.mxu0 %v3927
        %3986 = vmatpush1.msra.mxu0 %v3926
        %3987 = vmatprep.subr.mxu0 0.0
        %3988 = vmatpush2.msra.mxu0 0.0
        %3989 = vmatprep.subr.mxu0 0.0
        %3990 = vmatpush2.msra.mxu0 0.0
        %3991 = vmatprep.subr.mxu0 0.0
        %3992 = vmatpush2.msra.mxu0 0.0
        %3993 = vmatprep.subr.mxu0 0.0
        %3994 = vmatpush2.msra.mxu0 0.0
        %3995 = vmatprep.subr.mxu0 0.0
        %3996 = vmatpush2.msra.mxu0 0.0
        %3997 = vmatprep.subr.mxu0 0.0
        %3998 = vmatpush2.msra.mxu0 0.0
        %3999 = vmatprep.subr.mxu0 0.0
        %4000 = vmatpush2.msra.mxu0 0.0
        %4001 = vmatprep.subr.mxu0 0.0
        %4002 = vmatpush2.msra.mxu0 0.0
        %4003 = vmatprep.subr.mxu0 0.0
        %4004 = vmatpush2.msra.mxu0 0.0
        %4005 = vmatprep.subr.mxu0 0.0
        %4006 = vmatpush2.msra.mxu0 0.0
        %4007 = vmatprep.subr.mxu0 0.0
        %4008 = vmatpush2.msra.mxu0 0.0
        %4009 = vmatprep.subr.mxu0 0.0
        %4010 = vmatpush2.msra.mxu0 0.0
        %4011 = vmatprep.subr.mxu0 0.0
        %4012 = vmatpush2.msra.mxu0 0.0
        %4013 = vmatprep.subr.mxu0 0.0
        %4014 = vmatpush2.msra.mxu0 0.0
        %4015 = vmatprep.subr.mxu0 0.0
        %4016 = vmatpush2.msra.mxu0 0.0
        %4017 = vmatprep.subr.mxu0 0.0
        %4018 = vmatpush2.msra.mxu0 0.0
        %4019 = vmatprep.mubr.f32.mxu0 0.0
        %4020 = vmatmul.mubr.f32.gmra.mxu0 %v3951
        %v4021 = vpop.f32.mrf.mxu0
        %v4022 = vadd.f32 0.0, %v4021
        %v4023 = vpop.f32.mrf.mxu0
        %v4024 = vadd.f32 0.0, %v4023
        %4025 = vmatprep.mubr.f32.mxu0 0.0
        %4026 = vmatmul.mubr.f32.gmra.mxu0 %v3953
        %v4027 = vpop.f32.mrf.mxu0
        %v4028 = vadd.f32 0.0, %v4027
        %v4029 = vpop.f32.mrf.mxu0
        %v4030 = vadd.f32 0.0, %v4029
        %4031 = vdwg.mxu0
        %4032 = vmatprep.subr.mxu0 0.0
        %4033 = vmatpush1.msra.mxu0 0.0
        %4034 = vmatprep.subr.mxu0 0.0
        %4035 = vmatpush1.msra.mxu0 0.0
        %4036 = vmatprep.subr.mxu0 0.0
        %4037 = vmatpush1.msra.mxu0 0.0
        %4038 = vmatprep.subr.mxu0 0.0
        %4039 = vmatpush1.msra.mxu0 0.0
        %4040 = vmatprep.subr.mxu0 0.0
        %4041 = vmatpush1.msra.mxu0 0.0
        %4042 = vmatprep.subr.mxu0 0.0
        %4043 = vmatpush1.msra.mxu0 0.0
        %4044 = vmatprep.subr.mxu0 0.0
        %4045 = vmatpush1.msra.mxu0 0.0
        %4046 = vmatprep.subr.mxu0 0.0
        %4047 = vmatpush1.msra.mxu0 0.0
        %4048 = vmatprep.subr.mxu0 0.0
        %4049 = vmatpush1.msra.mxu0 0.0
        %4050 = vmatprep.subr.mxu0 0.0
        %4051 = vmatpush1.msra.mxu0 0.0
        %4052 = vmatprep.subr.mxu0 0.0
        %4053 = vmatpush1.msra.mxu0 0.0
        %4054 = vmatprep.subr.mxu0 0.0
        %4055 = vmatpush1.msra.mxu0 %v3924
        %4056 = vmatprep.subr.mxu0 0.0
        %4057 = vmatpush1.msra.mxu0 %v3918
        %4058 = vmatprep.subr.mxu0 0.0
        %4059 = vmatpush1.msra.mxu0 %v3912
        %4060 = vmatprep.subr.mxu0 0.0
        %4061 = vmatpush1.msra.mxu0 %v3906
        %4062 = vmatprep.subr.mxu0 0.0
        %4063 = vmatpush1.msra.mxu0 %v3900
        %4064 = vmatprep.subr.mxu0 0.0
        %4065 = vmatpush2.msra.mxu0 0.0
        %4066 = vmatprep.subr.mxu0 0.0
        %4067 = vmatpush2.msra.mxu0 0.0
        %4068 = vmatprep.subr.mxu0 0.0
        %4069 = vmatpush2.msra.mxu0 0.0
        %4070 = vmatprep.subr.mxu0 0.0
        %4071 = vmatpush2.msra.mxu0 0.0
        %4072 = vmatprep.subr.mxu0 0.0
        %4073 = vmatpush2.msra.mxu0 0.0
        %4074 = vmatprep.subr.mxu0 0.0
        %4075 = vmatpush2.msra.mxu0 0.0
        %4076 = vmatprep.subr.mxu0 0.0
        %4077 = vmatpush2.msra.mxu0 0.0
        %4078 = vmatprep.subr.mxu0 0.0
        %4079 = vmatpush2.msra.mxu0 0.0
        %4080 = vmatprep.subr.mxu0 0.0
        %4081 = vmatpush2.msra.mxu0 0.0
        %4082 = vmatprep.subr.mxu0 0.0
        %4083 = vmatpush2.msra.mxu0 0.0
        %4084 = vmatprep.subr.mxu0 0.0
        %4085 = vmatpush2.msra.mxu0 0.0
        %4086 = vmatprep.subr.mxu0 0.0
        %4087 = vmatpush2.msra.mxu0 0.0
        %4088 = vmatprep.subr.mxu0 0.0
        %4089 = vmatpush2.msra.mxu0 0.0
        %4090 = vmatprep.subr.mxu0 0.0
        %4091 = vmatpush2.msra.mxu0 0.0
        %4092 = vmatprep.subr.mxu0 0.0
        %4093 = vmatpush2.msra.mxu0 0.0
        %4094 = vmatprep.subr.mxu0 0.0
        %4095 = vmatpush2.msra.mxu0 0.0
        %4096 = vmatprep.mubr.f32.mxu0 0.0
        %4097 = vmatmul.mubr.f32.gmra.mxu0 %v3951
        %v4098 = vpop.f32.mrf.mxu0
        %v4099 = vadd.f32 0.0, %v4098
        %v4100 = vpop.f32.mrf.mxu0
        %4101 = vmatprep.mubr.f32.mxu0 0.0
        %4102 = vmatmul.mubr.f32.gmra.mxu0 %v3953
        %v4103 = vpop.f32.mrf.mxu0
        %v4104 = vadd.f32 0.0, %v4103
        %v4105 = vpop.f32.mrf.mxu0
        %4106 = vdwg.mxu0
        %v4107 = vsel %vm836, %v3887, 0
        %v4109 = vsel %vm836, %v3888, 0
        %4111 = vmatprep.subr.mxu0 0.0
        %4112 = vmatpush1.msra.mxu0 0.0
        %4113 = vmatprep.subr.mxu0 0.0
        %4114 = vmatpush1.msra.mxu0 0.0
        %4115 = vmatprep.subr.mxu0 0.0
        %4116 = vmatpush1.msra.mxu0 0.0
        %4117 = vmatprep.subr.mxu0 0.0
        %4118 = vmatpush1.msra.mxu0 0.0
        %4119 = vmatprep.subr.mxu0 0.0
        %4120 = vmatpush1.msra.mxu0 0.0
        %4121 = vmatprep.subr.mxu0 0.0
        %4122 = vmatpush1.msra.mxu0 0.0
        %4123 = vmatprep.subr.mxu0 0.0
        %4124 = vmatpush1.msra.mxu0 0.0
        %4125 = vmatprep.subr.mxu0 0.0
        %4126 = vmatpush1.msra.mxu0 0.0
        %4127 = vmatprep.subr.mxu0 0.0
        %4128 = vmatpush1.msra.mxu0 0.0
        %4129 = vmatprep.subr.mxu0 0.0
        %4130 = vmatpush1.msra.mxu0 0.0
        %4131 = vmatprep.subr.mxu0 0.0
        %4132 = vmatpush1.msra.mxu0 0.0
        %4133 = vmatprep.subr.mxu0 %v3883
        %4134 = vmatpush1.msra.mxu0 %v3882
        %4135 = vmatprep.subr.mxu0 %v3872
        %4136 = vmatpush1.msra.mxu0 %v3871
        %4137 = vmatprep.subr.mxu0 %v3861
        %4138 = vmatpush1.msra.mxu0 %v3860
        %4139 = vmatprep.subr.mxu0 %v3850
        %4140 = vmatpush1.msra.mxu0 %v3849
        %4141 = vmatprep.subr.mxu0 %v3838
        %4142 = vmatpush1.msra.mxu0 %v3837
        %4143 = vmatprep.subr.mxu0 0.0
        %4144 = vmatpush2.msra.mxu0 0.0
        %4145 = vmatprep.subr.mxu0 0.0
        %4146 = vmatpush2.msra.mxu0 0.0
        %4147 = vmatprep.subr.mxu0 0.0
        %4148 = vmatpush2.msra.mxu0 0.0
        %4149 = vmatprep.subr.mxu0 0.0
        %4150 = vmatpush2.msra.mxu0 0.0
        %4151 = vmatprep.subr.mxu0 0.0
        %4152 = vmatpush2.msra.mxu0 0.0
        %4153 = vmatprep.subr.mxu0 0.0
        %4154 = vmatpush2.msra.mxu0 0.0
        %4155 = vmatprep.subr.mxu0 0.0
        %4156 = vmatpush2.msra.mxu0 0.0
        %4157 = vmatprep.subr.mxu0 0.0
        %4158 = vmatpush2.msra.mxu0 0.0
        %4159 = vmatprep.subr.mxu0 0.0
        %4160 = vmatpush2.msra.mxu0 0.0
        %4161 = vmatprep.subr.mxu0 0.0
        %4162 = vmatpush2.msra.mxu0 0.0
        %4163 = vmatprep.subr.mxu0 0.0
        %4164 = vmatpush2.msra.mxu0 0.0
        %4165 = vmatprep.subr.mxu0 0.0
        %4166 = vmatpush2.msra.mxu0 0.0
        %4167 = vmatprep.subr.mxu0 0.0
        %4168 = vmatpush2.msra.mxu0 0.0
        %4169 = vmatprep.subr.mxu0 0.0
        %4170 = vmatpush2.msra.mxu0 0.0
        %4171 = vmatprep.subr.mxu0 0.0
        %4172 = vmatpush2.msra.mxu0 0.0
        %4173 = vmatprep.subr.mxu0 0.0
        %4174 = vmatpush2.msra.mxu0 0.0
        %4175 = vmatprep.mubr.f32.mxu0 0.0
        %4176 = vmatmul.mubr.f32.gmra.mxu0 %v4107
        %v4177 = vpop.f32.mrf.mxu0
        %v4178 = vadd.f32 %v4022, %v4177
        %v4179 = vpop.f32.mrf.mxu0
        %v4180 = vadd.f32 %v4024, %v4179
        %4181 = vmatprep.mubr.f32.mxu0 0.0
        %4182 = vmatmul.mubr.f32.gmra.mxu0 %v4109
        %v4183 = vpop.f32.mrf.mxu0
        %v4184 = vadd.f32 %v4028, %v4183
        %v4185 = vpop.f32.mrf.mxu0
        %v4186 = vadd.f32 %v4030, %v4185
        %4187 = vdwg.mxu0
        %4188 = vmatprep.subr.mxu0 0.0
        %4189 = vmatpush1.msra.mxu0 0.0
        %4190 = vmatprep.subr.mxu0 0.0
        %4191 = vmatpush1.msra.mxu0 0.0
        %4192 = vmatprep.subr.mxu0 0.0
        %4193 = vmatpush1.msra.mxu0 0.0
        %4194 = vmatprep.subr.mxu0 0.0
        %4195 = vmatpush1.msra.mxu0 0.0
        %4196 = vmatprep.subr.mxu0 0.0
        %4197 = vmatpush1.msra.mxu0 0.0
        %4198 = vmatprep.subr.mxu0 0.0
        %4199 = vmatpush1.msra.mxu0 0.0
        %4200 = vmatprep.subr.mxu0 0.0
        %4201 = vmatpush1.msra.mxu0 0.0
        %4202 = vmatprep.subr.mxu0 0.0
        %4203 = vmatpush1.msra.mxu0 0.0
        %4204 = vmatprep.subr.mxu0 0.0
        %4205 = vmatpush1.msra.mxu0 0.0
        %4206 = vmatprep.subr.mxu0 0.0
        %4207 = vmatpush1.msra.mxu0 0.0
        %4208 = vmatprep.subr.mxu0 0.0
        %4209 = vmatpush1.msra.mxu0 0.0
        %4210 = vmatprep.subr.mxu0 0.0
        %4211 = vmatpush1.msra.mxu0 %v3881
        %4212 = vmatprep.subr.mxu0 0.0
        %4213 = vmatpush1.msra.mxu0 %v3870
        %4214 = vmatprep.subr.mxu0 0.0
        %4215 = vmatpush1.msra.mxu0 %v3859
        %4216 = vmatprep.subr.mxu0 0.0
        %4217 = vmatpush1.msra.mxu0 %v3848
        %4218 = vmatprep.subr.mxu0 0.0
        %4219 = vmatpush1.msra.mxu0 %v3839
        %4220 = vmatprep.subr.mxu0 0.0
        %4221 = vmatpush2.msra.mxu0 0.0
        %4222 = vmatprep.subr.mxu0 0.0
        %4223 = vmatpush2.msra.mxu0 0.0
        %4224 = vmatprep.subr.mxu0 0.0
        %4225 = vmatpush2.msra.mxu0 0.0
        %4226 = vmatprep.subr.mxu0 0.0
        %4227 = vmatpush2.msra.mxu0 0.0
        %4228 = vmatprep.subr.mxu0 0.0
        %4229 = vmatpush2.msra.mxu0 0.0
        %4230 = vmatprep.subr.mxu0 0.0
        %4231 = vmatpush2.msra.mxu0 0.0
        %4232 = vmatprep.subr.mxu0 0.0
        %4233 = vmatpush2.msra.mxu0 0.0
        %4234 = vmatprep.subr.mxu0 0.0
        %4235 = vmatpush2.msra.mxu0 0.0
        %4236 = vmatprep.subr.mxu0 0.0
        %4237 = vmatpush2.msra.mxu0 0.0
        %4238 = vmatprep.subr.mxu0 0.0
        %4239 = vmatpush2.msra.mxu0 0.0
        %4240 = vmatprep.subr.mxu0 0.0
        %4241 = vmatpush2.msra.mxu0 0.0
        %4242 = vmatprep.subr.mxu0 0.0
        %4243 = vmatpush2.msra.mxu0 0.0
        %4244 = vmatprep.subr.mxu0 0.0
        %4245 = vmatpush2.msra.mxu0 0.0
        %4246 = vmatprep.subr.mxu0 0.0
        %4247 = vmatpush2.msra.mxu0 0.0
        %4248 = vmatprep.subr.mxu0 0.0
        %4249 = vmatpush2.msra.mxu0 0.0
        %4250 = vmatprep.subr.mxu0 0.0
        %4251 = vmatpush2.msra.mxu0 0.0
        %4252 = vmatprep.mubr.f32.mxu0 0.0
        %4253 = vmatmul.mubr.f32.gmra.mxu0 %v4107
        %v4254 = vpop.f32.mrf.mxu0
        %v4255 = vadd.f32 %v4099, %v4254
        %v4256 = vpop.f32.mrf.mxu0
        %4257 = vmatprep.mubr.f32.mxu0 0.0
        %4258 = vmatmul.mubr.f32.gmra.mxu0 %v4109
        %v4259 = vpop.f32.mrf.mxu0
        %v4260 = vadd.f32 %v4104, %v4259
        %v4261 = vpop.f32.mrf.mxu0
        %4262 = vdwg.mxu0
        %4263 = vrot.lane.b32.xlu0 %v3887, 48
        %v4264 = vpop.permute.xlu0 %4263
        %4265 = vrot.lane.b32.xlu0 %v3888, 48
        %v4266 = vpop.permute.xlu0 %4265
        %4267 = vrot.lane.b32.xlu0 %v3837, 88
        %v4268 = vpop.permute.xlu0 %4267
        %4269 = vrot.lane.b32.xlu0 %v3838, 88
        %v4270 = vpop.permute.xlu0 %4269
        %4271 = vrot.lane.b32.xlu0 %v3839, 88
        %v4272 = vpop.permute.xlu0 %4271
        %4273 = vrot.lane.b32.xlu0 %v3849, 88
        %v4274 = vpop.permute.xlu0 %4273
        %4275 = vrot.lane.b32.xlu0 %v3850, 88
        %v4276 = vpop.permute.xlu0 %4275
        %4277 = vrot.lane.b32.xlu0 %v3848, 88
        %v4278 = vpop.permute.xlu0 %4277
        %4279 = vrot.lane.b32.xlu0 %v3860, 88
        %v4280 = vpop.permute.xlu0 %4279
        %4281 = vrot.lane.b32.xlu0 %v3861, 88
        %v4282 = vpop.permute.xlu0 %4281
        %4283 = vrot.lane.b32.xlu0 %v3859, 88
        %v4284 = vpop.permute.xlu0 %4283
        %4285 = vrot.lane.b32.xlu0 %v3871, 88
        %v4286 = vpop.permute.xlu0 %4285
        %4287 = vrot.lane.b32.xlu0 %v3872, 88
        %v4288 = vpop.permute.xlu0 %4287
        %4289 = vrot.lane.b32.xlu0 %v3870, 88
        %v4290 = vpop.permute.xlu0 %4289
        %4291 = vrot.lane.b32.xlu0 %v3882, 88
        %v4292 = vpop.permute.xlu0 %4291
        %4293 = vrot.lane.b32.xlu0 %v3883, 88
        %v4294 = vpop.permute.xlu0 %4293
        %4295 = vrot.lane.b32.xlu0 %v3881, 88
        %v4296 = vpop.permute.xlu0 %4295
        %vm4297 = vcmask 719872
        %v4298 = vsel %vm4297, %v4268, %v4270
        %v4299 = vsel %vm4297, %v4270, %v4272
        %v4300 = vsel %vm4297, %v4274, %v4276
        %v4301 = vsel %vm4297, %v4276, %v4278
        %v4302 = vsel %vm4297, %v4280, %v4282
        %v4303 = vsel %vm4297, %v4282, %v4284
        %v4304 = vsel %vm4297, %v4286, %v4288
        %v4305 = vsel %vm4297, %v4288, %v4290
        %v4306 = vsel %vm4297, %v4292, %v4294
        %v4307 = vsel %vm4297, %v4294, %v4296
        %v4323 = vsel %vm836, %v4264, 0
        %v4325 = vsel %vm836, %v4266, 0
        %4327 = vmatprep.subr.mxu0 0.0
        %4328 = vmatpush1.msra.mxu0 0.0
        %4329 = vmatprep.subr.mxu0 0.0
        %4330 = vmatpush1.msra.mxu0 0.0
        %4331 = vmatprep.subr.mxu0 0.0
        %4332 = vmatpush1.msra.mxu0 0.0
        %4333 = vmatprep.subr.mxu0 0.0
        %4334 = vmatpush1.msra.mxu0 0.0
        %4335 = vmatprep.subr.mxu0 0.0
        %4336 = vmatpush1.msra.mxu0 0.0
        %4337 = vmatprep.subr.mxu0 0.0
        %4338 = vmatpush1.msra.mxu0 0.0
        %4339 = vmatprep.subr.mxu0 0.0
        %4340 = vmatpush1.msra.mxu0 0.0
        %4341 = vmatprep.subr.mxu0 0.0
        %4342 = vmatpush1.msra.mxu0 0.0
        %4343 = vmatprep.subr.mxu0 0.0
        %4344 = vmatpush1.msra.mxu0 0.0
        %4345 = vmatprep.subr.mxu0 0.0
        %4346 = vmatpush1.msra.mxu0 0.0
        %4347 = vmatprep.subr.mxu0 0.0
        %4348 = vmatpush1.msra.mxu0 0.0
        %4349 = vmatprep.subr.mxu0 %v4307
        %4350 = vmatpush1.msra.mxu0 %v4306
        %4351 = vmatprep.subr.mxu0 %v4305
        %4352 = vmatpush1.msra.mxu0 %v4304
        %4353 = vmatprep.subr.mxu0 %v4303
        %4354 = vmatpush1.msra.mxu0 %v4302
        %4355 = vmatprep.subr.mxu0 %v4301
        %4356 = vmatpush1.msra.mxu0 %v4300
        %4357 = vmatprep.subr.mxu0 %v4299
        %4358 = vmatpush1.msra.mxu0 %v4298
        %4359 = vmatprep.subr.mxu0 0.0
        %4360 = vmatpush2.msra.mxu0 0.0
        %4361 = vmatprep.subr.mxu0 0.0
        %4362 = vmatpush2.msra.mxu0 0.0
        %4363 = vmatprep.subr.mxu0 0.0
        %4364 = vmatpush2.msra.mxu0 0.0
        %4365 = vmatprep.subr.mxu0 0.0
        %4366 = vmatpush2.msra.mxu0 0.0
        %4367 = vmatprep.subr.mxu0 0.0
        %4368 = vmatpush2.msra.mxu0 0.0
        %4369 = vmatprep.subr.mxu0 0.0
        %4370 = vmatpush2.msra.mxu0 0.0
        %4371 = vmatprep.subr.mxu0 0.0
        %4372 = vmatpush2.msra.mxu0 0.0
        %4373 = vmatprep.subr.mxu0 0.0
        %4374 = vmatpush2.msra.mxu0 0.0
        %4375 = vmatprep.subr.mxu0 0.0
        %4376 = vmatpush2.msra.mxu0 0.0
        %4377 = vmatprep.subr.mxu0 0.0
        %4378 = vmatpush2.msra.mxu0 0.0
        %4379 = vmatprep.subr.mxu0 0.0
        %4380 = vmatpush2.msra.mxu0 0.0
        %4381 = vmatprep.subr.mxu0 0.0
        %4382 = vmatpush2.msra.mxu0 0.0
        %4383 = vmatprep.subr.mxu0 0.0
        %4384 = vmatpush2.msra.mxu0 0.0
        %4385 = vmatprep.subr.mxu0 0.0
        %4386 = vmatpush2.msra.mxu0 0.0
        %4387 = vmatprep.subr.mxu0 0.0
        %4388 = vmatpush2.msra.mxu0 0.0
        %4389 = vmatprep.subr.mxu0 0.0
        %4390 = vmatpush2.msra.mxu0 0.0
        %4391 = vmatprep.mubr.f32.mxu0 0.0
        %4392 = vmatmul.mubr.f32.gmra.mxu0 %v4323
        %v4393 = vpop.f32.mrf.mxu0
        %v4394 = vadd.f32 0.0, %v4393
        %v4395 = vpop.f32.mrf.mxu0
        %v4396 = vadd.f32 0.0, %v4395
        %4397 = vmatprep.mubr.f32.mxu0 0.0
        %4398 = vmatmul.mubr.f32.gmra.mxu0 %v4325
        %v4399 = vpop.f32.mrf.mxu0
        %v4400 = vadd.f32 0.0, %v4399
        %v4401 = vpop.f32.mrf.mxu0
        %v4402 = vadd.f32 0.0, %v4401
        %4403 = vdwg.mxu0
        %4404 = vmatprep.subr.mxu0 0.0
        %4405 = vmatpush1.msra.mxu0 0.0
        %4406 = vmatprep.subr.mxu0 0.0
        %4407 = vmatpush1.msra.mxu0 0.0
        %4408 = vmatprep.subr.mxu0 0.0
        %4409 = vmatpush1.msra.mxu0 0.0
        %4410 = vmatprep.subr.mxu0 0.0
        %4411 = vmatpush1.msra.mxu0 0.0
        %4412 = vmatprep.subr.mxu0 0.0
        %4413 = vmatpush1.msra.mxu0 0.0
        %4414 = vmatprep.subr.mxu0 0.0
        %4415 = vmatpush1.msra.mxu0 0.0
        %4416 = vmatprep.subr.mxu0 0.0
        %4417 = vmatpush1.msra.mxu0 0.0
        %4418 = vmatprep.subr.mxu0 0.0
        %4419 = vmatpush1.msra.mxu0 0.0
        %4420 = vmatprep.subr.mxu0 0.0
        %4421 = vmatpush1.msra.mxu0 0.0
        %4422 = vmatprep.subr.mxu0 0.0
        %4423 = vmatpush1.msra.mxu0 0.0
        %4424 = vmatprep.subr.mxu0 0.0
        %4425 = vmatpush1.msra.mxu0 0.0
        %4426 = vmatprep.subr.mxu0 0.0
        %4427 = vmatpush1.msra.mxu0 %v4296
        %4428 = vmatprep.subr.mxu0 0.0
        %4429 = vmatpush1.msra.mxu0 %v4290
        %4430 = vmatprep.subr.mxu0 0.0
        %4431 = vmatpush1.msra.mxu0 %v4284
        %4432 = vmatprep.subr.mxu0 0.0
        %4433 = vmatpush1.msra.mxu0 %v4278
        %4434 = vmatprep.subr.mxu0 0.0
        %4435 = vmatpush1.msra.mxu0 %v4272
        %4436 = vmatprep.subr.mxu0 0.0
        %4437 = vmatpush2.msra.mxu0 0.0
        %4438 = vmatprep.subr.mxu0 0.0
        %4439 = vmatpush2.msra.mxu0 0.0
        %4440 = vmatprep.subr.mxu0 0.0
        %4441 = vmatpush2.msra.mxu0 0.0
        %4442 = vmatprep.subr.mxu0 0.0
        %4443 = vmatpush2.msra.mxu0 0.0
        %4444 = vmatprep.subr.mxu0 0.0
        %4445 = vmatpush2.msra.mxu0 0.0
        %4446 = vmatprep.subr.mxu0 0.0
        %4447 = vmatpush2.msra.mxu0 0.0
        %4448 = vmatprep.subr.mxu0 0.0
        %4449 = vmatpush2.msra.mxu0 0.0
        %4450 = vmatprep.subr.mxu0 0.0
        %4451 = vmatpush2.msra.mxu0 0.0
        %4452 = vmatprep.subr.mxu0 0.0
        %4453 = vmatpush2.msra.mxu0 0.0
        %4454 = vmatprep.subr.mxu0 0.0
        %4455 = vmatpush2.msra.mxu0 0.0
        %4456 = vmatprep.subr.mxu0 0.0
        %4457 = vmatpush2.msra.mxu0 0.0
        %4458 = vmatprep.subr.mxu0 0.0
        %4459 = vmatpush2.msra.mxu0 0.0
        %4460 = vmatprep.subr.mxu0 0.0
        %4461 = vmatpush2.msra.mxu0 0.0
        %4462 = vmatprep.subr.mxu0 0.0
        %4463 = vmatpush2.msra.mxu0 0.0
        %4464 = vmatprep.subr.mxu0 0.0
        %4465 = vmatpush2.msra.mxu0 0.0
        %4466 = vmatprep.subr.mxu0 0.0
        %4467 = vmatpush2.msra.mxu0 0.0
        %4468 = vmatprep.mubr.f32.mxu0 0.0
        %4469 = vmatmul.mubr.f32.gmra.mxu0 %v4323
        %v4470 = vpop.f32.mrf.mxu0
        %v4471 = vadd.f32 0.0, %v4470
        %v4472 = vpop.f32.mrf.mxu0
        %4473 = vmatprep.mubr.f32.mxu0 0.0
        %4474 = vmatmul.mubr.f32.gmra.mxu0 %v4325
        %v4475 = vpop.f32.mrf.mxu0
        %v4476 = vadd.f32 0.0, %v4475
        %v4477 = vpop.f32.mrf.mxu0
        %4478 = vdwg.mxu0
        %v4479 = vadd.f32 %v4178, %v4394
        %v4480 = vadd.f32 %v4180, %v4396
        %v4481 = vadd.f32 %v4255, %v4471
        %v4482 = vadd.f32 %v4184, %v4400
        %v4483 = vadd.f32 %v4186, %v4402
        %v4484 = vadd.f32 %v4260, %v4476
        %v4485 = vld [vmem:[%s3] sm:$0xff]
        %v4486 = vld [vmem:[%s3 + $0x8] sm:$0xff]
        %v4487 = vld [vmem:[%s3 + $0x10] sm:$0xff]
        %v4488 = vld [vmem:[%s3 + $0x18] sm:$0xff]
        %4493 = vrot.lane.b32.xlu0 %v4485, 8
        %v4494 = vpop.permute.xlu0 %4493
        %4495 = vrot.lane.b32.xlu0 %v4486, 8
        %v4496 = vpop.permute.xlu0 %4495
        %4497 = vrot.lane.b32.xlu0 %v4487, 8
        %v4498 = vpop.permute.xlu0 %4497
        %4499 = vrot.lane.b32.xlu0 %v4488, 8
        %v4500 = vpop.permute.xlu0 %4499
        %v4501 = vsel %vm2115, %v4494, %v4496
        %v4502 = vsel %vm2115, %v4498, %v4500
        %4503 = vrot.lane.b32.xlu0 %v3837, 68
        %v4504 = vpop.permute.xlu0 %4503
        %4505 = vrot.lane.b32.xlu0 %v3838, 68
        %v4506 = vpop.permute.xlu0 %4505
        %4507 = vrot.lane.b32.xlu0 %v3839, 68
        %v4508 = vpop.permute.xlu0 %4507
        %4509 = vrot.lane.b32.xlu0 %v3849, 68
        %v4510 = vpop.permute.xlu0 %4509
        %4511 = vrot.lane.b32.xlu0 %v3850, 68
        %v4512 = vpop.permute.xlu0 %4511
        %4513 = vrot.lane.b32.xlu0 %v3848, 68
        %v4514 = vpop.permute.xlu0 %4513
        %4515 = vrot.lane.b32.xlu0 %v3860, 68
        %v4516 = vpop.permute.xlu0 %4515
        %4517 = vrot.lane.b32.xlu0 %v3861, 68
        %v4518 = vpop.permute.xlu0 %4517
        %4519 = vrot.lane.b32.xlu0 %v3859, 68
        %v4520 = vpop.permute.xlu0 %4519
        %4521 = vrot.lane.b32.xlu0 %v3871, 68
        %v4522 = vpop.permute.xlu0 %4521
        %4523 = vrot.lane.b32.xlu0 %v3872, 68
        %v4524 = vpop.permute.xlu0 %4523
        %4525 = vrot.lane.b32.xlu0 %v3870, 68
        %v4526 = vpop.permute.xlu0 %4525
        %4527 = vrot.lane.b32.xlu0 %v3882, 68
        %v4528 = vpop.permute.xlu0 %4527
        %4529 = vrot.lane.b32.xlu0 %v3883, 68
        %v4530 = vpop.permute.xlu0 %4529
        %4531 = vrot.lane.b32.xlu0 %v3881, 68
        %v4532 = vpop.permute.xlu0 %4531
        %vm4533 = vcmask 556032
        %v4534 = vsel %vm4533, %v4504, %v4506
        %v4535 = vsel %vm4533, %v4506, %v4508
        %v4536 = vsel %vm4533, %v4510, %v4512
        %v4537 = vsel %vm4533, %v4512, %v4514
        %v4538 = vsel %vm4533, %v4516, %v4518
        %v4539 = vsel %vm4533, %v4518, %v4520
        %v4540 = vsel %vm4533, %v4522, %v4524
        %v4541 = vsel %vm4533, %v4524, %v4526
        %v4542 = vsel %vm4533, %v4528, %v4530
        %v4543 = vsel %vm4533, %v4530, %v4532
        %v4559 = vsel %vm836, %v4501, 0
        %v4561 = vsel %vm836, %v4502, 0
        %4563 = vmatprep.subr.mxu0 0.0
        %4564 = vmatpush1.msra.mxu0 0.0
        %4565 = vmatprep.subr.mxu0 0.0
        %4566 = vmatpush1.msra.mxu0 0.0
        %4567 = vmatprep.subr.mxu0 0.0
        %4568 = vmatpush1.msra.mxu0 0.0
        %4569 = vmatprep.subr.mxu0 0.0
        %4570 = vmatpush1.msra.mxu0 0.0
        %4571 = vmatprep.subr.mxu0 0.0
        %4572 = vmatpush1.msra.mxu0 0.0
        %4573 = vmatprep.subr.mxu0 0.0
        %4574 = vmatpush1.msra.mxu0 0.0
        %4575 = vmatprep.subr.mxu0 0.0
        %4576 = vmatpush1.msra.mxu0 0.0
        %4577 = vmatprep.subr.mxu0 0.0
        %4578 = vmatpush1.msra.mxu0 0.0
        %4579 = vmatprep.subr.mxu0 0.0
        %4580 = vmatpush1.msra.mxu0 0.0
        %4581 = vmatprep.subr.mxu0 0.0
        %4582 = vmatpush1.msra.mxu0 0.0
        %4583 = vmatprep.subr.mxu0 0.0
        %4584 = vmatpush1.msra.mxu0 0.0
        %4585 = vmatprep.subr.mxu0 %v4543
        %4586 = vmatpush1.msra.mxu0 %v4542
        %4587 = vmatprep.subr.mxu0 %v4541
        %4588 = vmatpush1.msra.mxu0 %v4540
        %4589 = vmatprep.subr.mxu0 %v4539
        %4590 = vmatpush1.msra.mxu0 %v4538
        %4591 = vmatprep.subr.mxu0 %v4537
        %4592 = vmatpush1.msra.mxu0 %v4536
        %4593 = vmatprep.subr.mxu0 %v4535
        %4594 = vmatpush1.msra.mxu0 %v4534
        %4595 = vmatprep.subr.mxu0 0.0
        %4596 = vmatpush2.msra.mxu0 0.0
        %4597 = vmatprep.subr.mxu0 0.0
        %4598 = vmatpush2.msra.mxu0 0.0
        %4599 = vmatprep.subr.mxu0 0.0
        %4600 = vmatpush2.msra.mxu0 0.0
        %4601 = vmatprep.subr.mxu0 0.0
        %4602 = vmatpush2.msra.mxu0 0.0
        %4603 = vmatprep.subr.mxu0 0.0
        %4604 = vmatpush2.msra.mxu0 0.0
        %4605 = vmatprep.subr.mxu0 0.0
        %4606 = vmatpush2.msra.mxu0 0.0
        %4607 = vmatprep.subr.mxu0 0.0
        %4608 = vmatpush2.msra.mxu0 0.0
        %4609 = vmatprep.subr.mxu0 0.0
        %4610 = vmatpush2.msra.mxu0 0.0
        %4611 = vmatprep.subr.mxu0 0.0
        %4612 = vmatpush2.msra.mxu0 0.0
        %4613 = vmatprep.subr.mxu0 0.0
        %4614 = vmatpush2.msra.mxu0 0.0
        %4615 = vmatprep.subr.mxu0 0.0
        %4616 = vmatpush2.msra.mxu0 0.0
        %4617 = vmatprep.subr.mxu0 0.0
        %4618 = vmatpush2.msra.mxu0 0.0
        %4619 = vmatprep.subr.mxu0 0.0
        %4620 = vmatpush2.msra.mxu0 0.0
        %4621 = vmatprep.subr.mxu0 0.0
        %4622 = vmatpush2.msra.mxu0 0.0
        %4623 = vmatprep.subr.mxu0 0.0
        %4624 = vmatpush2.msra.mxu0 0.0
        %4625 = vmatprep.subr.mxu0 0.0
        %4626 = vmatpush2.msra.mxu0 0.0
        %4627 = vmatprep.mubr.f32.mxu0 0.0
        %4628 = vmatmul.mubr.f32.gmra.mxu0 %v4559
        %v4629 = vpop.f32.mrf.mxu0
        %v4630 = vadd.f32 0.0, %v4629
        %v4631 = vpop.f32.mrf.mxu0
        %v4632 = vadd.f32 0.0, %v4631
        %4633 = vmatprep.mubr.f32.mxu0 0.0
        %4634 = vmatmul.mubr.f32.gmra.mxu0 %v4561
        %v4635 = vpop.f32.mrf.mxu0
        %v4636 = vadd.f32 0.0, %v4635
        %v4637 = vpop.f32.mrf.mxu0
        %v4638 = vadd.f32 0.0, %v4637
        %4639 = vdwg.mxu0
        %4640 = vmatprep.subr.mxu0 0.0
        %4641 = vmatpush1.msra.mxu0 0.0
        %4642 = vmatprep.subr.mxu0 0.0
        %4643 = vmatpush1.msra.mxu0 0.0
        %4644 = vmatprep.subr.mxu0 0.0
        %4645 = vmatpush1.msra.mxu0 0.0
        %4646 = vmatprep.subr.mxu0 0.0
        %4647 = vmatpush1.msra.mxu0 0.0
        %4648 = vmatprep.subr.mxu0 0.0
        %4649 = vmatpush1.msra.mxu0 0.0
        %4650 = vmatprep.subr.mxu0 0.0
        %4651 = vmatpush1.msra.mxu0 0.0
        %4652 = vmatprep.subr.mxu0 0.0
        %4653 = vmatpush1.msra.mxu0 0.0
        %4654 = vmatprep.subr.mxu0 0.0
        %4655 = vmatpush1.msra.mxu0 0.0
        %4656 = vmatprep.subr.mxu0 0.0
        %4657 = vmatpush1.msra.mxu0 0.0
        %4658 = vmatprep.subr.mxu0 0.0
        %4659 = vmatpush1.msra.mxu0 0.0
        %4660 = vmatprep.subr.mxu0 0.0
        %4661 = vmatpush1.msra.mxu0 0.0
        %4662 = vmatprep.subr.mxu0 0.0
        %4663 = vmatpush1.msra.mxu0 %v4532
        %4664 = vmatprep.subr.mxu0 0.0
        %4665 = vmatpush1.msra.mxu0 %v4526
        %4666 = vmatprep.subr.mxu0 0.0
        %4667 = vmatpush1.msra.mxu0 %v4520
        %4668 = vmatprep.subr.mxu0 0.0
        %4669 = vmatpush1.msra.mxu0 %v4514
        %4670 = vmatprep.subr.mxu0 0.0
        %4671 = vmatpush1.msra.mxu0 %v4508
        %4672 = vmatprep.subr.mxu0 0.0
        %4673 = vmatpush2.msra.mxu0 0.0
        %4674 = vmatprep.subr.mxu0 0.0
        %4675 = vmatpush2.msra.mxu0 0.0
        %4676 = vmatprep.subr.mxu0 0.0
        %4677 = vmatpush2.msra.mxu0 0.0
        %4678 = vmatprep.subr.mxu0 0.0
        %4679 = vmatpush2.msra.mxu0 0.0
        %4680 = vmatprep.subr.mxu0 0.0
        %4681 = vmatpush2.msra.mxu0 0.0
        %4682 = vmatprep.subr.mxu0 0.0
        %4683 = vmatpush2.msra.mxu0 0.0
        %4684 = vmatprep.subr.mxu0 0.0
        %4685 = vmatpush2.msra.mxu0 0.0
        %4686 = vmatprep.subr.mxu0 0.0
        %4687 = vmatpush2.msra.mxu0 0.0
        %4688 = vmatprep.subr.mxu0 0.0
        %4689 = vmatpush2.msra.mxu0 0.0
        %4690 = vmatprep.subr.mxu0 0.0
        %4691 = vmatpush2.msra.mxu0 0.0
        %4692 = vmatprep.subr.mxu0 0.0
        %4693 = vmatpush2.msra.mxu0 0.0
        %4694 = vmatprep.subr.mxu0 0.0
        %4695 = vmatpush2.msra.mxu0 0.0
        %4696 = vmatprep.subr.mxu0 0.0
        %4697 = vmatpush2.msra.mxu0 0.0
        %4698 = vmatprep.subr.mxu0 0.0
        %4699 = vmatpush2.msra.mxu0 0.0
        %4700 = vmatprep.subr.mxu0 0.0
        %4701 = vmatpush2.msra.mxu0 0.0
        %4702 = vmatprep.subr.mxu0 0.0
        %4703 = vmatpush2.msra.mxu0 0.0
        %4704 = vmatprep.mubr.f32.mxu0 0.0
        %4705 = vmatmul.mubr.f32.gmra.mxu0 %v4559
        %v4706 = vpop.f32.mrf.mxu0
        %v4707 = vadd.f32 0.0, %v4706
        %v4708 = vpop.f32.mrf.mxu0
        %4709 = vmatprep.mubr.f32.mxu0 0.0
        %4710 = vmatmul.mubr.f32.gmra.mxu0 %v4561
        %v4711 = vpop.f32.mrf.mxu0
        %v4712 = vadd.f32 0.0, %v4711
        %v4713 = vpop.f32.mrf.mxu0
        %4714 = vdwg.mxu0
        %v4715 = vadd.f32 %v4479, %v4630
        %v4716 = vadd.f32 %v4480, %v4632
        %v4717 = vadd.f32 %v4481, %v4707
        %v4718 = vadd.f32 %v4482, %v4636
        %v4719 = vadd.f32 %v4483, %v4638
        %v4720 = vadd.f32 %v4484, %v4712
        %v4721 = vld [vmem:[#allocation2] sm:$0xff]
        %v4722 = vld [vmem:[#allocation2 + $0x8] sm:$0xff]
        %v4723 = vld [vmem:[#allocation2 + $0x10] sm:$0xff]
        %v4724 = vld [vmem:[#allocation2 + $0x18] sm:$0xff]
        %4729 = vrot.lane.b32.xlu0 %v4721, 127
        %v4730 = vpop.permute.xlu0 %4729
        %4731 = vrot.lane.b32.xlu0 %v4722, 127
        %v4732 = vpop.permute.xlu0 %4731
        %4733 = vrot.lane.b32.xlu0 %v4723, 127
        %v4734 = vpop.permute.xlu0 %4733
        %4735 = vrot.lane.b32.xlu0 %v4724, 127
        %v4736 = vpop.permute.xlu0 %4735
        %v4737 = vsel %vm505, %v4730, %v4732
        %v4738 = vsel %vm505, %v4732, %v4734
        %v4739 = vsel %vm505, %v4734, %v4736
        %4740 = vrot.lane.b32.xlu0 %v4721, 126
        %v4741 = vpop.permute.xlu0 %4740
        %4742 = vrot.lane.b32.xlu0 %v4722, 126
        %v4743 = vpop.permute.xlu0 %4742
        %4744 = vrot.lane.b32.xlu0 %v4723, 126
        %v4745 = vpop.permute.xlu0 %4744
        %4746 = vrot.lane.b32.xlu0 %v4724, 126
        %v4747 = vpop.permute.xlu0 %4746
        %v4748 = vsel %vm544, %v4741, %v4743
        %v4749 = vsel %vm544, %v4743, %v4745
        %v4750 = vsel %vm544, %v4745, %v4747
        %4751 = vrot.lane.b32.xlu0 %v4721, 125
        %v4752 = vpop.permute.xlu0 %4751
        %4753 = vrot.lane.b32.xlu0 %v4722, 125
        %v4754 = vpop.permute.xlu0 %4753
        %4755 = vrot.lane.b32.xlu0 %v4723, 125
        %v4756 = vpop.permute.xlu0 %4755
        %4757 = vrot.lane.b32.xlu0 %v4724, 125
        %v4758 = vpop.permute.xlu0 %4757
        %v4759 = vsel %vm583, %v4752, %v4754
        %v4760 = vsel %vm583, %v4754, %v4756
        %v4761 = vsel %vm583, %v4756, %v4758
        %4762 = vrot.lane.b32.xlu0 %v4721, 124
        %v4763 = vpop.permute.xlu0 %4762
        %4764 = vrot.lane.b32.xlu0 %v4722, 124
        %v4765 = vpop.permute.xlu0 %4764
        %4766 = vrot.lane.b32.xlu0 %v4723, 124
        %v4767 = vpop.permute.xlu0 %4766
        %4768 = vrot.lane.b32.xlu0 %v4724, 124
        %v4769 = vpop.permute.xlu0 %4768
        %v4770 = vsel %vm622, %v4763, %v4765
        %v4771 = vsel %vm622, %v4765, %v4767
        %v4772 = vsel %vm622, %v4767, %v4769
        %4773 = vrot.lane.b32.xlu0 %v4486, 96
        %v4774 = vpop.permute.xlu0 %4773
        %4775 = vrot.lane.b32.xlu0 %v4488, 96
        %v4776 = vpop.permute.xlu0 %4775
        %4777 = vrot.lane.b32.xlu0 %v4721, 48
        %v4778 = vpop.permute.xlu0 %4777
        %4779 = vrot.lane.b32.xlu0 %v4722, 48
        %v4780 = vpop.permute.xlu0 %4779
        %4781 = vrot.lane.b32.xlu0 %v4723, 48
        %v4782 = vpop.permute.xlu0 %4781
        %4783 = vrot.lane.b32.xlu0 %v4724, 48
        %v4784 = vpop.permute.xlu0 %4783
        %4785 = vrot.lane.b32.xlu0 %v4737, 48
        %v4786 = vpop.permute.xlu0 %4785
        %4787 = vrot.lane.b32.xlu0 %v4738, 48
        %v4788 = vpop.permute.xlu0 %4787
        %4789 = vrot.lane.b32.xlu0 %v4739, 48
        %v4790 = vpop.permute.xlu0 %4789
        %4791 = vrot.lane.b32.xlu0 %v4736, 48
        %v4792 = vpop.permute.xlu0 %4791
        %4793 = vrot.lane.b32.xlu0 %v4748, 48
        %v4794 = vpop.permute.xlu0 %4793
        %4795 = vrot.lane.b32.xlu0 %v4749, 48
        %v4796 = vpop.permute.xlu0 %4795
        %4797 = vrot.lane.b32.xlu0 %v4750, 48
        %v4798 = vpop.permute.xlu0 %4797
        %4799 = vrot.lane.b32.xlu0 %v4747, 48
        %v4800 = vpop.permute.xlu0 %4799
        %4801 = vrot.lane.b32.xlu0 %v4759, 48
        %v4802 = vpop.permute.xlu0 %4801
        %4803 = vrot.lane.b32.xlu0 %v4760, 48
        %v4804 = vpop.permute.xlu0 %4803
        %4805 = vrot.lane.b32.xlu0 %v4761, 48
        %v4806 = vpop.permute.xlu0 %4805
        %4807 = vrot.lane.b32.xlu0 %v4758, 48
        %v4808 = vpop.permute.xlu0 %4807
        %4809 = vrot.lane.b32.xlu0 %v4770, 48
        %v4810 = vpop.permute.xlu0 %4809
        %4811 = vrot.lane.b32.xlu0 %v4771, 48
        %v4812 = vpop.permute.xlu0 %4811
        %4813 = vrot.lane.b32.xlu0 %v4772, 48
        %v4814 = vpop.permute.xlu0 %4813
        %4815 = vrot.lane.b32.xlu0 %v4769, 48
        %v4816 = vpop.permute.xlu0 %4815
        %vm4817 = vcmask 392192
        %v4818 = vsel %vm4817, %v4778, %v4780
        %v4819 = vsel %vm4817, %v4780, %v4782
        %v4820 = vsel %vm4817, %v4782, %v4784
        %v4821 = vsel %vm4817, %v4786, %v4788
        %v4822 = vsel %vm4817, %v4788, %v4790
        %v4823 = vsel %vm4817, %v4790, %v4792
        %v4824 = vsel %vm4817, %v4794, %v4796
        %v4825 = vsel %vm4817, %v4796, %v4798
        %v4826 = vsel %vm4817, %v4798, %v4800
        %v4827 = vsel %vm4817, %v4802, %v4804
        %v4828 = vsel %vm4817, %v4804, %v4806
        %v4829 = vsel %vm4817, %v4806, %v4808
        %v4830 = vsel %vm4817, %v4810, %v4812
        %v4831 = vsel %vm4817, %v4812, %v4814
        %v4832 = vsel %vm4817, %v4814, %v4816
        %v4848 = vsel %vm836, %v4774, 0
        %v4850 = vsel %vm836, %v4776, 0
        %4852 = vmatprep.subr.mxu0 0.0
        %4853 = vmatpush1.msra.mxu0 0.0
        %4854 = vmatprep.subr.mxu0 0.0
        %4855 = vmatpush1.msra.mxu0 0.0
        %4856 = vmatprep.subr.mxu0 0.0
        %4857 = vmatpush1.msra.mxu0 0.0
        %4858 = vmatprep.subr.mxu0 0.0
        %4859 = vmatpush1.msra.mxu0 0.0
        %4860 = vmatprep.subr.mxu0 0.0
        %4861 = vmatpush1.msra.mxu0 0.0
        %4862 = vmatprep.subr.mxu0 0.0
        %4863 = vmatpush1.msra.mxu0 0.0
        %4864 = vmatprep.subr.mxu0 0.0
        %4865 = vmatpush1.msra.mxu0 0.0
        %4866 = vmatprep.subr.mxu0 0.0
        %4867 = vmatpush1.msra.mxu0 0.0
        %4868 = vmatprep.subr.mxu0 0.0
        %4869 = vmatpush1.msra.mxu0 0.0
        %4870 = vmatprep.subr.mxu0 0.0
        %4871 = vmatpush1.msra.mxu0 0.0
        %4872 = vmatprep.subr.mxu0 0.0
        %4873 = vmatpush1.msra.mxu0 0.0
        %4874 = vmatprep.subr.mxu0 %v4831
        %4875 = vmatpush1.msra.mxu0 %v4830
        %4876 = vmatprep.subr.mxu0 %v4828
        %4877 = vmatpush1.msra.mxu0 %v4827
        %4878 = vmatprep.subr.mxu0 %v4825
        %4879 = vmatpush1.msra.mxu0 %v4824
        %4880 = vmatprep.subr.mxu0 %v4822
        %4881 = vmatpush1.msra.mxu0 %v4821
        %4882 = vmatprep.subr.mxu0 %v4819
        %4883 = vmatpush1.msra.mxu0 %v4818
        %4884 = vmatprep.subr.mxu0 0.0
        %4885 = vmatpush2.msra.mxu0 0.0
        %4886 = vmatprep.subr.mxu0 0.0
        %4887 = vmatpush2.msra.mxu0 0.0
        %4888 = vmatprep.subr.mxu0 0.0
        %4889 = vmatpush2.msra.mxu0 0.0
        %4890 = vmatprep.subr.mxu0 0.0
        %4891 = vmatpush2.msra.mxu0 0.0
        %4892 = vmatprep.subr.mxu0 0.0
        %4893 = vmatpush2.msra.mxu0 0.0
        %4894 = vmatprep.subr.mxu0 0.0
        %4895 = vmatpush2.msra.mxu0 0.0
        %4896 = vmatprep.subr.mxu0 0.0
        %4897 = vmatpush2.msra.mxu0 0.0
        %4898 = vmatprep.subr.mxu0 0.0
        %4899 = vmatpush2.msra.mxu0 0.0
        %4900 = vmatprep.subr.mxu0 0.0
        %4901 = vmatpush2.msra.mxu0 0.0
        %4902 = vmatprep.subr.mxu0 0.0
        %4903 = vmatpush2.msra.mxu0 0.0
        %4904 = vmatprep.subr.mxu0 0.0
        %4905 = vmatpush2.msra.mxu0 0.0
        %4906 = vmatprep.subr.mxu0 0.0
        %4907 = vmatpush2.msra.mxu0 0.0
        %4908 = vmatprep.subr.mxu0 0.0
        %4909 = vmatpush2.msra.mxu0 0.0
        %4910 = vmatprep.subr.mxu0 0.0
        %4911 = vmatpush2.msra.mxu0 0.0
        %4912 = vmatprep.subr.mxu0 0.0
        %4913 = vmatpush2.msra.mxu0 0.0
        %4914 = vmatprep.subr.mxu0 0.0
        %4915 = vmatpush2.msra.mxu0 0.0
        %4916 = vmatprep.mubr.f32.mxu0 0.0
        %4917 = vmatmul.mubr.f32.gmra.mxu0 %v4848
        %v4918 = vpop.f32.mrf.mxu0
        %v4919 = vadd.f32 0.0, %v4918
        %v4920 = vpop.f32.mrf.mxu0
        %v4921 = vadd.f32 0.0, %v4920
        %4922 = vmatprep.mubr.f32.mxu0 0.0
        %4923 = vmatmul.mubr.f32.gmra.mxu0 %v4850
        %v4924 = vpop.f32.mrf.mxu0
        %v4925 = vadd.f32 0.0, %v4924
        %v4926 = vpop.f32.mrf.mxu0
        %v4927 = vadd.f32 0.0, %v4926
        %4928 = vdwg.mxu0
        %4929 = vmatprep.subr.mxu0 0.0
        %4930 = vmatpush1.msra.mxu0 0.0
        %4931 = vmatprep.subr.mxu0 0.0
        %4932 = vmatpush1.msra.mxu0 0.0
        %4933 = vmatprep.subr.mxu0 0.0
        %4934 = vmatpush1.msra.mxu0 0.0
        %4935 = vmatprep.subr.mxu0 0.0
        %4936 = vmatpush1.msra.mxu0 0.0
        %4937 = vmatprep.subr.mxu0 0.0
        %4938 = vmatpush1.msra.mxu0 0.0
        %4939 = vmatprep.subr.mxu0 0.0
        %4940 = vmatpush1.msra.mxu0 0.0
        %4941 = vmatprep.subr.mxu0 0.0
        %4942 = vmatpush1.msra.mxu0 0.0
        %4943 = vmatprep.subr.mxu0 0.0
        %4944 = vmatpush1.msra.mxu0 0.0
        %4945 = vmatprep.subr.mxu0 0.0
        %4946 = vmatpush1.msra.mxu0 0.0
        %4947 = vmatprep.subr.mxu0 0.0
        %4948 = vmatpush1.msra.mxu0 0.0
        %4949 = vmatprep.subr.mxu0 0.0
        %4950 = vmatpush1.msra.mxu0 0.0
        %4951 = vmatprep.subr.mxu0 0.0
        %4952 = vmatpush1.msra.mxu0 %v4832
        %4953 = vmatprep.subr.mxu0 0.0
        %4954 = vmatpush1.msra.mxu0 %v4829
        %4955 = vmatprep.subr.mxu0 0.0
        %4956 = vmatpush1.msra.mxu0 %v4826
        %4957 = vmatprep.subr.mxu0 0.0
        %4958 = vmatpush1.msra.mxu0 %v4823
        %4959 = vmatprep.subr.mxu0 0.0
        %4960 = vmatpush1.msra.mxu0 %v4820
        %4961 = vmatprep.subr.mxu0 0.0
        %4962 = vmatpush2.msra.mxu0 0.0
        %4963 = vmatprep.subr.mxu0 0.0
        %4964 = vmatpush2.msra.mxu0 0.0
        %4965 = vmatprep.subr.mxu0 0.0
        %4966 = vmatpush2.msra.mxu0 0.0
        %4967 = vmatprep.subr.mxu0 0.0
        %4968 = vmatpush2.msra.mxu0 0.0
        %4969 = vmatprep.subr.mxu0 0.0
        %4970 = vmatpush2.msra.mxu0 0.0
        %4971 = vmatprep.subr.mxu0 0.0
        %4972 = vmatpush2.msra.mxu0 0.0
        %4973 = vmatprep.subr.mxu0 0.0
        %4974 = vmatpush2.msra.mxu0 0.0
        %4975 = vmatprep.subr.mxu0 0.0
        %4976 = vmatpush2.msra.mxu0 0.0
        %4977 = vmatprep.subr.mxu0 0.0
        %4978 = vmatpush2.msra.mxu0 0.0
        %4979 = vmatprep.subr.mxu0 0.0
        %4980 = vmatpush2.msra.mxu0 0.0
        %4981 = vmatprep.subr.mxu0 0.0
        %4982 = vmatpush2.msra.mxu0 0.0
        %4983 = vmatprep.subr.mxu0 0.0
        %4984 = vmatpush2.msra.mxu0 0.0
        %4985 = vmatprep.subr.mxu0 0.0
        %4986 = vmatpush2.msra.mxu0 0.0
        %4987 = vmatprep.subr.mxu0 0.0
        %4988 = vmatpush2.msra.mxu0 0.0
        %4989 = vmatprep.subr.mxu0 0.0
        %4990 = vmatpush2.msra.mxu0 0.0
        %4991 = vmatprep.subr.mxu0 0.0
        %4992 = vmatpush2.msra.mxu0 0.0
        %4993 = vmatprep.mubr.f32.mxu0 0.0
        %4994 = vmatmul.mubr.f32.gmra.mxu0 %v4848
        %v4995 = vpop.f32.mrf.mxu0
        %v4996 = vadd.f32 0.0, %v4995
        %v4997 = vpop.f32.mrf.mxu0
        %4998 = vmatprep.mubr.f32.mxu0 0.0
        %4999 = vmatmul.mubr.f32.gmra.mxu0 %v4850
        %v5000 = vpop.f32.mrf.mxu0
        %v5001 = vadd.f32 0.0, %v5000
        %v5002 = vpop.f32.mrf.mxu0
        %5003 = vdwg.mxu0
        %v5004 = vadd.f32 %v4715, %v4919
        %v5005 = vadd.f32 %v4716, %v4921
        %v5006 = vadd.f32 %v4717, %v4996
        %v5007 = vadd.f32 %v4718, %v4925
        %v5008 = vadd.f32 %v4719, %v4927
        %v5009 = vadd.f32 %v4720, %v5001
        %v5010 = vld [vmem:[%s4] sm:$0xff]
        %v5011 = vld [vmem:[%s4 + $0x8] sm:$0xff]
        %5013 = vset.pattern.permute.xlu0 0
        %5014 = vperm.xlu0 %5013, %v5010
        %v5015 = vpop.permute.xlu0 %5014
        %5018 = vset.pattern.permute.xlu0 0
        %5019 = vperm.xlu0 %5018, %v5011
        %v5020 = vpop.permute.xlu0 %5019
        %v5022 = vadd.f32 %v5004, %v5015
        %v5023 = vadd.f32 %v5005, %v5015
        %v5024 = vadd.f32 %v5006, %v5015
        %v5025 = vadd.f32 %v5007, %v5020
        %v5026 = vadd.f32 %v5008, %v5020
        %v5027 = vadd.f32 %v5009, %v5020
        %v5028 = vmax.f32 %v5022, 0.0
        %v5029 = vmax.f32 %v5023, 0.0
        %v5030 = vmax.f32 %v5024, 0.0
        %v5031 = vmax.f32 %v5025, 0.0
        %v5032 = vmax.f32 %v5026, 0.0
        %v5033 = vmax.f32 %v5027, 0.0
        %5040 = vrot.lane.b32.xlu0 %v5028, 127
        %v5041 = vpop.permute.xlu0 %5040
        %5042 = vrot.lane.b32.xlu0 %v5029, 127
        %v5043 = vpop.permute.xlu0 %5042
        %5044 = vrot.lane.b32.xlu0 %v5030, 127
        %v5045 = vpop.permute.xlu0 %5044
        %5046 = vrot.lane.b32.xlu0 %v5031, 127
        %v5047 = vpop.permute.xlu0 %5046
        %5048 = vrot.lane.b32.xlu0 %v5032, 127
        %v5049 = vpop.permute.xlu0 %5048
        %5050 = vrot.lane.b32.xlu0 %v5033, 127
        %v5051 = vpop.permute.xlu0 %5050
        %v5052 = vsel %vm505, %v5041, %v5043
        %v5053 = vsel %vm505, %v5043, %v5045
        %v5054 = vsel %vm505, %v5047, %v5049
        %v5055 = vsel %vm505, %v5049, %v5051
        %v5062 = vmax.f32 %v5028, %v5052
        %v5063 = vmax.f32 %v5029, %v5053
        %v5064 = vmax.f32 %v5030, %v5045
        %v5065 = vmax.f32 %v5031, %v5054
        %v5066 = vmax.f32 %v5032, %v5055
        %v5067 = vmax.f32 %v5033, %v5051
        %5074 = vrot.lane.b32.xlu0 %v5062, 108
        %v5075 = vpop.permute.xlu0 %5074
        %5076 = vrot.lane.b32.xlu0 %v5063, 108
        %v5077 = vpop.permute.xlu0 %5076
        %5078 = vrot.lane.b32.xlu0 %v5064, 108
        %v5079 = vpop.permute.xlu0 %5078
        %5080 = vrot.lane.b32.xlu0 %v5065, 108
        %v5081 = vpop.permute.xlu0 %5080
        %5082 = vrot.lane.b32.xlu0 %v5066, 108
        %v5083 = vpop.permute.xlu0 %5082
        %5084 = vrot.lane.b32.xlu0 %v5067, 108
        %v5085 = vpop.permute.xlu0 %5084
        %v5086 = vsel %vm3925, %v5075, %v5077
        %v5087 = vsel %vm3925, %v5077, %v5079
        %v5088 = vsel %vm3925, %v5081, %v5083
        %v5089 = vsel %vm3925, %v5083, %v5085
        %v5096 = vmax.f32 %v5062, %v5086
        %v5097 = vmax.f32 %v5063, %v5087
        %v5098 = vmax.f32 %v5064, %v5079
        %v5099 = vmax.f32 %v5065, %v5088
        %v5100 = vmax.f32 %v5066, %v5089
        %v5101 = vmax.f32 %v5067, %v5085
        %5104 = vrot.lane.b32.xlu0 %v5096, 88
        %v5105 = vpop.permute.xlu0 %5104
        %5106 = vrot.lane.b32.xlu0 %v5099, 88
        %v5107 = vpop.permute.xlu0 %5106
        %5108 = vrot.lane.b32.xlu0 %v5096, 48
        %v5109 = vpop.permute.xlu0 %5108
        %5110 = vrot.lane.b32.xlu0 %v5099, 48
        %v5111 = vpop.permute.xlu0 %5110
        %5114 = vrot.lane.b32.xlu0 %v5096, 8
        %v5115 = vpop.permute.xlu0 %5114
        %5116 = vrot.lane.b32.xlu0 %v5097, 8
        %v5117 = vpop.permute.xlu0 %5116
        %5118 = vrot.lane.b32.xlu0 %v5099, 8
        %v5119 = vpop.permute.xlu0 %5118
        %5120 = vrot.lane.b32.xlu0 %v5100, 8
        %v5121 = vpop.permute.xlu0 %5120
        %v5122 = vsel %vm2115, %v5115, %v5117
        %v5123 = vsel %vm2115, %v5119, %v5121
        %5124 = vrot.lane.b32.xlu0 %v5097, 96
        %v5125 = vpop.permute.xlu0 %5124
        %5126 = vrot.lane.b32.xlu0 %v5100, 96
        %v5127 = vpop.permute.xlu0 %5126
        %5128 = vrot.lane.b32.xlu0 %v5097, 56
        %v5129 = vpop.permute.xlu0 %5128
        %5130 = vrot.lane.b32.xlu0 %v5100, 56
        %v5131 = vpop.permute.xlu0 %5130
        %5132 = vrot.lane.b32.xlu0 %v5097, 16
        %v5133 = vpop.permute.xlu0 %5132
        %5134 = vrot.lane.b32.xlu0 %v5100, 16
        %v5135 = vpop.permute.xlu0 %5134
        %5138 = vrot.lane.b32.xlu0 %v5098, 104
        %v5139 = vpop.permute.xlu0 %5138
        %5140 = vrot.lane.b32.xlu0 %v5101, 104
        %v5141 = vpop.permute.xlu0 %5140
        %v5142 = vld [vmem:[%s10] sm:$0xff]
        %v5143 = vld [vmem:[%s10 + $0x8] sm:$0x7f]
        %vm5144 = vcmask 121856
        %v5145 = vsel %vm5144, %v5096, 0
        %v5147 = vsel %vm5144, %v5099, 0
        %v5149 = vsel %vm5144, %v5105, 0
        %v5151 = vsel %vm5144, %v5107, 0
        %v5153 = vsel %vm5144, %v5109, 0
        %v5155 = vsel %vm5144, %v5111, 0
        %v5157 = vsel %vm5144, %v5122, 0
        %v5159 = vsel %vm5144, %v5123, 0
        %v5161 = vsel %vm5144, %v5125, 0
        %v5163 = vsel %vm5144, %v5127, 0
        %v5165 = vsel %vm5144, %v5129, 0
        %v5167 = vsel %vm5144, %v5131, 0
        %v5169 = vsel %vm5144, %v5133, 0
        %v5171 = vsel %vm5144, %v5135, 0
        %v5173 = vsel %vm5144, %v5139, 0
        %v5175 = vsel %vm5144, %v5141, 0
        %v5178 = vsel %vm3584, %v5143, 0
        %5180 = vmatprep.subr.mxu0 0.0
        %5181 = vmatpush1.msra.mxu0 0.0
        %5182 = vmatprep.subr.mxu0 0.0
        %5183 = vmatpush1.msra.mxu0 0.0
        %5184 = vmatprep.subr.mxu0 0.0
        %5185 = vmatpush1.msra.mxu0 0.0
        %5186 = vmatprep.subr.mxu0 0.0
        %5187 = vmatpush1.msra.mxu0 0.0
        %5188 = vmatprep.subr.mxu0 0.0
        %5189 = vmatpush1.msra.mxu0 0.0
        %5190 = vmatprep.subr.mxu0 0.0
        %5191 = vmatpush1.msra.mxu0 0.0
        %5192 = vmatprep.subr.mxu0 0.0
        %5193 = vmatpush1.msra.mxu0 0.0
        %5194 = vmatprep.subr.mxu0 0.0
        %5195 = vmatpush1.msra.mxu0 0.0
        %5196 = vmatprep.subr.mxu0 0.0
        %5197 = vmatpush1.msra.mxu0 0.0
        %5198 = vmatprep.subr.mxu0 0.0
        %5199 = vmatpush1.msra.mxu0 0.0
        %5200 = vmatprep.subr.mxu0 0.0
        %5201 = vmatpush1.msra.mxu0 0.0
        %5202 = vmatprep.subr.mxu0 0.0
        %5203 = vmatpush1.msra.mxu0 0.0
        %5204 = vmatprep.subr.mxu0 0.0
        %5205 = vmatpush1.msra.mxu0 0.0
        %5206 = vmatprep.subr.mxu0 0.0
        %5207 = vmatpush1.msra.mxu0 0.0
        %5208 = vmatprep.subr.mxu0 0.0
        %5209 = vmatpush1.msra.mxu0 %v5178
        %5210 = vmatprep.subr.mxu0 0.0
        %5211 = vmatpush1.msra.mxu0 %v5142
        %5212 = vmatprep.subr.mxu0 0.0
        %5213 = vmatpush2.msra.mxu0 0.0
        %5214 = vmatprep.subr.mxu0 0.0
        %5215 = vmatpush2.msra.mxu0 0.0
        %5216 = vmatprep.subr.mxu0 0.0
        %5217 = vmatpush2.msra.mxu0 0.0
        %5218 = vmatprep.subr.mxu0 0.0
        %5219 = vmatpush2.msra.mxu0 0.0
        %5220 = vmatprep.subr.mxu0 0.0
        %5221 = vmatpush2.msra.mxu0 0.0
        %5222 = vmatprep.subr.mxu0 0.0
        %5223 = vmatpush2.msra.mxu0 0.0
        %5224 = vmatprep.subr.mxu0 0.0
        %5225 = vmatpush2.msra.mxu0 0.0
        %5226 = vmatprep.subr.mxu0 0.0
        %5227 = vmatpush2.msra.mxu0 0.0
        %5228 = vmatprep.subr.mxu0 0.0
        %5229 = vmatpush2.msra.mxu0 0.0
        %5230 = vmatprep.subr.mxu0 0.0
        %5231 = vmatpush2.msra.mxu0 0.0
        %5232 = vmatprep.subr.mxu0 0.0
        %5233 = vmatpush2.msra.mxu0 0.0
        %5234 = vmatprep.subr.mxu0 0.0
        %5235 = vmatpush2.msra.mxu0 0.0
        %5236 = vmatprep.subr.mxu0 0.0
        %5237 = vmatpush2.msra.mxu0 0.0
        %5238 = vmatprep.subr.mxu0 0.0
        %5239 = vmatpush2.msra.mxu0 0.0
        %5240 = vmatprep.subr.mxu0 0.0
        %5241 = vmatpush2.msra.mxu0 0.0
        %5242 = vmatprep.subr.mxu0 0.0
        %5243 = vmatpush2.msra.mxu0 0.0
        %5244 = vmatprep.mubr.f32.mxu0 0.0
        %5245 = vmatmul.mubr.f32.gmra.mxu0 %v5145
        %v5246 = vpop.f32.mrf.mxu0
        %v5247 = vadd.f32 0.0, %v5246
        %v5248 = vpop.f32.mrf.mxu0
        %5249 = vmatprep.mubr.f32.mxu0 0.0
        %5250 = vmatmul.mubr.f32.gmra.mxu0 %v5147
        %v5251 = vpop.f32.mrf.mxu0
        %v5252 = vadd.f32 0.0, %v5251
        %v5253 = vpop.f32.mrf.mxu0
        %5254 = vmatprep.mubr.f32.mxu0 0.0
        %5255 = vmatmul.mubr.f32.gmra.mxu0 %v5149
        %v5256 = vpop.f32.mrf.mxu0
        %v5257 = vadd.f32 0.0, %v5256
        %v5258 = vpop.f32.mrf.mxu0
        %5259 = vmatprep.mubr.f32.mxu0 0.0
        %5260 = vmatmul.mubr.f32.gmra.mxu0 %v5151
        %v5261 = vpop.f32.mrf.mxu0
        %v5262 = vadd.f32 0.0, %v5261
        %v5263 = vpop.f32.mrf.mxu0
        %5264 = vmatprep.mubr.f32.mxu0 0.0
        %5265 = vmatmul.mubr.f32.gmra.mxu0 %v5153
        %v5266 = vpop.f32.mrf.mxu0
        %v5267 = vadd.f32 0.0, %v5266
        %v5268 = vpop.f32.mrf.mxu0
        %5269 = vmatprep.mubr.f32.mxu0 0.0
        %5270 = vmatmul.mubr.f32.gmra.mxu0 %v5155
        %v5271 = vpop.f32.mrf.mxu0
        %v5272 = vadd.f32 0.0, %v5271
        %v5273 = vpop.f32.mrf.mxu0
        %5274 = vmatprep.mubr.f32.mxu0 0.0
        %5275 = vmatmul.mubr.f32.gmra.mxu0 %v5157
        %v5276 = vpop.f32.mrf.mxu0
        %v5277 = vadd.f32 0.0, %v5276
        %v5278 = vpop.f32.mrf.mxu0
        %5279 = vmatprep.mubr.f32.mxu0 0.0
        %5280 = vmatmul.mubr.f32.gmra.mxu0 %v5159
        %v5281 = vpop.f32.mrf.mxu0
        %v5282 = vadd.f32 0.0, %v5281
        %v5283 = vpop.f32.mrf.mxu0
        %5284 = vmatprep.mubr.f32.mxu0 0.0
        %5285 = vmatmul.mubr.f32.gmra.mxu0 %v5161
        %v5286 = vpop.f32.mrf.mxu0
        %v5287 = vadd.f32 0.0, %v5286
        %v5288 = vpop.f32.mrf.mxu0
        %5289 = vmatprep.mubr.f32.mxu0 0.0
        %5290 = vmatmul.mubr.f32.gmra.mxu0 %v5163
        %v5291 = vpop.f32.mrf.mxu0
        %v5292 = vadd.f32 0.0, %v5291
        %v5293 = vpop.f32.mrf.mxu0
        %5294 = vmatprep.mubr.f32.mxu0 0.0
        %5295 = vmatmul.mubr.f32.gmra.mxu0 %v5165
        %v5296 = vpop.f32.mrf.mxu0
        %v5297 = vadd.f32 0.0, %v5296
        %v5298 = vpop.f32.mrf.mxu0
        %5299 = vmatprep.mubr.f32.mxu0 0.0
        %5300 = vmatmul.mubr.f32.gmra.mxu0 %v5167
        %v5301 = vpop.f32.mrf.mxu0
        %v5302 = vadd.f32 0.0, %v5301
        %v5303 = vpop.f32.mrf.mxu0
        %5304 = vmatprep.mubr.f32.mxu0 0.0
        %5305 = vmatmul.mubr.f32.gmra.mxu0 %v5169
        %v5306 = vpop.f32.mrf.mxu0
        %v5307 = vadd.f32 0.0, %v5306
        %v5308 = vpop.f32.mrf.mxu0
        %5309 = vmatprep.mubr.f32.mxu0 0.0
        %5310 = vmatmul.mubr.f32.gmra.mxu0 %v5171
        %v5311 = vpop.f32.mrf.mxu0
        %v5312 = vadd.f32 0.0, %v5311
        %v5313 = vpop.f32.mrf.mxu0
        %5314 = vmatprep.mubr.f32.mxu0 0.0
        %5315 = vmatmul.mubr.f32.gmra.mxu0 %v5173
        %v5316 = vpop.f32.mrf.mxu0
        %v5317 = vadd.f32 0.0, %v5316
        %v5318 = vpop.f32.mrf.mxu0
        %5319 = vmatprep.mubr.f32.mxu0 0.0
        %5320 = vmatmul.mubr.f32.gmra.mxu0 %v5175
        %v5321 = vpop.f32.mrf.mxu0
        %v5322 = vadd.f32 0.0, %v5321
        %v5323 = vpop.f32.mrf.mxu0
        %5324 = vdwg.mxu0
        %5325 = vst [vmem:[#allocation3] sm:$0xff] 0.0
        %5326 = vst.msk [vmem:[#allocation3 + $0x8] sm:$0xff] %vm2217, 0.0
        %5327 = vst [vmem:[#allocation3 + $0x10] sm:$0xff] 0.0
        %5328 = vst.msk [vmem:[#allocation3 + $0x18] sm:$0xff] %vm2217, 0.0
        %5331 = vrot.lane.b32.xlu0 %v5247, 26
        %v5332 = vpop.permute.xlu0 %5331
        %5333 = vrot.lane.b32.xlu0 %v5252, 26
        %v5334 = vpop.permute.xlu0 %5333
        %vm5337 = vcmask 277712
        %5338 = vst.msk [vmem:[#allocation3] sm:$0xff] %vm5337, %v5332
        %5339 = vst.msk [vmem:[#allocation3 + $0x10] sm:$0xff] %vm5337, %v5334
        %5342 = vrot.lane.b32.xlu0 %v5257, 38
        %v5343 = vpop.permute.xlu0 %5342
        %5344 = vrot.lane.b32.xlu0 %v5262, 38
        %v5345 = vpop.permute.xlu0 %5344
        %vm5348 = vcmask 376112
        %5349 = vst.msk [vmem:[#allocation3] sm:$0xff] %vm5348, %v5343
        %5350 = vst.msk [vmem:[#allocation3 + $0x10] sm:$0xff] %vm5348, %v5345
        %5353 = vrot.lane.b32.xlu0 %v5267, 50
        %v5354 = vpop.permute.xlu0 %5353
        %5355 = vrot.lane.b32.xlu0 %v5272, 50
        %v5356 = vpop.permute.xlu0 %5355
        %vm5359 = vcmask 474512
        %5360 = vst.msk [vmem:[#allocation3] sm:$0xff] %vm5359, %v5354
        %5361 = vst.msk [vmem:[#allocation3 + $0x10] sm:$0xff] %vm5359, %v5356
        %5364 = vrot.lane.b32.xlu0 %v5277, 62
        %v5365 = vpop.permute.xlu0 %5364
        %5366 = vrot.lane.b32.xlu0 %v5282, 62
        %v5367 = vpop.permute.xlu0 %5366
        %vm5370 = vcmask 572912
        %5371 = vst.msk [vmem:[#allocation3] sm:$0xff] %vm5370, %v5365
        %5372 = vst.msk [vmem:[#allocation3 + $0x10] sm:$0xff] %vm5370, %v5367
        %5375 = vrot.lane.b32.xlu0 %v5287, 74
        %v5376 = vpop.permute.xlu0 %5375
        %5377 = vrot.lane.b32.xlu0 %v5292, 74
        %v5378 = vpop.permute.xlu0 %5377
        %vm5381 = vcmask 671312
        %5382 = vst.msk [vmem:[#allocation3] sm:$0xff] %vm5381, %v5376
        %5383 = vst.msk [vmem:[#allocation3 + $0x10] sm:$0xff] %vm5381, %v5378
        %5386 = vrot.lane.b32.xlu0 %v5297, 86
        %v5387 = vpop.permute.xlu0 %5386
        %5388 = vrot.lane.b32.xlu0 %v5302, 86
        %v5389 = vpop.permute.xlu0 %5388
        %vm5392 = vcmask 769712
        %5393 = vst.msk [vmem:[#allocation3] sm:$0xff] %vm5392, %v5387
        %5394 = vst.msk [vmem:[#allocation3 + $0x10] sm:$0xff] %vm5392, %v5389
        %5397 = vrot.lane.b32.xlu0 %v5307, 98
        %v5398 = vpop.permute.xlu0 %5397
        %5399 = vrot.lane.b32.xlu0 %v5312, 98
        %v5400 = vpop.permute.xlu0 %5399
        %vm5403 = vcmask 868112
        %5404 = vst.msk [vmem:[#allocation3] sm:$0xff] %vm5403, %v5398
        %5405 = vst.msk [vmem:[#allocation3 + $0x10] sm:$0xff] %vm5403, %v5400
        %5408 = vrot.lane.b32.xlu0 %v5317, 110
        %v5409 = vpop.permute.xlu0 %5408
        %5410 = vrot.lane.b32.xlu0 %v5322, 110
        %v5411 = vpop.permute.xlu0 %5410
        %vm5414 = vcmask 966512
        %5415 = vst.msk [vmem:[#allocation3] sm:$0xff] %vm5414, %v5409
        %5416 = vst.msk [vmem:[#allocation3 + $0x10] sm:$0xff] %vm5414, %v5411
        %v5417 = vld [vmem:[#allocation3] sm:$0xff]
        %v5418 = vld [vmem:[#allocation3 + $0x10] sm:$0xff]
        %5421 = vrot.lane.b32.xlu0 %v5417, 127
        %v5422 = vpop.permute.xlu0 %5421
        %5423 = vrot.lane.b32.xlu0 %v5418, 127
        %v5424 = vpop.permute.xlu0 %5423
        %5427 = vrot.lane.b32.xlu0 %v5417, 126
        %v5428 = vpop.permute.xlu0 %5427
        %5429 = vrot.lane.b32.xlu0 %v5418, 126
        %v5430 = vpop.permute.xlu0 %5429
        %5433 = vrot.lane.b32.xlu0 %v5417, 125
        %v5434 = vpop.permute.xlu0 %5433
        %5435 = vrot.lane.b32.xlu0 %v5418, 125
        %v5436 = vpop.permute.xlu0 %5435
        %5439 = vrot.lane.b32.xlu0 %v5417, 124
        %v5440 = vpop.permute.xlu0 %5439
        %5441 = vrot.lane.b32.xlu0 %v5418, 124
        %v5442 = vpop.permute.xlu0 %5441
        %v5445 = vld [vmem:[%s5] sm:$0xff]
        %v5446 = vld [vmem:[%s5 + $0x20] sm:$0xff]
        %v5447 = vld [vmem:[%s5 + $0x40] sm:$0xff]
        %v5448 = vld [vmem:[%s5 + $0x60] sm:$0xff]
        %v5449 = vld [vmem:[%s5 + $0x8] sm:$0xff]
        %v5450 = vld [vmem:[%s5 + $0x28] sm:$0xff]
        %v5451 = vld [vmem:[%s5 + $0x48] sm:$0xff]
        %v5452 = vld [vmem:[%s5 + $0x68] sm:$0xff]
        %5461 = vrot.lane.b32.xlu0 %v5445, 48
        %v5462 = vpop.permute.xlu0 %5461
        %5463 = vrot.lane.b32.xlu0 %v5449, 48
        %v5464 = vpop.permute.xlu0 %5463
        %5465 = vrot.lane.b32.xlu0 %v5446, 48
        %v5466 = vpop.permute.xlu0 %5465
        %5467 = vrot.lane.b32.xlu0 %v5450, 48
        %v5468 = vpop.permute.xlu0 %5467
        %5469 = vrot.lane.b32.xlu0 %v5447, 48
        %v5470 = vpop.permute.xlu0 %5469
        %5471 = vrot.lane.b32.xlu0 %v5451, 48
        %v5472 = vpop.permute.xlu0 %5471
        %5473 = vrot.lane.b32.xlu0 %v5448, 48
        %v5474 = vpop.permute.xlu0 %5473
        %5475 = vrot.lane.b32.xlu0 %v5452, 48
        %v5476 = vpop.permute.xlu0 %5475
        %v5477 = vsel %vm4817, %v5462, %v5464
        %v5478 = vsel %vm4817, %v5466, %v5468
        %v5479 = vsel %vm4817, %v5470, %v5472
        %v5480 = vsel %vm4817, %v5474, %v5476
        %5481 = vrot.lane.b32.xlu0 %v5417, 116
        %v5482 = vpop.permute.xlu0 %5481
        %5483 = vrot.lane.b32.xlu0 %v5418, 116
        %v5484 = vpop.permute.xlu0 %5483
        %5485 = vrot.lane.b32.xlu0 %v5422, 116
        %v5486 = vpop.permute.xlu0 %5485
        %5487 = vrot.lane.b32.xlu0 %v5424, 116
        %v5488 = vpop.permute.xlu0 %5487
        %5489 = vrot.lane.b32.xlu0 %v5428, 116
        %v5490 = vpop.permute.xlu0 %5489
        %5491 = vrot.lane.b32.xlu0 %v5430, 116
        %v5492 = vpop.permute.xlu0 %5491
        %5493 = vrot.lane.b32.xlu0 %v5434, 116
        %v5494 = vpop.permute.xlu0 %5493
        %5495 = vrot.lane.b32.xlu0 %v5436, 116
        %v5496 = vpop.permute.xlu0 %5495
        %5497 = vrot.lane.b32.xlu0 %v5440, 116
        %v5498 = vpop.permute.xlu0 %5497
        %5499 = vrot.lane.b32.xlu0 %v5442, 116
        %v5500 = vpop.permute.xlu0 %5499
        %vm5511 = vcmask 654336
        %v5512 = vsel %vm5511, %v5477, 0
        %v5514 = vsel %vm5511, %v5478, 0
        %v5516 = vsel %vm5511, %v5479, 0
        %v5518 = vsel %vm5511, %v5480, 0
        %5520 = vmatprep.subr.mxu0 0.0
        %5521 = vmatpush1.msra.mxu0 0.0
        %5522 = vmatprep.subr.mxu0 0.0
        %5523 = vmatpush1.msra.mxu0 0.0
        %5524 = vmatprep.subr.mxu0 0.0
        %5525 = vmatpush1.msra.mxu0 0.0
        %5526 = vmatprep.subr.mxu0 0.0
        %5527 = vmatpush1.msra.mxu0 0.0
        %5528 = vmatprep.subr.mxu0 0.0
        %5529 = vmatpush1.msra.mxu0 0.0
        %5530 = vmatprep.subr.mxu0 0.0
        %5531 = vmatpush1.msra.mxu0 0.0
        %5532 = vmatprep.subr.mxu0 0.0
        %5533 = vmatpush1.msra.mxu0 %v5500
        %5534 = vmatprep.subr.mxu0 0.0
        %5535 = vmatpush1.msra.mxu0 %v5498
        %5536 = vmatprep.subr.mxu0 0.0
        %5537 = vmatpush1.msra.mxu0 %v5496
        %5538 = vmatprep.subr.mxu0 0.0
        %5539 = vmatpush1.msra.mxu0 %v5494
        %5540 = vmatprep.subr.mxu0 0.0
        %5541 = vmatpush1.msra.mxu0 %v5492
        %5542 = vmatprep.subr.mxu0 0.0
        %5543 = vmatpush1.msra.mxu0 %v5490
        %5544 = vmatprep.subr.mxu0 0.0
        %5545 = vmatpush1.msra.mxu0 %v5488
        %5546 = vmatprep.subr.mxu0 0.0
        %5547 = vmatpush1.msra.mxu0 %v5486
        %5548 = vmatprep.subr.mxu0 0.0
        %5549 = vmatpush1.msra.mxu0 %v5484
        %5550 = vmatprep.subr.mxu0 0.0
        %5551 = vmatpush1.msra.mxu0 %v5482
        %5552 = vmatprep.subr.mxu0 0.0
        %5553 = vmatpush2.msra.mxu0 0.0
        %5554 = vmatprep.subr.mxu0 0.0
        %5555 = vmatpush2.msra.mxu0 0.0
        %5556 = vmatprep.subr.mxu0 0.0
        %5557 = vmatpush2.msra.mxu0 0.0
        %5558 = vmatprep.subr.mxu0 0.0
        %5559 = vmatpush2.msra.mxu0 0.0
        %5560 = vmatprep.subr.mxu0 0.0
        %5561 = vmatpush2.msra.mxu0 0.0
        %5562 = vmatprep.subr.mxu0 0.0
        %5563 = vmatpush2.msra.mxu0 0.0
        %5564 = vmatprep.subr.mxu0 0.0
        %5565 = vmatpush2.msra.mxu0 0.0
        %5566 = vmatprep.subr.mxu0 0.0
        %5567 = vmatpush2.msra.mxu0 0.0
        %5568 = vmatprep.subr.mxu0 0.0
        %5569 = vmatpush2.msra.mxu0 0.0
        %5570 = vmatprep.subr.mxu0 0.0
        %5571 = vmatpush2.msra.mxu0 0.0
        %5572 = vmatprep.subr.mxu0 0.0
        %5573 = vmatpush2.msra.mxu0 0.0
        %5574 = vmatprep.subr.mxu0 0.0
        %5575 = vmatpush2.msra.mxu0 0.0
        %5576 = vmatprep.subr.mxu0 0.0
        %5577 = vmatpush2.msra.mxu0 0.0
        %5578 = vmatprep.subr.mxu0 0.0
        %5579 = vmatpush2.msra.mxu0 0.0
        %5580 = vmatprep.subr.mxu0 0.0
        %5581 = vmatpush2.msra.mxu0 0.0
        %5582 = vmatprep.subr.mxu0 0.0
        %5583 = vmatpush2.msra.mxu0 0.0
        %5584 = vmatprep.mubr.f32.mxu0 0.0
        %5585 = vmatmul.mubr.f32.gmra.mxu0 %v5512
        %v5586 = vpop.f32.mrf.mxu0
        %v5587 = vadd.f32 0.0, %v5586
        %v5588 = vpop.f32.mrf.mxu0
        %5589 = vmatprep.mubr.f32.mxu0 0.0
        %5590 = vmatmul.mubr.f32.gmra.mxu0 %v5514
        %v5591 = vpop.f32.mrf.mxu0
        %v5592 = vadd.f32 0.0, %v5591
        %v5593 = vpop.f32.mrf.mxu0
        %5594 = vmatprep.mubr.f32.mxu0 0.0
        %5595 = vmatmul.mubr.f32.gmra.mxu0 %v5516
        %v5596 = vpop.f32.mrf.mxu0
        %v5597 = vadd.f32 0.0, %v5596
        %v5598 = vpop.f32.mrf.mxu0
        %5599 = vmatprep.mubr.f32.mxu0 0.0
        %5600 = vmatmul.mubr.f32.gmra.mxu0 %v5518
        %v5601 = vpop.f32.mrf.mxu0
        %v5602 = vadd.f32 0.0, %v5601
        %v5603 = vpop.f32.mrf.mxu0
        %5604 = vdwg.mxu0
        %v5605 = vsel %vm5511, %v5445, 0
        %v5607 = vsel %vm5511, %v5446, 0
        %v5609 = vsel %vm5511, %v5447, 0
        %v5611 = vsel %vm5511, %v5448, 0
        %5613 = vmatprep.subr.mxu0 0.0
        %5614 = vmatpush1.msra.mxu0 0.0
        %5615 = vmatprep.subr.mxu0 0.0
        %5616 = vmatpush1.msra.mxu0 0.0
        %5617 = vmatprep.subr.mxu0 0.0
        %5618 = vmatpush1.msra.mxu0 0.0
        %5619 = vmatprep.subr.mxu0 0.0
        %5620 = vmatpush1.msra.mxu0 0.0
        %5621 = vmatprep.subr.mxu0 0.0
        %5622 = vmatpush1.msra.mxu0 0.0
        %5623 = vmatprep.subr.mxu0 0.0
        %5624 = vmatpush1.msra.mxu0 0.0
        %5625 = vmatprep.subr.mxu0 0.0
        %5626 = vmatpush1.msra.mxu0 %v5442
        %5627 = vmatprep.subr.mxu0 0.0
        %5628 = vmatpush1.msra.mxu0 %v5440
        %5629 = vmatprep.subr.mxu0 0.0
        %5630 = vmatpush1.msra.mxu0 %v5436
        %5631 = vmatprep.subr.mxu0 0.0
        %5632 = vmatpush1.msra.mxu0 %v5434
        %5633 = vmatprep.subr.mxu0 0.0
        %5634 = vmatpush1.msra.mxu0 %v5430
        %5635 = vmatprep.subr.mxu0 0.0
        %5636 = vmatpush1.msra.mxu0 %v5428
        %5637 = vmatprep.subr.mxu0 0.0
        %5638 = vmatpush1.msra.mxu0 %v5424
        %5639 = vmatprep.subr.mxu0 0.0
        %5640 = vmatpush1.msra.mxu0 %v5422
        %5641 = vmatprep.subr.mxu0 0.0
        %5642 = vmatpush1.msra.mxu0 %v5418
        %5643 = vmatprep.subr.mxu0 0.0
        %5644 = vmatpush1.msra.mxu0 %v5417
        %5645 = vmatprep.subr.mxu0 0.0
        %5646 = vmatpush2.msra.mxu0 0.0
        %5647 = vmatprep.subr.mxu0 0.0
        %5648 = vmatpush2.msra.mxu0 0.0
        %5649 = vmatprep.subr.mxu0 0.0
        %5650 = vmatpush2.msra.mxu0 0.0
        %5651 = vmatprep.subr.mxu0 0.0
        %5652 = vmatpush2.msra.mxu0 0.0
        %5653 = vmatprep.subr.mxu0 0.0
        %5654 = vmatpush2.msra.mxu0 0.0
        %5655 = vmatprep.subr.mxu0 0.0
        %5656 = vmatpush2.msra.mxu0 0.0
        %5657 = vmatprep.subr.mxu0 0.0
        %5658 = vmatpush2.msra.mxu0 0.0
        %5659 = vmatprep.subr.mxu0 0.0
        %5660 = vmatpush2.msra.mxu0 0.0
        %5661 = vmatprep.subr.mxu0 0.0
        %5662 = vmatpush2.msra.mxu0 0.0
        %5663 = vmatprep.subr.mxu0 0.0
        %5664 = vmatpush2.msra.mxu0 0.0
        %5665 = vmatprep.subr.mxu0 0.0
        %5666 = vmatpush2.msra.mxu0 0.0
        %5667 = vmatprep.subr.mxu0 0.0
        %5668 = vmatpush2.msra.mxu0 0.0
        %5669 = vmatprep.subr.mxu0 0.0
        %5670 = vmatpush2.msra.mxu0 0.0
        %5671 = vmatprep.subr.mxu0 0.0
        %5672 = vmatpush2.msra.mxu0 0.0
        %5673 = vmatprep.subr.mxu0 0.0
        %5674 = vmatpush2.msra.mxu0 0.0
        %5675 = vmatprep.subr.mxu0 0.0
        %5676 = vmatpush2.msra.mxu0 0.0
        %5677 = vmatprep.mubr.f32.mxu0 0.0
        %5678 = vmatmul.mubr.f32.gmra.mxu0 %v5605
        %v5679 = vpop.f32.mrf.mxu0
        %v5680 = vadd.f32 %v5587, %v5679
        %v5681 = vpop.f32.mrf.mxu0
        %5682 = vmatprep.mubr.f32.mxu0 0.0
        %5683 = vmatmul.mubr.f32.gmra.mxu0 %v5607
        %v5684 = vpop.f32.mrf.mxu0
        %v5685 = vadd.f32 %v5592, %v5684
        %v5686 = vpop.f32.mrf.mxu0
        %5687 = vmatprep.mubr.f32.mxu0 0.0
        %5688 = vmatmul.mubr.f32.gmra.mxu0 %v5609
        %v5689 = vpop.f32.mrf.mxu0
        %v5690 = vadd.f32 %v5597, %v5689
        %v5691 = vpop.f32.mrf.mxu0
        %5692 = vmatprep.mubr.f32.mxu0 0.0
        %5693 = vmatmul.mubr.f32.gmra.mxu0 %v5611
        %v5694 = vpop.f32.mrf.mxu0
        %v5695 = vadd.f32 %v5602, %v5694
        %v5696 = vpop.f32.mrf.mxu0
        %5697 = vdwg.mxu0
        %5698 = vrot.lane.b32.xlu0 %v5449, 96
        %v5699 = vpop.permute.xlu0 %5698
        %5700 = vrot.lane.b32.xlu0 %v5450, 96
        %v5701 = vpop.permute.xlu0 %5700
        %5702 = vrot.lane.b32.xlu0 %v5451, 96
        %v5703 = vpop.permute.xlu0 %5702
        %5704 = vrot.lane.b32.xlu0 %v5452, 96
        %v5705 = vpop.permute.xlu0 %5704
        %5706 = vrot.lane.b32.xlu0 %v5417, 104
        %v5707 = vpop.permute.xlu0 %5706
        %5708 = vrot.lane.b32.xlu0 %v5418, 104
        %v5709 = vpop.permute.xlu0 %5708
        %5710 = vrot.lane.b32.xlu0 %v5422, 104
        %v5711 = vpop.permute.xlu0 %5710
        %5712 = vrot.lane.b32.xlu0 %v5424, 104
        %v5713 = vpop.permute.xlu0 %5712
        %5714 = vrot.lane.b32.xlu0 %v5428, 104
        %v5715 = vpop.permute.xlu0 %5714
        %5716 = vrot.lane.b32.xlu0 %v5430, 104
        %v5717 = vpop.permute.xlu0 %5716
        %5718 = vrot.lane.b32.xlu0 %v5434, 104
        %v5719 = vpop.permute.xlu0 %5718
        %5720 = vrot.lane.b32.xlu0 %v5436, 104
        %v5721 = vpop.permute.xlu0 %5720
        %5722 = vrot.lane.b32.xlu0 %v5440, 104
        %v5723 = vpop.permute.xlu0 %5722
        %5724 = vrot.lane.b32.xlu0 %v5442, 104
        %v5725 = vpop.permute.xlu0 %5724
        %v5736 = vsel %vm5511, %v5699, 0
        %v5738 = vsel %vm5511, %v5701, 0
        %v5740 = vsel %vm5511, %v5703, 0
        %v5742 = vsel %vm5511, %v5705, 0
        %5744 = vmatprep.subr.mxu0 0.0
        %5745 = vmatpush1.msra.mxu0 0.0
        %5746 = vmatprep.subr.mxu0 0.0
        %5747 = vmatpush1.msra.mxu0 0.0
        %5748 = vmatprep.subr.mxu0 0.0
        %5749 = vmatpush1.msra.mxu0 0.0
        %5750 = vmatprep.subr.mxu0 0.0
        %5751 = vmatpush1.msra.mxu0 0.0
        %5752 = vmatprep.subr.mxu0 0.0
        %5753 = vmatpush1.msra.mxu0 0.0
        %5754 = vmatprep.subr.mxu0 0.0
        %5755 = vmatpush1.msra.mxu0 0.0
        %5756 = vmatprep.subr.mxu0 0.0
        %5757 = vmatpush1.msra.mxu0 %v5725
        %5758 = vmatprep.subr.mxu0 0.0
        %5759 = vmatpush1.msra.mxu0 %v5723
        %5760 = vmatprep.subr.mxu0 0.0
        %5761 = vmatpush1.msra.mxu0 %v5721
        %5762 = vmatprep.subr.mxu0 0.0
        %5763 = vmatpush1.msra.mxu0 %v5719
        %5764 = vmatprep.subr.mxu0 0.0
        %5765 = vmatpush1.msra.mxu0 %v5717
        %5766 = vmatprep.subr.mxu0 0.0
        %5767 = vmatpush1.msra.mxu0 %v5715
        %5768 = vmatprep.subr.mxu0 0.0
        %5769 = vmatpush1.msra.mxu0 %v5713
        %5770 = vmatprep.subr.mxu0 0.0
        %5771 = vmatpush1.msra.mxu0 %v5711
        %5772 = vmatprep.subr.mxu0 0.0
        %5773 = vmatpush1.msra.mxu0 %v5709
        %5774 = vmatprep.subr.mxu0 0.0
        %5775 = vmatpush1.msra.mxu0 %v5707
        %5776 = vmatprep.subr.mxu0 0.0
        %5777 = vmatpush2.msra.mxu0 0.0
        %5778 = vmatprep.subr.mxu0 0.0
        %5779 = vmatpush2.msra.mxu0 0.0
        %5780 = vmatprep.subr.mxu0 0.0
        %5781 = vmatpush2.msra.mxu0 0.0
        %5782 = vmatprep.subr.mxu0 0.0
        %5783 = vmatpush2.msra.mxu0 0.0
        %5784 = vmatprep.subr.mxu0 0.0
        %5785 = vmatpush2.msra.mxu0 0.0
        %5786 = vmatprep.subr.mxu0 0.0
        %5787 = vmatpush2.msra.mxu0 0.0
        %5788 = vmatprep.subr.mxu0 0.0
        %5789 = vmatpush2.msra.mxu0 0.0
        %5790 = vmatprep.subr.mxu0 0.0
        %5791 = vmatpush2.msra.mxu0 0.0
        %5792 = vmatprep.subr.mxu0 0.0
        %5793 = vmatpush2.msra.mxu0 0.0
        %5794 = vmatprep.subr.mxu0 0.0
        %5795 = vmatpush2.msra.mxu0 0.0
        %5796 = vmatprep.subr.mxu0 0.0
        %5797 = vmatpush2.msra.mxu0 0.0
        %5798 = vmatprep.subr.mxu0 0.0
        %5799 = vmatpush2.msra.mxu0 0.0
        %5800 = vmatprep.subr.mxu0 0.0
        %5801 = vmatpush2.msra.mxu0 0.0
        %5802 = vmatprep.subr.mxu0 0.0
        %5803 = vmatpush2.msra.mxu0 0.0
        %5804 = vmatprep.subr.mxu0 0.0
        %5805 = vmatpush2.msra.mxu0 0.0
        %5806 = vmatprep.subr.mxu0 0.0
        %5807 = vmatpush2.msra.mxu0 0.0
        %5808 = vmatprep.mubr.f32.mxu0 0.0
        %5809 = vmatmul.mubr.f32.gmra.mxu0 %v5736
        %v5810 = vpop.f32.mrf.mxu0
        %v5811 = vadd.f32 0.0, %v5810
        %v5812 = vpop.f32.mrf.mxu0
        %5813 = vmatprep.mubr.f32.mxu0 0.0
        %5814 = vmatmul.mubr.f32.gmra.mxu0 %v5738
        %v5815 = vpop.f32.mrf.mxu0
        %v5816 = vadd.f32 0.0, %v5815
        %v5817 = vpop.f32.mrf.mxu0
        %5818 = vmatprep.mubr.f32.mxu0 0.0
        %5819 = vmatmul.mubr.f32.gmra.mxu0 %v5740
        %v5820 = vpop.f32.mrf.mxu0
        %v5821 = vadd.f32 0.0, %v5820
        %v5822 = vpop.f32.mrf.mxu0
        %5823 = vmatprep.mubr.f32.mxu0 0.0
        %5824 = vmatmul.mubr.f32.gmra.mxu0 %v5742
        %v5825 = vpop.f32.mrf.mxu0
        %v5826 = vadd.f32 0.0, %v5825
        %v5827 = vpop.f32.mrf.mxu0
        %5828 = vdwg.mxu0
        %v5829 = vadd.f32 %v5680, %v5811
        %v5830 = vadd.f32 %v5685, %v5816
        %v5831 = vadd.f32 %v5690, %v5821
        %v5832 = vadd.f32 %v5695, %v5826
        %v5833 = vld [vmem:[#allocation3] sm:$0xff]
        %v5834 = vld [vmem:[#allocation3 + $0x8] sm:$0xff]
        %v5835 = vld [vmem:[#allocation3 + $0x10] sm:$0xff]
        %v5836 = vld [vmem:[#allocation3 + $0x18] sm:$0xff]
        %5841 = vrot.lane.b32.xlu0 %v5833, 127
        %v5842 = vpop.permute.xlu0 %5841
        %5843 = vrot.lane.b32.xlu0 %v5834, 127
        %v5844 = vpop.permute.xlu0 %5843
        %5845 = vrot.lane.b32.xlu0 %v5835, 127
        %v5846 = vpop.permute.xlu0 %5845
        %5847 = vrot.lane.b32.xlu0 %v5836, 127
        %v5848 = vpop.permute.xlu0 %5847
        %v5849 = vsel %vm505, %v5842, %v5844
        %v5850 = vsel %vm505, %v5846, %v5848
        %5851 = vrot.lane.b32.xlu0 %v5833, 126
        %v5852 = vpop.permute.xlu0 %5851
        %5853 = vrot.lane.b32.xlu0 %v5834, 126
        %v5854 = vpop.permute.xlu0 %5853
        %5855 = vrot.lane.b32.xlu0 %v5835, 126
        %v5856 = vpop.permute.xlu0 %5855
        %5857 = vrot.lane.b32.xlu0 %v5836, 126
        %v5858 = vpop.permute.xlu0 %5857
        %v5859 = vsel %vm544, %v5852, %v5854
        %v5860 = vsel %vm544, %v5856, %v5858
        %5861 = vrot.lane.b32.xlu0 %v5833, 125
        %v5862 = vpop.permute.xlu0 %5861
        %5863 = vrot.lane.b32.xlu0 %v5834, 125
        %v5864 = vpop.permute.xlu0 %5863
        %5865 = vrot.lane.b32.xlu0 %v5835, 125
        %v5866 = vpop.permute.xlu0 %5865
        %5867 = vrot.lane.b32.xlu0 %v5836, 125
        %v5868 = vpop.permute.xlu0 %5867
        %v5869 = vsel %vm583, %v5862, %v5864
        %v5870 = vsel %vm583, %v5866, %v5868
        %5871 = vrot.lane.b32.xlu0 %v5833, 124
        %v5872 = vpop.permute.xlu0 %5871
        %5873 = vrot.lane.b32.xlu0 %v5834, 124
        %v5874 = vpop.permute.xlu0 %5873
        %5875 = vrot.lane.b32.xlu0 %v5835, 124
        %v5876 = vpop.permute.xlu0 %5875
        %5877 = vrot.lane.b32.xlu0 %v5836, 124
        %v5878 = vpop.permute.xlu0 %5877
        %v5879 = vsel %vm622, %v5872, %v5874
        %v5880 = vsel %vm622, %v5876, %v5878
        %v5881 = vld [vmem:[%s5 + $0x8] sm:$0xff]
        %v5882 = vld [vmem:[%s5 + $0x10] sm:$0xff]
        %v5883 = vld [vmem:[%s5 + $0x28] sm:$0xff]
        %v5884 = vld [vmem:[%s5 + $0x30] sm:$0xff]
        %v5885 = vld [vmem:[%s5 + $0x48] sm:$0xff]
        %v5886 = vld [vmem:[%s5 + $0x50] sm:$0xff]
        %v5887 = vld [vmem:[%s5 + $0x68] sm:$0xff]
        %v5888 = vld [vmem:[%s5 + $0x70] sm:$0xff]
        %5897 = vrot.lane.b32.xlu0 %v5881, 16
        %v5898 = vpop.permute.xlu0 %5897
        %5899 = vrot.lane.b32.xlu0 %v5882, 16
        %v5900 = vpop.permute.xlu0 %5899
        %5901 = vrot.lane.b32.xlu0 %v5883, 16
        %v5902 = vpop.permute.xlu0 %5901
        %5903 = vrot.lane.b32.xlu0 %v5884, 16
        %v5904 = vpop.permute.xlu0 %5903
        %5905 = vrot.lane.b32.xlu0 %v5885, 16
        %v5906 = vpop.permute.xlu0 %5905
        %5907 = vrot.lane.b32.xlu0 %v5886, 16
        %v5908 = vpop.permute.xlu0 %5907
        %5909 = vrot.lane.b32.xlu0 %v5887, 16
        %v5910 = vpop.permute.xlu0 %5909
        %5911 = vrot.lane.b32.xlu0 %v5888, 16
        %v5912 = vpop.permute.xlu0 %5911
        %v5913 = vsel %vm3543, %v5898, %v5900
        %v5914 = vsel %vm3543, %v5902, %v5904
        %v5915 = vsel %vm3543, %v5906, %v5908
        %v5916 = vsel %vm3543, %v5910, %v5912
        %5917 = vrot.lane.b32.xlu0 %v5833, 92
        %v5918 = vpop.permute.xlu0 %5917
        %5919 = vrot.lane.b32.xlu0 %v5834, 92
        %v5920 = vpop.permute.xlu0 %5919
        %5921 = vrot.lane.b32.xlu0 %v5835, 92
        %v5922 = vpop.permute.xlu0 %5921
        %5923 = vrot.lane.b32.xlu0 %v5836, 92
        %v5924 = vpop.permute.xlu0 %5923
        %5925 = vrot.lane.b32.xlu0 %v5849, 92
        %v5926 = vpop.permute.xlu0 %5925
        %5927 = vrot.lane.b32.xlu0 %v5844, 92
        %v5928 = vpop.permute.xlu0 %5927
        %5929 = vrot.lane.b32.xlu0 %v5850, 92
        %v5930 = vpop.permute.xlu0 %5929
        %5931 = vrot.lane.b32.xlu0 %v5848, 92
        %v5932 = vpop.permute.xlu0 %5931
        %5933 = vrot.lane.b32.xlu0 %v5859, 92
        %v5934 = vpop.permute.xlu0 %5933
        %5935 = vrot.lane.b32.xlu0 %v5854, 92
        %v5936 = vpop.permute.xlu0 %5935
        %5937 = vrot.lane.b32.xlu0 %v5860, 92
        %v5938 = vpop.permute.xlu0 %5937
        %5939 = vrot.lane.b32.xlu0 %v5858, 92
        %v5940 = vpop.permute.xlu0 %5939
        %5941 = vrot.lane.b32.xlu0 %v5869, 92
        %v5942 = vpop.permute.xlu0 %5941
        %5943 = vrot.lane.b32.xlu0 %v5864, 92
        %v5944 = vpop.permute.xlu0 %5943
        %5945 = vrot.lane.b32.xlu0 %v5870, 92
        %v5946 = vpop.permute.xlu0 %5945
        %5947 = vrot.lane.b32.xlu0 %v5868, 92
        %v5948 = vpop.permute.xlu0 %5947
        %5949 = vrot.lane.b32.xlu0 %v5879, 92
        %v5950 = vpop.permute.xlu0 %5949
        %5951 = vrot.lane.b32.xlu0 %v5874, 92
        %v5952 = vpop.permute.xlu0 %5951
        %5953 = vrot.lane.b32.xlu0 %v5880, 92
        %v5954 = vpop.permute.xlu0 %5953
        %5955 = vrot.lane.b32.xlu0 %v5878, 92
        %v5956 = vpop.permute.xlu0 %5955
        %v5957 = vsel %vm745, %v5918, %v5920
        %v5958 = vsel %vm745, %v5922, %v5924
        %v5959 = vsel %vm745, %v5926, %v5928
        %v5960 = vsel %vm745, %v5930, %v5932
        %v5961 = vsel %vm745, %v5934, %v5936
        %v5962 = vsel %vm745, %v5938, %v5940
        %v5963 = vsel %vm745, %v5942, %v5944
        %v5964 = vsel %vm745, %v5946, %v5948
        %v5965 = vsel %vm745, %v5950, %v5952
        %v5966 = vsel %vm745, %v5954, %v5956
        %v5977 = vsel %vm5511, %v5913, 0
        %v5979 = vsel %vm5511, %v5914, 0
        %v5981 = vsel %vm5511, %v5915, 0
        %v5983 = vsel %vm5511, %v5916, 0
        %5985 = vmatprep.subr.mxu0 0.0
        %5986 = vmatpush1.msra.mxu0 0.0
        %5987 = vmatprep.subr.mxu0 0.0
        %5988 = vmatpush1.msra.mxu0 0.0
        %5989 = vmatprep.subr.mxu0 0.0
        %5990 = vmatpush1.msra.mxu0 0.0
        %5991 = vmatprep.subr.mxu0 0.0
        %5992 = vmatpush1.msra.mxu0 0.0
        %5993 = vmatprep.subr.mxu0 0.0
        %5994 = vmatpush1.msra.mxu0 0.0
        %5995 = vmatprep.subr.mxu0 0.0
        %5996 = vmatpush1.msra.mxu0 0.0
        %5997 = vmatprep.subr.mxu0 0.0
        %5998 = vmatpush1.msra.mxu0 %v5966
        %5999 = vmatprep.subr.mxu0 0.0
        %6000 = vmatpush1.msra.mxu0 %v5965
        %6001 = vmatprep.subr.mxu0 0.0
        %6002 = vmatpush1.msra.mxu0 %v5964
        %6003 = vmatprep.subr.mxu0 0.0
        %6004 = vmatpush1.msra.mxu0 %v5963
        %6005 = vmatprep.subr.mxu0 0.0
        %6006 = vmatpush1.msra.mxu0 %v5962
        %6007 = vmatprep.subr.mxu0 0.0
        %6008 = vmatpush1.msra.mxu0 %v5961
        %6009 = vmatprep.subr.mxu0 0.0
        %6010 = vmatpush1.msra.mxu0 %v5960
        %6011 = vmatprep.subr.mxu0 0.0
        %6012 = vmatpush1.msra.mxu0 %v5959
        %6013 = vmatprep.subr.mxu0 0.0
        %6014 = vmatpush1.msra.mxu0 %v5958
        %6015 = vmatprep.subr.mxu0 0.0
        %6016 = vmatpush1.msra.mxu0 %v5957
        %6017 = vmatprep.subr.mxu0 0.0
        %6018 = vmatpush2.msra.mxu0 0.0
        %6019 = vmatprep.subr.mxu0 0.0
        %6020 = vmatpush2.msra.mxu0 0.0
        %6021 = vmatprep.subr.mxu0 0.0
        %6022 = vmatpush2.msra.mxu0 0.0
        %6023 = vmatprep.subr.mxu0 0.0
        %6024 = vmatpush2.msra.mxu0 0.0
        %6025 = vmatprep.subr.mxu0 0.0
        %6026 = vmatpush2.msra.mxu0 0.0
        %6027 = vmatprep.subr.mxu0 0.0
        %6028 = vmatpush2.msra.mxu0 0.0
        %6029 = vmatprep.subr.mxu0 0.0
        %6030 = vmatpush2.msra.mxu0 0.0
        %6031 = vmatprep.subr.mxu0 0.0
        %6032 = vmatpush2.msra.mxu0 0.0
        %6033 = vmatprep.subr.mxu0 0.0
        %6034 = vmatpush2.msra.mxu0 0.0
        %6035 = vmatprep.subr.mxu0 0.0
        %6036 = vmatpush2.msra.mxu0 0.0
        %6037 = vmatprep.subr.mxu0 0.0
        %6038 = vmatpush2.msra.mxu0 0.0
        %6039 = vmatprep.subr.mxu0 0.0
        %6040 = vmatpush2.msra.mxu0 0.0
        %6041 = vmatprep.subr.mxu0 0.0
        %6042 = vmatpush2.msra.mxu0 0.0
        %6043 = vmatprep.subr.mxu0 0.0
        %6044 = vmatpush2.msra.mxu0 0.0
        %6045 = vmatprep.subr.mxu0 0.0
        %6046 = vmatpush2.msra.mxu0 0.0
        %6047 = vmatprep.subr.mxu0 0.0
        %6048 = vmatpush2.msra.mxu0 0.0
        %6049 = vmatprep.mubr.f32.mxu0 0.0
        %6050 = vmatmul.mubr.f32.gmra.mxu0 %v5977
        %v6051 = vpop.f32.mrf.mxu0
        %v6052 = vadd.f32 0.0, %v6051
        %v6053 = vpop.f32.mrf.mxu0
        %6054 = vmatprep.mubr.f32.mxu0 0.0
        %6055 = vmatmul.mubr.f32.gmra.mxu0 %v5979
        %v6056 = vpop.f32.mrf.mxu0
        %v6057 = vadd.f32 0.0, %v6056
        %v6058 = vpop.f32.mrf.mxu0
        %6059 = vmatprep.mubr.f32.mxu0 0.0
        %6060 = vmatmul.mubr.f32.gmra.mxu0 %v5981
        %v6061 = vpop.f32.mrf.mxu0
        %v6062 = vadd.f32 0.0, %v6061
        %v6063 = vpop.f32.mrf.mxu0
        %6064 = vmatprep.mubr.f32.mxu0 0.0
        %6065 = vmatmul.mubr.f32.gmra.mxu0 %v5983
        %v6066 = vpop.f32.mrf.mxu0
        %v6067 = vadd.f32 0.0, %v6066
        %v6068 = vpop.f32.mrf.mxu0
        %6069 = vdwg.mxu0
        %v6070 = vadd.f32 %v5829, %v6052
        %v6071 = vadd.f32 %v5830, %v6057
        %v6072 = vadd.f32 %v5831, %v6062
        %v6073 = vadd.f32 %v5832, %v6067
        %v6074 = vld [vmem:[%s5 + $0x10] sm:$0xff]
        %v6075 = vld [vmem:[%s5 + $0x18] sm:$0xff]
        %v6076 = vld [vmem:[%s5 + $0x30] sm:$0xff]
        %v6077 = vld [vmem:[%s5 + $0x38] sm:$0xff]
        %v6078 = vld [vmem:[%s5 + $0x50] sm:$0xff]
        %v6079 = vld [vmem:[%s5 + $0x58] sm:$0xff]
        %v6080 = vld [vmem:[%s5 + $0x70] sm:$0xff]
        %v6081 = vld [vmem:[%s5 + $0x78] sm:$0xff]
        %6090 = vrot.lane.b32.xlu0 %v6074, 64
        %v6091 = vpop.permute.xlu0 %6090
        %6092 = vrot.lane.b32.xlu0 %v6075, 64
        %v6093 = vpop.permute.xlu0 %6092
        %6094 = vrot.lane.b32.xlu0 %v6076, 64
        %v6095 = vpop.permute.xlu0 %6094
        %6096 = vrot.lane.b32.xlu0 %v6077, 64
        %v6097 = vpop.permute.xlu0 %6096
        %6098 = vrot.lane.b32.xlu0 %v6078, 64
        %v6099 = vpop.permute.xlu0 %6098
        %6100 = vrot.lane.b32.xlu0 %v6079, 64
        %v6101 = vpop.permute.xlu0 %6100
        %6102 = vrot.lane.b32.xlu0 %v6080, 64
        %v6103 = vpop.permute.xlu0 %6102
        %6104 = vrot.lane.b32.xlu0 %v6081, 64
        %v6105 = vpop.permute.xlu0 %6104
        %vm6106 = vcmask 523264
        %v6107 = vsel %vm6106, %v6091, %v6093
        %v6108 = vsel %vm6106, %v6095, %v6097
        %v6109 = vsel %vm6106, %v6099, %v6101
        %v6110 = vsel %vm6106, %v6103, %v6105
        %6111 = vrot.lane.b32.xlu0 %v5833, 80
        %v6112 = vpop.permute.xlu0 %6111
        %6113 = vrot.lane.b32.xlu0 %v5834, 80
        %v6114 = vpop.permute.xlu0 %6113
        %6115 = vrot.lane.b32.xlu0 %v5835, 80
        %v6116 = vpop.permute.xlu0 %6115
        %6117 = vrot.lane.b32.xlu0 %v5836, 80
        %v6118 = vpop.permute.xlu0 %6117
        %6119 = vrot.lane.b32.xlu0 %v5849, 80
        %v6120 = vpop.permute.xlu0 %6119
        %6121 = vrot.lane.b32.xlu0 %v5844, 80
        %v6122 = vpop.permute.xlu0 %6121
        %6123 = vrot.lane.b32.xlu0 %v5850, 80
        %v6124 = vpop.permute.xlu0 %6123
        %6125 = vrot.lane.b32.xlu0 %v5848, 80
        %v6126 = vpop.permute.xlu0 %6125
        %6127 = vrot.lane.b32.xlu0 %v5859, 80
        %v6128 = vpop.permute.xlu0 %6127
        %6129 = vrot.lane.b32.xlu0 %v5854, 80
        %v6130 = vpop.permute.xlu0 %6129
        %6131 = vrot.lane.b32.xlu0 %v5860, 80
        %v6132 = vpop.permute.xlu0 %6131
        %6133 = vrot.lane.b32.xlu0 %v5858, 80
        %v6134 = vpop.permute.xlu0 %6133
        %6135 = vrot.lane.b32.xlu0 %v5869, 80
        %v6136 = vpop.permute.xlu0 %6135
        %6137 = vrot.lane.b32.xlu0 %v5864, 80
        %v6138 = vpop.permute.xlu0 %6137
        %6139 = vrot.lane.b32.xlu0 %v5870, 80
        %v6140 = vpop.permute.xlu0 %6139
        %6141 = vrot.lane.b32.xlu0 %v5868, 80
        %v6142 = vpop.permute.xlu0 %6141
        %6143 = vrot.lane.b32.xlu0 %v5879, 80
        %v6144 = vpop.permute.xlu0 %6143
        %6145 = vrot.lane.b32.xlu0 %v5874, 80
        %v6146 = vpop.permute.xlu0 %6145
        %6147 = vrot.lane.b32.xlu0 %v5880, 80
        %v6148 = vpop.permute.xlu0 %6147
        %6149 = vrot.lane.b32.xlu0 %v5878, 80
        %v6150 = vpop.permute.xlu0 %6149
        %v6151 = vsel %vm5511, %v6112, %v6114
        %v6152 = vsel %vm5511, %v6116, %v6118
        %v6153 = vsel %vm5511, %v6120, %v6122
        %v6154 = vsel %vm5511, %v6124, %v6126
        %v6155 = vsel %vm5511, %v6128, %v6130
        %v6156 = vsel %vm5511, %v6132, %v6134
        %v6157 = vsel %vm5511, %v6136, %v6138
        %v6158 = vsel %vm5511, %v6140, %v6142
        %v6159 = vsel %vm5511, %v6144, %v6146
        %v6160 = vsel %vm5511, %v6148, %v6150
        %v6171 = vsel %vm5511, %v6107, 0
        %v6173 = vsel %vm5511, %v6108, 0
        %v6175 = vsel %vm5511, %v6109, 0
        %v6177 = vsel %vm5511, %v6110, 0
        %6179 = vmatprep.subr.mxu0 0.0
        %6180 = vmatpush1.msra.mxu0 0.0
        %6181 = vmatprep.subr.mxu0 0.0
        %6182 = vmatpush1.msra.mxu0 0.0
        %6183 = vmatprep.subr.mxu0 0.0
        %6184 = vmatpush1.msra.mxu0 0.0
        %6185 = vmatprep.subr.mxu0 0.0
        %6186 = vmatpush1.msra.mxu0 0.0
        %6187 = vmatprep.subr.mxu0 0.0
        %6188 = vmatpush1.msra.mxu0 0.0
        %6189 = vmatprep.subr.mxu0 0.0
        %6190 = vmatpush1.msra.mxu0 0.0
        %6191 = vmatprep.subr.mxu0 0.0
        %6192 = vmatpush1.msra.mxu0 %v6160
        %6193 = vmatprep.subr.mxu0 0.0
        %6194 = vmatpush1.msra.mxu0 %v6159
        %6195 = vmatprep.subr.mxu0 0.0
        %6196 = vmatpush1.msra.mxu0 %v6158
        %6197 = vmatprep.subr.mxu0 0.0
        %6198 = vmatpush1.msra.mxu0 %v6157
        %6199 = vmatprep.subr.mxu0 0.0
        %6200 = vmatpush1.msra.mxu0 %v6156
        %6201 = vmatprep.subr.mxu0 0.0
        %6202 = vmatpush1.msra.mxu0 %v6155
        %6203 = vmatprep.subr.mxu0 0.0
        %6204 = vmatpush1.msra.mxu0 %v6154
        %6205 = vmatprep.subr.mxu0 0.0
        %6206 = vmatpush1.msra.mxu0 %v6153
        %6207 = vmatprep.subr.mxu0 0.0
        %6208 = vmatpush1.msra.mxu0 %v6152
        %6209 = vmatprep.subr.mxu0 0.0
        %6210 = vmatpush1.msra.mxu0 %v6151
        %6211 = vmatprep.subr.mxu0 0.0
        %6212 = vmatpush2.msra.mxu0 0.0
        %6213 = vmatprep.subr.mxu0 0.0
        %6214 = vmatpush2.msra.mxu0 0.0
        %6215 = vmatprep.subr.mxu0 0.0
        %6216 = vmatpush2.msra.mxu0 0.0
        %6217 = vmatprep.subr.mxu0 0.0
        %6218 = vmatpush2.msra.mxu0 0.0
        %6219 = vmatprep.subr.mxu0 0.0
        %6220 = vmatpush2.msra.mxu0 0.0
        %6221 = vmatprep.subr.mxu0 0.0
        %6222 = vmatpush2.msra.mxu0 0.0
        %6223 = vmatprep.subr.mxu0 0.0
        %6224 = vmatpush2.msra.mxu0 0.0
        %6225 = vmatprep.subr.mxu0 0.0
        %6226 = vmatpush2.msra.mxu0 0.0
        %6227 = vmatprep.subr.mxu0 0.0
        %6228 = vmatpush2.msra.mxu0 0.0
        %6229 = vmatprep.subr.mxu0 0.0
        %6230 = vmatpush2.msra.mxu0 0.0
        %6231 = vmatprep.subr.mxu0 0.0
        %6232 = vmatpush2.msra.mxu0 0.0
        %6233 = vmatprep.subr.mxu0 0.0
        %6234 = vmatpush2.msra.mxu0 0.0
        %6235 = vmatprep.subr.mxu0 0.0
        %6236 = vmatpush2.msra.mxu0 0.0
        %6237 = vmatprep.subr.mxu0 0.0
        %6238 = vmatpush2.msra.mxu0 0.0
        %6239 = vmatprep.subr.mxu0 0.0
        %6240 = vmatpush2.msra.mxu0 0.0
        %6241 = vmatprep.subr.mxu0 0.0
        %6242 = vmatpush2.msra.mxu0 0.0
        %6243 = vmatprep.mubr.f32.mxu0 0.0
        %6244 = vmatmul.mubr.f32.gmra.mxu0 %v6171
        %v6245 = vpop.f32.mrf.mxu0
        %v6246 = vadd.f32 0.0, %v6245
        %v6247 = vpop.f32.mrf.mxu0
        %6248 = vmatprep.mubr.f32.mxu0 0.0
        %6249 = vmatmul.mubr.f32.gmra.mxu0 %v6173
        %v6250 = vpop.f32.mrf.mxu0
        %v6251 = vadd.f32 0.0, %v6250
        %v6252 = vpop.f32.mrf.mxu0
        %6253 = vmatprep.mubr.f32.mxu0 0.0
        %6254 = vmatmul.mubr.f32.gmra.mxu0 %v6175
        %v6255 = vpop.f32.mrf.mxu0
        %v6256 = vadd.f32 0.0, %v6255
        %v6257 = vpop.f32.mrf.mxu0
        %6258 = vmatprep.mubr.f32.mxu0 0.0
        %6259 = vmatmul.mubr.f32.gmra.mxu0 %v6177
        %v6260 = vpop.f32.mrf.mxu0
        %v6261 = vadd.f32 0.0, %v6260
        %v6262 = vpop.f32.mrf.mxu0
        %6263 = vdwg.mxu0
        %v6264 = vadd.f32 %v6070, %v6246
        %v6265 = vadd.f32 %v6071, %v6251
        %v6266 = vadd.f32 %v6072, %v6256
        %v6267 = vadd.f32 %v6073, %v6261
        %v6268 = vld [vmem:[%s6] sm:$0xff]
        %v6269 = vld [vmem:[%s6 + $0x8] sm:$0xff]
        %v6270 = vld [vmem:[%s6 + $0x10] sm:$0xff]
        %v6271 = vld [vmem:[%s6 + $0x18] sm:$0xff]
        %6273 = vset.pattern.permute.xlu0 0
        %6274 = vperm.xlu0 %6273, %v6268
        %v6275 = vpop.permute.xlu0 %6274
        %6278 = vset.pattern.permute.xlu0 0
        %6279 = vperm.xlu0 %6278, %v6269
        %v6280 = vpop.permute.xlu0 %6279
        %6283 = vset.pattern.permute.xlu0 0
        %6284 = vperm.xlu0 %6283, %v6270
        %v6285 = vpop.permute.xlu0 %6284
        %6288 = vset.pattern.permute.xlu0 0
        %6289 = vperm.xlu0 %6288, %v6271
        %v6290 = vpop.permute.xlu0 %6289
        %v6292 = vadd.f32 %v6264, %v6275
        %v6293 = vadd.f32 %v6265, %v6280
        %v6294 = vadd.f32 %v6266, %v6285
        %v6295 = vadd.f32 %v6267, %v6290
        %v6296 = vmax.f32 %v6292, 0.0
        %v6297 = vmax.f32 %v6293, 0.0
        %v6298 = vmax.f32 %v6294, 0.0
        %v6299 = vmax.f32 %v6295, 0.0
        %6304 = vrot.lane.b32.xlu0 %v6296, 127
        %v6305 = vpop.permute.xlu0 %6304
        %6306 = vrot.lane.b32.xlu0 %v6297, 127
        %v6307 = vpop.permute.xlu0 %6306
        %6308 = vrot.lane.b32.xlu0 %v6298, 127
        %v6309 = vpop.permute.xlu0 %6308
        %6310 = vrot.lane.b32.xlu0 %v6299, 127
        %v6311 = vpop.permute.xlu0 %6310
        %v6316 = vmax.f32 %v6296, %v6305
        %v6317 = vmax.f32 %v6297, %v6307
        %v6318 = vmax.f32 %v6298, %v6309
        %v6319 = vmax.f32 %v6299, %v6311
        %6324 = vrot.lane.b32.xlu0 %v6316, 116
        %v6325 = vpop.permute.xlu0 %6324
        %6326 = vrot.lane.b32.xlu0 %v6317, 116
        %v6327 = vpop.permute.xlu0 %6326
        %6328 = vrot.lane.b32.xlu0 %v6318, 116
        %v6329 = vpop.permute.xlu0 %6328
        %6330 = vrot.lane.b32.xlu0 %v6319, 116
        %v6331 = vpop.permute.xlu0 %6330
        %v6336 = vmax.f32 %v6316, %v6325
        %v6337 = vmax.f32 %v6317, %v6327
        %v6338 = vmax.f32 %v6318, %v6329
        %v6339 = vmax.f32 %v6319, %v6331
        %6344 = vrot.lane.b32.xlu0 %v6336, 104
        %v6345 = vpop.permute.xlu0 %6344
        %6346 = vrot.lane.b32.xlu0 %v6337, 104
        %v6347 = vpop.permute.xlu0 %6346
        %6348 = vrot.lane.b32.xlu0 %v6338, 104
        %v6349 = vpop.permute.xlu0 %6348
        %6350 = vrot.lane.b32.xlu0 %v6339, 104
        %v6351 = vpop.permute.xlu0 %6350
        %6352 = vrot.lane.b32.xlu0 %v6336, 80
        %v6353 = vpop.permute.xlu0 %6352
        %6354 = vrot.lane.b32.xlu0 %v6337, 80
        %v6355 = vpop.permute.xlu0 %6354
        %6356 = vrot.lane.b32.xlu0 %v6338, 80
        %v6357 = vpop.permute.xlu0 %6356
        %6358 = vrot.lane.b32.xlu0 %v6339, 80
        %v6359 = vpop.permute.xlu0 %6358
        %6360 = vrot.lane.b32.xlu0 %v6336, 56
        %v6361 = vpop.permute.xlu0 %6360
        %6362 = vrot.lane.b32.xlu0 %v6337, 56
        %v6363 = vpop.permute.xlu0 %6362
        %6364 = vrot.lane.b32.xlu0 %v6338, 56
        %v6365 = vpop.permute.xlu0 %6364
        %6366 = vrot.lane.b32.xlu0 %v6339, 56
        %v6367 = vpop.permute.xlu0 %6366
        %v6368 = vld [vmem:[%s11] sm:$0x7f]
        %vm6369 = vcmask 56320
        %v6370 = vsel %vm6369, %v6336, 0
        %v6372 = vsel %vm6369, %v6337, 0
        %v6374 = vsel %vm6369, %v6338, 0
        %v6376 = vsel %vm6369, %v6339, 0
        %v6378 = vsel %vm6369, %v6345, 0
        %v6380 = vsel %vm6369, %v6347, 0
        %v6382 = vsel %vm6369, %v6349, 0
        %v6384 = vsel %vm6369, %v6351, 0
        %v6386 = vsel %vm6369, %v6353, 0
        %v6388 = vsel %vm6369, %v6355, 0
        %v6390 = vsel %vm6369, %v6357, 0
        %v6392 = vsel %vm6369, %v6359, 0
        %v6394 = vsel %vm6369, %v6361, 0
        %v6396 = vsel %vm6369, %v6363, 0
        %v6398 = vsel %vm6369, %v6365, 0
        %v6400 = vsel %vm6369, %v6367, 0
        %v6403 = vsel %vm3584, %v6368, 0
        %6405 = vmatprep.subr.mxu0 0.0
        %6406 = vmatpush1.msra.mxu0 0.0
        %6407 = vmatprep.subr.mxu0 0.0
        %6408 = vmatpush1.msra.mxu0 0.0
        %6409 = vmatprep.subr.mxu0 0.0
        %6410 = vmatpush1.msra.mxu0 0.0
        %6411 = vmatprep.subr.mxu0 0.0
        %6412 = vmatpush1.msra.mxu0 0.0
        %6413 = vmatprep.subr.mxu0 0.0
        %6414 = vmatpush1.msra.mxu0 0.0
        %6415 = vmatprep.subr.mxu0 0.0
        %6416 = vmatpush1.msra.mxu0 0.0
        %6417 = vmatprep.subr.mxu0 0.0
        %6418 = vmatpush1.msra.mxu0 0.0
        %6419 = vmatprep.subr.mxu0 0.0
        %6420 = vmatpush1.msra.mxu0 0.0
        %6421 = vmatprep.subr.mxu0 0.0
        %6422 = vmatpush1.msra.mxu0 0.0
        %6423 = vmatprep.subr.mxu0 0.0
        %6424 = vmatpush1.msra.mxu0 0.0
        %6425 = vmatprep.subr.mxu0 0.0
        %6426 = vmatpush1.msra.mxu0 0.0
        %6427 = vmatprep.subr.mxu0 0.0
        %6428 = vmatpush1.msra.mxu0 0.0
        %6429 = vmatprep.subr.mxu0 0.0
        %6430 = vmatpush1.msra.mxu0 0.0
        %6431 = vmatprep.subr.mxu0 0.0
        %6432 = vmatpush1.msra.mxu0 0.0
        %6433 = vmatprep.subr.mxu0 0.0
        %6434 = vmatpush1.msra.mxu0 0.0
        %6435 = vmatprep.subr.mxu0 0.0
        %6436 = vmatpush1.msra.mxu0 %v6403
        %6437 = vmatprep.subr.mxu0 0.0
        %6438 = vmatpush2.msra.mxu0 0.0
        %6439 = vmatprep.subr.mxu0 0.0
        %6440 = vmatpush2.msra.mxu0 0.0
        %6441 = vmatprep.subr.mxu0 0.0
        %6442 = vmatpush2.msra.mxu0 0.0
        %6443 = vmatprep.subr.mxu0 0.0
        %6444 = vmatpush2.msra.mxu0 0.0
        %6445 = vmatprep.subr.mxu0 0.0
        %6446 = vmatpush2.msra.mxu0 0.0
        %6447 = vmatprep.subr.mxu0 0.0
        %6448 = vmatpush2.msra.mxu0 0.0
        %6449 = vmatprep.subr.mxu0 0.0
        %6450 = vmatpush2.msra.mxu0 0.0
        %6451 = vmatprep.subr.mxu0 0.0
        %6452 = vmatpush2.msra.mxu0 0.0
        %6453 = vmatprep.subr.mxu0 0.0
        %6454 = vmatpush2.msra.mxu0 0.0
        %6455 = vmatprep.subr.mxu0 0.0
        %6456 = vmatpush2.msra.mxu0 0.0
        %6457 = vmatprep.subr.mxu0 0.0
        %6458 = vmatpush2.msra.mxu0 0.0
        %6459 = vmatprep.subr.mxu0 0.0
        %6460 = vmatpush2.msra.mxu0 0.0
        %6461 = vmatprep.subr.mxu0 0.0
        %6462 = vmatpush2.msra.mxu0 0.0
        %6463 = vmatprep.subr.mxu0 0.0
        %6464 = vmatpush2.msra.mxu0 0.0
        %6465 = vmatprep.subr.mxu0 0.0
        %6466 = vmatpush2.msra.mxu0 0.0
        %6467 = vmatprep.subr.mxu0 0.0
        %6468 = vmatpush2.msra.mxu0 0.0
        %6469 = vmatprep.mubr.f32.mxu0 0.0
        %6470 = vmatmul.mubr.f32.gmra.mxu0 %v6370
        %v6471 = vpop.f32.mrf.mxu0
        %v6472 = vadd.f32 0.0, %v6471
        %v6473 = vpop.f32.mrf.mxu0
        %6474 = vmatprep.mubr.f32.mxu0 0.0
        %6475 = vmatmul.mubr.f32.gmra.mxu0 %v6372
        %v6476 = vpop.f32.mrf.mxu0
        %v6477 = vadd.f32 0.0, %v6476
        %v6478 = vpop.f32.mrf.mxu0
        %6479 = vmatprep.mubr.f32.mxu0 0.0
        %6480 = vmatmul.mubr.f32.gmra.mxu0 %v6374
        %v6481 = vpop.f32.mrf.mxu0
        %v6482 = vadd.f32 0.0, %v6481
        %v6483 = vpop.f32.mrf.mxu0
        %6484 = vmatprep.mubr.f32.mxu0 0.0
        %6485 = vmatmul.mubr.f32.gmra.mxu0 %v6376
        %v6486 = vpop.f32.mrf.mxu0
        %v6487 = vadd.f32 0.0, %v6486
        %v6488 = vpop.f32.mrf.mxu0
        %6489 = vmatprep.mubr.f32.mxu0 0.0
        %6490 = vmatmul.mubr.f32.gmra.mxu0 %v6378
        %v6491 = vpop.f32.mrf.mxu0
        %v6492 = vadd.f32 0.0, %v6491
        %v6493 = vpop.f32.mrf.mxu0
        %6494 = vmatprep.mubr.f32.mxu0 0.0
        %6495 = vmatmul.mubr.f32.gmra.mxu0 %v6380
        %v6496 = vpop.f32.mrf.mxu0
        %v6497 = vadd.f32 0.0, %v6496
        %v6498 = vpop.f32.mrf.mxu0
        %6499 = vmatprep.mubr.f32.mxu0 0.0
        %6500 = vmatmul.mubr.f32.gmra.mxu0 %v6382
        %v6501 = vpop.f32.mrf.mxu0
        %v6502 = vadd.f32 0.0, %v6501
        %v6503 = vpop.f32.mrf.mxu0
        %6504 = vmatprep.mubr.f32.mxu0 0.0
        %6505 = vmatmul.mubr.f32.gmra.mxu0 %v6384
        %v6506 = vpop.f32.mrf.mxu0
        %v6507 = vadd.f32 0.0, %v6506
        %v6508 = vpop.f32.mrf.mxu0
        %6509 = vmatprep.mubr.f32.mxu0 0.0
        %6510 = vmatmul.mubr.f32.gmra.mxu0 %v6386
        %v6511 = vpop.f32.mrf.mxu0
        %v6512 = vadd.f32 0.0, %v6511
        %v6513 = vpop.f32.mrf.mxu0
        %6514 = vmatprep.mubr.f32.mxu0 0.0
        %6515 = vmatmul.mubr.f32.gmra.mxu0 %v6388
        %v6516 = vpop.f32.mrf.mxu0
        %v6517 = vadd.f32 0.0, %v6516
        %v6518 = vpop.f32.mrf.mxu0
        %6519 = vmatprep.mubr.f32.mxu0 0.0
        %6520 = vmatmul.mubr.f32.gmra.mxu0 %v6390
        %v6521 = vpop.f32.mrf.mxu0
        %v6522 = vadd.f32 0.0, %v6521
        %v6523 = vpop.f32.mrf.mxu0
        %6524 = vmatprep.mubr.f32.mxu0 0.0
        %6525 = vmatmul.mubr.f32.gmra.mxu0 %v6392
        %v6526 = vpop.f32.mrf.mxu0
        %v6527 = vadd.f32 0.0, %v6526
        %v6528 = vpop.f32.mrf.mxu0
        %6529 = vmatprep.mubr.f32.mxu0 0.0
        %6530 = vmatmul.mubr.f32.gmra.mxu0 %v6394
        %v6531 = vpop.f32.mrf.mxu0
        %v6532 = vadd.f32 0.0, %v6531
        %v6533 = vpop.f32.mrf.mxu0
        %6534 = vmatprep.mubr.f32.mxu0 0.0
        %6535 = vmatmul.mubr.f32.gmra.mxu0 %v6396
        %v6536 = vpop.f32.mrf.mxu0
        %v6537 = vadd.f32 0.0, %v6536
        %v6538 = vpop.f32.mrf.mxu0
        %6539 = vmatprep.mubr.f32.mxu0 0.0
        %6540 = vmatmul.mubr.f32.gmra.mxu0 %v6398
        %v6541 = vpop.f32.mrf.mxu0
        %v6542 = vadd.f32 0.0, %v6541
        %v6543 = vpop.f32.mrf.mxu0
        %6544 = vmatprep.mubr.f32.mxu0 0.0
        %6545 = vmatmul.mubr.f32.gmra.mxu0 %v6400
        %v6546 = vpop.f32.mrf.mxu0
        %v6547 = vadd.f32 0.0, %v6546
        %v6548 = vpop.f32.mrf.mxu0
        %6549 = vdwg.mxu0
        %6550 = vst.msk [vmem:[#allocation4] sm:$0xff] %vm4533, 0.0
        %6551 = vst.msk [vmem:[#allocation4 + $0x8] sm:$0xff] %vm4533, 0.0
        %6552 = vst.msk [vmem:[#allocation4 + $0x10] sm:$0xff] %vm4533, 0.0
        %6553 = vst.msk [vmem:[#allocation4 + $0x18] sm:$0xff] %vm4533, 0.0
        %6558 = vrot.lane.b32.xlu0 %v6472, 18
        %v6559 = vpop.permute.xlu0 %6558
        %6560 = vrot.lane.b32.xlu0 %v6477, 18
        %v6561 = vpop.permute.xlu0 %6560
        %6562 = vrot.lane.b32.xlu0 %v6482, 18
        %v6563 = vpop.permute.xlu0 %6562
        %6564 = vrot.lane.b32.xlu0 %v6487, 18
        %v6565 = vpop.permute.xlu0 %6564
        %vm6570 = vcmask 179344
        %6571 = vst.msk [vmem:[#allocation4] sm:$0xff] %vm6570, %v6559
        %6572 = vst.msk [vmem:[#allocation4 + $0x8] sm:$0xff] %vm6570, %v6561
        %6573 = vst.msk [vmem:[#allocation4 + $0x10] sm:$0xff] %vm6570, %v6563
        %6574 = vst.msk [vmem:[#allocation4 + $0x18] sm:$0xff] %vm6570, %v6565
        %6579 = vrot.lane.b32.xlu0 %v6492, 26
        %v6580 = vpop.permute.xlu0 %6579
        %6581 = vrot.lane.b32.xlu0 %v6497, 26
        %v6582 = vpop.permute.xlu0 %6581
        %6583 = vrot.lane.b32.xlu0 %v6502, 26
        %v6584 = vpop.permute.xlu0 %6583
        %6585 = vrot.lane.b32.xlu0 %v6507, 26
        %v6586 = vpop.permute.xlu0 %6585
        %vm6591 = vcmask 244944
        %6592 = vst.msk [vmem:[#allocation4] sm:$0xff] %vm6591, %v6580
        %6593 = vst.msk [vmem:[#allocation4 + $0x8] sm:$0xff] %vm6591, %v6582
        %6594 = vst.msk [vmem:[#allocation4 + $0x10] sm:$0xff] %vm6591, %v6584
        %6595 = vst.msk [vmem:[#allocation4 + $0x18] sm:$0xff] %vm6591, %v6586
        %6600 = vrot.lane.b32.xlu0 %v6512, 34
        %v6601 = vpop.permute.xlu0 %6600
        %6602 = vrot.lane.b32.xlu0 %v6517, 34
        %v6603 = vpop.permute.xlu0 %6602
        %6604 = vrot.lane.b32.xlu0 %v6522, 34
        %v6605 = vpop.permute.xlu0 %6604
        %6606 = vrot.lane.b32.xlu0 %v6527, 34
        %v6607 = vpop.permute.xlu0 %6606
        %vm6612 = vcmask 310544
        %6613 = vst.msk [vmem:[#allocation4] sm:$0xff] %vm6612, %v6601
        %6614 = vst.msk [vmem:[#allocation4 + $0x8] sm:$0xff] %vm6612, %v6603
        %6615 = vst.msk [vmem:[#allocation4 + $0x10] sm:$0xff] %vm6612, %v6605
        %6616 = vst.msk [vmem:[#allocation4 + $0x18] sm:$0xff] %vm6612, %v6607
        %6621 = vrot.lane.b32.xlu0 %v6532, 42
        %v6622 = vpop.permute.xlu0 %6621
        %6623 = vrot.lane.b32.xlu0 %v6537, 42
        %v6624 = vpop.permute.xlu0 %6623
        %6625 = vrot.lane.b32.xlu0 %v6542, 42
        %v6626 = vpop.permute.xlu0 %6625
        %6627 = vrot.lane.b32.xlu0 %v6547, 42
        %v6628 = vpop.permute.xlu0 %6627
        %vm6633 = vcmask 376144
        %6634 = vst.msk [vmem:[#allocation4] sm:$0xff] %vm6633, %v6622
        %6635 = vst.msk [vmem:[#allocation4 + $0x8] sm:$0xff] %vm6633, %v6624
        %6636 = vst.msk [vmem:[#allocation4 + $0x10] sm:$0xff] %vm6633, %v6626
        %6637 = vst.msk [vmem:[#allocation4 + $0x18] sm:$0xff] %vm6633, %v6628
        %v6638 = vld [vmem:[#allocation4] sm:$0xff]
        %v6639 = vld [vmem:[#allocation4 + $0x8] sm:$0xff]
        %v6640 = vld [vmem:[#allocation4 + $0x10] sm:$0xff]
        %v6641 = vld [vmem:[#allocation4 + $0x18] sm:$0xff]
        %6646 = vrot.lane.b32.xlu0 %v6638, 127
        %v6647 = vpop.permute.xlu0 %6646
        %6648 = vrot.lane.b32.xlu0 %v6639, 127
        %v6649 = vpop.permute.xlu0 %6648
        %6650 = vrot.lane.b32.xlu0 %v6640, 127
        %v6651 = vpop.permute.xlu0 %6650
        %6652 = vrot.lane.b32.xlu0 %v6641, 127
        %v6653 = vpop.permute.xlu0 %6652
        %6658 = vrot.lane.b32.xlu0 %v6638, 126
        %v6659 = vpop.permute.xlu0 %6658
        %6660 = vrot.lane.b32.xlu0 %v6639, 126
        %v6661 = vpop.permute.xlu0 %6660
        %6662 = vrot.lane.b32.xlu0 %v6640, 126
        %v6663 = vpop.permute.xlu0 %6662
        %6664 = vrot.lane.b32.xlu0 %v6641, 126
        %v6665 = vpop.permute.xlu0 %6664
        %6670 = vrot.lane.b32.xlu0 %v6638, 125
        %v6671 = vpop.permute.xlu0 %6670
        %6672 = vrot.lane.b32.xlu0 %v6639, 125
        %v6673 = vpop.permute.xlu0 %6672
        %6674 = vrot.lane.b32.xlu0 %v6640, 125
        %v6675 = vpop.permute.xlu0 %6674
        %6676 = vrot.lane.b32.xlu0 %v6641, 125
        %v6677 = vpop.permute.xlu0 %6676
        %6682 = vrot.lane.b32.xlu0 %v6638, 124
        %v6683 = vpop.permute.xlu0 %6682
        %6684 = vrot.lane.b32.xlu0 %v6639, 124
        %v6685 = vpop.permute.xlu0 %6684
        %6686 = vrot.lane.b32.xlu0 %v6640, 124
        %v6687 = vpop.permute.xlu0 %6686
        %6688 = vrot.lane.b32.xlu0 %v6641, 124
        %v6689 = vpop.permute.xlu0 %6688
        %v6694 = vld [vmem:[%s7] sm:$0xff]
        %v6695 = vld [vmem:[%s7 + $0x8] sm:$0xff]
        %v6696 = vld [vmem:[%s7 + $0x38] sm:$0xff]
        %v6697 = vld [vmem:[%s7 + $0x40] sm:$0xff]
        %v6698 = vld [vmem:[%s7 + $0x70] sm:$0xff]
        %v6699 = vld [vmem:[%s7 + $0x78] sm:$0xff]
        %v6700 = vld [vmem:[%s7 + $0xa8] sm:$0xff]
        %v6701 = vld [vmem:[%s7 + $0xb0] sm:$0xff]
        %v6702 = vld [vmem:[%s7 + $0xe0] sm:$0xff]
        %v6703 = vld [vmem:[%s7 + $0xe8] sm:$0xff]
        %v6704 = vld [vmem:[%s7 + $0x118] sm:$0xff]
        %v6705 = vld [vmem:[%s7 + $0x120] sm:$0xff]
        %v6706 = vld [vmem:[%s7 + $0x150] sm:$0xff]
        %v6707 = vld [vmem:[%s7 + $0x158] sm:$0xff]
        %v6708 = vld [vmem:[%s7 + $0x188] sm:$0xff]
        %v6709 = vld [vmem:[%s7 + $0x190] sm:$0xff]
        %v6710 = vld [vmem:[%s7 + $0x10] sm:$0xff]
        %v6711 = vld [vmem:[%s7 + $0x48] sm:$0xff]
        %v6712 = vld [vmem:[%s7 + $0x80] sm:$0xff]
        %v6713 = vld [vmem:[%s7 + $0xb8] sm:$0xff]
        %v6714 = vld [vmem:[%s7 + $0xf0] sm:$0xff]
        %v6715 = vld [vmem:[%s7 + $0x128] sm:$0xff]
        %v6716 = vld [vmem:[%s7 + $0x160] sm:$0xff]
        %v6717 = vld [vmem:[%s7 + $0x198] sm:$0xff]
        %6734 = vrot.lane.b32.xlu0 %v6695, 96
        %v6735 = vpop.permute.xlu0 %6734
        %6736 = vrot.lane.b32.xlu0 %v6710, 96
        %v6737 = vpop.permute.xlu0 %6736
        %6738 = vrot.lane.b32.xlu0 %v6697, 96
        %v6739 = vpop.permute.xlu0 %6738
        %6740 = vrot.lane.b32.xlu0 %v6711, 96
        %v6741 = vpop.permute.xlu0 %6740
        %6742 = vrot.lane.b32.xlu0 %v6699, 96
        %v6743 = vpop.permute.xlu0 %6742
        %6744 = vrot.lane.b32.xlu0 %v6712, 96
        %v6745 = vpop.permute.xlu0 %6744
        %6746 = vrot.lane.b32.xlu0 %v6701, 96
        %v6747 = vpop.permute.xlu0 %6746
        %6748 = vrot.lane.b32.xlu0 %v6713, 96
        %v6749 = vpop.permute.xlu0 %6748
        %6750 = vrot.lane.b32.xlu0 %v6703, 96
        %v6751 = vpop.permute.xlu0 %6750
        %6752 = vrot.lane.b32.xlu0 %v6714, 96
        %v6753 = vpop.permute.xlu0 %6752
        %6754 = vrot.lane.b32.xlu0 %v6705, 96
        %v6755 = vpop.permute.xlu0 %6754
        %6756 = vrot.lane.b32.xlu0 %v6715, 96
        %v6757 = vpop.permute.xlu0 %6756
        %6758 = vrot.lane.b32.xlu0 %v6707, 96
        %v6759 = vpop.permute.xlu0 %6758
        %6760 = vrot.lane.b32.xlu0 %v6716, 96
        %v6761 = vpop.permute.xlu0 %6760
        %6762 = vrot.lane.b32.xlu0 %v6709, 96
        %v6763 = vpop.permute.xlu0 %6762
        %6764 = vrot.lane.b32.xlu0 %v6717, 96
        %v6765 = vpop.permute.xlu0 %6764
        %vm6766 = vcmask 785408
        %v6767 = vsel %vm6766, %v6735, %v6737
        %v6768 = vsel %vm6766, %v6739, %v6741
        %v6769 = vsel %vm6766, %v6743, %v6745
        %v6770 = vsel %vm6766, %v6747, %v6749
        %v6771 = vsel %vm6766, %v6751, %v6753
        %v6772 = vsel %vm6766, %v6755, %v6757
        %v6773 = vsel %vm6766, %v6759, %v6761
        %v6774 = vsel %vm6766, %v6763, %v6765
        %6783 = vrot.lane.b32.xlu0 %v6638, 120
        %v6784 = vpop.permute.xlu0 %6783
        %6785 = vrot.lane.b32.xlu0 %v6639, 120
        %v6786 = vpop.permute.xlu0 %6785
        %6787 = vrot.lane.b32.xlu0 %v6640, 120
        %v6788 = vpop.permute.xlu0 %6787
        %6789 = vrot.lane.b32.xlu0 %v6641, 120
        %v6790 = vpop.permute.xlu0 %6789
        %6791 = vrot.lane.b32.xlu0 %v6647, 120
        %v6792 = vpop.permute.xlu0 %6791
        %6793 = vrot.lane.b32.xlu0 %v6649, 120
        %v6794 = vpop.permute.xlu0 %6793
        %6795 = vrot.lane.b32.xlu0 %v6651, 120
        %v6796 = vpop.permute.xlu0 %6795
        %6797 = vrot.lane.b32.xlu0 %v6653, 120
        %v6798 = vpop.permute.xlu0 %6797
        %6799 = vrot.lane.b32.xlu0 %v6659, 120
        %v6800 = vpop.permute.xlu0 %6799
        %6801 = vrot.lane.b32.xlu0 %v6661, 120
        %v6802 = vpop.permute.xlu0 %6801
        %6803 = vrot.lane.b32.xlu0 %v6663, 120
        %v6804 = vpop.permute.xlu0 %6803
        %6805 = vrot.lane.b32.xlu0 %v6665, 120
        %v6806 = vpop.permute.xlu0 %6805
        %6807 = vrot.lane.b32.xlu0 %v6671, 120
        %v6808 = vpop.permute.xlu0 %6807
        %6809 = vrot.lane.b32.xlu0 %v6673, 120
        %v6810 = vpop.permute.xlu0 %6809
        %6811 = vrot.lane.b32.xlu0 %v6675, 120
        %v6812 = vpop.permute.xlu0 %6811
        %6813 = vrot.lane.b32.xlu0 %v6677, 120
        %v6814 = vpop.permute.xlu0 %6813
        %6815 = vrot.lane.b32.xlu0 %v6683, 120
        %v6816 = vpop.permute.xlu0 %6815
        %6817 = vrot.lane.b32.xlu0 %v6685, 120
        %v6818 = vpop.permute.xlu0 %6817
        %6819 = vrot.lane.b32.xlu0 %v6687, 120
        %v6820 = vpop.permute.xlu0 %6819
        %6821 = vrot.lane.b32.xlu0 %v6689, 120
        %v6822 = vpop.permute.xlu0 %6821
        %vm6843 = vcmask 261120
        %v6844 = vsel %vm6843, %v6737, 0
        %v6846 = vsel %vm6843, %v6741, 0
        %v6848 = vsel %vm6843, %v6745, 0
        %v6850 = vsel %vm6843, %v6749, 0
        %v6852 = vsel %vm6843, %v6753, 0
        %v6854 = vsel %vm6843, %v6757, 0
        %v6856 = vsel %vm6843, %v6761, 0
        %v6858 = vsel %vm6843, %v6765, 0
        %6860 = vmatprep.subr.mxu0 0.0
        %6861 = vmatpush1.msra.mxu0 %v6814
        %6862 = vmatprep.subr.mxu0 0.0
        %6863 = vmatpush1.msra.mxu0 %v6812
        %6864 = vmatprep.subr.mxu0 0.0
        %6865 = vmatpush1.msra.mxu0 %v6810
        %6866 = vmatprep.subr.mxu0 0.0
        %6867 = vmatpush1.msra.mxu0 %v6808
        %6868 = vmatprep.subr.mxu0 0.0
        %6869 = vmatpush1.msra.mxu0 %v6806
        %6870 = vmatprep.subr.mxu0 0.0
        %6871 = vmatpush1.msra.mxu0 %v6804
        %6872 = vmatprep.subr.mxu0 0.0
        %6873 = vmatpush1.msra.mxu0 %v6802
        %6874 = vmatprep.subr.mxu0 0.0
        %6875 = vmatpush1.msra.mxu0 %v6800
        %6876 = vmatprep.subr.mxu0 0.0
        %6877 = vmatpush1.msra.mxu0 %v6798
        %6878 = vmatprep.subr.mxu0 0.0
        %6879 = vmatpush1.msra.mxu0 %v6796
        %6880 = vmatprep.subr.mxu0 0.0
        %6881 = vmatpush1.msra.mxu0 %v6794
        %6882 = vmatprep.subr.mxu0 0.0
        %6883 = vmatpush1.msra.mxu0 %v6792
        %6884 = vmatprep.subr.mxu0 0.0
        %6885 = vmatpush1.msra.mxu0 %v6790
        %6886 = vmatprep.subr.mxu0 0.0
        %6887 = vmatpush1.msra.mxu0 %v6788
        %6888 = vmatprep.subr.mxu0 0.0
        %6889 = vmatpush1.msra.mxu0 %v6786
        %6890 = vmatprep.subr.mxu0 0.0
        %6891 = vmatpush1.msra.mxu0 %v6784
        %6892 = vmatprep.subr.mxu0 0.0
        %6893 = vmatpush2.msra.mxu0 0.0
        %6894 = vmatprep.subr.mxu0 0.0
        %6895 = vmatpush2.msra.mxu0 0.0
        %6896 = vmatprep.subr.mxu0 0.0
        %6897 = vmatpush2.msra.mxu0 0.0
        %6898 = vmatprep.subr.mxu0 0.0
        %6899 = vmatpush2.msra.mxu0 0.0
        %6900 = vmatprep.subr.mxu0 0.0
        %6901 = vmatpush2.msra.mxu0 0.0
        %6902 = vmatprep.subr.mxu0 0.0
        %6903 = vmatpush2.msra.mxu0 0.0
        %6904 = vmatprep.subr.mxu0 0.0
        %6905 = vmatpush2.msra.mxu0 0.0
        %6906 = vmatprep.subr.mxu0 0.0
        %6907 = vmatpush2.msra.mxu0 0.0
        %6908 = vmatprep.subr.mxu0 0.0
        %6909 = vmatpush2.msra.mxu0 0.0
        %6910 = vmatprep.subr.mxu0 0.0
        %6911 = vmatpush2.msra.mxu0 0.0
        %6912 = vmatprep.subr.mxu0 0.0
        %6913 = vmatpush2.msra.mxu0 0.0
        %6914 = vmatprep.subr.mxu0 0.0
        %6915 = vmatpush2.msra.mxu0 0.0
        %6916 = vmatprep.subr.mxu0 0.0
        %6917 = vmatpush2.msra.mxu0 %v6822
        %6918 = vmatprep.subr.mxu0 0.0
        %6919 = vmatpush2.msra.mxu0 %v6820
        %6920 = vmatprep.subr.mxu0 0.0
        %6921 = vmatpush2.msra.mxu0 %v6818
        %6922 = vmatprep.subr.mxu0 0.0
        %6923 = vmatpush2.msra.mxu0 %v6816
        %6924 = vmatprep.mubr.f32.mxu0 %v6844
        %6925 = vmatmul.mubr.f32.gmra.mxu0 %v6767
        %v6926 = vpop.f32.mrf.mxu0
        %v6927 = vadd.f32 0.0, %v6926
        %v6928 = vpop.f32.mrf.mxu0
        %6929 = vmatprep.mubr.f32.mxu0 %v6846
        %6930 = vmatmul.mubr.f32.gmra.mxu0 %v6768
        %v6931 = vpop.f32.mrf.mxu0
        %v6932 = vadd.f32 0.0, %v6931
        %v6933 = vpop.f32.mrf.mxu0
        %6934 = vmatprep.mubr.f32.mxu0 %v6848
        %6935 = vmatmul.mubr.f32.gmra.mxu0 %v6769
        %v6936 = vpop.f32.mrf.mxu0
        %v6937 = vadd.f32 0.0, %v6936
        %v6938 = vpop.f32.mrf.mxu0
        %6939 = vmatprep.mubr.f32.mxu0 %v6850
        %6940 = vmatmul.mubr.f32.gmra.mxu0 %v6770
        %v6941 = vpop.f32.mrf.mxu0
        %v6942 = vadd.f32 0.0, %v6941
        %v6943 = vpop.f32.mrf.mxu0
        %6944 = vmatprep.mubr.f32.mxu0 %v6852
        %6945 = vmatmul.mubr.f32.gmra.mxu0 %v6771
        %v6946 = vpop.f32.mrf.mxu0
        %v6947 = vadd.f32 0.0, %v6946
        %v6948 = vpop.f32.mrf.mxu0
        %6949 = vmatprep.mubr.f32.mxu0 %v6854
        %6950 = vmatmul.mubr.f32.gmra.mxu0 %v6772
        %v6951 = vpop.f32.mrf.mxu0
        %v6952 = vadd.f32 0.0, %v6951
        %v6953 = vpop.f32.mrf.mxu0
        %6954 = vmatprep.mubr.f32.mxu0 %v6856
        %6955 = vmatmul.mubr.f32.gmra.mxu0 %v6773
        %v6956 = vpop.f32.mrf.mxu0
        %v6957 = vadd.f32 0.0, %v6956
        %v6958 = vpop.f32.mrf.mxu0
        %6959 = vmatprep.mubr.f32.mxu0 %v6858
        %6960 = vmatmul.mubr.f32.gmra.mxu0 %v6774
        %v6961 = vpop.f32.mrf.mxu0
        %v6962 = vadd.f32 0.0, %v6961
        %v6963 = vpop.f32.mrf.mxu0
        %6964 = vdwg.mxu0
        %v6965 = vsel %vm6843, %v6695, 0
        %v6967 = vsel %vm6843, %v6697, 0
        %v6969 = vsel %vm6843, %v6699, 0
        %v6971 = vsel %vm6843, %v6701, 0
        %v6973 = vsel %vm6843, %v6703, 0
        %v6975 = vsel %vm6843, %v6705, 0
        %v6977 = vsel %vm6843, %v6707, 0
        %v6979 = vsel %vm6843, %v6709, 0
        %6981 = vmatprep.subr.mxu0 0.0
        %6982 = vmatpush1.msra.mxu0 %v6677
        %6983 = vmatprep.subr.mxu0 0.0
        %6984 = vmatpush1.msra.mxu0 %v6675
        %6985 = vmatprep.subr.mxu0 0.0
        %6986 = vmatpush1.msra.mxu0 %v6673
        %6987 = vmatprep.subr.mxu0 0.0
        %6988 = vmatpush1.msra.mxu0 %v6671
        %6989 = vmatprep.subr.mxu0 0.0
        %6990 = vmatpush1.msra.mxu0 %v6665
        %6991 = vmatprep.subr.mxu0 0.0
        %6992 = vmatpush1.msra.mxu0 %v6663
        %6993 = vmatprep.subr.mxu0 0.0
        %6994 = vmatpush1.msra.mxu0 %v6661
        %6995 = vmatprep.subr.mxu0 0.0
        %6996 = vmatpush1.msra.mxu0 %v6659
        %6997 = vmatprep.subr.mxu0 0.0
        %6998 = vmatpush1.msra.mxu0 %v6653
        %6999 = vmatprep.subr.mxu0 0.0
        %7000 = vmatpush1.msra.mxu0 %v6651
        %7001 = vmatprep.subr.mxu0 0.0
        %7002 = vmatpush1.msra.mxu0 %v6649
        %7003 = vmatprep.subr.mxu0 0.0
        %7004 = vmatpush1.msra.mxu0 %v6647
        %7005 = vmatprep.subr.mxu0 0.0
        %7006 = vmatpush1.msra.mxu0 %v6641
        %7007 = vmatprep.subr.mxu0 0.0
        %7008 = vmatpush1.msra.mxu0 %v6640
        %7009 = vmatprep.subr.mxu0 0.0
        %7010 = vmatpush1.msra.mxu0 %v6639
        %7011 = vmatprep.subr.mxu0 0.0
        %7012 = vmatpush1.msra.mxu0 %v6638
        %7013 = vmatprep.subr.mxu0 0.0
        %7014 = vmatpush2.msra.mxu0 0.0
        %7015 = vmatprep.subr.mxu0 0.0
        %7016 = vmatpush2.msra.mxu0 0.0
        %7017 = vmatprep.subr.mxu0 0.0
        %7018 = vmatpush2.msra.mxu0 0.0
        %7019 = vmatprep.subr.mxu0 0.0
        %7020 = vmatpush2.msra.mxu0 0.0
        %7021 = vmatprep.subr.mxu0 0.0
        %7022 = vmatpush2.msra.mxu0 0.0
        %7023 = vmatprep.subr.mxu0 0.0
        %7024 = vmatpush2.msra.mxu0 0.0
        %7025 = vmatprep.subr.mxu0 0.0
        %7026 = vmatpush2.msra.mxu0 0.0
        %7027 = vmatprep.subr.mxu0 0.0
        %7028 = vmatpush2.msra.mxu0 0.0
        %7029 = vmatprep.subr.mxu0 0.0
        %7030 = vmatpush2.msra.mxu0 0.0
        %7031 = vmatprep.subr.mxu0 0.0
        %7032 = vmatpush2.msra.mxu0 0.0
        %7033 = vmatprep.subr.mxu0 0.0
        %7034 = vmatpush2.msra.mxu0 0.0
        %7035 = vmatprep.subr.mxu0 0.0
        %7036 = vmatpush2.msra.mxu0 0.0
        %7037 = vmatprep.subr.mxu0 0.0
        %7038 = vmatpush2.msra.mxu0 %v6689
        %7039 = vmatprep.subr.mxu0 0.0
        %7040 = vmatpush2.msra.mxu0 %v6687
        %7041 = vmatprep.subr.mxu0 0.0
        %7042 = vmatpush2.msra.mxu0 %v6685
        %7043 = vmatprep.subr.mxu0 0.0
        %7044 = vmatpush2.msra.mxu0 %v6683
        %7045 = vmatprep.mubr.f32.mxu0 %v6965
        %7046 = vmatmul.mubr.f32.gmra.mxu0 %v6694
        %v7047 = vpop.f32.mrf.mxu0
        %v7048 = vadd.f32 %v6927, %v7047
        %v7049 = vpop.f32.mrf.mxu0
        %7050 = vmatprep.mubr.f32.mxu0 %v6967
        %7051 = vmatmul.mubr.f32.gmra.mxu0 %v6696
        %v7052 = vpop.f32.mrf.mxu0
        %v7053 = vadd.f32 %v6932, %v7052
        %v7054 = vpop.f32.mrf.mxu0
        %7055 = vmatprep.mubr.f32.mxu0 %v6969
        %7056 = vmatmul.mubr.f32.gmra.mxu0 %v6698
        %v7057 = vpop.f32.mrf.mxu0
        %v7058 = vadd.f32 %v6937, %v7057
        %v7059 = vpop.f32.mrf.mxu0
        %7060 = vmatprep.mubr.f32.mxu0 %v6971
        %7061 = vmatmul.mubr.f32.gmra.mxu0 %v6700
        %v7062 = vpop.f32.mrf.mxu0
        %v7063 = vadd.f32 %v6942, %v7062
        %v7064 = vpop.f32.mrf.mxu0
        %7065 = vmatprep.mubr.f32.mxu0 %v6973
        %7066 = vmatmul.mubr.f32.gmra.mxu0 %v6702
        %v7067 = vpop.f32.mrf.mxu0
        %v7068 = vadd.f32 %v6947, %v7067
        %v7069 = vpop.f32.mrf.mxu0
        %7070 = vmatprep.mubr.f32.mxu0 %v6975
        %7071 = vmatmul.mubr.f32.gmra.mxu0 %v6704
        %v7072 = vpop.f32.mrf.mxu0
        %v7073 = vadd.f32 %v6952, %v7072
        %v7074 = vpop.f32.mrf.mxu0
        %7075 = vmatprep.mubr.f32.mxu0 %v6977
        %7076 = vmatmul.mubr.f32.gmra.mxu0 %v6706
        %v7077 = vpop.f32.mrf.mxu0
        %v7078 = vadd.f32 %v6957, %v7077
        %v7079 = vpop.f32.mrf.mxu0
        %7080 = vmatprep.mubr.f32.mxu0 %v6979
        %7081 = vmatmul.mubr.f32.gmra.mxu0 %v6708
        %v7082 = vpop.f32.mrf.mxu0
        %v7083 = vadd.f32 %v6962, %v7082
        %v7084 = vpop.f32.mrf.mxu0
        %7085 = vdwg.mxu0
        %v7086 = vld [vmem:[%s7 + $0x10] sm:$0xff]
        %v7087 = vld [vmem:[%s7 + $0x18] sm:$0xff]
        %v7088 = vld [vmem:[%s7 + $0x48] sm:$0xff]
        %v7089 = vld [vmem:[%s7 + $0x50] sm:$0xff]
        %v7090 = vld [vmem:[%s7 + $0x80] sm:$0xff]
        %v7091 = vld [vmem:[%s7 + $0x88] sm:$0xff]
        %v7092 = vld [vmem:[%s7 + $0xb8] sm:$0xff]
        %v7093 = vld [vmem:[%s7 + $0xc0] sm:$0xff]
        %v7094 = vld [vmem:[%s7 + $0xf0] sm:$0xff]
        %v7095 = vld [vmem:[%s7 + $0xf8] sm:$0xff]
        %v7096 = vld [vmem:[%s7 + $0x128] sm:$0xff]
        %v7097 = vld [vmem:[%s7 + $0x130] sm:$0xff]
        %v7098 = vld [vmem:[%s7 + $0x160] sm:$0xff]
        %v7099 = vld [vmem:[%s7 + $0x168] sm:$0xff]
        %v7100 = vld [vmem:[%s7 + $0x198] sm:$0xff]
        %v7101 = vld [vmem:[%s7 + $0x1a0] sm:$0xff]
        %7118 = vrot.lane.b32.xlu0 %v7086, 64
        %v7119 = vpop.permute.xlu0 %7118
        %7120 = vrot.lane.b32.xlu0 %v7087, 64
        %v7121 = vpop.permute.xlu0 %7120
        %7122 = vrot.lane.b32.xlu0 %v7088, 64
        %v7123 = vpop.permute.xlu0 %7122
        %7124 = vrot.lane.b32.xlu0 %v7089, 64
        %v7125 = vpop.permute.xlu0 %7124
        %7126 = vrot.lane.b32.xlu0 %v7090, 64
        %v7127 = vpop.permute.xlu0 %7126
        %7128 = vrot.lane.b32.xlu0 %v7091, 64
        %v7129 = vpop.permute.xlu0 %7128
        %7130 = vrot.lane.b32.xlu0 %v7092, 64
        %v7131 = vpop.permute.xlu0 %7130
        %7132 = vrot.lane.b32.xlu0 %v7093, 64
        %v7133 = vpop.permute.xlu0 %7132
        %7134 = vrot.lane.b32.xlu0 %v7094, 64
        %v7135 = vpop.permute.xlu0 %7134
        %7136 = vrot.lane.b32.xlu0 %v7095, 64
        %v7137 = vpop.permute.xlu0 %7136
        %7138 = vrot.lane.b32.xlu0 %v7096, 64
        %v7139 = vpop.permute.xlu0 %7138
        %7140 = vrot.lane.b32.xlu0 %v7097, 64
        %v7141 = vpop.permute.xlu0 %7140
        %7142 = vrot.lane.b32.xlu0 %v7098, 64
        %v7143 = vpop.permute.xlu0 %7142
        %7144 = vrot.lane.b32.xlu0 %v7099, 64
        %v7145 = vpop.permute.xlu0 %7144
        %7146 = vrot.lane.b32.xlu0 %v7100, 64
        %v7147 = vpop.permute.xlu0 %7146
        %7148 = vrot.lane.b32.xlu0 %v7101, 64
        %v7149 = vpop.permute.xlu0 %7148
        %v7150 = vsel %vm6106, %v7119, %v7121
        %v7151 = vsel %vm6106, %v7123, %v7125
        %v7152 = vsel %vm6106, %v7127, %v7129
        %v7153 = vsel %vm6106, %v7131, %v7133
        %v7154 = vsel %vm6106, %v7135, %v7137
        %v7155 = vsel %vm6106, %v7139, %v7141
        %v7156 = vsel %vm6106, %v7143, %v7145
        %v7157 = vsel %vm6106, %v7147, %v7149
        %7166 = vrot.lane.b32.xlu0 %v6638, 112
        %v7167 = vpop.permute.xlu0 %7166
        %7168 = vrot.lane.b32.xlu0 %v6639, 112
        %v7169 = vpop.permute.xlu0 %7168
        %7170 = vrot.lane.b32.xlu0 %v6640, 112
        %v7171 = vpop.permute.xlu0 %7170
        %7172 = vrot.lane.b32.xlu0 %v6641, 112
        %v7173 = vpop.permute.xlu0 %7172
        %7174 = vrot.lane.b32.xlu0 %v6647, 112
        %v7175 = vpop.permute.xlu0 %7174
        %7176 = vrot.lane.b32.xlu0 %v6649, 112
        %v7177 = vpop.permute.xlu0 %7176
        %7178 = vrot.lane.b32.xlu0 %v6651, 112
        %v7179 = vpop.permute.xlu0 %7178
        %7180 = vrot.lane.b32.xlu0 %v6653, 112
        %v7181 = vpop.permute.xlu0 %7180
        %7182 = vrot.lane.b32.xlu0 %v6659, 112
        %v7183 = vpop.permute.xlu0 %7182
        %7184 = vrot.lane.b32.xlu0 %v6661, 112
        %v7185 = vpop.permute.xlu0 %7184
        %7186 = vrot.lane.b32.xlu0 %v6663, 112
        %v7187 = vpop.permute.xlu0 %7186
        %7188 = vrot.lane.b32.xlu0 %v6665, 112
        %v7189 = vpop.permute.xlu0 %7188
        %7190 = vrot.lane.b32.xlu0 %v6671, 112
        %v7191 = vpop.permute.xlu0 %7190
        %7192 = vrot.lane.b32.xlu0 %v6673, 112
        %v7193 = vpop.permute.xlu0 %7192
        %7194 = vrot.lane.b32.xlu0 %v6675, 112
        %v7195 = vpop.permute.xlu0 %7194
        %7196 = vrot.lane.b32.xlu0 %v6677, 112
        %v7197 = vpop.permute.xlu0 %7196
        %7198 = vrot.lane.b32.xlu0 %v6683, 112
        %v7199 = vpop.permute.xlu0 %7198
        %7200 = vrot.lane.b32.xlu0 %v6685, 112
        %v7201 = vpop.permute.xlu0 %7200
        %7202 = vrot.lane.b32.xlu0 %v6687, 112
        %v7203 = vpop.permute.xlu0 %7202
        %7204 = vrot.lane.b32.xlu0 %v6689, 112
        %v7205 = vpop.permute.xlu0 %7204
        %v7226 = vsel %vm6843, %v7121, 0
        %v7228 = vsel %vm6843, %v7125, 0
        %v7230 = vsel %vm6843, %v7129, 0
        %v7232 = vsel %vm6843, %v7133, 0
        %v7234 = vsel %vm6843, %v7137, 0
        %v7236 = vsel %vm6843, %v7141, 0
        %v7238 = vsel %vm6843, %v7145, 0
        %v7240 = vsel %vm6843, %v7149, 0
        %7242 = vmatprep.subr.mxu0 0.0
        %7243 = vmatpush1.msra.mxu0 %v7197
        %7244 = vmatprep.subr.mxu0 0.0
        %7245 = vmatpush1.msra.mxu0 %v7195
        %7246 = vmatprep.subr.mxu0 0.0
        %7247 = vmatpush1.msra.mxu0 %v7193
        %7248 = vmatprep.subr.mxu0 0.0
        %7249 = vmatpush1.msra.mxu0 %v7191
        %7250 = vmatprep.subr.mxu0 0.0
        %7251 = vmatpush1.msra.mxu0 %v7189
        %7252 = vmatprep.subr.mxu0 0.0
        %7253 = vmatpush1.msra.mxu0 %v7187
        %7254 = vmatprep.subr.mxu0 0.0
        %7255 = vmatpush1.msra.mxu0 %v7185
        %7256 = vmatprep.subr.mxu0 0.0
        %7257 = vmatpush1.msra.mxu0 %v7183
        %7258 = vmatprep.subr.mxu0 0.0
        %7259 = vmatpush1.msra.mxu0 %v7181
        %7260 = vmatprep.subr.mxu0 0.0
        %7261 = vmatpush1.msra.mxu0 %v7179
        %7262 = vmatprep.subr.mxu0 0.0
        %7263 = vmatpush1.msra.mxu0 %v7177
        %7264 = vmatprep.subr.mxu0 0.0
        %7265 = vmatpush1.msra.mxu0 %v7175
        %7266 = vmatprep.subr.mxu0 0.0
        %7267 = vmatpush1.msra.mxu0 %v7173
        %7268 = vmatprep.subr.mxu0 0.0
        %7269 = vmatpush1.msra.mxu0 %v7171
        %7270 = vmatprep.subr.mxu0 0.0
        %7271 = vmatpush1.msra.mxu0 %v7169
        %7272 = vmatprep.subr.mxu0 0.0
        %7273 = vmatpush1.msra.mxu0 %v7167
        %7274 = vmatprep.subr.mxu0 0.0
        %7275 = vmatpush2.msra.mxu0 0.0
        %7276 = vmatprep.subr.mxu0 0.0
        %7277 = vmatpush2.msra.mxu0 0.0
        %7278 = vmatprep.subr.mxu0 0.0
        %7279 = vmatpush2.msra.mxu0 0.0
        %7280 = vmatprep.subr.mxu0 0.0
        %7281 = vmatpush2.msra.mxu0 0.0
        %7282 = vmatprep.subr.mxu0 0.0
        %7283 = vmatpush2.msra.mxu0 0.0
        %7284 = vmatprep.subr.mxu0 0.0
        %7285 = vmatpush2.msra.mxu0 0.0
        %7286 = vmatprep.subr.mxu0 0.0
        %7287 = vmatpush2.msra.mxu0 0.0
        %7288 = vmatprep.subr.mxu0 0.0
        %7289 = vmatpush2.msra.mxu0 0.0
        %7290 = vmatprep.subr.mxu0 0.0
        %7291 = vmatpush2.msra.mxu0 0.0
        %7292 = vmatprep.subr.mxu0 0.0
        %7293 = vmatpush2.msra.mxu0 0.0
        %7294 = vmatprep.subr.mxu0 0.0
        %7295 = vmatpush2.msra.mxu0 0.0
        %7296 = vmatprep.subr.mxu0 0.0
        %7297 = vmatpush2.msra.mxu0 0.0
        %7298 = vmatprep.subr.mxu0 0.0
        %7299 = vmatpush2.msra.mxu0 %v7205
        %7300 = vmatprep.subr.mxu0 0.0
        %7301 = vmatpush2.msra.mxu0 %v7203
        %7302 = vmatprep.subr.mxu0 0.0
        %7303 = vmatpush2.msra.mxu0 %v7201
        %7304 = vmatprep.subr.mxu0 0.0
        %7305 = vmatpush2.msra.mxu0 %v7199
        %7306 = vmatprep.mubr.f32.mxu0 %v7226
        %7307 = vmatmul.mubr.f32.gmra.mxu0 %v7150
        %v7308 = vpop.f32.mrf.mxu0
        %v7309 = vadd.f32 0.0, %v7308
        %v7310 = vpop.f32.mrf.mxu0
        %7311 = vmatprep.mubr.f32.mxu0 %v7228
        %7312 = vmatmul.mubr.f32.gmra.mxu0 %v7151
        %v7313 = vpop.f32.mrf.mxu0
        %v7314 = vadd.f32 0.0, %v7313
        %v7315 = vpop.f32.mrf.mxu0
        %7316 = vmatprep.mubr.f32.mxu0 %v7230
        %7317 = vmatmul.mubr.f32.gmra.mxu0 %v7152
        %v7318 = vpop.f32.mrf.mxu0
        %v7319 = vadd.f32 0.0, %v7318
        %v7320 = vpop.f32.mrf.mxu0
        %7321 = vmatprep.mubr.f32.mxu0 %v7232
        %7322 = vmatmul.mubr.f32.gmra.mxu0 %v7153
        %v7323 = vpop.f32.mrf.mxu0
        %v7324 = vadd.f32 0.0, %v7323
        %v7325 = vpop.f32.mrf.mxu0
        %7326 = vmatprep.mubr.f32.mxu0 %v7234
        %7327 = vmatmul.mubr.f32.gmra.mxu0 %v7154
        %v7328 = vpop.f32.mrf.mxu0
        %v7329 = vadd.f32 0.0, %v7328
        %v7330 = vpop.f32.mrf.mxu0
        %7331 = vmatprep.mubr.f32.mxu0 %v7236
        %7332 = vmatmul.mubr.f32.gmra.mxu0 %v7155
        %v7333 = vpop.f32.mrf.mxu0
        %v7334 = vadd.f32 0.0, %v7333
        %v7335 = vpop.f32.mrf.mxu0
        %7336 = vmatprep.mubr.f32.mxu0 %v7238
        %7337 = vmatmul.mubr.f32.gmra.mxu0 %v7156
        %v7338 = vpop.f32.mrf.mxu0
        %v7339 = vadd.f32 0.0, %v7338
        %v7340 = vpop.f32.mrf.mxu0
        %7341 = vmatprep.mubr.f32.mxu0 %v7240
        %7342 = vmatmul.mubr.f32.gmra.mxu0 %v7157
        %v7343 = vpop.f32.mrf.mxu0
        %v7344 = vadd.f32 0.0, %v7343
        %v7345 = vpop.f32.mrf.mxu0
        %7346 = vdwg.mxu0
        %v7347 = vadd.f32 %v7048, %v7309
        %v7348 = vadd.f32 %v7053, %v7314
        %v7349 = vadd.f32 %v7058, %v7319
        %v7350 = vadd.f32 %v7063, %v7324
        %v7351 = vadd.f32 %v7068, %v7329
        %v7352 = vadd.f32 %v7073, %v7334
        %v7353 = vadd.f32 %v7078, %v7339
        %v7354 = vadd.f32 %v7083, %v7344
        %v7355 = vld [vmem:[%s7 + $0x18] sm:$0xff]
        %v7356 = vld [vmem:[%s7 + $0x20] sm:$0xff]
        %v7357 = vld [vmem:[%s7 + $0x50] sm:$0xff]
        %v7358 = vld [vmem:[%s7 + $0x58] sm:$0xff]
        %v7359 = vld [vmem:[%s7 + $0x88] sm:$0xff]
        %v7360 = vld [vmem:[%s7 + $0x90] sm:$0xff]
        %v7361 = vld [vmem:[%s7 + $0xc0] sm:$0xff]
        %v7362 = vld [vmem:[%s7 + $0xc8] sm:$0xff]
        %v7363 = vld [vmem:[%s7 + $0xf8] sm:$0xff]
        %v7364 = vld [vmem:[%s7 + $0x100] sm:$0xff]
        %v7365 = vld [vmem:[%s7 + $0x130] sm:$0xff]
        %v7366 = vld [vmem:[%s7 + $0x138] sm:$0xff]
        %v7367 = vld [vmem:[%s7 + $0x168] sm:$0xff]
        %v7368 = vld [vmem:[%s7 + $0x170] sm:$0xff]
        %v7369 = vld [vmem:[%s7 + $0x1a0] sm:$0xff]
        %v7370 = vld [vmem:[%s7 + $0x1a8] sm:$0xff]
        %7387 = vrot.lane.b32.xlu0 %v7355, 32
        %v7388 = vpop.permute.xlu0 %7387
        %7389 = vrot.lane.b32.xlu0 %v7356, 32
        %v7390 = vpop.permute.xlu0 %7389
        %7391 = vrot.lane.b32.xlu0 %v7357, 32
        %v7392 = vpop.permute.xlu0 %7391
        %7393 = vrot.lane.b32.xlu0 %v7358, 32
        %v7394 = vpop.permute.xlu0 %7393
        %7395 = vrot.lane.b32.xlu0 %v7359, 32
        %v7396 = vpop.permute.xlu0 %7395
        %7397 = vrot.lane.b32.xlu0 %v7360, 32
        %v7398 = vpop.permute.xlu0 %7397
        %7399 = vrot.lane.b32.xlu0 %v7361, 32
        %v7400 = vpop.permute.xlu0 %7399
        %7401 = vrot.lane.b32.xlu0 %v7362, 32
        %v7402 = vpop.permute.xlu0 %7401
        %7403 = vrot.lane.b32.xlu0 %v7363, 32
        %v7404 = vpop.permute.xlu0 %7403
        %7405 = vrot.lane.b32.xlu0 %v7364, 32
        %v7406 = vpop.permute.xlu0 %7405
        %7407 = vrot.lane.b32.xlu0 %v7365, 32
        %v7408 = vpop.permute.xlu0 %7407
        %7409 = vrot.lane.b32.xlu0 %v7366, 32
        %v7410 = vpop.permute.xlu0 %7409
        %7411 = vrot.lane.b32.xlu0 %v7367, 32
        %v7412 = vpop.permute.xlu0 %7411
        %7413 = vrot.lane.b32.xlu0 %v7368, 32
        %v7414 = vpop.permute.xlu0 %7413
        %7415 = vrot.lane.b32.xlu0 %v7369, 32
        %v7416 = vpop.permute.xlu0 %7415
        %7417 = vrot.lane.b32.xlu0 %v7370, 32
        %v7418 = vpop.permute.xlu0 %7417
        %v7419 = vsel %vm6843, %v7388, %v7390
        %v7420 = vsel %vm6843, %v7392, %v7394
        %v7421 = vsel %vm6843, %v7396, %v7398
        %v7422 = vsel %vm6843, %v7400, %v7402
        %v7423 = vsel %vm6843, %v7404, %v7406
        %v7424 = vsel %vm6843, %v7408, %v7410
        %v7425 = vsel %vm6843, %v7412, %v7414
        %v7426 = vsel %vm6843, %v7416, %v7418
        %7435 = vrot.lane.b32.xlu0 %v6638, 104
        %v7436 = vpop.permute.xlu0 %7435
        %7437 = vrot.lane.b32.xlu0 %v6639, 104
        %v7438 = vpop.permute.xlu0 %7437
        %7439 = vrot.lane.b32.xlu0 %v6640, 104
        %v7440 = vpop.permute.xlu0 %7439
        %7441 = vrot.lane.b32.xlu0 %v6641, 104
        %v7442 = vpop.permute.xlu0 %7441
        %7443 = vrot.lane.b32.xlu0 %v6647, 104
        %v7444 = vpop.permute.xlu0 %7443
        %7445 = vrot.lane.b32.xlu0 %v6649, 104
        %v7446 = vpop.permute.xlu0 %7445
        %7447 = vrot.lane.b32.xlu0 %v6651, 104
        %v7448 = vpop.permute.xlu0 %7447
        %7449 = vrot.lane.b32.xlu0 %v6653, 104
        %v7450 = vpop.permute.xlu0 %7449
        %7451 = vrot.lane.b32.xlu0 %v6659, 104
        %v7452 = vpop.permute.xlu0 %7451
        %7453 = vrot.lane.b32.xlu0 %v6661, 104
        %v7454 = vpop.permute.xlu0 %7453
        %7455 = vrot.lane.b32.xlu0 %v6663, 104
        %v7456 = vpop.permute.xlu0 %7455
        %7457 = vrot.lane.b32.xlu0 %v6665, 104
        %v7458 = vpop.permute.xlu0 %7457
        %7459 = vrot.lane.b32.xlu0 %v6671, 104
        %v7460 = vpop.permute.xlu0 %7459
        %7461 = vrot.lane.b32.xlu0 %v6673, 104
        %v7462 = vpop.permute.xlu0 %7461
        %7463 = vrot.lane.b32.xlu0 %v6675, 104
        %v7464 = vpop.permute.xlu0 %7463
        %7465 = vrot.lane.b32.xlu0 %v6677, 104
        %v7466 = vpop.permute.xlu0 %7465
        %7467 = vrot.lane.b32.xlu0 %v6683, 104
        %v7468 = vpop.permute.xlu0 %7467
        %7469 = vrot.lane.b32.xlu0 %v6685, 104
        %v7470 = vpop.permute.xlu0 %7469
        %7471 = vrot.lane.b32.xlu0 %v6687, 104
        %v7472 = vpop.permute.xlu0 %7471
        %7473 = vrot.lane.b32.xlu0 %v6689, 104
        %v7474 = vpop.permute.xlu0 %7473
        %v7495 = vsel %vm6843, %v7390, 0
        %v7497 = vsel %vm6843, %v7394, 0
        %v7499 = vsel %vm6843, %v7398, 0
        %v7501 = vsel %vm6843, %v7402, 0
        %v7503 = vsel %vm6843, %v7406, 0
        %v7505 = vsel %vm6843, %v7410, 0
        %v7507 = vsel %vm6843, %v7414, 0
        %v7509 = vsel %vm6843, %v7418, 0
        %7511 = vmatprep.subr.mxu0 0.0
        %7512 = vmatpush1.msra.mxu0 %v7466
        %7513 = vmatprep.subr.mxu0 0.0
        %7514 = vmatpush1.msra.mxu0 %v7464
        %7515 = vmatprep.subr.mxu0 0.0
        %7516 = vmatpush1.msra.mxu0 %v7462
        %7517 = vmatprep.subr.mxu0 0.0
        %7518 = vmatpush1.msra.mxu0 %v7460
        %7519 = vmatprep.subr.mxu0 0.0
        %7520 = vmatpush1.msra.mxu0 %v7458
        %7521 = vmatprep.subr.mxu0 0.0
        %7522 = vmatpush1.msra.mxu0 %v7456
        %7523 = vmatprep.subr.mxu0 0.0
        %7524 = vmatpush1.msra.mxu0 %v7454
        %7525 = vmatprep.subr.mxu0 0.0
        %7526 = vmatpush1.msra.mxu0 %v7452
        %7527 = vmatprep.subr.mxu0 0.0
        %7528 = vmatpush1.msra.mxu0 %v7450
        %7529 = vmatprep.subr.mxu0 0.0
        %7530 = vmatpush1.msra.mxu0 %v7448
        %7531 = vmatprep.subr.mxu0 0.0
        %7532 = vmatpush1.msra.mxu0 %v7446
        %7533 = vmatprep.subr.mxu0 0.0
        %7534 = vmatpush1.msra.mxu0 %v7444
        %7535 = vmatprep.subr.mxu0 0.0
        %7536 = vmatpush1.msra.mxu0 %v7442
        %7537 = vmatprep.subr.mxu0 0.0
        %7538 = vmatpush1.msra.mxu0 %v7440
        %7539 = vmatprep.subr.mxu0 0.0
        %7540 = vmatpush1.msra.mxu0 %v7438
        %7541 = vmatprep.subr.mxu0 0.0
        %7542 = vmatpush1.msra.mxu0 %v7436
        %7543 = vmatprep.subr.mxu0 0.0
        %7544 = vmatpush2.msra.mxu0 0.0
        %7545 = vmatprep.subr.mxu0 0.0
        %7546 = vmatpush2.msra.mxu0 0.0
        %7547 = vmatprep.subr.mxu0 0.0
        %7548 = vmatpush2.msra.mxu0 0.0
        %7549 = vmatprep.subr.mxu0 0.0
        %7550 = vmatpush2.msra.mxu0 0.0
        %7551 = vmatprep.subr.mxu0 0.0
        %7552 = vmatpush2.msra.mxu0 0.0
        %7553 = vmatprep.subr.mxu0 0.0
        %7554 = vmatpush2.msra.mxu0 0.0
        %7555 = vmatprep.subr.mxu0 0.0
        %7556 = vmatpush2.msra.mxu0 0.0
        %7557 = vmatprep.subr.mxu0 0.0
        %7558 = vmatpush2.msra.mxu0 0.0
        %7559 = vmatprep.subr.mxu0 0.0
        %7560 = vmatpush2.msra.mxu0 0.0
        %7561 = vmatprep.subr.mxu0 0.0
        %7562 = vmatpush2.msra.mxu0 0.0
        %7563 = vmatprep.subr.mxu0 0.0
        %7564 = vmatpush2.msra.mxu0 0.0
        %7565 = vmatprep.subr.mxu0 0.0
        %7566 = vmatpush2.msra.mxu0 0.0
        %7567 = vmatprep.subr.mxu0 0.0
        %7568 = vmatpush2.msra.mxu0 %v7474
        %7569 = vmatprep.subr.mxu0 0.0
        %7570 = vmatpush2.msra.mxu0 %v7472
        %7571 = vmatprep.subr.mxu0 0.0
        %7572 = vmatpush2.msra.mxu0 %v7470
        %7573 = vmatprep.subr.mxu0 0.0
        %7574 = vmatpush2.msra.mxu0 %v7468
        %7575 = vmatprep.mubr.f32.mxu0 %v7495
        %7576 = vmatmul.mubr.f32.gmra.mxu0 %v7419
        %v7577 = vpop.f32.mrf.mxu0
        %v7578 = vadd.f32 0.0, %v7577
        %v7579 = vpop.f32.mrf.mxu0
        %7580 = vmatprep.mubr.f32.mxu0 %v7497
        %7581 = vmatmul.mubr.f32.gmra.mxu0 %v7420
        %v7582 = vpop.f32.mrf.mxu0
        %v7583 = vadd.f32 0.0, %v7582
        %v7584 = vpop.f32.mrf.mxu0
        %7585 = vmatprep.mubr.f32.mxu0 %v7499
        %7586 = vmatmul.mubr.f32.gmra.mxu0 %v7421
        %v7587 = vpop.f32.mrf.mxu0
        %v7588 = vadd.f32 0.0, %v7587
        %v7589 = vpop.f32.mrf.mxu0
        %7590 = vmatprep.mubr.f32.mxu0 %v7501
        %7591 = vmatmul.mubr.f32.gmra.mxu0 %v7422
        %v7592 = vpop.f32.mrf.mxu0
        %v7593 = vadd.f32 0.0, %v7592
        %v7594 = vpop.f32.mrf.mxu0
        %7595 = vmatprep.mubr.f32.mxu0 %v7503
        %7596 = vmatmul.mubr.f32.gmra.mxu0 %v7423
        %v7597 = vpop.f32.mrf.mxu0
        %v7598 = vadd.f32 0.0, %v7597
        %v7599 = vpop.f32.mrf.mxu0
        %7600 = vmatprep.mubr.f32.mxu0 %v7505
        %7601 = vmatmul.mubr.f32.gmra.mxu0 %v7424
        %v7602 = vpop.f32.mrf.mxu0
        %v7603 = vadd.f32 0.0, %v7602
        %v7604 = vpop.f32.mrf.mxu0
        %7605 = vmatprep.mubr.f32.mxu0 %v7507
        %7606 = vmatmul.mubr.f32.gmra.mxu0 %v7425
        %v7607 = vpop.f32.mrf.mxu0
        %v7608 = vadd.f32 0.0, %v7607
        %v7609 = vpop.f32.mrf.mxu0
        %7610 = vmatprep.mubr.f32.mxu0 %v7509
        %7611 = vmatmul.mubr.f32.gmra.mxu0 %v7426
        %v7612 = vpop.f32.mrf.mxu0
        %v7613 = vadd.f32 0.0, %v7612
        %v7614 = vpop.f32.mrf.mxu0
        %7615 = vdwg.mxu0
        %v7616 = vadd.f32 %v7347, %v7578
        %v7617 = vadd.f32 %v7348, %v7583
        %v7618 = vadd.f32 %v7349, %v7588
        %v7619 = vadd.f32 %v7350, %v7593
        %v7620 = vadd.f32 %v7351, %v7598
        %v7621 = vadd.f32 %v7352, %v7603
        %v7622 = vadd.f32 %v7353, %v7608
        %v7623 = vadd.f32 %v7354, %v7613
        %v7624 = vld [vmem:[%s7 + $0x28] sm:$0xff]
        %v7625 = vld [vmem:[%s7 + $0x30] sm:$0xff]
        %v7626 = vld [vmem:[%s7 + $0x60] sm:$0xff]
        %v7627 = vld [vmem:[%s7 + $0x68] sm:$0xff]
        %v7628 = vld [vmem:[%s7 + $0x98] sm:$0xff]
        %v7629 = vld [vmem:[%s7 + $0xa0] sm:$0xff]
        %v7630 = vld [vmem:[%s7 + $0xd0] sm:$0xff]
        %v7631 = vld [vmem:[%s7 + $0xd8] sm:$0xff]
        %v7632 = vld [vmem:[%s7 + $0x108] sm:$0xff]
        %v7633 = vld [vmem:[%s7 + $0x110] sm:$0xff]
        %v7634 = vld [vmem:[%s7 + $0x140] sm:$0xff]
        %v7635 = vld [vmem:[%s7 + $0x148] sm:$0xff]
        %v7636 = vld [vmem:[%s7 + $0x178] sm:$0xff]
        %v7637 = vld [vmem:[%s7 + $0x180] sm:$0xff]
        %v7638 = vld [vmem:[%s7 + $0x1b0] sm:$0xff]
        %v7639 = vld [vmem:[%s7 + $0x1b8] sm:$0xff]
        %7640 = vrot.lane.b32.xlu0 %v6638, 96
        %v7641 = vpop.permute.xlu0 %7640
        %7642 = vrot.lane.b32.xlu0 %v6639, 96
        %v7643 = vpop.permute.xlu0 %7642
        %7644 = vrot.lane.b32.xlu0 %v6640, 96
        %v7645 = vpop.permute.xlu0 %7644
        %7646 = vrot.lane.b32.xlu0 %v6641, 96
        %v7647 = vpop.permute.xlu0 %7646
        %7648 = vrot.lane.b32.xlu0 %v6647, 96
        %v7649 = vpop.permute.xlu0 %7648
        %7650 = vrot.lane.b32.xlu0 %v6649, 96
        %v7651 = vpop.permute.xlu0 %7650
        %7652 = vrot.lane.b32.xlu0 %v6651, 96
        %v7653 = vpop.permute.xlu0 %7652
        %7654 = vrot.lane.b32.xlu0 %v6653, 96
        %v7655 = vpop.permute.xlu0 %7654
        %7656 = vrot.lane.b32.xlu0 %v6659, 96
        %v7657 = vpop.permute.xlu0 %7656
        %7658 = vrot.lane.b32.xlu0 %v6661, 96
        %v7659 = vpop.permute.xlu0 %7658
        %7660 = vrot.lane.b32.xlu0 %v6663, 96
        %v7661 = vpop.permute.xlu0 %7660
        %7662 = vrot.lane.b32.xlu0 %v6665, 96
        %v7663 = vpop.permute.xlu0 %7662
        %7664 = vrot.lane.b32.xlu0 %v6671, 96
        %v7665 = vpop.permute.xlu0 %7664
        %7666 = vrot.lane.b32.xlu0 %v6673, 96
        %v7667 = vpop.permute.xlu0 %7666
        %7668 = vrot.lane.b32.xlu0 %v6675, 96
        %v7669 = vpop.permute.xlu0 %7668
        %7670 = vrot.lane.b32.xlu0 %v6677, 96
        %v7671 = vpop.permute.xlu0 %7670
        %7672 = vrot.lane.b32.xlu0 %v6683, 96
        %v7673 = vpop.permute.xlu0 %7672
        %7674 = vrot.lane.b32.xlu0 %v6685, 96
        %v7675 = vpop.permute.xlu0 %7674
        %7676 = vrot.lane.b32.xlu0 %v6687, 96
        %v7677 = vpop.permute.xlu0 %7676
        %7678 = vrot.lane.b32.xlu0 %v6689, 96
        %v7679 = vpop.permute.xlu0 %7678
        %v7701 = vsel %vm6843, %v7625, 0
        %v7704 = vsel %vm6843, %v7627, 0
        %v7707 = vsel %vm6843, %v7629, 0
        %v7710 = vsel %vm6843, %v7631, 0
        %v7713 = vsel %vm6843, %v7633, 0
        %v7716 = vsel %vm6843, %v7635, 0
        %v7719 = vsel %vm6843, %v7637, 0
        %v7722 = vsel %vm6843, %v7639, 0
        %7724 = vmatprep.subr.mxu0 0.0
        %7725 = vmatpush1.msra.mxu0 %v7671
        %7726 = vmatprep.subr.mxu0 0.0
        %7727 = vmatpush1.msra.mxu0 %v7669
        %7728 = vmatprep.subr.mxu0 0.0
        %7729 = vmatpush1.msra.mxu0 %v7667
        %7730 = vmatprep.subr.mxu0 0.0
        %7731 = vmatpush1.msra.mxu0 %v7665
        %7732 = vmatprep.subr.mxu0 0.0
        %7733 = vmatpush1.msra.mxu0 %v7663
        %7734 = vmatprep.subr.mxu0 0.0
        %7735 = vmatpush1.msra.mxu0 %v7661
        %7736 = vmatprep.subr.mxu0 0.0
        %7737 = vmatpush1.msra.mxu0 %v7659
        %7738 = vmatprep.subr.mxu0 0.0
        %7739 = vmatpush1.msra.mxu0 %v7657
        %7740 = vmatprep.subr.mxu0 0.0
        %7741 = vmatpush1.msra.mxu0 %v7655
        %7742 = vmatprep.subr.mxu0 0.0
        %7743 = vmatpush1.msra.mxu0 %v7653
        %7744 = vmatprep.subr.mxu0 0.0
        %7745 = vmatpush1.msra.mxu0 %v7651
        %7746 = vmatprep.subr.mxu0 0.0
        %7747 = vmatpush1.msra.mxu0 %v7649
        %7748 = vmatprep.subr.mxu0 0.0
        %7749 = vmatpush1.msra.mxu0 %v7647
        %7750 = vmatprep.subr.mxu0 0.0
        %7751 = vmatpush1.msra.mxu0 %v7645
        %7752 = vmatprep.subr.mxu0 0.0
        %7753 = vmatpush1.msra.mxu0 %v7643
        %7754 = vmatprep.subr.mxu0 0.0
        %7755 = vmatpush1.msra.mxu0 %v7641
        %7756 = vmatprep.subr.mxu0 0.0
        %7757 = vmatpush2.msra.mxu0 0.0
        %7758 = vmatprep.subr.mxu0 0.0
        %7759 = vmatpush2.msra.mxu0 0.0
        %7760 = vmatprep.subr.mxu0 0.0
        %7761 = vmatpush2.msra.mxu0 0.0
        %7762 = vmatprep.subr.mxu0 0.0
        %7763 = vmatpush2.msra.mxu0 0.0
        %7764 = vmatprep.subr.mxu0 0.0
        %7765 = vmatpush2.msra.mxu0 0.0
        %7766 = vmatprep.subr.mxu0 0.0
        %7767 = vmatpush2.msra.mxu0 0.0
        %7768 = vmatprep.subr.mxu0 0.0
        %7769 = vmatpush2.msra.mxu0 0.0
        %7770 = vmatprep.subr.mxu0 0.0
        %7771 = vmatpush2.msra.mxu0 0.0
        %7772 = vmatprep.subr.mxu0 0.0
        %7773 = vmatpush2.msra.mxu0 0.0
        %7774 = vmatprep.subr.mxu0 0.0
        %7775 = vmatpush2.msra.mxu0 0.0
        %7776 = vmatprep.subr.mxu0 0.0
        %7777 = vmatpush2.msra.mxu0 0.0
        %7778 = vmatprep.subr.mxu0 0.0
        %7779 = vmatpush2.msra.mxu0 0.0
        %7780 = vmatprep.subr.mxu0 0.0
        %7781 = vmatpush2.msra.mxu0 %v7679
        %7782 = vmatprep.subr.mxu0 0.0
        %7783 = vmatpush2.msra.mxu0 %v7677
        %7784 = vmatprep.subr.mxu0 0.0
        %7785 = vmatpush2.msra.mxu0 %v7675
        %7786 = vmatprep.subr.mxu0 0.0
        %7787 = vmatpush2.msra.mxu0 %v7673
        %7788 = vmatprep.mubr.f32.mxu0 %v7701
        %7789 = vmatmul.mubr.f32.gmra.mxu0 %v7624
        %v7790 = vpop.f32.mrf.mxu0
        %v7791 = vadd.f32 0.0, %v7790
        %v7792 = vpop.f32.mrf.mxu0
        %7793 = vmatprep.mubr.f32.mxu0 %v7704
        %7794 = vmatmul.mubr.f32.gmra.mxu0 %v7626
        %v7795 = vpop.f32.mrf.mxu0
        %v7796 = vadd.f32 0.0, %v7795
        %v7797 = vpop.f32.mrf.mxu0
        %7798 = vmatprep.mubr.f32.mxu0 %v7707
        %7799 = vmatmul.mubr.f32.gmra.mxu0 %v7628
        %v7800 = vpop.f32.mrf.mxu0
        %v7801 = vadd.f32 0.0, %v7800
        %v7802 = vpop.f32.mrf.mxu0
        %7803 = vmatprep.mubr.f32.mxu0 %v7710
        %7804 = vmatmul.mubr.f32.gmra.mxu0 %v7630
        %v7805 = vpop.f32.mrf.mxu0
        %v7806 = vadd.f32 0.0, %v7805
        %v7807 = vpop.f32.mrf.mxu0
        %7808 = vmatprep.mubr.f32.mxu0 %v7713
        %7809 = vmatmul.mubr.f32.gmra.mxu0 %v7632
        %v7810 = vpop.f32.mrf.mxu0
        %v7811 = vadd.f32 0.0, %v7810
        %v7812 = vpop.f32.mrf.mxu0
        %7813 = vmatprep.mubr.f32.mxu0 %v7716
        %7814 = vmatmul.mubr.f32.gmra.mxu0 %v7634
        %v7815 = vpop.f32.mrf.mxu0
        %v7816 = vadd.f32 0.0, %v7815
        %v7817 = vpop.f32.mrf.mxu0
        %7818 = vmatprep.mubr.f32.mxu0 %v7719
        %7819 = vmatmul.mubr.f32.gmra.mxu0 %v7636
        %v7820 = vpop.f32.mrf.mxu0
        %v7821 = vadd.f32 0.0, %v7820
        %v7822 = vpop.f32.mrf.mxu0
        %7823 = vmatprep.mubr.f32.mxu0 %v7722
        %7824 = vmatmul.mubr.f32.gmra.mxu0 %v7638
        %v7825 = vpop.f32.mrf.mxu0
        %v7826 = vadd.f32 0.0, %v7825
        %v7827 = vpop.f32.mrf.mxu0
        %7828 = vdwg.mxu0
        %v7829 = vadd.f32 %v7616, %v7791
        %v7830 = vadd.f32 %v7617, %v7796
        %v7831 = vadd.f32 %v7618, %v7801
        %v7832 = vadd.f32 %v7619, %v7806
        %v7833 = vadd.f32 %v7620, %v7811
        %v7834 = vadd.f32 %v7621, %v7816
        %v7835 = vadd.f32 %v7622, %v7821
        %v7836 = vadd.f32 %v7623, %v7826
        %v7837 = vld [vmem:[%s8] sm:$0xff]
        %v7838 = vld [vmem:[%s8 + $0x8] sm:$0xff]
        %v7839 = vld [vmem:[%s8 + $0x10] sm:$0xff]
        %v7840 = vld [vmem:[%s8 + $0x18] sm:$0xff]
        %v7841 = vld [vmem:[%s8 + $0x20] sm:$0xff]
        %v7842 = vld [vmem:[%s8 + $0x28] sm:$0xff]
        %v7843 = vld [vmem:[%s8 + $0x30] sm:$0xff]
        %v7844 = vld [vmem:[%s8 + $0x38] sm:$0xff]
        %7846 = vset.pattern.permute.xlu0 0
        %7847 = vperm.xlu0 %7846, %v7837
        %v7848 = vpop.permute.xlu0 %7847
        %7851 = vset.pattern.permute.xlu0 0
        %7852 = vperm.xlu0 %7851, %v7838
        %v7853 = vpop.permute.xlu0 %7852
        %7856 = vset.pattern.permute.xlu0 0
        %7857 = vperm.xlu0 %7856, %v7839
        %v7858 = vpop.permute.xlu0 %7857
        %7861 = vset.pattern.permute.xlu0 0
        %7862 = vperm.xlu0 %7861, %v7840
        %v7863 = vpop.permute.xlu0 %7862
        %7866 = vset.pattern.permute.xlu0 0
        %7867 = vperm.xlu0 %7866, %v7841
        %v7868 = vpop.permute.xlu0 %7867
        %7871 = vset.pattern.permute.xlu0 0
        %7872 = vperm.xlu0 %7871, %v7842
        %v7873 = vpop.permute.xlu0 %7872
        %7876 = vset.pattern.permute.xlu0 0
        %7877 = vperm.xlu0 %7876, %v7843
        %v7878 = vpop.permute.xlu0 %7877
        %7881 = vset.pattern.permute.xlu0 0
        %7882 = vperm.xlu0 %7881, %v7844
        %v7883 = vpop.permute.xlu0 %7882
        %v7885 = vadd.f32 %v7829, %v7848
        %v7886 = vadd.f32 %v7830, %v7853
        %v7887 = vadd.f32 %v7831, %v7858
        %v7888 = vadd.f32 %v7832, %v7863
        %v7889 = vadd.f32 %v7833, %v7868
        %v7890 = vadd.f32 %v7834, %v7873
        %v7891 = vadd.f32 %v7835, %v7878
        %v7892 = vadd.f32 %v7836, %v7883
        %v7893 = vmax.f32 %v7885, 0.0
        %v7894 = vmax.f32 %v7886, 0.0
        %v7895 = vmax.f32 %v7887, 0.0
        %v7896 = vmax.f32 %v7888, 0.0
        %v7897 = vmax.f32 %v7889, 0.0
        %v7898 = vmax.f32 %v7890, 0.0
        %v7899 = vmax.f32 %v7891, 0.0
        %v7900 = vmax.f32 %v7892, 0.0
        %7909 = vrot.lane.b32.xlu0 %v7893, 127
        %v7910 = vpop.permute.xlu0 %7909
        %7911 = vrot.lane.b32.xlu0 %v7894, 127
        %v7912 = vpop.permute.xlu0 %7911
        %7913 = vrot.lane.b32.xlu0 %v7895, 127
        %v7914 = vpop.permute.xlu0 %7913
        %7915 = vrot.lane.b32.xlu0 %v7896, 127
        %v7916 = vpop.permute.xlu0 %7915
        %7917 = vrot.lane.b32.xlu0 %v7897, 127
        %v7918 = vpop.permute.xlu0 %7917
        %7919 = vrot.lane.b32.xlu0 %v7898, 127
        %v7920 = vpop.permute.xlu0 %7919
        %7921 = vrot.lane.b32.xlu0 %v7899, 127
        %v7922 = vpop.permute.xlu0 %7921
        %7923 = vrot.lane.b32.xlu0 %v7900, 127
        %v7924 = vpop.permute.xlu0 %7923
        %v7933 = vmax.f32 %v7893, %v7910
        %v7934 = vmax.f32 %v7894, %v7912
        %v7935 = vmax.f32 %v7895, %v7914
        %v7936 = vmax.f32 %v7896, %v7916
        %v7937 = vmax.f32 %v7897, %v7918
        %v7938 = vmax.f32 %v7898, %v7920
        %v7939 = vmax.f32 %v7899, %v7922
        %v7940 = vmax.f32 %v7900, %v7924
        %7949 = vrot.lane.b32.xlu0 %v7933, 120
        %v7950 = vpop.permute.xlu0 %7949
        %7951 = vrot.lane.b32.xlu0 %v7934, 120
        %v7952 = vpop.permute.xlu0 %7951
        %7953 = vrot.lane.b32.xlu0 %v7935, 120
        %v7954 = vpop.permute.xlu0 %7953
        %7955 = vrot.lane.b32.xlu0 %v7936, 120
        %v7956 = vpop.permute.xlu0 %7955
        %7957 = vrot.lane.b32.xlu0 %v7937, 120
        %v7958 = vpop.permute.xlu0 %7957
        %7959 = vrot.lane.b32.xlu0 %v7938, 120
        %v7960 = vpop.permute.xlu0 %7959
        %7961 = vrot.lane.b32.xlu0 %v7939, 120
        %v7962 = vpop.permute.xlu0 %7961
        %7963 = vrot.lane.b32.xlu0 %v7940, 120
        %v7964 = vpop.permute.xlu0 %7963
        %v7973 = vmax.f32 %v7933, %v7950
        %v7974 = vmax.f32 %v7934, %v7952
        %v7975 = vmax.f32 %v7935, %v7954
        %v7976 = vmax.f32 %v7936, %v7956
        %v7977 = vmax.f32 %v7937, %v7958
        %v7978 = vmax.f32 %v7938, %v7960
        %v7979 = vmax.f32 %v7939, %v7962
        %v7980 = vmax.f32 %v7940, %v7964
        %v7981 = vld [vmem:[%s12] sm:$0xff]
        %v7982 = vld [vmem:[%s12 + $0x8] sm:$0xff]
        %v7983 = vld [vmem:[%s12 + $0x10] sm:$0xff]
        %v7984 = vld [vmem:[%s12 + $0x18] sm:$0xff]
        %v7985 = vld [vmem:[%s12 + $0x20] sm:$0xff]
        %v7986 = vld [vmem:[%s12 + $0x28] sm:$0xff]
        %v7987 = vld [vmem:[%s12 + $0x30] sm:$0xff]
        %v7988 = vld [vmem:[%s12 + $0x38] sm:$0xff]
        %7990 = vset.pattern.permute.xlu0 0
        %7991 = vperm.xlu0 %7990, %v7973
        %v7992 = vpop.permute.xlu0 %7991
        %7995 = vset.pattern.permute.xlu0 0
        %7996 = vperm.xlu0 %7995, %v7974
        %v7997 = vpop.permute.xlu0 %7996
        %8000 = vset.pattern.permute.xlu0 0
        %8001 = vperm.xlu0 %8000, %v7975
        %v8002 = vpop.permute.xlu0 %8001
        %8005 = vset.pattern.permute.xlu0 0
        %8006 = vperm.xlu0 %8005, %v7976
        %v8007 = vpop.permute.xlu0 %8006
        %8010 = vset.pattern.permute.xlu0 0
        %8011 = vperm.xlu0 %8010, %v7977
        %v8012 = vpop.permute.xlu0 %8011
        %8015 = vset.pattern.permute.xlu0 0
        %8016 = vperm.xlu0 %8015, %v7978
        %v8017 = vpop.permute.xlu0 %8016
        %8020 = vset.pattern.permute.xlu0 0
        %8021 = vperm.xlu0 %8020, %v7979
        %v8022 = vpop.permute.xlu0 %8021
        %8025 = vset.pattern.permute.xlu0 0
        %8026 = vperm.xlu0 %8025, %v7980
        %v8027 = vpop.permute.xlu0 %8026
        %v8029 = vmul.f32 %v7992, %v7981
        %v8030 = vmul.f32 %v7997, %v7982
        %v8031 = vmul.f32 %v8002, %v7983
        %v8032 = vmul.f32 %v8007, %v7984
        %v8033 = vmul.f32 %v8012, %v7985
        %v8034 = vmul.f32 %v8017, %v7986
        %v8035 = vmul.f32 %v8022, %v7987
        %v8036 = vmul.f32 %v8027, %v7988
        %s8037 = scalar_lea.vmem %s12, 64
        %v8038 = vld [vmem:[%s8037] sm:$0xff]
        %v8039 = vld [vmem:[%s8037 + $0x8] sm:$0xff]
        %v8040 = vld [vmem:[%s8037 + $0x10] sm:$0xff]
        %v8041 = vld [vmem:[%s8037 + $0x18] sm:$0xff]
        %v8042 = vld [vmem:[%s8037 + $0x20] sm:$0xff]
        %v8043 = vld [vmem:[%s8037 + $0x28] sm:$0xff]
        %v8044 = vld [vmem:[%s8037 + $0x30] sm:$0xff]
        %v8045 = vld [vmem:[%s8037 + $0x38] sm:$0xff]
        %8046 = vset.pattern.permute.xlu0 2
        %8047 = vperm.xlu0 %8046, %v7973
        %v8048 = vpop.permute.xlu0 %8047
        %8050 = vset.pattern.permute.xlu0 2
        %8051 = vperm.xlu0 %8050, %v7974
        %v8052 = vpop.permute.xlu0 %8051
        %8054 = vset.pattern.permute.xlu0 2
        %8055 = vperm.xlu0 %8054, %v7975
        %v8056 = vpop.permute.xlu0 %8055
        %8058 = vset.pattern.permute.xlu0 2
        %8059 = vperm.xlu0 %8058, %v7976
        %v8060 = vpop.permute.xlu0 %8059
        %8062 = vset.pattern.permute.xlu0 2
        %8063 = vperm.xlu0 %8062, %v7977
        %v8064 = vpop.permute.xlu0 %8063
        %8066 = vset.pattern.permute.xlu0 2
        %8067 = vperm.xlu0 %8066, %v7978
        %v8068 = vpop.permute.xlu0 %8067
        %8070 = vset.pattern.permute.xlu0 2
        %8071 = vperm.xlu0 %8070, %v7979
        %v8072 = vpop.permute.xlu0 %8071
        %8074 = vset.pattern.permute.xlu0 2
        %8075 = vperm.xlu0 %8074, %v7980
        %v8076 = vpop.permute.xlu0 %8075
        %v8078 = vmul.f32 %v8048, %v8038
        %v8079 = vmul.f32 %v8052, %v8039
        %v8080 = vmul.f32 %v8056, %v8040
        %v8081 = vmul.f32 %v8060, %v8041
        %v8082 = vmul.f32 %v8064, %v8042
        %v8083 = vmul.f32 %v8068, %v8043
        %v8084 = vmul.f32 %v8072, %v8044
        %v8085 = vmul.f32 %v8076, %v8045
        %v8086 = vadd.f32 %v8029, %v8078
        %v8087 = vadd.f32 %v8030, %v8079
        %v8088 = vadd.f32 %v8031, %v8080
        %v8089 = vadd.f32 %v8032, %v8081
        %v8090 = vadd.f32 %v8033, %v8082
        %v8091 = vadd.f32 %v8034, %v8083
        %v8092 = vadd.f32 %v8035, %v8084
        %v8093 = vadd.f32 %v8036, %v8085
        %s8094 = scalar_lea.vmem %s12, 128
        %v8095 = vld [vmem:[%s8094] sm:$0xff]
        %v8096 = vld [vmem:[%s8094 + $0x8] sm:$0xff]
        %v8097 = vld [vmem:[%s8094 + $0x10] sm:$0xff]
        %v8098 = vld [vmem:[%s8094 + $0x18] sm:$0xff]
        %v8099 = vld [vmem:[%s8094 + $0x20] sm:$0xff]
        %v8100 = vld [vmem:[%s8094 + $0x28] sm:$0xff]
        %v8101 = vld [vmem:[%s8094 + $0x30] sm:$0xff]
        %v8102 = vld [vmem:[%s8094 + $0x38] sm:$0xff]
        %8103 = vset.pattern.permute.xlu0 16
        %8104 = vperm.xlu0 %8103, %v7973
        %v8105 = vpop.permute.xlu0 %8104
        %8107 = vset.pattern.permute.xlu0 16
        %8108 = vperm.xlu0 %8107, %v7974
        %v8109 = vpop.permute.xlu0 %8108
        %8111 = vset.pattern.permute.xlu0 16
        %8112 = vperm.xlu0 %8111, %v7975
        %v8113 = vpop.permute.xlu0 %8112
        %8115 = vset.pattern.permute.xlu0 16
        %8116 = vperm.xlu0 %8115, %v7976
        %v8117 = vpop.permute.xlu0 %8116
        %8119 = vset.pattern.permute.xlu0 16
        %8120 = vperm.xlu0 %8119, %v7977
        %v8121 = vpop.permute.xlu0 %8120
        %8123 = vset.pattern.permute.xlu0 16
        %8124 = vperm.xlu0 %8123, %v7978
        %v8125 = vpop.permute.xlu0 %8124
        %8127 = vset.pattern.permute.xlu0 16
        %8128 = vperm.xlu0 %8127, %v7979
        %v8129 = vpop.permute.xlu0 %8128
        %8131 = vset.pattern.permute.xlu0 16
        %8132 = vperm.xlu0 %8131, %v7980
        %v8133 = vpop.permute.xlu0 %8132
        %v8135 = vmul.f32 %v8105, %v8095
        %v8136 = vmul.f32 %v8109, %v8096
        %v8137 = vmul.f32 %v8113, %v8097
        %v8138 = vmul.f32 %v8117, %v8098
        %v8139 = vmul.f32 %v8121, %v8099
        %v8140 = vmul.f32 %v8125, %v8100
        %v8141 = vmul.f32 %v8129, %v8101
        %v8142 = vmul.f32 %v8133, %v8102
        %v8143 = vadd.f32 %v8086, %v8135
        %v8144 = vadd.f32 %v8087, %v8136
        %v8145 = vadd.f32 %v8088, %v8137
        %v8146 = vadd.f32 %v8089, %v8138
        %v8147 = vadd.f32 %v8090, %v8139
        %v8148 = vadd.f32 %v8091, %v8140
        %v8149 = vadd.f32 %v8092, %v8141
        %v8150 = vadd.f32 %v8093, %v8142
        %s8151 = scalar_lea.vmem %s12, 192
        %v8152 = vld [vmem:[%s8151] sm:$0xff]
        %v8153 = vld [vmem:[%s8151 + $0x8] sm:$0xff]
        %v8154 = vld [vmem:[%s8151 + $0x10] sm:$0xff]
        %v8155 = vld [vmem:[%s8151 + $0x18] sm:$0xff]
        %v8156 = vld [vmem:[%s8151 + $0x20] sm:$0xff]
        %v8157 = vld [vmem:[%s8151 + $0x28] sm:$0xff]
        %v8158 = vld [vmem:[%s8151 + $0x30] sm:$0xff]
        %v8159 = vld [vmem:[%s8151 + $0x38] sm:$0xff]
        %8160 = vset.pattern.permute.xlu0 18
        %8161 = vperm.xlu0 %8160, %v7973
        %v8162 = vpop.permute.xlu0 %8161
        %8164 = vset.pattern.permute.xlu0 18
        %8165 = vperm.xlu0 %8164, %v7974
        %v8166 = vpop.permute.xlu0 %8165
        %8168 = vset.pattern.permute.xlu0 18
        %8169 = vperm.xlu0 %8168, %v7975
        %v8170 = vpop.permute.xlu0 %8169
        %8172 = vset.pattern.permute.xlu0 18
        %8173 = vperm.xlu0 %8172, %v7976
        %v8174 = vpop.permute.xlu0 %8173
        %8176 = vset.pattern.permute.xlu0 18
        %8177 = vperm.xlu0 %8176, %v7977
        %v8178 = vpop.permute.xlu0 %8177
        %8180 = vset.pattern.permute.xlu0 18
        %8181 = vperm.xlu0 %8180, %v7978
        %v8182 = vpop.permute.xlu0 %8181
        %8184 = vset.pattern.permute.xlu0 18
        %8185 = vperm.xlu0 %8184, %v7979
        %v8186 = vpop.permute.xlu0 %8185
        %8188 = vset.pattern.permute.xlu0 18
        %8189 = vperm.xlu0 %8188, %v7980
        %v8190 = vpop.permute.xlu0 %8189
        %v8192 = vmul.f32 %v8162, %v8152
        %v8193 = vmul.f32 %v8166, %v8153
        %v8194 = vmul.f32 %v8170, %v8154
        %v8195 = vmul.f32 %v8174, %v8155
        %v8196 = vmul.f32 %v8178, %v8156
        %v8197 = vmul.f32 %v8182, %v8157
        %v8198 = vmul.f32 %v8186, %v8158
        %v8199 = vmul.f32 %v8190, %v8159
        %v8200 = vadd.f32 %v8143, %v8192
        %v8201 = vadd.f32 %v8144, %v8193
        %v8202 = vadd.f32 %v8145, %v8194
        %v8203 = vadd.f32 %v8146, %v8195
        %v8204 = vadd.f32 %v8147, %v8196
        %v8205 = vadd.f32 %v8148, %v8197
        %v8206 = vadd.f32 %v8149, %v8198
        %v8207 = vadd.f32 %v8150, %v8199
        %v8208 = vsel %vm3513, %v8200, 0.0
        %v8209 = vsel %vm3513, %v8201, 0.0
        %v8210 = vadd.f32 %v8208, %v8209
        %v8211 = vsel %vm3513, %v8202, 0.0
        %v8212 = vadd.f32 %v8210, %v8211
        %v8213 = vsel %vm3513, %v8203, 0.0
        %v8214 = vadd.f32 %v8212, %v8213
        %v8215 = vsel %vm3513, %v8204, 0.0
        %v8216 = vadd.f32 %v8214, %v8215
        %v8217 = vsel %vm3513, %v8205, 0.0
        %v8218 = vadd.f32 %v8216, %v8217
        %v8219 = vsel %vm3513, %v8206, 0.0
        %v8220 = vadd.f32 %v8218, %v8219
        %v8221 = vsel %vm3513, %v8207, 0.0
        %v8222 = vadd.f32 %v8220, %v8221
        %v8223 = vrot.slane %v8222, 4
        %v8224 = vadd.f32 %v8222, %v8223
        %v8225 = vrot.slane %v8224, 2
        %v8226 = vadd.f32 %v8224, %v8225
        %v8227 = vrot.slane %v8226, 1
        %v8228 = vadd.f32 %v8226, %v8227
        %v8229 = vld [vmem:[%s13] sm:$0x1]
        %v8230 = vadd.f32 %v8228, %v8229
        %vm8231 = vcmask 188416
        %8232 = vst.msk [vmem:[%s459] sm:$0x1] %vm8231, %v8230
        %s8233 = sand.u32 %s335, 1
        %s8234 = scalar_lea.sflag [#allocation6], %s8233
        %s8235 = sand.u32 %s335, 1
        %s8236 = scalar_lea.vmem [#allocation5], %s8235
        // Predicated region
        $region77: #{forward.1} parent=75 // pred_check
          %p8237 = pneg %p345
        $region78: #{forward.1} parent=75 // pred_check_branch
          %8239 = sbr.rel (%p8237) target = $region80
        $region79: #{forward.1} parent=75 // pred_region
          %s8241 = ssub.s32 16, 16
          %8242 = vsyncadd %s8234, %s8241
          %s8243 = smul.addr %s28, 16
          %s8244 = scalar_lea.hbm %s14, %s8243
          %s8246 = sshll.u32 %s8236, 4
          %s8247 = int_to_ptr.vmem [resolvable:$true] %s8246
          %8249 = dma.vmem_to_hbm [thread:$0]  %s8247, 16, %s8244, %s8234
        $region80: #{forward.1} parent=75 // pred_fallthru
          _
      $region76: #{forward.1} parent=5 // pred_fallthru
        _
      %p8250 = scmp.le.s32.totalorder 2, %s23
      // Predicated region
      $region81: #{forward.1} parent=5 // pred_check
        %p8251 = pneg %p8250
      $region82: #{forward.1} parent=5 // pred_check_branch
        %8253 = sbr.rel (%p8251) target = $region84
      $region83: #{forward.1} parent=5 // pred_region
        %s8254 = ssub.s32 %s23, 2
        // Predicated region
        $region85: #{forward.1} parent=83 // pred_check
          %p8255 = pneg %p351
        $region86: #{forward.1} parent=83 // pred_check_branch
          %8257 = sbr.rel (%p8255) target = $region88
        $region87: #{forward.1} parent=83 // pred_region
          %s8258 = sand.u32 %s336, 1
          %s8259 = scalar_lea.sflag [#allocation6], %s8258
          %s8260 = sand.u32 %s336, 1
          %s8261 = scalar_lea.vmem [#allocation5], %s8260
          %8262 = dma.done %s8259, 16
        $region88: #{forward.1} parent=83 // pred_fallthru
          _
      $region84: #{forward.1} parent=5 // pred_fallthru
        _
    $region6: #{forward.1} parent=1 // loop_footer
      %s27 = sadd.s32 1, %s23
    $region7: #{forward.1} parent=1 // loop_footer_branch
      %22 = sbr.rel target = $region3
    $region8: #{forward.1} parent=1 // loop_exit
      _
    %8263 = vsyncpa [#allocation6], 1
    %s8264 = scalar_lea.sflag [#allocation6], 1
    %8265 = vsyncpa %s8264, 1

</llo_original>
